<compile_context>
chip_gen: v6e
topology: v6e:2x2x1
jax: 0.10.0
libtpu: 0.0.40
codegen_flags: <defaults>
</compile_context>

<pallas_src>
import functools
import math

import jax
import jax.numpy as jnp
import numpy as np
from jax import lax
from jax.experimental import pallas as pl
from jax.experimental.pallas import tpu as pltpu

_LANE = 128
_SUBLANE = 8
_MAX_BATCH_TILE = 256   # v6e/v7x MXU has 256 rows; v5e (128 rows) saturates too.
_TARGET_ROWS = 512      # target Tt*Bt rows for the hoisted input projection.


def _round_up(x, m):
    return (x + m - 1) // m * m


@functools.lru_cache(maxsize=1)
def _single_buffer_supported():
    """Probe once whether pipeline_mode=pl.Buffered(1) lowers on this jax/Mosaic
    version; used to keep constant-index weight blocks single-buffered."""
    try:
        def _copy(x_ref, o_ref):
            o_ref[...] = x_ref[...]
        spec = pl.BlockSpec((8, 128), lambda i: (0, 0),
                            pipeline_mode=pl.Buffered(1))
        fn = pl.pallas_call(
            _copy,
            out_shape=jax.ShapeDtypeStruct((8, 128), jnp.float32),
            grid=(1,),
            in_specs=[spec],
            out_specs=pl.BlockSpec((8, 128), lambda i: (0, 0)))
        jax.jit(fn).lower(jax.ShapeDtypeStruct((8, 128), jnp.float32)).compile()
        return True
    except Exception:  # older jax or unsupported buffer_count -> double buffer
        return False


# ----------------------------------------------------------------------------
# Kernel: one LSTM layer over one (batch-tile, time-chunk) grid cell.
# ----------------------------------------------------------------------------
def _lstm_layer_kernel(x_ref, w_ih_ref, w_hh_ref, b_ref,
                       out_ref, hn_ref, cn_ref,
                       xg_scr, h_scr, c_scr,
                       *, t_chunk, b_tile, hidden_pad, seq_len, compute_dtype,
                       unroll):
    """Refs:
      x_ref   : (Tt*Bt, in_p)  compute_dtype, rows ordered (t0 b0..bBt-1, t1 ...)
      w_ih_ref: (in_p, 4*Hp)   compute_dtype (single-buffered when supported)
      w_hh_ref: (Hp,   4*Hp)   compute_dtype
      b_ref   : (1,    4*Hp)   f32  (b_ih + b_hh, per-gate lane-padded)
      out_ref : (Tt*Bt, Hp)    f32 (top layer) or compute_dtype (inner layers)
      hn_ref, cn_ref: (Bt, Hp) f32  final state (written on last time chunk)
      xg_scr  : (Tt*Bt, 4*Hp)  f32  batched input projection for the chunk
      h_scr, c_scr: (Bt, Hp)   f32  recurrent state carried across time chunks
    """
    Hp = hidden_pad
    Tt = t_chunk
    Bt = b_tile
    tc = pl.program_id(1)

    @pl.when(tc == 0)
    def _():
        h_scr[...] = jnp.zeros_like(h_scr)
        c_scr[...] = jnp.zeros_like(c_scr)

    # Hoisted input projection: one big MXU matmul for the whole chunk.
    xg_scr[...] = (
        jnp.dot(x_ref[...], w_ih_ref[...], preferred_element_type=jnp.float32)
        + b_ref[...])

    has_tail = (seq_len % Tt) != 0  # static: only trace the mask when needed

    def step(t, carry):
        h_prev, c_prev = carry
        row = pl.multiple_of(t * Bt, Bt)
        # Single recurrent matmul per step; gate columns are 128-lane aligned.
        gates = xg_scr[pl.ds(row, Bt), :] + jnp.dot(
            h_prev.astype(compute_dtype), w_hh_ref[...],
            preferred_element_type=jnp.float32)
        i_g = jax.nn.sigmoid(gates[:, 0 * Hp:1 * Hp])
        f_g = jax.nn.sigmoid(gates[:, 1 * Hp:2 * Hp])
        g_g = jnp.tanh(gates[:, 2 * Hp:3 * Hp])
        o_g = jax.nn.sigmoid(gates[:, 3 * Hp:4 * Hp])
        c_new = f_g * c_prev + i_g * g_g
        h_new = o_g * jnp.tanh(c_new)
        if has_tail:  # freeze state on zero-padded trailing timesteps
            keep = (tc * Tt + t) < seq_len
            c_new = jnp.where(keep, c_new, c_prev)
            h_new = jnp.where(keep, h_new, h_prev)
        out_ref[pl.ds(row, Bt), :] = h_new.astype(out_ref.dtype)
        return h_new, c_new

    h_last, c_last = lax.fori_loop(
        0, Tt, step, (h_scr[...], c_scr[...]), unroll=unroll)
    h_scr[...] = h_last
    c_scr[...] = c_last

    @pl.when(tc == pl.num_programs(1) - 1)
    def _():
        hn_ref[...] = h_scr[...]
        cn_ref[...] = c_scr[...]


# ----------------------------------------------------------------------------
# VMEM budget (weights counted once when single-buffered, actual dtypes).
# ----------------------------------------------------------------------------
def _vmem_limit_bytes(in_p, hidden_pad, t_chunk, b_tile, *, w_bytes, in_bytes,
                      out_bytes, single_buf_weights):
    Hp = hidden_pad
    rows = t_chunk * b_tile
    wbuf = 1 if single_buf_weights else 2
    weights = wbuf * ((in_p + Hp) * 4 * Hp * w_bytes + 4 * Hp * 4)
    io = (2 * rows * in_p * in_bytes        # x block (double-buffered)
          + 2 * rows * Hp * out_bytes       # out slab (double-buffered)
          + 2 * 2 * b_tile * Hp * 4)        # hn/cn blocks
    scratch = rows * 4 * Hp * 4 + 2 * b_tile * Hp * 4
    est = weights + io + scratch
    # 1.5x margin for Mosaic-internal scratch; clamp to v7x's 64 MiB / TC.
    # TODO(synk): for Hp >= ~2048 on v7x, tile the 4*Hp gate-column axis across
    # a grid dimension instead of holding the full weight slab resident.
    return int(min(max(int(est * 1.5), 16 * 2 ** 20), 64 * 2 ** 20))


def _run_lstm_layer(x_flat, w_ih, w_hh, b, *, n_btiles, b_tile, t_pad, t_chunk,
                    hidden_pad, seq_len, compute_dtype, out_dtype, unroll):
    in_p = x_flat.shape[-1]
    Tt, Bt, Hp = t_chunk, b_tile, hidden_pad
    n_tchunks = t_pad // Tt
    rows = Tt * Bt
    single_buf = _single_buffer_supported()

    kernel = functools.partial(
        _lstm_layer_kernel, t_chunk=Tt, b_tile=Bt, hidden_pad=Hp,
        seq_len=seq_len, compute_dtype=compute_dtype, unroll=unroll)

    def _wspec(shape):
        idx = lambda bi, tc, _n=len(shape): (0,) * _n
        if single_buf:  # constant-index block: one resident buffer is enough
            return pl.BlockSpec(shape, idx, pipeline_mode=pl.Buffered(1))
        return pl.BlockSpec(shape, idx)

    out_shapes = (
        jax.ShapeDtypeStruct((n_btiles, t_pad * Bt, Hp), out_dtype),  # h_t slab
        jax.ShapeDtypeStruct((n_btiles * Bt, Hp), jnp.float32),       # h_T
        jax.ShapeDtypeStruct((n_btiles * Bt, Hp), jnp.float32),       # c_T
    )
    in_specs = [
        pl.BlockSpec((None, rows, in_p), lambda bi, tc: (bi, tc, 0)),
        _wspec((in_p, 4 * Hp)),
        _wspec((Hp, 4 * Hp)),
        _wspec((1, 4 * Hp)),
    ]
    out_specs = (
        pl.BlockSpec((None, rows, Hp), lambda bi, tc: (bi, tc, 0)),
        pl.BlockSpec((Bt, Hp), lambda bi, tc: (bi, 0)),
        pl.BlockSpec((Bt, Hp), lambda bi, tc: (bi, 0)),
    )
    scratch_shapes = [
        pltpu.VMEM((rows, 4 * Hp), jnp.float32),  # batched input projection
        pltpu.VMEM((Bt, Hp), jnp.float32),        # h state
        pltpu.VMEM((Bt, Hp), jnp.float32),        # c state
    ]
    vmem_limit = _vmem_limit_bytes(
        in_p, Hp, Tt, Bt,
        w_bytes=jnp.dtype(compute_dtype).itemsize,
        in_bytes=jnp.dtype(x_flat.dtype).itemsize,
        out_bytes=jnp.dtype(out_dtype).itemsize,
        single_buf_weights=single_buf)
    return pl.pallas_call(
        kernel,
        out_shape=out_shapes,
        grid_spec=pltpu.PrefetchScalarGridSpec(
            num_scalar_prefetch=0,
            grid=(n_btiles, n_tchunks),
            in_specs=in_specs,
            out_specs=out_specs,
            scratch_shapes=scratch_shapes),
        compiler_params=pltpu.CompilerParams(
            dimension_semantics=("parallel", "arbitrary"),
            vmem_limit_bytes=vmem_limit),
    )(x_flat, w_ih, w_hh, b)


# ----------------------------------------------------------------------------
# One-time weight packing (hoisted out of the forward pass).
# ----------------------------------------------------------------------------
def pack_lstm_params(params, input_size, hidden_size,
                     compute_dtype=jnp.bfloat16):
    """Pad each gate's columns to a multiple of 128 lanes, pad input-feature
    rows, and cast matmul weights to compute_dtype (f32 also allowed)."""
    H = hidden_size
    Hp = _round_up(H, _LANE)
    Ip = _round_up(input_size, _LANE)

    def pad_gates(w, rows_pad):
        r = w.shape[0]
        w = w.reshape(r, 4, H)
        w = jnp.pad(w, ((0, rows_pad - r), (0, 0), (0, Hp - H)))
        return w.reshape(rows_pad, 4 * Hp)

    packed = []
    for l, (w_ih_t, w_hh_t, bias) in enumerate(params):
        in_p = Ip if l == 0 else Hp
        packed.append((pad_gates(w_ih_t, in_p).astype(compute_dtype),
                       pad_gates(w_hh_t, Hp).astype(compute_dtype),
                       pad_gates(bias, 1).astype(jnp.float32)))
    return packed


# ----------------------------------------------------------------------------
# Public forward: matches PyTorch nn.LSTM(batch_first=True) semantics.
# ----------------------------------------------------------------------------
def lstm_encoder_forward(x, packed_params, hidden_size, num_layers, *,
                         t_chunk=None, b_tile=None,
                         compute_dtype=jnp.bfloat16):
    """x: (B, T, input_size) f32. packed_params: from pack_lstm_params.
    Returns (out, (h_n, c_n)) with out f32 (B, T, H)."""
    B, T, I = x.shape
    H = hidden_size
    Hp = _round_up(H, _LANE)
    Ip = _round_up(I, _LANE)

    # Batch tile: feed as many rows as possible into the serial recurrent
    # matmul (MXU row utilization), but keep >=2 batch tiles for large batches
    # so v7x's second TensorCore gets work via the "parallel" grid axis.
    if b_tile is not None:
        Bt = max(_SUBLANE, _round_up(b_tile, _SUBLANE))
    else:
        Bp8 = _round_up(B, _SUBLANE)
        if Bp8 <= 128:
            Bt = Bp8
        else:
            Bt = min(_MAX_BATCH_TILE, _round_up((Bp8 + 1) // 2, _SUBLANE))
    Bp = _round_up(B, Bt)
    n_btiles = Bp // Bt

    # Time chunk: aim for Tt*Bt ~ _TARGET_ROWS rows per hoisted projection.
    if t_chunk is not None:
        Tt = max(1, min(t_chunk, T))
    else:
        Tt = max(1, min(T, max(1, _TARGET_ROWS // Bt)))
    T_pad = _round_up(T, Tt)

    # Bound the unroll of the recurrence by the live gate-tile size (64 vregs).
    gates_bytes = Bt * 4 * Hp * 4
    if gates_bytes <= 32 * 1024:
        unroll = min(Tt, 8)
    elif gates_bytes <= 96 * 1024:
        unroll = min(Tt, 4)
    else:
        unroll = min(Tt, 2)

    # Time-major, padded, flattened to (n_btiles, T_pad*Bt, Ip) with rows
    # ordered (time, batch-within-tile): all kernel blocks are 2D, lane-dense.
    xt = jnp.transpose(x, (1, 0, 2))                               # (T, B, I)
    xt = jnp.pad(xt, ((0, T_pad - T), (0, Bp - B), (0, Ip - I)))
    xt = xt.reshape(T_pad, n_btiles, Bt, Ip).transpose(1, 0, 2, 3)
    layer_in = xt.reshape(n_btiles, T_pad * Bt, Ip).astype(compute_dtype)

    hs, cs = [], []
    out_flat = None
    for l in range(num_layers):
        w_ih_p, w_hh_p, b_p = packed_params[l]
        is_last = (l == num_layers - 1)
        # Inner layers emit bf16 slabs consumed directly by the next layer
        # (no f32 slab + external cast); top layer emits f32 like PyTorch.
        out_dtype = jnp.float32 if is_last else compute_dtype
        out_flat, hn, cn = _run_lstm_layer(
            layer_in, w_ih_p, w_hh_p, b_p,
            n_btiles=n_btiles, b_tile=Bt, t_pad=T_pad, t_chunk=Tt,
            hidden_pad=Hp, seq_len=T, compute_dtype=compute_dtype,
            out_dtype=out_dtype, unroll=unroll)
        hs.append(hn[:B, :H])
        cs.append(cn[:B, :H])
        layer_in = out_flat  # already compute_dtype for non-final layers

    # Un-flatten the top layer's per-timestep output back to (B, T, H).
    out = out_flat.reshape(n_btiles, T_pad, Bt, Hp).transpose(1, 0, 2, 3)
    out = out.reshape(T_pad, Bp, Hp)[:T, :B, :H]
    out = jnp.transpose(out, (1, 0, 2))
    return out, (jnp.stack(hs, axis=0), jnp.stack(cs, axis=0))


def init_lstm_params(key, input_size, hidden_size, num_layers):
    """PyTorch-style uniform(-1/sqrt(H), 1/sqrt(H)) init; weights stored
    transposed as (in_features, 4H) so kernels do x @ W; bias = b_ih + b_hh."""
    H = hidden_size
    bound = 1.0 / math.sqrt(H)
    params = []
    for l in range(num_layers):
        in_l = input_size if l == 0 else H
        key, k1, k2, k3, k4 = jax.random.split(key, 5)
        w_ih = jax.random.uniform(k1, (4 * H, in_l), jnp.float32, -bound, bound)
        w_hh = jax.random.uniform(k2, (4 * H, H), jnp.float32, -bound, bound)
        b_ih = jax.random.uniform(k3, (4 * H,), jnp.float32, -bound, bound)
        b_hh = jax.random.uniform(k4, (4 * H,), jnp.float32, -bound, bound)
        params.append((w_ih.T, w_hh.T, (b_ih + b_hh).reshape(1, 4 * H)))
    return params


def _reference_lstm(x, params, hidden_size, num_layers,
                    compute_dtype=jnp.float32):
    """Pure-JAX reference of PyTorch nn.LSTM forward. With compute_dtype=bf16 it
    mirrors the kernel precision (bf16 matmul inputs, f32 accumulation/state)."""
    B, T, _ = x.shape
    H = hidden_size
    hs, cs = [], []
    layer_in = x
    for l in range(num_layers):
        w_ih, w_hh, b = params[l]
        w_ih_c = w_ih.astype(compute_dtype)
        w_hh_c = w_hh.astype(compute_dtype)
        xg = jnp.dot(layer_in.astype(compute_dtype), w_ih_c,
                     preferred_element_type=jnp.float32) + b      # (B, T, 4H)
        h = jnp.zeros((B, H), jnp.float32)
        c = jnp.zeros((B, H), jnp.float32)
        outs = []
        for t in range(T):
            gates = xg[:, t, :] + jnp.dot(h.astype(compute_dtype), w_hh_c,
                                          preferred_element_type=jnp.float32)
            i_g = jax.nn.sigmoid(gates[:, 0:H])
            f_g = jax.nn.sigmoid(gates[:, H:2 * H])
            g_g = jnp.tanh(gates[:, 2 * H:3 * H])
            o_g = jax.nn.sigmoid(gates[:, 3 * H:4 * H])
            c = f_g * c + i_g * g_g
            h = o_g * jnp.tanh(c)
            outs.append(h)
        layer_in = jnp.stack(outs, axis=1)
        hs.append(h)
        cs.append(c)
    return layer_in, (jnp.stack(hs, axis=0), jnp.stack(cs, axis=0))


if __name__ == "__main__":
    _single_buffer_supported()   # warm the capability probe outside any jit

    def run_case(batch, seq_len, input_size, hidden_size, num_layers,
                 t_chunk=None, b_tile=None):
        key = jax.random.PRNGKey(0)
        kx, kp = jax.random.split(key)
        x = jax.random.normal(kx, (batch, seq_len, input_size), jnp.float32)
        params = init_lstm_params(kp, input_size, hidden_size, num_layers)
        packed = pack_lstm_params(params, input_size, hidden_size)  # once

        fwd = jax.jit(functools.partial(
            lstm_encoder_forward, hidden_size=hidden_size,
            num_layers=num_layers, t_chunk=t_chunk, b_tile=b_tile))
        out, (h_n, c_n) = jax.block_until_ready(fwd(x, packed))

        # 1) Matched-precision reference (bf16 matmul inputs, f32 accum/state).
        ref_out, (ref_h, ref_c) = _reference_lstm(
            x, params, hidden_size, num_layers, compute_dtype=jnp.bfloat16)
        np.testing.assert_allclose(np.asarray(out), np.asarray(ref_out),
                                   rtol=1e-3, atol=1e-3)
        np.testing.assert_allclose(np.asarray(h_n), np.asarray(ref_h),
                                   rtol=1e-3, atol=1e-3)
        np.testing.assert_allclose(np.asarray(c_n), np.asarray(ref_c),
                                   rtol=1e-3, atol=1e-3)

        # 2) Full-f32 PyTorch-semantics reference (loose: bf16 weight quant).
        f32_out, (f32_h, f32_c) = _reference_lstm(
            x, params, hidden_size, num_layers, compute_dtype=jnp.float32)
        np.testing.assert_allclose(np.asarray(out), np.asarray(f32_out),
                                   rtol=5e-2, atol=5e-2)
        np.testing.assert_allclose(np.asarray(h_n), np.asarray(f32_h),
                                   rtol=5e-2, atol=5e-2)
        np.testing.assert_allclose(np.asarray(c_n), np.asarray(f32_c),
                                   rtol=5e-2, atol=5e-2)

        assert out.shape == (batch, seq_len, hidden_size)
        assert h_n.shape == (num_layers, batch, hidden_size)
        assert c_n.shape == (num_layers, batch, hidden_size)

    # Case 1: shapes consistent with the module's forward (batch_first input).
    run_case(batch=2, seq_len=8, input_size=16, hidden_size=32, num_layers=2)
    # Case 2: exercises batch padding + trailing-time-chunk state masking.
    run_case(batch=3, seq_len=10, input_size=16, hidden_size=32, num_layers=2,
             t_chunk=4, b_tile=8)

    print("KERNEL_OK")
</pallas_src>

<mosaic_0001>
module attributes {stable_mosaic.version = 11 : i64} {
  func.func @_lstm_layer_kernel(%arg0: i32, %arg1: i32, %arg2: memref<1x64x128xbf16, #tpu.memory_space<vmem>>, %arg3: memref<128x512xbf16, #tpu.memory_space<vmem>>, %arg4: memref<128x512xbf16, #tpu.memory_space<vmem>>, %arg5: memref<1x512xf32, #tpu.memory_space<vmem>>, %arg6: memref<1x64x128xbf16, #tpu.memory_space<vmem>>, %arg7: memref<8x128xf32, #tpu.memory_space<vmem>>, %arg8: memref<8x128xf32, #tpu.memory_space<vmem>>, %arg9: memref<64x512xf32, #tpu.memory_space<vmem>>, %arg10: memref<8x128xf32, #tpu.memory_space<vmem>>, %arg11: memref<8x128xf32, #tpu.memory_space<vmem>>) attributes {dimension_semantics = [#tpu.dimension_semantics<parallel>, #tpu.dimension_semantics<arbitrary>], iteration_bounds = array<i64: 1, 1>, scalar_prefetch = 0 : i64, scratch_operands = 3 : i64, tpu.core_type = #tpu.core_type<tc>, window_params = [{transform_indices = @transform_0, window_bounds = array<i64: 1, 64, 128>}, {pipeline_mode = #tpu.pipeline_mode<synchronous>, transform_indices = @transform_1, window_bounds = array<i64: 128, 512>}, {pipeline_mode = #tpu.pipeline_mode<synchronous>, transform_indices = @transform_2, window_bounds = array<i64: 128, 512>}, {pipeline_mode = #tpu.pipeline_mode<synchronous>, transform_indices = @transform_3, window_bounds = array<i64: 1, 512>}, {transform_indices = @transform_4, window_bounds = array<i64: 1, 64, 128>}, {transform_indices = @transform_5, window_bounds = array<i64: 8, 128>}, {transform_indices = @transform_6, window_bounds = array<i64: 8, 128>}]} {
    %c0_i32 = arith.constant 0 : i32
    %0 = arith.cmpi eq, %arg1, %c0_i32 : i32
    %1 = arith.extui %0 : i1 to i32
    %c0_i32_0 = arith.constant 0 : i32
    %2 = arith.cmpi ne, %1, %c0_i32_0 : i32
    scf.if %2 {
      %cst_100 = arith.constant 0.000000e+00 : f32
      %322 = vector.broadcast %cst_100 : f32 to vector<8x128xf32>
      %c0_101 = arith.constant 0 : index
      %c0_102 = arith.constant 0 : index
      %323 = vector.load %arg10[%c0_101, %c0_102] : memref<8x128xf32, #tpu.memory_space<vmem>>, vector<8x128xf32>
      tpu.vector_store %arg10[%c0_101, %c0_102], %322 {strides = array<i32>} : memref<8x128xf32, #tpu.memory_space<vmem>>, vector<8x128xf32>,
      %cst_103 = arith.constant 0.000000e+00 : f32
      %324 = vector.broadcast %cst_103 : f32 to vector<8x128xf32>
      %c0_104 = arith.constant 0 : index
      %c0_105 = arith.constant 0 : index
      %325 = vector.load %arg11[%c0_104, %c0_105] : memref<8x128xf32, #tpu.memory_space<vmem>>, vector<8x128xf32>
      tpu.vector_store %arg11[%c0_104, %c0_105], %324 {strides = array<i32>} : memref<8x128xf32, #tpu.memory_space<vmem>>, vector<8x128xf32>,
    } else {
    }
    %c0 = arith.constant 0 : index
    %c0_1 = arith.constant 0 : index
    %c0_2 = arith.constant 0 : index
    %3 = vector.load %arg2[%c0, %c0_1, %c0_2] : memref<1x64x128xbf16, #tpu.memory_space<vmem>>, vector<1x64x128xbf16>
    %4 = vector.shape_cast %3 : vector<1x64x128xbf16> to vector<64x128xbf16>
    %c0_3 = arith.constant 0 : index
    %c0_4 = arith.constant 0 : index
    %5 = vector.load %arg3[%c0_3, %c0_4] : memref<128x512xbf16, #tpu.memory_space<vmem>>, vector<128x512xbf16>
    %cst = arith.constant dense<0.000000e+00> : vector<64x512xf32>
    %6 = tpu.matmul %4, %5, %cst {dimension_numbers = #tpu.dot_dimension_numbers<[1], [0], [0], [1], [0, 0, 1, 1], [], []>} : vector<64x128xbf16>, vector<128x512xbf16>, vector<64x512xf32> -> vector<64x512xf32>
    %c0_5 = arith.constant 0 : index
    %c0_6 = arith.constant 0 : index
    %7 = vector.load %arg5[%c0_5, %c0_6] : memref<1x512xf32, #tpu.memory_space<vmem>>, vector<1x512xf32>
    %8 = vector.broadcast %7 : vector<1x512xf32> to vector<64x512xf32>
    %9 = arith.addf %6, %8 : vector<64x512xf32>
    %c0_7 = arith.constant 0 : index
    %c0_8 = arith.constant 0 : index
    %10 = vector.load %arg9[%c0_7, %c0_8] : memref<64x512xf32, #tpu.memory_space<vmem>>, vector<64x512xf32>
    tpu.vector_store %arg9[%c0_7, %c0_8], %9 {strides = array<i32>} : memref<64x512xf32, #tpu.memory_space<vmem>>, vector<64x512xf32>,
    %c0_9 = arith.constant 0 : index
    %c0_10 = arith.constant 0 : index
    %11 = vector.load %arg10[%c0_9, %c0_10] : memref<8x128xf32, #tpu.memory_space<vmem>>, vector<8x128xf32>
    %c0_11 = arith.constant 0 : index
    %c0_12 = arith.constant 0 : index
    %12 = vector.load %arg11[%c0_11, %c0_12] : memref<8x128xf32, #tpu.memory_space<vmem>>, vector<8x128xf32>
    %c0_i32_13 = arith.constant 0 : i32
    %c8_i32 = arith.constant 8 : i32
    %13 = arith.muli %c0_i32_13, %c8_i32 : i32
    %14 = tpu.assume_multiple %13, 8 : i32
    %15 = arith.index_cast %14 : i32 to index
    %c0_14 = arith.constant 0 : index
    %16 = vector.load %arg9[%15, %c0_14] : memref<64x512xf32, #tpu.memory_space<vmem>>, vector<8x512xf32>
    %17 = arith.truncf %11 : vector<8x128xf32> to vector<8x128xbf16>
    %c0_15 = arith.constant 0 : index
    %c0_16 = arith.constant 0 : index
    %18 = vector.load %arg4[%c0_15, %c0_16] : memref<128x512xbf16, #tpu.memory_space<vmem>>, vector<128x512xbf16>
    %cst_17 = arith.constant dense<0.000000e+00> : vector<8x512xf32>
    %19 = tpu.matmul %17, %18, %cst_17 {dimension_numbers = #tpu.dot_dimension_numbers<[1], [0], [0], [1], [0, 0, 1, 1], [], []>} : vector<8x128xbf16>, vector<128x512xbf16>, vector<8x512xf32> -> vector<8x512xf32>
    %20 = arith.addf %16, %19 : vector<8x512xf32>
    %21 = vector.extract_strided_slice %20 {offsets = [0, 0], sizes = [8, 128], strides = [1, 1]} : vector<8x512xf32> to vector<8x128xf32>
    %22 = arith.negf %21 : vector<8x128xf32>
    %23 = math.exp %22 : vector<8x128xf32>
    %cst_18 = arith.constant 1.000000e+00 : f32
    %24 = vector.broadcast %cst_18 : f32 to vector<8x128xf32>
    %25 = arith.addf %24, %23 : vector<8x128xf32>
    %26 = arith.divf %24, %25 : vector<8x128xf32>
    %27 = vector.extract_strided_slice %20 {offsets = [0, 128], sizes = [8, 128], strides = [1, 1]} : vector<8x512xf32> to vector<8x128xf32>
    %28 = arith.negf %27 : vector<8x128xf32>
    %29 = math.exp %28 : vector<8x128xf32>
    %cst_19 = arith.constant 1.000000e+00 : f32
    %30 = vector.broadcast %cst_19 : f32 to vector<8x128xf32>
    %31 = arith.addf %30, %29 : vector<8x128xf32>
    %32 = arith.divf %30, %31 : vector<8x128xf32>
    %33 = vector.extract_strided_slice %20 {offsets = [0, 256], sizes = [8, 128], strides = [1, 1]} : vector<8x512xf32> to vector<8x128xf32>
    %34 = math.tanh %33 : vector<8x128xf32>
    %35 = vector.extract_strided_slice %20 {offsets = [0, 384], sizes = [8, 128], strides = [1, 1]} : vector<8x512xf32> to vector<8x128xf32>
    %36 = arith.negf %35 : vector<8x128xf32>
    %37 = math.exp %36 : vector<8x128xf32>
    %cst_20 = arith.constant 1.000000e+00 : f32
    %38 = vector.broadcast %cst_20 : f32 to vector<8x128xf32>
    %39 = arith.addf %38, %37 : vector<8x128xf32>
    %40 = arith.divf %38, %39 : vector<8x128xf32>
    %41 = arith.mulf %32, %12 : vector<8x128xf32>
    %42 = arith.mulf %26, %34 : vector<8x128xf32>
    %43 = arith.addf %41, %42 : vector<8x128xf32>
    %44 = math.tanh %43 : vector<8x128xf32>
    %45 = arith.mulf %40, %44 : vector<8x128xf32>
    %46 = arith.truncf %45 : vector<8x128xf32> to vector<8x128xbf16>
    %c0_21 = arith.constant 0 : index
    %47 = arith.index_cast %14 : i32 to index
    %c0_22 = arith.constant 0 : index
    %48 = vector.load %arg6[%c0_21, %47, %c0_22] : memref<1x64x128xbf16, #tpu.memory_space<vmem>>, vector<1x8x128xbf16>
    %49 = vector.shape_cast %48 : vector<1x8x128xbf16> to vector<8x128xbf16>
    %50 = vector.shape_cast %46 : vector<8x128xbf16> to vector<1x8x128xbf16>
    tpu.vector_store %arg6[%c0_21, %47, %c0_22], %50 {strides = array<i32>} : memref<1x64x128xbf16, #tpu.memory_space<vmem>>, vector<1x8x128xbf16>,
    %c1_i32 = arith.constant 1 : i32
    %c8_i32_23 = arith.constant 8 : i32
    %51 = arith.muli %c1_i32, %c8_i32_23 : i32
    %52 = tpu.assume_multiple %51, 8 : i32
    %53 = arith.index_cast %52 : i32 to index
    %c0_24 = arith.constant 0 : index
    %54 = vector.load %arg9[%53, %c0_24] : memref<64x512xf32, #tpu.memory_space<vmem>>, vector<8x512xf32>
    %55 = arith.truncf %45 : vector<8x128xf32> to vector<8x128xbf16>
    %c0_25 = arith.constant 0 : index
    %c0_26 = arith.constant 0 : index
    %56 = vector.load %arg4[%c0_25, %c0_26] : memref<128x512xbf16, #tpu.memory_space<vmem>>, vector<128x512xbf16>
    %cst_27 = arith.constant dense<0.000000e+00> : vector<8x512xf32>
    %57 = tpu.matmul %55, %56, %cst_27 {dimension_numbers = #tpu.dot_dimension_numbers<[1], [0], [0], [1], [0, 0, 1, 1], [], []>} : vector<8x128xbf16>, vector<128x512xbf16>, vector<8x512xf32> -> vector<8x512xf32>
    %58 = arith.addf %54, %57 : vector<8x512xf32>
    %59 = vector.extract_strided_slice %58 {offsets = [0, 0], sizes = [8, 128], strides = [1, 1]} : vector<8x512xf32> to vector<8x128xf32>
    %60 = arith.negf %59 : vector<8x128xf32>
    %61 = math.exp %60 : vector<8x128xf32>
    %cst_28 = arith.constant 1.000000e+00 : f32
    %62 = vector.broadcast %cst_28 : f32 to vector<8x128xf32>
    %63 = arith.addf %62, %61 : vector<8x128xf32>
    %64 = arith.divf %62, %63 : vector<8x128xf32>
    %65 = vector.extract_strided_slice %58 {offsets = [0, 128], sizes = [8, 128], strides = [1, 1]} : vector<8x512xf32> to vector<8x128xf32>
    %66 = arith.negf %65 : vector<8x128xf32>
    %67 = math.exp %66 : vector<8x128xf32>
    %cst_29 = arith.constant 1.000000e+00 : f32
    %68 = vector.broadcast %cst_29 : f32 to vector<8x128xf32>
    %69 = arith.addf %68, %67 : vector<8x128xf32>
    %70 = arith.divf %68, %69 : vector<8x128xf32>
    %71 = vector.extract_strided_slice %58 {offsets = [0, 256], sizes = [8, 128], strides = [1, 1]} : vector<8x512xf32> to vector<8x128xf32>
    %72 = math.tanh %71 : vector<8x128xf32>
    %73 = vector.extract_strided_slice %58 {offsets = [0, 384], sizes = [8, 128], strides = [1, 1]} : vector<8x512xf32> to vector<8x128xf32>
    %74 = arith.negf %73 : vector<8x128xf32>
    %75 = math.exp %74 : vector<8x128xf32>
    %cst_30 = arith.constant 1.000000e+00 : f32
    %76 = vector.broadcast %cst_30 : f32 to vector<8x128xf32>
    %77 = arith.addf %76, %75 : vector<8x128xf32>
    %78 = arith.divf %76, %77 : vector<8x128xf32>
    %79 = arith.mulf %70, %43 : vector<8x128xf32>
    %80 = arith.mulf %64, %72 : vector<8x128xf32>
    %81 = arith.addf %79, %80 : vector<8x128xf32>
    %82 = math.tanh %81 : vector<8x128xf32>
    %83 = arith.mulf %78, %82 : vector<8x128xf32>
    %84 = arith.truncf %83 : vector<8x128xf32> to vector<8x128xbf16>
    %c0_31 = arith.constant 0 : index
    %85 = arith.index_cast %52 : i32 to index
    %c0_32 = arith.constant 0 : index
    %86 = vector.load %arg6[%c0_31, %85, %c0_32] : memref<1x64x128xbf16, #tpu.memory_space<vmem>>, vector<1x8x128xbf16>
    %87 = vector.shape_cast %86 : vector<1x8x128xbf16> to vector<8x128xbf16>
    %88 = vector.shape_cast %84 : vector<8x128xbf16> to vector<1x8x128xbf16>
    tpu.vector_store %arg6[%c0_31, %85, %c0_32], %88 {strides = array<i32>} : memref<1x64x128xbf16, #tpu.memory_space<vmem>>, vector<1x8x128xbf16>,
    %c2_i32 = arith.constant 2 : i32
    %c8_i32_33 = arith.constant 8 : i32
    %89 = arith.muli %c2_i32, %c8_i32_33 : i32
    %90 = tpu.assume_multiple %89, 8 : i32
    %91 = arith.index_cast %90 : i32 to index
    %c0_34 = arith.constant 0 : index
    %92 = vector.load %arg9[%91, %c0_34] : memref<64x512xf32, #tpu.memory_space<vmem>>, vector<8x512xf32>
    %93 = arith.truncf %83 : vector<8x128xf32> to vector<8x128xbf16>
    %c0_35 = arith.constant 0 : index
    %c0_36 = arith.constant 0 : index
    %94 = vector.load %arg4[%c0_35, %c0_36] : memref<128x512xbf16, #tpu.memory_space<vmem>>, vector<128x512xbf16>
    %cst_37 = arith.constant dense<0.000000e+00> : vector<8x512xf32>
    %95 = tpu.matmul %93, %94, %cst_37 {dimension_numbers = #tpu.dot_dimension_numbers<[1], [0], [0], [1], [0, 0, 1, 1], [], []>} : vector<8x128xbf16>, vector<128x512xbf16>, vector<8x512xf32> -> vector<8x512xf32>
    %96 = arith.addf %92, %95 : vector<8x512xf32>
    %97 = vector.extract_strided_slice %96 {offsets = [0, 0], sizes = [8, 128], strides = [1, 1]} : vector<8x512xf32> to vector<8x128xf32>
    %98 = arith.negf %97 : vector<8x128xf32>
    %99 = math.exp %98 : vector<8x128xf32>
    %cst_38 = arith.constant 1.000000e+00 : f32
    %100 = vector.broadcast %cst_38 : f32 to vector<8x128xf32>
    %101 = arith.addf %100, %99 : vector<8x128xf32>
    %102 = arith.divf %100, %101 : vector<8x128xf32>
    %103 = vector.extract_strided_slice %96 {offsets = [0, 128], sizes = [8, 128], strides = [1, 1]} : vector<8x512xf32> to vector<8x128xf32>
    %104 = arith.negf %103 : vector<8x128xf32>
    %105 = math.exp %104 : vector<8x128xf32>
    %cst_39 = arith.constant 1.000000e+00 : f32
    %106 = vector.broadcast %cst_39 : f32 to vector<8x128xf32>
    %107 = arith.addf %106, %105 : vector<8x128xf32>
    %108 = arith.divf %106, %107 : vector<8x128xf32>
    %109 = vector.extract_strided_slice %96 {offsets = [0, 256], sizes = [8, 128], strides = [1, 1]} : vector<8x512xf32> to vector<8x128xf32>
    %110 = math.tanh %109 : vector<8x128xf32>
    %111 = vector.extract_strided_slice %96 {offsets = [0, 384], sizes = [8, 128], strides = [1, 1]} : vector<8x512xf32> to vector<8x128xf32>
    %112 = arith.negf %111 : vector<8x128xf32>
    %113 = math.exp %112 : vector<8x128xf32>
    %cst_40 = arith.constant 1.000000e+00 : f32
    %114 = vector.broadcast %cst_40 : f32 to vector<8x128xf32>
    %115 = arith.addf %114, %113 : vector<8x128xf32>
    %116 = arith.divf %114, %115 : vector<8x128xf32>
    %117 = arith.mulf %108, %81 : vector<8x128xf32>
    %118 = arith.mulf %102, %110 : vector<8x128xf32>
    %119 = arith.addf %117, %118 : vector<8x128xf32>
    %120 = math.tanh %119 : vector<8x128xf32>
    %121 = arith.mulf %116, %120 : vector<8x128xf32>
    %122 = arith.truncf %121 : vector<8x128xf32> to vector<8x128xbf16>
    %c0_41 = arith.constant 0 : index
    %123 = arith.index_cast %90 : i32 to index
    %c0_42 = arith.constant 0 : index
    %124 = vector.load %arg6[%c0_41, %123, %c0_42] : memref<1x64x128xbf16, #tpu.memory_space<vmem>>, vector<1x8x128xbf16>
    %125 = vector.shape_cast %124 : vector<1x8x128xbf16> to vector<8x128xbf16>
    %126 = vector.shape_cast %122 : vector<8x128xbf16> to vector<1x8x128xbf16>
    tpu.vector_store %arg6[%c0_41, %123, %c0_42], %126 {strides = array<i32>} : memref<1x64x128xbf16, #tpu.memory_space<vmem>>, vector<1x8x128xbf16>,
    %c3_i32 = arith.constant 3 : i32
    %c8_i32_43 = arith.constant 8 : i32
    %127 = arith.muli %c3_i32, %c8_i32_43 : i32
    %128 = tpu.assume_multiple %127, 8 : i32
    %129 = arith.index_cast %128 : i32 to index
    %c0_44 = arith.constant 0 : index
    %130 = vector.load %arg9[%129, %c0_44] : memref<64x512xf32, #tpu.memory_space<vmem>>, vector<8x512xf32>
    %131 = arith.truncf %121 : vector<8x128xf32> to vector<8x128xbf16>
    %c0_45 = arith.constant 0 : index
    %c0_46 = arith.constant 0 : index
    %132 = vector.load %arg4[%c0_45, %c0_46] : memref<128x512xbf16, #tpu.memory_space<vmem>>, vector<128x512xbf16>
    %cst_47 = arith.constant dense<0.000000e+00> : vector<8x512xf32>
    %133 = tpu.matmul %131, %132, %cst_47 {dimension_numbers = #tpu.dot_dimension_numbers<[1], [0], [0], [1], [0, 0, 1, 1], [], []>} : vector<8x128xbf16>, vector<128x512xbf16>, vector<8x512xf32> -> vector<8x512xf32>
    %134 = arith.addf %130, %133 : vector<8x512xf32>
    %135 = vector.extract_strided_slice %134 {offsets = [0, 0], sizes = [8, 128], strides = [1, 1]} : vector<8x512xf32> to vector<8x128xf32>
    %136 = arith.negf %135 : vector<8x128xf32>
    %137 = math.exp %136 : vector<8x128xf32>
    %cst_48 = arith.constant 1.000000e+00 : f32
    %138 = vector.broadcast %cst_48 : f32 to vector<8x128xf32>
    %139 = arith.addf %138, %137 : vector<8x128xf32>
    %140 = arith.divf %138, %139 : vector<8x128xf32>
    %141 = vector.extract_strided_slice %134 {offsets = [0, 128], sizes = [8, 128], strides = [1, 1]} : vector<8x512xf32> to vector<8x128xf32>
    %142 = arith.negf %141 : vector<8x128xf32>
    %143 = math.exp %142 : vector<8x128xf32>
    %cst_49 = arith.constant 1.000000e+00 : f32
    %144 = vector.broadcast %cst_49 : f32 to vector<8x128xf32>
    %145 = arith.addf %144, %143 : vector<8x128xf32>
    %146 = arith.divf %144, %145 : vector<8x128xf32>
    %147 = vector.extract_strided_slice %134 {offsets = [0, 256], sizes = [8, 128], strides = [1, 1]} : vector<8x512xf32> to vector<8x128xf32>
    %148 = math.tanh %147 : vector<8x128xf32>
    %149 = vector.extract_strided_slice %134 {offsets = [0, 384], sizes = [8, 128], strides = [1, 1]} : vector<8x512xf32> to vector<8x128xf32>
    %150 = arith.negf %149 : vector<8x128xf32>
    %151 = math.exp %150 : vector<8x128xf32>
    %cst_50 = arith.constant 1.000000e+00 : f32
    %152 = vector.broadcast %cst_50 : f32 to vector<8x128xf32>
    %153 = arith.addf %152, %151 : vector<8x128xf32>
    %154 = arith.divf %152, %153 : vector<8x128xf32>
    %155 = arith.mulf %146, %119 : vector<8x128xf32>
    %156 = arith.mulf %140, %148 : vector<8x128xf32>
    %157 = arith.addf %155, %156 : vector<8x128xf32>
    %158 = math.tanh %157 : vector<8x128xf32>
    %159 = arith.mulf %154, %158 : vector<8x128xf32>
    %160 = arith.truncf %159 : vector<8x128xf32> to vector<8x128xbf16>
    %c0_51 = arith.constant 0 : index
    %161 = arith.index_cast %128 : i32 to index
    %c0_52 = arith.constant 0 : index
    %162 = vector.load %arg6[%c0_51, %161, %c0_52] : memref<1x64x128xbf16, #tpu.memory_space<vmem>>, vector<1x8x128xbf16>
    %163 = vector.shape_cast %162 : vector<1x8x128xbf16> to vector<8x128xbf16>
    %164 = vector.shape_cast %160 : vector<8x128xbf16> to vector<1x8x128xbf16>
    tpu.vector_store %arg6[%c0_51, %161, %c0_52], %164 {strides = array<i32>} : memref<1x64x128xbf16, #tpu.memory_space<vmem>>, vector<1x8x128xbf16>,
    %c4_i32 = arith.constant 4 : i32
    %c8_i32_53 = arith.constant 8 : i32
    %165 = arith.muli %c4_i32, %c8_i32_53 : i32
    %166 = tpu.assume_multiple %165, 8 : i32
    %167 = arith.index_cast %166 : i32 to index
    %c0_54 = arith.constant 0 : index
    %168 = vector.load %arg9[%167, %c0_54] : memref<64x512xf32, #tpu.memory_space<vmem>>, vector<8x512xf32>
    %169 = arith.truncf %159 : vector<8x128xf32> to vector<8x128xbf16>
    %c0_55 = arith.constant 0 : index
    %c0_56 = arith.constant 0 : index
    %170 = vector.load %arg4[%c0_55, %c0_56] : memref<128x512xbf16, #tpu.memory_space<vmem>>, vector<128x512xbf16>
    %cst_57 = arith.constant dense<0.000000e+00> : vector<8x512xf32>
    %171 = tpu.matmul %169, %170, %cst_57 {dimension_numbers = #tpu.dot_dimension_numbers<[1], [0], [0], [1], [0, 0, 1, 1], [], []>} : vector<8x128xbf16>, vector<128x512xbf16>, vector<8x512xf32> -> vector<8x512xf32>
    %172 = arith.addf %168, %171 : vector<8x512xf32>
    %173 = vector.extract_strided_slice %172 {offsets = [0, 0], sizes = [8, 128], strides = [1, 1]} : vector<8x512xf32> to vector<8x128xf32>
    %174 = arith.negf %173 : vector<8x128xf32>
    %175 = math.exp %174 : vector<8x128xf32>
    %cst_58 = arith.constant 1.000000e+00 : f32
    %176 = vector.broadcast %cst_58 : f32 to vector<8x128xf32>
    %177 = arith.addf %176, %175 : vector<8x128xf32>
    %178 = arith.divf %176, %177 : vector<8x128xf32>
    %179 = vector.extract_strided_slice %172 {offsets = [0, 128], sizes = [8, 128], strides = [1, 1]} : vector<8x512xf32> to vector<8x128xf32>
    %180 = arith.negf %179 : vector<8x128xf32>
    %181 = math.exp %180 : vector<8x128xf32>
    %cst_59 = arith.constant 1.000000e+00 : f32
    %182 = vector.broadcast %cst_59 : f32 to vector<8x128xf32>
    %183 = arith.addf %182, %181 : vector<8x128xf32>
    %184 = arith.divf %182, %183 : vector<8x128xf32>
    %185 = vector.extract_strided_slice %172 {offsets = [0, 256], sizes = [8, 128], strides = [1, 1]} : vector<8x512xf32> to vector<8x128xf32>
    %186 = math.tanh %185 : vector<8x128xf32>
    %187 = vector.extract_strided_slice %172 {offsets = [0, 384], sizes = [8, 128], strides = [1, 1]} : vector<8x512xf32> to vector<8x128xf32>
    %188 = arith.negf %187 : vector<8x128xf32>
    %189 = math.exp %188 : vector<8x128xf32>
    %cst_60 = arith.constant 1.000000e+00 : f32
    %190 = vector.broadcast %cst_60 : f32 to vector<8x128xf32>
    %191 = arith.addf %190, %189 : vector<8x128xf32>
    %192 = arith.divf %190, %191 : vector<8x128xf32>
    %193 = arith.mulf %184, %157 : vector<8x128xf32>
    %194 = arith.mulf %178, %186 : vector<8x128xf32>
    %195 = arith.addf %193, %194 : vector<8x128xf32>
    %196 = math.tanh %195 : vector<8x128xf32>
    %197 = arith.mulf %192, %196 : vector<8x128xf32>
    %198 = arith.truncf %197 : vector<8x128xf32> to vector<8x128xbf16>
    %c0_61 = arith.constant 0 : index
    %199 = arith.index_cast %166 : i32 to index
    %c0_62 = arith.constant 0 : index
    %200 = vector.load %arg6[%c0_61, %199, %c0_62] : memref<1x64x128xbf16, #tpu.memory_space<vmem>>, vector<1x8x128xbf16>
    %201 = vector.shape_cast %200 : vector<1x8x128xbf16> to vector<8x128xbf16>
    %202 = vector.shape_cast %198 : vector<8x128xbf16> to vector<1x8x128xbf16>
    tpu.vector_store %arg6[%c0_61, %199, %c0_62], %202 {strides = array<i32>} : memref<1x64x128xbf16, #tpu.memory_space<vmem>>, vector<1x8x128xbf16>,
    %c5_i32 = arith.constant 5 : i32
    %c8_i32_63 = arith.constant 8 : i32
    %203 = arith.muli %c5_i32, %c8_i32_63 : i32
    %204 = tpu.assume_multiple %203, 8 : i32
    %205 = arith.index_cast %204 : i32 to index
    %c0_64 = arith.constant 0 : index
    %206 = vector.load %arg9[%205, %c0_64] : memref<64x512xf32, #tpu.memory_space<vmem>>, vector<8x512xf32>
    %207 = arith.truncf %197 : vector<8x128xf32> to vector<8x128xbf16>
    %c0_65 = arith.constant 0 : index
    %c0_66 = arith.constant 0 : index
    %208 = vector.load %arg4[%c0_65, %c0_66] : memref<128x512xbf16, #tpu.memory_space<vmem>>, vector<128x512xbf16>
    %cst_67 = arith.constant dense<0.000000e+00> : vector<8x512xf32>
    %209 = tpu.matmul %207, %208, %cst_67 {dimension_numbers = #tpu.dot_dimension_numbers<[1], [0], [0], [1], [0, 0, 1, 1], [], []>} : vector<8x128xbf16>, vector<128x512xbf16>, vector<8x512xf32> -> vector<8x512xf32>
    %210 = arith.addf %206, %209 : vector<8x512xf32>
    %211 = vector.extract_strided_slice %210 {offsets = [0, 0], sizes = [8, 128], strides = [1, 1]} : vector<8x512xf32> to vector<8x128xf32>
    %212 = arith.negf %211 : vector<8x128xf32>
    %213 = math.exp %212 : vector<8x128xf32>
    %cst_68 = arith.constant 1.000000e+00 : f32
    %214 = vector.broadcast %cst_68 : f32 to vector<8x128xf32>
    %215 = arith.addf %214, %213 : vector<8x128xf32>
    %216 = arith.divf %214, %215 : vector<8x128xf32>
    %217 = vector.extract_strided_slice %210 {offsets = [0, 128], sizes = [8, 128], strides = [1, 1]} : vector<8x512xf32> to vector<8x128xf32>
    %218 = arith.negf %217 : vector<8x128xf32>
    %219 = math.exp %218 : vector<8x128xf32>
    %cst_69 = arith.constant 1.000000e+00 : f32
    %220 = vector.broadcast %cst_69 : f32 to vector<8x128xf32>
    %221 = arith.addf %220, %219 : vector<8x128xf32>
    %222 = arith.divf %220, %221 : vector<8x128xf32>
    %223 = vector.extract_strided_slice %210 {offsets = [0, 256], sizes = [8, 128], strides = [1, 1]} : vector<8x512xf32> to vector<8x128xf32>
    %224 = math.tanh %223 : vector<8x128xf32>
    %225 = vector.extract_strided_slice %210 {offsets = [0, 384], sizes = [8, 128], strides = [1, 1]} : vector<8x512xf32> to vector<8x128xf32>
    %226 = arith.negf %225 : vector<8x128xf32>
    %227 = math.exp %226 : vector<8x128xf32>
    %cst_70 = arith.constant 1.000000e+00 : f32
    %228 = vector.broadcast %cst_70 : f32 to vector<8x128xf32>
    %229 = arith.addf %228, %227 : vector<8x128xf32>
    %230 = arith.divf %228, %229 : vector<8x128xf32>
    %231 = arith.mulf %222, %195 : vector<8x128xf32>
    %232 = arith.mulf %216, %224 : vector<8x128xf32>
    %233 = arith.addf %231, %232 : vector<8x128xf32>
    %234 = math.tanh %233 : vector<8x128xf32>
    %235 = arith.mulf %230, %234 : vector<8x128xf32>
    %236 = arith.truncf %235 : vector<8x128xf32> to vector<8x128xbf16>
    %c0_71 = arith.constant 0 : index
    %237 = arith.index_cast %204 : i32 to index
    %c0_72 = arith.constant 0 : index
    %238 = vector.load %arg6[%c0_71, %237, %c0_72] : memref<1x64x128xbf16, #tpu.memory_space<vmem>>, vector<1x8x128xbf16>
    %239 = vector.shape_cast %238 : vector<1x8x128xbf16> to vector<8x128xbf16>
    %240 = vector.shape_cast %236 : vector<8x128xbf16> to vector<1x8x128xbf16>
    tpu.vector_store %arg6[%c0_71, %237, %c0_72], %240 {strides = array<i32>} : memref<1x64x128xbf16, #tpu.memory_space<vmem>>, vector<1x8x128xbf16>,
    %c6_i32 = arith.constant 6 : i32
    %c8_i32_73 = arith.constant 8 : i32
    %241 = arith.muli %c6_i32, %c8_i32_73 : i32
    %242 = tpu.assume_multiple %241, 8 : i32
    %243 = arith.index_cast %242 : i32 to index
    %c0_74 = arith.constant 0 : index
    %244 = vector.load %arg9[%243, %c0_74] : memref<64x512xf32, #tpu.memory_space<vmem>>, vector<8x512xf32>
    %245 = arith.truncf %235 : vector<8x128xf32> to vector<8x128xbf16>
    %c0_75 = arith.constant 0 : index
    %c0_76 = arith.constant 0 : index
    %246 = vector.load %arg4[%c0_75, %c0_76] : memref<128x512xbf16, #tpu.memory_space<vmem>>, vector<128x512xbf16>
    %cst_77 = arith.constant dense<0.000000e+00> : vector<8x512xf32>
    %247 = tpu.matmul %245, %246, %cst_77 {dimension_numbers = #tpu.dot_dimension_numbers<[1], [0], [0], [1], [0, 0, 1, 1], [], []>} : vector<8x128xbf16>, vector<128x512xbf16>, vector<8x512xf32> -> vector<8x512xf32>
    %248 = arith.addf %244, %247 : vector<8x512xf32>
    %249 = vector.extract_strided_slice %248 {offsets = [0, 0], sizes = [8, 128], strides = [1, 1]} : vector<8x512xf32> to vector<8x128xf32>
    %250 = arith.negf %249 : vector<8x128xf32>
    %251 = math.exp %250 : vector<8x128xf32>
    %cst_78 = arith.constant 1.000000e+00 : f32
    %252 = vector.broadcast %cst_78 : f32 to vector<8x128xf32>
    %253 = arith.addf %252, %251 : vector<8x128xf32>
    %254 = arith.divf %252, %253 : vector<8x128xf32>
    %255 = vector.extract_strided_slice %248 {offsets = [0, 128], sizes = [8, 128], strides = [1, 1]} : vector<8x512xf32> to vector<8x128xf32>
    %256 = arith.negf %255 : vector<8x128xf32>
    %257 = math.exp %256 : vector<8x128xf32>
    %cst_79 = arith.constant 1.000000e+00 : f32
    %258 = vector.broadcast %cst_79 : f32 to vector<8x128xf32>
    %259 = arith.addf %258, %257 : vector<8x128xf32>
    %260 = arith.divf %258, %259 : vector<8x128xf32>
    %261 = vector.extract_strided_slice %248 {offsets = [0, 256], sizes = [8, 128], strides = [1, 1]} : vector<8x512xf32> to vector<8x128xf32>
    %262 = math.tanh %261 : vector<8x128xf32>
    %263 = vector.extract_strided_slice %248 {offsets = [0, 384], sizes = [8, 128], strides = [1, 1]} : vector<8x512xf32> to vector<8x128xf32>
    %264 = arith.negf %263 : vector<8x128xf32>
    %265 = math.exp %264 : vector<8x128xf32>
    %cst_80 = arith.constant 1.000000e+00 : f32
    %266 = vector.broadcast %cst_80 : f32 to vector<8x128xf32>
    %267 = arith.addf %266, %265 : vector<8x128xf32>
    %268 = arith.divf %266, %267 : vector<8x128xf32>
    %269 = arith.mulf %260, %233 : vector<8x128xf32>
    %270 = arith.mulf %254, %262 : vector<8x128xf32>
    %271 = arith.addf %269, %270 : vector<8x128xf32>
    %272 = math.tanh %271 : vector<8x128xf32>
    %273 = arith.mulf %268, %272 : vector<8x128xf32>
    %274 = arith.truncf %273 : vector<8x128xf32> to vector<8x128xbf16>
    %c0_81 = arith.constant 0 : index
    %275 = arith.index_cast %242 : i32 to index
    %c0_82 = arith.constant 0 : index
    %276 = vector.load %arg6[%c0_81, %275, %c0_82] : memref<1x64x128xbf16, #tpu.memory_space<vmem>>, vector<1x8x128xbf16>
    %277 = vector.shape_cast %276 : vector<1x8x128xbf16> to vector<8x128xbf16>
    %278 = vector.shape_cast %274 : vector<8x128xbf16> to vector<1x8x128xbf16>
    tpu.vector_store %arg6[%c0_81, %275, %c0_82], %278 {strides = array<i32>} : memref<1x64x128xbf16, #tpu.memory_space<vmem>>, vector<1x8x128xbf16>,
    %c7_i32 = arith.constant 7 : i32
    %c8_i32_83 = arith.constant 8 : i32
    %279 = arith.muli %c7_i32, %c8_i32_83 : i32
    %280 = tpu.assume_multiple %279, 8 : i32
    %281 = arith.index_cast %280 : i32 to index
    %c0_84 = arith.constant 0 : index
    %282 = vector.load %arg9[%281, %c0_84] : memref<64x512xf32, #tpu.memory_space<vmem>>, vector<8x512xf32>
    %283 = arith.truncf %273 : vector<8x128xf32> to vector<8x128xbf16>
    %c0_85 = arith.constant 0 : index
    %c0_86 = arith.constant 0 : index
    %284 = vector.load %arg4[%c0_85, %c0_86] : memref<128x512xbf16, #tpu.memory_space<vmem>>, vector<128x512xbf16>
    %cst_87 = arith.constant dense<0.000000e+00> : vector<8x512xf32>
    %285 = tpu.matmul %283, %284, %cst_87 {dimension_numbers = #tpu.dot_dimension_numbers<[1], [0], [0], [1], [0, 0, 1, 1], [], []>} : vector<8x128xbf16>, vector<128x512xbf16>, vector<8x512xf32> -> vector<8x512xf32>
    %286 = arith.addf %282, %285 : vector<8x512xf32>
    %287 = vector.extract_strided_slice %286 {offsets = [0, 0], sizes = [8, 128], strides = [1, 1]} : vector<8x512xf32> to vector<8x128xf32>
    %288 = arith.negf %287 : vector<8x128xf32>
    %289 = math.exp %288 : vector<8x128xf32>
    %cst_88 = arith.constant 1.000000e+00 : f32
    %290 = vector.broadcast %cst_88 : f32 to vector<8x128xf32>
    %291 = arith.addf %290, %289 : vector<8x128xf32>
    %292 = arith.divf %290, %291 : vector<8x128xf32>
    %293 = vector.extract_strided_slice %286 {offsets = [0, 128], sizes = [8, 128], strides = [1, 1]} : vector<8x512xf32> to vector<8x128xf32>
    %294 = arith.negf %293 : vector<8x128xf32>
    %295 = math.exp %294 : vector<8x128xf32>
    %cst_89 = arith.constant 1.000000e+00 : f32
    %296 = vector.broadcast %cst_89 : f32 to vector<8x128xf32>
    %297 = arith.addf %296, %295 : vector<8x128xf32>
    %298 = arith.divf %296, %297 : vector<8x128xf32>
    %299 = vector.extract_strided_slice %286 {offsets = [0, 256], sizes = [8, 128], strides = [1, 1]} : vector<8x512xf32> to vector<8x128xf32>
    %300 = math.tanh %299 : vector<8x128xf32>
    %301 = vector.extract_strided_slice %286 {offsets = [0, 384], sizes = [8, 128], strides = [1, 1]} : vector<8x512xf32> to vector<8x128xf32>
    %302 = arith.negf %301 : vector<8x128xf32>
    %303 = math.exp %302 : vector<8x128xf32>
    %cst_90 = arith.constant 1.000000e+00 : f32
    %304 = vector.broadcast %cst_90 : f32 to vector<8x128xf32>
    %305 = arith.addf %304, %303 : vector<8x128xf32>
    %306 = arith.divf %304, %305 : vector<8x128xf32>
    %307 = arith.mulf %298, %271 : vector<8x128xf32>
    %308 = arith.mulf %292, %300 : vector<8x128xf32>
    %309 = arith.addf %307, %308 : vector<8x128xf32>
    %310 = math.tanh %309 : vector<8x128xf32>
    %311 = arith.mulf %306, %310 : vector<8x128xf32>
    %312 = arith.truncf %311 : vector<8x128xf32> to vector<8x128xbf16>
    %c0_91 = arith.constant 0 : index
    %313 = arith.index_cast %280 : i32 to index
    %c0_92 = arith.constant 0 : index
    %314 = vector.load %arg6[%c0_91, %313, %c0_92] : memref<1x64x128xbf16, #tpu.memory_space<vmem>>, vector<1x8x128xbf16>
    %315 = vector.shape_cast %314 : vector<1x8x128xbf16> to vector<8x128xbf16>
    %316 = vector.shape_cast %312 : vector<8x128xbf16> to vector<1x8x128xbf16>
    tpu.vector_store %arg6[%c0_91, %313, %c0_92], %316 {strides = array<i32>} : memref<1x64x128xbf16, #tpu.memory_space<vmem>>, vector<1x8x128xbf16>,
    %c8_i32_93 = arith.constant 8 : i32
    %c0_94 = arith.constant 0 : index
    %c0_95 = arith.constant 0 : index
    %317 = vector.load %arg10[%c0_94, %c0_95] : memref<8x128xf32, #tpu.memory_space<vmem>>, vector<8x128xf32>
    tpu.vector_store %arg10[%c0_94, %c0_95], %311 {strides = array<i32>} : memref<8x128xf32, #tpu.memory_space<vmem>>, vector<8x128xf32>,
    %c0_96 = arith.constant 0 : index
    %c0_97 = arith.constant 0 : index
    %318 = vector.load %arg11[%c0_96, %c0_97] : memref<8x128xf32, #tpu.memory_space<vmem>>, vector<8x128xf32>
    tpu.vector_store %arg11[%c0_96, %c0_97], %309 {strides = array<i32>} : memref<8x128xf32, #tpu.memory_space<vmem>>, vector<8x128xf32>,
    %c0_i32_98 = arith.constant 0 : i32
    %319 = arith.cmpi eq, %arg1, %c0_i32_98 : i32
    %320 = arith.extui %319 : i1 to i32
    %c0_i32_99 = arith.constant 0 : i32
    %321 = arith.cmpi ne, %320, %c0_i32_99 : i32
    scf.if %321 {
      %c0_100 = arith.constant 0 : index
      %c0_101 = arith.constant 0 : index
      %322 = vector.load %arg10[%c0_100, %c0_101] : memref<8x128xf32, #tpu.memory_space<vmem>>, vector<8x128xf32>
      %c0_102 = arith.constant 0 : index
      %c0_103 = arith.constant 0 : index
      %323 = vector.load %arg7[%c0_102, %c0_103] : memref<8x128xf32, #tpu.memory_space<vmem>>, vector<8x128xf32>
      tpu.vector_store %arg7[%c0_102, %c0_103], %322 {strides = array<i32>} : memref<8x128xf32, #tpu.memory_space<vmem>>, vector<8x128xf32>,
      %c0_104 = arith.constant 0 : index
      %c0_105 = arith.constant 0 : index
      %324 = vector.load %arg11[%c0_104, %c0_105] : memref<8x128xf32, #tpu.memory_space<vmem>>, vector<8x128xf32>
      %c0_106 = arith.constant 0 : index
      %c0_107 = arith.constant 0 : index
      %325 = vector.load %arg8[%c0_106, %c0_107] : memref<8x128xf32, #tpu.memory_space<vmem>>, vector<8x128xf32>
      tpu.vector_store %arg8[%c0_106, %c0_107], %324 {strides = array<i32>} : memref<8x128xf32, #tpu.memory_space<vmem>>, vector<8x128xf32>,
    } else {
    }
    return
  }
  func.func @transform_0(%arg0: i32, %arg1: i32) -> (i32, i32, i32) {
    %c0_i32 = arith.constant 0 : i32
    %c0_i32_0 = arith.constant 0 : i32
    return %arg0, %arg1, %c0_i32 : i32, i32, i32
  }
  func.func @transform_1(%arg0: i32, %arg1: i32) -> (i32, i32) {
    %c0_i32 = arith.constant 0 : i32
    %c0_i32_0 = arith.constant 0 : i32
    %c0_i32_1 = arith.constant 0 : i32
    return %c0_i32, %c0_i32_0 : i32, i32
  }
  func.func @transform_2(%arg0: i32, %arg1: i32) -> (i32, i32) {
    %c0_i32 = arith.constant 0 : i32
    %c0_i32_0 = arith.constant 0 : i32
    %c0_i32_1 = arith.constant 0 : i32
    return %c0_i32, %c0_i32_0 : i32, i32
  }
  func.func @transform_3(%arg0: i32, %arg1: i32) -> (i32, i32) {
    %c0_i32 = arith.constant 0 : i32
    %c0_i32_0 = arith.constant 0 : i32
    %c0_i32_1 = arith.constant 0 : i32
    return %c0_i32, %c0_i32_0 : i32, i32
  }
  func.func @transform_4(%arg0: i32, %arg1: i32) -> (i32, i32, i32) {
    %c0_i32 = arith.constant 0 : i32
    %c0_i32_0 = arith.constant 0 : i32
    return %arg0, %arg1, %c0_i32 : i32, i32, i32
  }
  func.func @transform_5(%arg0: i32, %arg1: i32) -> (i32, i32) {
    %c0_i32 = arith.constant 0 : i32
    %c0_i32_0 = arith.constant 0 : i32
    return %arg0, %c0_i32 : i32, i32
  }
  func.func @transform_6(%arg0: i32, %arg1: i32) -> (i32, i32) {
    %c0_i32 = arith.constant 0 : i32
    %c0_i32_0 = arith.constant 0 : i32
    return %arg0, %c0_i32 : i32, i32
  }
}

module attributes {stable_mosaic.version = 11 : i64} {
  func.func @_lstm_layer_kernel(%arg0: i32, %arg1: i32, %arg2: memref<1x64x128xbf16, #tpu.memory_space<vmem>>, %arg3: memref<128x512xbf16, #tpu.memory_space<vmem>>, %arg4: memref<128x512xbf16, #tpu.memory_space<vmem>>, %arg5: memref<1x512xf32, #tpu.memory_space<vmem>>, %arg6: memref<1x64x128xf32, #tpu.memory_space<vmem>>, %arg7: memref<8x128xf32, #tpu.memory_space<vmem>>, %arg8: memref<8x128xf32, #tpu.memory_space<vmem>>, %arg9: memref<64x512xf32, #tpu.memory_space<vmem>>, %arg10: memref<8x128xf32, #tpu.memory_space<vmem>>, %arg11: memref<8x128xf32, #tpu.memory_space<vmem>>) attributes {dimension_semantics = [#tpu.dimension_semantics<parallel>, #tpu.dimension_semantics<arbitrary>], iteration_bounds = array<i64: 1, 1>, scalar_prefetch = 0 : i64, scratch_operands = 3 : i64, tpu.core_type = #tpu.core_type<tc>, window_params = [{transform_indices = @transform_0, window_bounds = array<i64: 1, 64, 128>}, {pipeline_mode = #tpu.pipeline_mode<synchronous>, transform_indices = @transform_1, window_bounds = array<i64: 128, 512>}, {pipeline_mode = #tpu.pipeline_mode<synchronous>, transform_indices = @transform_2, window_bounds = array<i64: 128, 512>}, {pipeline_mode = #tpu.pipeline_mode<synchronous>, transform_indices = @transform_3, window_bounds = array<i64: 1, 512>}, {transform_indices = @transform_4, window_bounds = array<i64: 1, 64, 128>}, {transform_indices = @transform_5, window_bounds = array<i64: 8, 128>}, {transform_indices = @transform_6, window_bounds = array<i64: 8, 128>}]} {
    %c0_i32 = arith.constant 0 : i32
    %0 = arith.cmpi eq, %arg1, %c0_i32 : i32
    %1 = arith.extui %0 : i1 to i32
    %c0_i32_0 = arith.constant 0 : i32
    %2 = arith.cmpi ne, %1, %c0_i32_0 : i32
    scf.if %2 {
      %cst_100 = arith.constant 0.000000e+00 : f32
      %314 = vector.broadcast %cst_100 : f32 to vector<8x128xf32>
      %c0_101 = arith.constant 0 : index
      %c0_102 = arith.constant 0 : index
      %315 = vector.load %arg10[%c0_101, %c0_102] : memref<8x128xf32, #tpu.memory_space<vmem>>, vector<8x128xf32>
      tpu.vector_store %arg10[%c0_101, %c0_102], %314 {strides = array<i32>} : memref<8x128xf32, #tpu.memory_space<vmem>>, vector<8x128xf32>,
      %cst_103 = arith.constant 0.000000e+00 : f32
      %316 = vector.broadcast %cst_103 : f32 to vector<8x128xf32>
      %c0_104 = arith.constant 0 : index
      %c0_105 = arith.constant 0 : index
      %317 = vector.load %arg11[%c0_104, %c0_105] : memref<8x128xf32, #tpu.memory_space<vmem>>, vector<8x128xf32>
      tpu.vector_store %arg11[%c0_104, %c0_105], %316 {strides = array<i32>} : memref<8x128xf32, #tpu.memory_space<vmem>>, vector<8x128xf32>,
    } else {
    }
    %c0 = arith.constant 0 : index
    %c0_1 = arith.constant 0 : index
    %c0_2 = arith.constant 0 : index
    %3 = vector.load %arg2[%c0, %c0_1, %c0_2] : memref<1x64x128xbf16, #tpu.memory_space<vmem>>, vector<1x64x128xbf16>
    %4 = vector.shape_cast %3 : vector<1x64x128xbf16> to vector<64x128xbf16>
    %c0_3 = arith.constant 0 : index
    %c0_4 = arith.constant 0 : index
    %5 = vector.load %arg3[%c0_3, %c0_4] : memref<128x512xbf16, #tpu.memory_space<vmem>>, vector<128x512xbf16>
    %cst = arith.constant dense<0.000000e+00> : vector<64x512xf32>
    %6 = tpu.matmul %4, %5, %cst {dimension_numbers = #tpu.dot_dimension_numbers<[1], [0], [0], [1], [0, 0, 1, 1], [], []>} : vector<64x128xbf16>, vector<128x512xbf16>, vector<64x512xf32> -> vector<64x512xf32>
    %c0_5 = arith.constant 0 : index
    %c0_6 = arith.constant 0 : index
    %7 = vector.load %arg5[%c0_5, %c0_6] : memref<1x512xf32, #tpu.memory_space<vmem>>, vector<1x512xf32>
    %8 = vector.broadcast %7 : vector<1x512xf32> to vector<64x512xf32>
    %9 = arith.addf %6, %8 : vector<64x512xf32>
    %c0_7 = arith.constant 0 : index
    %c0_8 = arith.constant 0 : index
    %10 = vector.load %arg9[%c0_7, %c0_8] : memref<64x512xf32, #tpu.memory_space<vmem>>, vector<64x512xf32>
    tpu.vector_store %arg9[%c0_7, %c0_8], %9 {strides = array<i32>} : memref<64x512xf32, #tpu.memory_space<vmem>>, vector<64x512xf32>,
    %c0_9 = arith.constant 0 : index
    %c0_10 = arith.constant 0 : index
    %11 = vector.load %arg10[%c0_9, %c0_10] : memref<8x128xf32, #tpu.memory_space<vmem>>, vector<8x128xf32>
    %c0_11 = arith.constant 0 : index
    %c0_12 = arith.constant 0 : index
    %12 = vector.load %arg11[%c0_11, %c0_12] : memref<8x128xf32, #tpu.memory_space<vmem>>, vector<8x128xf32>
    %c0_i32_13 = arith.constant 0 : i32
    %c8_i32 = arith.constant 8 : i32
    %13 = arith.muli %c0_i32_13, %c8_i32 : i32
    %14 = tpu.assume_multiple %13, 8 : i32
    %15 = arith.index_cast %14 : i32 to index
    %c0_14 = arith.constant 0 : index
    %16 = vector.load %arg9[%15, %c0_14] : memref<64x512xf32, #tpu.memory_space<vmem>>, vector<8x512xf32>
    %17 = arith.truncf %11 : vector<8x128xf32> to vector<8x128xbf16>
    %c0_15 = arith.constant 0 : index
    %c0_16 = arith.constant 0 : index
    %18 = vector.load %arg4[%c0_15, %c0_16] : memref<128x512xbf16, #tpu.memory_space<vmem>>, vector<128x512xbf16>
    %cst_17 = arith.constant dense<0.000000e+00> : vector<8x512xf32>
    %19 = tpu.matmul %17, %18, %cst_17 {dimension_numbers = #tpu.dot_dimension_numbers<[1], [0], [0], [1], [0, 0, 1, 1], [], []>} : vector<8x128xbf16>, vector<128x512xbf16>, vector<8x512xf32> -> vector<8x512xf32>
    %20 = arith.addf %16, %19 : vector<8x512xf32>
    %21 = vector.extract_strided_slice %20 {offsets = [0, 0], sizes = [8, 128], strides = [1, 1]} : vector<8x512xf32> to vector<8x128xf32>
    %22 = arith.negf %21 : vector<8x128xf32>
    %23 = math.exp %22 : vector<8x128xf32>
    %cst_18 = arith.constant 1.000000e+00 : f32
    %24 = vector.broadcast %cst_18 : f32 to vector<8x128xf32>
    %25 = arith.addf %24, %23 : vector<8x128xf32>
    %26 = arith.divf %24, %25 : vector<8x128xf32>
    %27 = vector.extract_strided_slice %20 {offsets = [0, 128], sizes = [8, 128], strides = [1, 1]} : vector<8x512xf32> to vector<8x128xf32>
    %28 = arith.negf %27 : vector<8x128xf32>
    %29 = math.exp %28 : vector<8x128xf32>
    %cst_19 = arith.constant 1.000000e+00 : f32
    %30 = vector.broadcast %cst_19 : f32 to vector<8x128xf32>
    %31 = arith.addf %30, %29 : vector<8x128xf32>
    %32 = arith.divf %30, %31 : vector<8x128xf32>
    %33 = vector.extract_strided_slice %20 {offsets = [0, 256], sizes = [8, 128], strides = [1, 1]} : vector<8x512xf32> to vector<8x128xf32>
    %34 = math.tanh %33 : vector<8x128xf32>
    %35 = vector.extract_strided_slice %20 {offsets = [0, 384], sizes = [8, 128], strides = [1, 1]} : vector<8x512xf32> to vector<8x128xf32>
    %36 = arith.negf %35 : vector<8x128xf32>
    %37 = math.exp %36 : vector<8x128xf32>
    %cst_20 = arith.constant 1.000000e+00 : f32
    %38 = vector.broadcast %cst_20 : f32 to vector<8x128xf32>
    %39 = arith.addf %38, %37 : vector<8x128xf32>
    %40 = arith.divf %38, %39 : vector<8x128xf32>
    %41 = arith.mulf %32, %12 : vector<8x128xf32>
    %42 = arith.mulf %26, %34 : vector<8x128xf32>
    %43 = arith.addf %41, %42 : vector<8x128xf32>
    %44 = math.tanh %43 : vector<8x128xf32>
    %45 = arith.mulf %40, %44 : vector<8x128xf32>
    %c0_21 = arith.constant 0 : index
    %46 = arith.index_cast %14 : i32 to index
    %c0_22 = arith.constant 0 : index
    %47 = vector.load %arg6[%c0_21, %46, %c0_22] : memref<1x64x128xf32, #tpu.memory_space<vmem>>, vector<1x8x128xf32>
    %48 = vector.shape_cast %47 : vector<1x8x128xf32> to vector<8x128xf32>
    %49 = vector.shape_cast %45 : vector<8x128xf32> to vector<1x8x128xf32>
    tpu.vector_store %arg6[%c0_21, %46, %c0_22], %49 {strides = array<i32>} : memref<1x64x128xf32, #tpu.memory_space<vmem>>, vector<1x8x128xf32>,
    %c1_i32 = arith.constant 1 : i32
    %c8_i32_23 = arith.constant 8 : i32
    %50 = arith.muli %c1_i32, %c8_i32_23 : i32
    %51 = tpu.assume_multiple %50, 8 : i32
    %52 = arith.index_cast %51 : i32 to index
    %c0_24 = arith.constant 0 : index
    %53 = vector.load %arg9[%52, %c0_24] : memref<64x512xf32, #tpu.memory_space<vmem>>, vector<8x512xf32>
    %54 = arith.truncf %45 : vector<8x128xf32> to vector<8x128xbf16>
    %c0_25 = arith.constant 0 : index
    %c0_26 = arith.constant 0 : index
    %55 = vector.load %arg4[%c0_25, %c0_26] : memref<128x512xbf16, #tpu.memory_space<vmem>>, vector<128x512xbf16>
    %cst_27 = arith.constant dense<0.000000e+00> : vector<8x512xf32>
    %56 = tpu.matmul %54, %55, %cst_27 {dimension_numbers = #tpu.dot_dimension_numbers<[1], [0], [0], [1], [0, 0, 1, 1], [], []>} : vector<8x128xbf16>, vector<128x512xbf16>, vector<8x512xf32> -> vector<8x512xf32>
    %57 = arith.addf %53, %56 : vector<8x512xf32>
    %58 = vector.extract_strided_slice %57 {offsets = [0, 0], sizes = [8, 128], strides = [1, 1]} : vector<8x512xf32> to vector<8x128xf32>
    %59 = arith.negf %58 : vector<8x128xf32>
    %60 = math.exp %59 : vector<8x128xf32>
    %cst_28 = arith.constant 1.000000e+00 : f32
    %61 = vector.broadcast %cst_28 : f32 to vector<8x128xf32>
    %62 = arith.addf %61, %60 : vector<8x128xf32>
    %63 = arith.divf %61, %62 : vector<8x128xf32>
    %64 = vector.extract_strided_slice %57 {offsets = [0, 128], sizes = [8, 128], strides = [1, 1]} : vector<8x512xf32> to vector<8x128xf32>
    %65 = arith.negf %64 : vector<8x128xf32>
    %66 = math.exp %65 : vector<8x128xf32>
    %cst_29 = arith.constant 1.000000e+00 : f32
    %67 = vector.broadcast %cst_29 : f32 to vector<8x128xf32>
    %68 = arith.addf %67, %66 : vector<8x128xf32>
    %69 = arith.divf %67, %68 : vector<8x128xf32>
    %70 = vector.extract_strided_slice %57 {offsets = [0, 256], sizes = [8, 128], strides = [1, 1]} : vector<8x512xf32> to vector<8x128xf32>
    %71 = math.tanh %70 : vector<8x128xf32>
    %72 = vector.extract_strided_slice %57 {offsets = [0, 384], sizes = [8, 128], strides = [1, 1]} : vector<8x512xf32> to vector<8x128xf32>
    %73 = arith.negf %72 : vector<8x128xf32>
    %74 = math.exp %73 : vector<8x128xf32>
    %cst_30 = arith.constant 1.000000e+00 : f32
    %75 = vector.broadcast %cst_30 : f32 to vector<8x128xf32>
    %76 = arith.addf %75, %74 : vector<8x128xf32>
    %77 = arith.divf %75, %76 : vector<8x128xf32>
    %78 = arith.mulf %69, %43 : vector<8x128xf32>
    %79 = arith.mulf %63, %71 : vector<8x128xf32>
    %80 = arith.addf %78, %79 : vector<8x128xf32>
    %81 = math.tanh %80 : vector<8x128xf32>
    %82 = arith.mulf %77, %81 : vector<8x128xf32>
    %c0_31 = arith.constant 0 : index
    %83 = arith.index_cast %51 : i32 to index
    %c0_32 = arith.constant 0 : index
    %84 = vector.load %arg6[%c0_31, %83, %c0_32] : memref<1x64x128xf32, #tpu.memory_space<vmem>>, vector<1x8x128xf32>
    %85 = vector.shape_cast %84 : vector<1x8x128xf32> to vector<8x128xf32>
    %86 = vector.shape_cast %82 : vector<8x128xf32> to vector<1x8x128xf32>
    tpu.vector_store %arg6[%c0_31, %83, %c0_32], %86 {strides = array<i32>} : memref<1x64x128xf32, #tpu.memory_space<vmem>>, vector<1x8x128xf32>,
    %c2_i32 = arith.constant 2 : i32
    %c8_i32_33 = arith.constant 8 : i32
    %87 = arith.muli %c2_i32, %c8_i32_33 : i32
    %88 = tpu.assume_multiple %87, 8 : i32
    %89 = arith.index_cast %88 : i32 to index
    %c0_34 = arith.constant 0 : index
    %90 = vector.load %arg9[%89, %c0_34] : memref<64x512xf32, #tpu.memory_space<vmem>>, vector<8x512xf32>
    %91 = arith.truncf %82 : vector<8x128xf32> to vector<8x128xbf16>
    %c0_35 = arith.constant 0 : index
    %c0_36 = arith.constant 0 : index
    %92 = vector.load %arg4[%c0_35, %c0_36] : memref<128x512xbf16, #tpu.memory_space<vmem>>, vector<128x512xbf16>
    %cst_37 = arith.constant dense<0.000000e+00> : vector<8x512xf32>
    %93 = tpu.matmul %91, %92, %cst_37 {dimension_numbers = #tpu.dot_dimension_numbers<[1], [0], [0], [1], [0, 0, 1, 1], [], []>} : vector<8x128xbf16>, vector<128x512xbf16>, vector<8x512xf32> -> vector<8x512xf32>
    %94 = arith.addf %90, %93 : vector<8x512xf32>
    %95 = vector.extract_strided_slice %94 {offsets = [0, 0], sizes = [8, 128], strides = [1, 1]} : vector<8x512xf32> to vector<8x128xf32>
    %96 = arith.negf %95 : vector<8x128xf32>
    %97 = math.exp %96 : vector<8x128xf32>
    %cst_38 = arith.constant 1.000000e+00 : f32
    %98 = vector.broadcast %cst_38 : f32 to vector<8x128xf32>
    %99 = arith.addf %98, %97 : vector<8x128xf32>
    %100 = arith.divf %98, %99 : vector<8x128xf32>
    %101 = vector.extract_strided_slice %94 {offsets = [0, 128], sizes = [8, 128], strides = [1, 1]} : vector<8x512xf32> to vector<8x128xf32>
    %102 = arith.negf %101 : vector<8x128xf32>
    %103 = math.exp %102 : vector<8x128xf32>
    %cst_39 = arith.constant 1.000000e+00 : f32
    %104 = vector.broadcast %cst_39 : f32 to vector<8x128xf32>
    %105 = arith.addf %104, %103 : vector<8x128xf32>
    %106 = arith.divf %104, %105 : vector<8x128xf32>
    %107 = vector.extract_strided_slice %94 {offsets = [0, 256], sizes = [8, 128], strides = [1, 1]} : vector<8x512xf32> to vector<8x128xf32>
    %108 = math.tanh %107 : vector<8x128xf32>
    %109 = vector.extract_strided_slice %94 {offsets = [0, 384], sizes = [8, 128], strides = [1, 1]} : vector<8x512xf32> to vector<8x128xf32>
    %110 = arith.negf %109 : vector<8x128xf32>
    %111 = math.exp %110 : vector<8x128xf32>
    %cst_40 = arith.constant 1.000000e+00 : f32
    %112 = vector.broadcast %cst_40 : f32 to vector<8x128xf32>
    %113 = arith.addf %112, %111 : vector<8x128xf32>
    %114 = arith.divf %112, %113 : vector<8x128xf32>
    %115 = arith.mulf %106, %80 : vector<8x128xf32>
    %116 = arith.mulf %100, %108 : vector<8x128xf32>
    %117 = arith.addf %115, %116 : vector<8x128xf32>
    %118 = math.tanh %117 : vector<8x128xf32>
    %119 = arith.mulf %114, %118 : vector<8x128xf32>
    %c0_41 = arith.constant 0 : index
    %120 = arith.index_cast %88 : i32 to index
    %c0_42 = arith.constant 0 : index
    %121 = vector.load %arg6[%c0_41, %120, %c0_42] : memref<1x64x128xf32, #tpu.memory_space<vmem>>, vector<1x8x128xf32>
    %122 = vector.shape_cast %121 : vector<1x8x128xf32> to vector<8x128xf32>
    %123 = vector.shape_cast %119 : vector<8x128xf32> to vector<1x8x128xf32>
    tpu.vector_store %arg6[%c0_41, %120, %c0_42], %123 {strides = array<i32>} : memref<1x64x128xf32, #tpu.memory_space<vmem>>, vector<1x8x128xf32>,
    %c3_i32 = arith.constant 3 : i32
    %c8_i32_43 = arith.constant 8 : i32
    %124 = arith.muli %c3_i32, %c8_i32_43 : i32
    %125 = tpu.assume_multiple %124, 8 : i32
    %126 = arith.index_cast %125 : i32 to index
    %c0_44 = arith.constant 0 : index
    %127 = vector.load %arg9[%126, %c0_44] : memref<64x512xf32, #tpu.memory_space<vmem>>, vector<8x512xf32>
    %128 = arith.truncf %119 : vector<8x128xf32> to vector<8x128xbf16>
    %c0_45 = arith.constant 0 : index
    %c0_46 = arith.constant 0 : index
    %129 = vector.load %arg4[%c0_45, %c0_46] : memref<128x512xbf16, #tpu.memory_space<vmem>>, vector<128x512xbf16>
    %cst_47 = arith.constant dense<0.000000e+00> : vector<8x512xf32>
    %130 = tpu.matmul %128, %129, %cst_47 {dimension_numbers = #tpu.dot_dimension_numbers<[1], [0], [0], [1], [0, 0, 1, 1], [], []>} : vector<8x128xbf16>, vector<128x512xbf16>, vector<8x512xf32> -> vector<8x512xf32>
    %131 = arith.addf %127, %130 : vector<8x512xf32>
    %132 = vector.extract_strided_slice %131 {offsets = [0, 0], sizes = [8, 128], strides = [1, 1]} : vector<8x512xf32> to vector<8x128xf32>
    %133 = arith.negf %132 : vector<8x128xf32>
    %134 = math.exp %133 : vector<8x128xf32>
    %cst_48 = arith.constant 1.000000e+00 : f32
    %135 = vector.broadcast %cst_48 : f32 to vector<8x128xf32>
    %136 = arith.addf %135, %134 : vector<8x128xf32>
    %137 = arith.divf %135, %136 : vector<8x128xf32>
    %138 = vector.extract_strided_slice %131 {offsets = [0, 128], sizes = [8, 128], strides = [1, 1]} : vector<8x512xf32> to vector<8x128xf32>
    %139 = arith.negf %138 : vector<8x128xf32>
    %140 = math.exp %139 : vector<8x128xf32>
    %cst_49 = arith.constant 1.000000e+00 : f32
    %141 = vector.broadcast %cst_49 : f32 to vector<8x128xf32>
    %142 = arith.addf %141, %140 : vector<8x128xf32>
    %143 = arith.divf %141, %142 : vector<8x128xf32>
    %144 = vector.extract_strided_slice %131 {offsets = [0, 256], sizes = [8, 128], strides = [1, 1]} : vector<8x512xf32> to vector<8x128xf32>
    %145 = math.tanh %144 : vector<8x128xf32>
    %146 = vector.extract_strided_slice %131 {offsets = [0, 384], sizes = [8, 128], strides = [1, 1]} : vector<8x512xf32> to vector<8x128xf32>
    %147 = arith.negf %146 : vector<8x128xf32>
    %148 = math.exp %147 : vector<8x128xf32>
    %cst_50 = arith.constant 1.000000e+00 : f32
    %149 = vector.broadcast %cst_50 : f32 to vector<8x128xf32>
    %150 = arith.addf %149, %148 : vector<8x128xf32>
    %151 = arith.divf %149, %150 : vector<8x128xf32>
    %152 = arith.mulf %143, %117 : vector<8x128xf32>
    %153 = arith.mulf %137, %145 : vector<8x128xf32>
    %154 = arith.addf %152, %153 : vector<8x128xf32>
    %155 = math.tanh %154 : vector<8x128xf32>
    %156 = arith.mulf %151, %155 : vector<8x128xf32>
    %c0_51 = arith.constant 0 : index
    %157 = arith.index_cast %125 : i32 to index
    %c0_52 = arith.constant 0 : index
    %158 = vector.load %arg6[%c0_51, %157, %c0_52] : memref<1x64x128xf32, #tpu.memory_space<vmem>>, vector<1x8x128xf32>
    %159 = vector.shape_cast %158 : vector<1x8x128xf32> to vector<8x128xf32>
    %160 = vector.shape_cast %156 : vector<8x128xf32> to vector<1x8x128xf32>
    tpu.vector_store %arg6[%c0_51, %157, %c0_52], %160 {strides = array<i32>} : memref<1x64x128xf32, #tpu.memory_space<vmem>>, vector<1x8x128xf32>,
    %c4_i32 = arith.constant 4 : i32
    %c8_i32_53 = arith.constant 8 : i32
    %161 = arith.muli %c4_i32, %c8_i32_53 : i32
    %162 = tpu.assume_multiple %161, 8 : i32
    %163 = arith.index_cast %162 : i32 to index
    %c0_54 = arith.constant 0 : index
    %164 = vector.load %arg9[%163, %c0_54] : memref<64x512xf32, #tpu.memory_space<vmem>>, vector<8x512xf32>
    %165 = arith.truncf %156 : vector<8x128xf32> to vector<8x128xbf16>
    %c0_55 = arith.constant 0 : index
    %c0_56 = arith.constant 0 : index
    %166 = vector.load %arg4[%c0_55, %c0_56] : memref<128x512xbf16, #tpu.memory_space<vmem>>, vector<128x512xbf16>
    %cst_57 = arith.constant dense<0.000000e+00> : vector<8x512xf32>
    %167 = tpu.matmul %165, %166, %cst_57 {dimension_numbers = #tpu.dot_dimension_numbers<[1], [0], [0], [1], [0, 0, 1, 1], [], []>} : vector<8x128xbf16>, vector<128x512xbf16>, vector<8x512xf32> -> vector<8x512xf32>
    %168 = arith.addf %164, %167 : vector<8x512xf32>
    %169 = vector.extract_strided_slice %168 {offsets = [0, 0], sizes = [8, 128], strides = [1, 1]} : vector<8x512xf32> to vector<8x128xf32>
    %170 = arith.negf %169 : vector<8x128xf32>
    %171 = math.exp %170 : vector<8x128xf32>
    %cst_58 = arith.constant 1.000000e+00 : f32
    %172 = vector.broadcast %cst_58 : f32 to vector<8x128xf32>
    %173 = arith.addf %172, %171 : vector<8x128xf32>
    %174 = arith.divf %172, %173 : vector<8x128xf32>
    %175 = vector.extract_strided_slice %168 {offsets = [0, 128], sizes = [8, 128], strides = [1, 1]} : vector<8x512xf32> to vector<8x128xf32>
    %176 = arith.negf %175 : vector<8x128xf32>
    %177 = math.exp %176 : vector<8x128xf32>
    %cst_59 = arith.constant 1.000000e+00 : f32
    %178 = vector.broadcast %cst_59 : f32 to vector<8x128xf32>
    %179 = arith.addf %178, %177 : vector<8x128xf32>
    %180 = arith.divf %178, %179 : vector<8x128xf32>
    %181 = vector.extract_strided_slice %168 {offsets = [0, 256], sizes = [8, 128], strides = [1, 1]} : vector<8x512xf32> to vector<8x128xf32>
    %182 = math.tanh %181 : vector<8x128xf32>
    %183 = vector.extract_strided_slice %168 {offsets = [0, 384], sizes = [8, 128], strides = [1, 1]} : vector<8x512xf32> to vector<8x128xf32>
    %184 = arith.negf %183 : vector<8x128xf32>
    %185 = math.exp %184 : vector<8x128xf32>
    %cst_60 = arith.constant 1.000000e+00 : f32
    %186 = vector.broadcast %cst_60 : f32 to vector<8x128xf32>
    %187 = arith.addf %186, %185 : vector<8x128xf32>
    %188 = arith.divf %186, %187 : vector<8x128xf32>
    %189 = arith.mulf %180, %154 : vector<8x128xf32>
    %190 = arith.mulf %174, %182 : vector<8x128xf32>
    %191 = arith.addf %189, %190 : vector<8x128xf32>
    %192 = math.tanh %191 : vector<8x128xf32>
    %193 = arith.mulf %188, %192 : vector<8x128xf32>
    %c0_61 = arith.constant 0 : index
    %194 = arith.index_cast %162 : i32 to index
    %c0_62 = arith.constant 0 : index
    %195 = vector.load %arg6[%c0_61, %194, %c0_62] : memref<1x64x128xf32, #tpu.memory_space<vmem>>, vector<1x8x128xf32>
    %196 = vector.shape_cast %195 : vector<1x8x128xf32> to vector<8x128xf32>
    %197 = vector.shape_cast %193 : vector<8x128xf32> to vector<1x8x128xf32>
    tpu.vector_store %arg6[%c0_61, %194, %c0_62], %197 {strides = array<i32>} : memref<1x64x128xf32, #tpu.memory_space<vmem>>, vector<1x8x128xf32>,
    %c5_i32 = arith.constant 5 : i32
    %c8_i32_63 = arith.constant 8 : i32
    %198 = arith.muli %c5_i32, %c8_i32_63 : i32
    %199 = tpu.assume_multiple %198, 8 : i32
    %200 = arith.index_cast %199 : i32 to index
    %c0_64 = arith.constant 0 : index
    %201 = vector.load %arg9[%200, %c0_64] : memref<64x512xf32, #tpu.memory_space<vmem>>, vector<8x512xf32>
    %202 = arith.truncf %193 : vector<8x128xf32> to vector<8x128xbf16>
    %c0_65 = arith.constant 0 : index
    %c0_66 = arith.constant 0 : index
    %203 = vector.load %arg4[%c0_65, %c0_66] : memref<128x512xbf16, #tpu.memory_space<vmem>>, vector<128x512xbf16>
    %cst_67 = arith.constant dense<0.000000e+00> : vector<8x512xf32>
    %204 = tpu.matmul %202, %203, %cst_67 {dimension_numbers = #tpu.dot_dimension_numbers<[1], [0], [0], [1], [0, 0, 1, 1], [], []>} : vector<8x128xbf16>, vector<128x512xbf16>, vector<8x512xf32> -> vector<8x512xf32>
    %205 = arith.addf %201, %204 : vector<8x512xf32>
    %206 = vector.extract_strided_slice %205 {offsets = [0, 0], sizes = [8, 128], strides = [1, 1]} : vector<8x512xf32> to vector<8x128xf32>
    %207 = arith.negf %206 : vector<8x128xf32>
    %208 = math.exp %207 : vector<8x128xf32>
    %cst_68 = arith.constant 1.000000e+00 : f32
    %209 = vector.broadcast %cst_68 : f32 to vector<8x128xf32>
    %210 = arith.addf %209, %208 : vector<8x128xf32>
    %211 = arith.divf %209, %210 : vector<8x128xf32>
    %212 = vector.extract_strided_slice %205 {offsets = [0, 128], sizes = [8, 128], strides = [1, 1]} : vector<8x512xf32> to vector<8x128xf32>
    %213 = arith.negf %212 : vector<8x128xf32>
    %214 = math.exp %213 : vector<8x128xf32>
    %cst_69 = arith.constant 1.000000e+00 : f32
    %215 = vector.broadcast %cst_69 : f32 to vector<8x128xf32>
    %216 = arith.addf %215, %214 : vector<8x128xf32>
    %217 = arith.divf %215, %216 : vector<8x128xf32>
    %218 = vector.extract_strided_slice %205 {offsets = [0, 256], sizes = [8, 128], strides = [1, 1]} : vector<8x512xf32> to vector<8x128xf32>
    %219 = math.tanh %218 : vector<8x128xf32>
    %220 = vector.extract_strided_slice %205 {offsets = [0, 384], sizes = [8, 128], strides = [1, 1]} : vector<8x512xf32> to vector<8x128xf32>
    %221 = arith.negf %220 : vector<8x128xf32>
    %222 = math.exp %221 : vector<8x128xf32>
    %cst_70 = arith.constant 1.000000e+00 : f32
    %223 = vector.broadcast %cst_70 : f32 to vector<8x128xf32>
    %224 = arith.addf %223, %222 : vector<8x128xf32>
    %225 = arith.divf %223, %224 : vector<8x128xf32>
    %226 = arith.mulf %217, %191 : vector<8x128xf32>
    %227 = arith.mulf %211, %219 : vector<8x128xf32>
    %228 = arith.addf %226, %227 : vector<8x128xf32>
    %229 = math.tanh %228 : vector<8x128xf32>
    %230 = arith.mulf %225, %229 : vector<8x128xf32>
    %c0_71 = arith.constant 0 : index
    %231 = arith.index_cast %199 : i32 to index
    %c0_72 = arith.constant 0 : index
    %232 = vector.load %arg6[%c0_71, %231, %c0_72] : memref<1x64x128xf32, #tpu.memory_space<vmem>>, vector<1x8x128xf32>
    %233 = vector.shape_cast %232 : vector<1x8x128xf32> to vector<8x128xf32>
    %234 = vector.shape_cast %230 : vector<8x128xf32> to vector<1x8x128xf32>
    tpu.vector_store %arg6[%c0_71, %231, %c0_72], %234 {strides = array<i32>} : memref<1x64x128xf32, #tpu.memory_space<vmem>>, vector<1x8x128xf32>,
    %c6_i32 = arith.constant 6 : i32
    %c8_i32_73 = arith.constant 8 : i32
    %235 = arith.muli %c6_i32, %c8_i32_73 : i32
    %236 = tpu.assume_multiple %235, 8 : i32
    %237 = arith.index_cast %236 : i32 to index
    %c0_74 = arith.constant 0 : index
    %238 = vector.load %arg9[%237, %c0_74] : memref<64x512xf32, #tpu.memory_space<vmem>>, vector<8x512xf32>
    %239 = arith.truncf %230 : vector<8x128xf32> to vector<8x128xbf16>
    %c0_75 = arith.constant 0 : index
    %c0_76 = arith.constant 0 : index
    %240 = vector.load %arg4[%c0_75, %c0_76] : memref<128x512xbf16, #tpu.memory_space<vmem>>, vector<128x512xbf16>
    %cst_77 = arith.constant dense<0.000000e+00> : vector<8x512xf32>
    %241 = tpu.matmul %239, %240, %cst_77 {dimension_numbers = #tpu.dot_dimension_numbers<[1], [0], [0], [1], [0, 0, 1, 1], [], []>} : vector<8x128xbf16>, vector<128x512xbf16>, vector<8x512xf32> -> vector<8x512xf32>
    %242 = arith.addf %238, %241 : vector<8x512xf32>
    %243 = vector.extract_strided_slice %242 {offsets = [0, 0], sizes = [8, 128], strides = [1, 1]} : vector<8x512xf32> to vector<8x128xf32>
    %244 = arith.negf %243 : vector<8x128xf32>
    %245 = math.exp %244 : vector<8x128xf32>
    %cst_78 = arith.constant 1.000000e+00 : f32
    %246 = vector.broadcast %cst_78 : f32 to vector<8x128xf32>
    %247 = arith.addf %246, %245 : vector<8x128xf32>
    %248 = arith.divf %246, %247 : vector<8x128xf32>
    %249 = vector.extract_strided_slice %242 {offsets = [0, 128], sizes = [8, 128], strides = [1, 1]} : vector<8x512xf32> to vector<8x128xf32>
    %250 = arith.negf %249 : vector<8x128xf32>
    %251 = math.exp %250 : vector<8x128xf32>
    %cst_79 = arith.constant 1.000000e+00 : f32
    %252 = vector.broadcast %cst_79 : f32 to vector<8x128xf32>
    %253 = arith.addf %252, %251 : vector<8x128xf32>
    %254 = arith.divf %252, %253 : vector<8x128xf32>
    %255 = vector.extract_strided_slice %242 {offsets = [0, 256], sizes = [8, 128], strides = [1, 1]} : vector<8x512xf32> to vector<8x128xf32>
    %256 = math.tanh %255 : vector<8x128xf32>
    %257 = vector.extract_strided_slice %242 {offsets = [0, 384], sizes = [8, 128], strides = [1, 1]} : vector<8x512xf32> to vector<8x128xf32>
    %258 = arith.negf %257 : vector<8x128xf32>
    %259 = math.exp %258 : vector<8x128xf32>
    %cst_80 = arith.constant 1.000000e+00 : f32
    %260 = vector.broadcast %cst_80 : f32 to vector<8x128xf32>
    %261 = arith.addf %260, %259 : vector<8x128xf32>
    %262 = arith.divf %260, %261 : vector<8x128xf32>
    %263 = arith.mulf %254, %228 : vector<8x128xf32>
    %264 = arith.mulf %248, %256 : vector<8x128xf32>
    %265 = arith.addf %263, %264 : vector<8x128xf32>
    %266 = math.tanh %265 : vector<8x128xf32>
    %267 = arith.mulf %262, %266 : vector<8x128xf32>
    %c0_81 = arith.constant 0 : index
    %268 = arith.index_cast %236 : i32 to index
    %c0_82 = arith.constant 0 : index
    %269 = vector.load %arg6[%c0_81, %268, %c0_82] : memref<1x64x128xf32, #tpu.memory_space<vmem>>, vector<1x8x128xf32>
    %270 = vector.shape_cast %269 : vector<1x8x128xf32> to vector<8x128xf32>
    %271 = vector.shape_cast %267 : vector<8x128xf32> to vector<1x8x128xf32>
    tpu.vector_store %arg6[%c0_81, %268, %c0_82], %271 {strides = array<i32>} : memref<1x64x128xf32, #tpu.memory_space<vmem>>, vector<1x8x128xf32>,
    %c7_i32 = arith.constant 7 : i32
    %c8_i32_83 = arith.constant 8 : i32
    %272 = arith.muli %c7_i32, %c8_i32_83 : i32
    %273 = tpu.assume_multiple %272, 8 : i32
    %274 = arith.index_cast %273 : i32 to index
    %c0_84 = arith.constant 0 : index
    %275 = vector.load %arg9[%274, %c0_84] : memref<64x512xf32, #tpu.memory_space<vmem>>, vector<8x512xf32>
    %276 = arith.truncf %267 : vector<8x128xf32> to vector<8x128xbf16>
    %c0_85 = arith.constant 0 : index
    %c0_86 = arith.constant 0 : index
    %277 = vector.load %arg4[%c0_85, %c0_86] : memref<128x512xbf16, #tpu.memory_space<vmem>>, vector<128x512xbf16>
    %cst_87 = arith.constant dense<0.000000e+00> : vector<8x512xf32>
    %278 = tpu.matmul %276, %277, %cst_87 {dimension_numbers = #tpu.dot_dimension_numbers<[1], [0], [0], [1], [0, 0, 1, 1], [], []>} : vector<8x128xbf16>, vector<128x512xbf16>, vector<8x512xf32> -> vector<8x512xf32>
    %279 = arith.addf %275, %278 : vector<8x512xf32>
    %280 = vector.extract_strided_slice %279 {offsets = [0, 0], sizes = [8, 128], strides = [1, 1]} : vector<8x512xf32> to vector<8x128xf32>
    %281 = arith.negf %280 : vector<8x128xf32>
    %282 = math.exp %281 : vector<8x128xf32>
    %cst_88 = arith.constant 1.000000e+00 : f32
    %283 = vector.broadcast %cst_88 : f32 to vector<8x128xf32>
    %284 = arith.addf %283, %282 : vector<8x128xf32>
    %285 = arith.divf %283, %284 : vector<8x128xf32>
    %286 = vector.extract_strided_slice %279 {offsets = [0, 128], sizes = [8, 128], strides = [1, 1]} : vector<8x512xf32> to vector<8x128xf32>
    %287 = arith.negf %286 : vector<8x128xf32>
    %288 = math.exp %287 : vector<8x128xf32>
    %cst_89 = arith.constant 1.000000e+00 : f32
    %289 = vector.broadcast %cst_89 : f32 to vector<8x128xf32>
    %290 = arith.addf %289, %288 : vector<8x128xf32>
    %291 = arith.divf %289, %290 : vector<8x128xf32>
    %292 = vector.extract_strided_slice %279 {offsets = [0, 256], sizes = [8, 128], strides = [1, 1]} : vector<8x512xf32> to vector<8x128xf32>
    %293 = math.tanh %292 : vector<8x128xf32>
    %294 = vector.extract_strided_slice %279 {offsets = [0, 384], sizes = [8, 128], strides = [1, 1]} : vector<8x512xf32> to vector<8x128xf32>
    %295 = arith.negf %294 : vector<8x128xf32>
    %296 = math.exp %295 : vector<8x128xf32>
    %cst_90 = arith.constant 1.000000e+00 : f32
    %297 = vector.broadcast %cst_90 : f32 to vector<8x128xf32>
    %298 = arith.addf %297, %296 : vector<8x128xf32>
    %299 = arith.divf %297, %298 : vector<8x128xf32>
    %300 = arith.mulf %291, %265 : vector<8x128xf32>
    %301 = arith.mulf %285, %293 : vector<8x128xf32>
    %302 = arith.addf %300, %301 : vector<8x128xf32>
    %303 = math.tanh %302 : vector<8x128xf32>
    %304 = arith.mulf %299, %303 : vector<8x128xf32>
    %c0_91 = arith.constant 0 : index
    %305 = arith.index_cast %273 : i32 to index
    %c0_92 = arith.constant 0 : index
    %306 = vector.load %arg6[%c0_91, %305, %c0_92] : memref<1x64x128xf32, #tpu.memory_space<vmem>>, vector<1x8x128xf32>
    %307 = vector.shape_cast %306 : vector<1x8x128xf32> to vector<8x128xf32>
    %308 = vector.shape_cast %304 : vector<8x128xf32> to vector<1x8x128xf32>
    tpu.vector_store %arg6[%c0_91, %305, %c0_92], %308 {strides = array<i32>} : memref<1x64x128xf32, #tpu.memory_space<vmem>>, vector<1x8x128xf32>,
    %c8_i32_93 = arith.constant 8 : i32
    %c0_94 = arith.constant 0 : index
    %c0_95 = arith.constant 0 : index
    %309 = vector.load %arg10[%c0_94, %c0_95] : memref<8x128xf32, #tpu.memory_space<vmem>>, vector<8x128xf32>
    tpu.vector_store %arg10[%c0_94, %c0_95], %304 {strides = array<i32>} : memref<8x128xf32, #tpu.memory_space<vmem>>, vector<8x128xf32>,
    %c0_96 = arith.constant 0 : index
    %c0_97 = arith.constant 0 : index
    %310 = vector.load %arg11[%c0_96, %c0_97] : memref<8x128xf32, #tpu.memory_space<vmem>>, vector<8x128xf32>
    tpu.vector_store %arg11[%c0_96, %c0_97], %302 {strides = array<i32>} : memref<8x128xf32, #tpu.memory_space<vmem>>, vector<8x128xf32>,
    %c0_i32_98 = arith.constant 0 : i32
    %311 = arith.cmpi eq, %arg1, %c0_i32_98 : i32
    %312 = arith.extui %311 : i1 to i32
    %c0_i32_99 = arith.constant 0 : i32
    %313 = arith.cmpi ne, %312, %c0_i32_99 : i32
    scf.if %313 {
      %c0_100 = arith.constant 0 : index
      %c0_101 = arith.constant 0 : index
      %314 = vector.load %arg10[%c0_100, %c0_101] : memref<8x128xf32, #tpu.memory_space<vmem>>, vector<8x128xf32>
      %c0_102 = arith.constant 0 : index
      %c0_103 = arith.constant 0 : index
      %315 = vector.load %arg7[%c0_102, %c0_103] : memref<8x128xf32, #tpu.memory_space<vmem>>, vector<8x128xf32>
      tpu.vector_store %arg7[%c0_102, %c0_103], %314 {strides = array<i32>} : memref<8x128xf32, #tpu.memory_space<vmem>>, vector<8x128xf32>,
      %c0_104 = arith.constant 0 : index
      %c0_105 = arith.constant 0 : index
      %316 = vector.load %arg11[%c0_104, %c0_105] : memref<8x128xf32, #tpu.memory_space<vmem>>, vector<8x128xf32>
      %c0_106 = arith.constant 0 : index
      %c0_107 = arith.constant 0 : index
      %317 = vector.load %arg8[%c0_106, %c0_107] : memref<8x128xf32, #tpu.memory_space<vmem>>, vector<8x128xf32>
      tpu.vector_store %arg8[%c0_106, %c0_107], %316 {strides = array<i32>} : memref<8x128xf32, #tpu.memory_space<vmem>>, vector<8x128xf32>,
    } else {
    }
    return
  }
  func.func @transform_0(%arg0: i32, %arg1: i32) -> (i32, i32, i32) {
    %c0_i32 = arith.constant 0 : i32
    %c0_i32_0 = arith.constant 0 : i32
    return %arg0, %arg1, %c0_i32 : i32, i32, i32
  }
  func.func @transform_1(%arg0: i32, %arg1: i32) -> (i32, i32) {
    %c0_i32 = arith.constant 0 : i32
    %c0_i32_0 = arith.constant 0 : i32
    %c0_i32_1 = arith.constant 0 : i32
    return %c0_i32, %c0_i32_0 : i32, i32
  }
  func.func @transform_2(%arg0: i32, %arg1: i32) -> (i32, i32) {
    %c0_i32 = arith.constant 0 : i32
    %c0_i32_0 = arith.constant 0 : i32
    %c0_i32_1 = arith.constant 0 : i32
    return %c0_i32, %c0_i32_0 : i32, i32
  }
  func.func @transform_3(%arg0: i32, %arg1: i32) -> (i32, i32) {
    %c0_i32 = arith.constant 0 : i32
    %c0_i32_0 = arith.constant 0 : i32
    %c0_i32_1 = arith.constant 0 : i32
    return %c0_i32, %c0_i32_0 : i32, i32
  }
  func.func @transform_4(%arg0: i32, %arg1: i32) -> (i32, i32, i32) {
    %c0_i32 = arith.constant 0 : i32
    %c0_i32_0 = arith.constant 0 : i32
    return %arg0, %arg1, %c0_i32 : i32, i32, i32
  }
  func.func @transform_5(%arg0: i32, %arg1: i32) -> (i32, i32) {
    %c0_i32 = arith.constant 0 : i32
    %c0_i32_0 = arith.constant 0 : i32
    return %arg0, %c0_i32 : i32, i32
  }
  func.func @transform_6(%arg0: i32, %arg1: i32) -> (i32, i32) {
    %c0_i32 = arith.constant 0 : i32
    %c0_i32_0 = arith.constant 0 : i32
    return %arg0, %c0_i32 : i32, i32
  }
}

</mosaic_0001>

<llo_original>
// kernel: lstm_encoder_forward.2
$region0: #{lstm_encoder_forward.2}
  #allocation0 [shape = 'u32[]', space=smem, size = 0x4, offset = 0x4, fixed_abs, tag = 'smem constant byte address 0x4 - core index']
  #allocation1 [shape = 'u32[144,128]{1,0:T(1,128)}', space=vmem, size = 0x12000, scoped, tag = 'internal scratch']
  #allocation2 [shape = 'f32[64,512]{1,0:T(8,128)}', space=vmem, size = 0x20000, scoped, tag = 'scratch operand']
  #allocation3 [shape = 'f32[8,128]{1,0:T(8,128)}', space=vmem, size = 0x1000, scoped, tag = 'scratch operand']
  #allocation4 [shape = 'f32[8,128]{1,0:T(8,128)}', space=vmem, size = 0x1000, scoped, tag = 'scratch operand']
  %s0 = inlined_call_operand.vmem [shape: bf16[1,64,128], index: 0, kind: input, shape index: {}]
  %s1 = inlined_call_operand.hbm [shape: bf16[128,512], index: 1, kind: input, shape index: {}]
  %s2 = inlined_call_operand.hbm [shape: bf16[128,512], index: 2, kind: input, shape index: {}]
  %s3 = inlined_call_operand.vmem [shape: f32[1,512], index: 3, kind: input, shape index: {}]
  %s4 = inlined_call_operand.vmem [shape: bf16[1,64,128], index: 4, kind: output, shape index: {0}]
  %s5 = inlined_call_operand.vmem [shape: f32[8,128], index: 5, kind: output, shape index: {1}]
  %s6 = inlined_call_operand.vmem [shape: f32[8,128], index: 6, kind: output, shape index: {2}]
  %7 = xla_tuple %s4, %s5, %s6
  %s8 = sld [smem:[#allocation0]]
  $region58: #{lstm_encoder_forward.2} parent=0
    _
  %s10 = ssub.s32 1, %s8
  %s11 = scalar_select 0, %s10, %s8
  $region1: #{lstm_encoder_forward.2} parent=0
    #allocation5 [shape = 'u8[131072]{0}', space=vmem, size = 0x20000, scoped, tag = 'input window, operand 1, single buffered']
    #allocation6 [shape = 's32[1]{0}', space=sflag, size = 0x4, scoped, tag = 'scoped memory for lstm_encoder_forward.2']
    #allocation7 [shape = 'u8[131072]{0}', space=vmem, size = 0x20000, scoped, tag = 'input window, operand 2, single buffered']
    #allocation8 [shape = 's32[1]{0}', space=sflag, size = 0x4, scoped, tag = 'scoped memory for lstm_encoder_forward.2']
    %12 = vsyncpa [#allocation6], 0
    %13 = vsyncpa [#allocation8], 0
    // Predicated region
    $region2: #{lstm_encoder_forward.2} parent=1 // pred_check
      _
    $region3: #{lstm_encoder_forward.2} parent=1 // pred_check_branch
      %15 = sbr.rel (0) target = $region5
    $region4: #{lstm_encoder_forward.2} parent=1 // pred_region
      _
    $region5: #{lstm_encoder_forward.2} parent=1 // pred_fallthru
      _
    // Predicated region
    $region6: #{lstm_encoder_forward.2} parent=1 // pred_check
      _
    $region7: #{lstm_encoder_forward.2} parent=1 // pred_check_branch
      %17 = sbr.rel (0) target = $region9
    $region8: #{lstm_encoder_forward.2} parent=1 // pred_region
      %s19 = ssub.s32 4096, 4096
      %20 = vsyncadd [#allocation6], %s19
      %s21 = sshll.u32 [#allocation5], 4
      %s22 = int_to_ptr.vmem [resolvable:$true] %s21
      %27 = dma.hbm_to_vmem [thread:$0]  %s1, 4096, %s22, [#allocation6], 256, 256, 16
    $region9: #{lstm_encoder_forward.2} parent=1 // pred_fallthru
      _
    // Predicated region
    $region10: #{lstm_encoder_forward.2} parent=1 // pred_check
      _
    $region11: #{lstm_encoder_forward.2} parent=1 // pred_check_branch
      %29 = sbr.rel (0) target = $region13
    $region12: #{lstm_encoder_forward.2} parent=1 // pred_region
      %s31 = ssub.s32 4096, 4096
      %32 = vsyncadd [#allocation8], %s31
      %s33 = sshll.u32 [#allocation7], 4
      %s34 = int_to_ptr.vmem [resolvable:$true] %s33
      %39 = dma.hbm_to_vmem [thread:$0]  %s2, 4096, %s34, [#allocation8], 256, 256, 16
    $region13: #{lstm_encoder_forward.2} parent=1 // pred_fallthru
      _
    // Predicated region
    $region14: #{lstm_encoder_forward.2} parent=1 // pred_check
      _
    $region15: #{lstm_encoder_forward.2} parent=1 // pred_check_branch
      %41 = sbr.rel (0) target = $region17
    $region16: #{lstm_encoder_forward.2} parent=1 // pred_region
      _
    $region17: #{lstm_encoder_forward.2} parent=1 // pred_fallthru
      _
    // Predicated region
    $region18: #{lstm_encoder_forward.2} parent=1 // pred_check
      _
    $region19: #{lstm_encoder_forward.2} parent=1 // pred_check_branch
      %43 = sbr.rel (0) target = $region21
    $region20: #{lstm_encoder_forward.2} parent=1 // pred_region
      %44 = dma.done [#allocation6], 4096
    $region21: #{lstm_encoder_forward.2} parent=1 // pred_fallthru
      _
    // Predicated region
    $region22: #{lstm_encoder_forward.2} parent=1 // pred_check
      _
    $region23: #{lstm_encoder_forward.2} parent=1 // pred_check_branch
      %46 = sbr.rel (0) target = $region25
    $region24: #{lstm_encoder_forward.2} parent=1 // pred_region
      %47 = dma.done [#allocation8], 4096
    $region25: #{lstm_encoder_forward.2} parent=1 // pred_fallthru
      _
    %p49 = scmp.eq.s32.totalorder 0, 0
    // Predicated region
    $region26: #{lstm_encoder_forward.2} parent=1 // pred_check
      %p50 = pneg %p49
    $region27: #{lstm_encoder_forward.2} parent=1 // pred_check_branch
      %52 = sbr.rel (%p50) target = $region29
    $region28: #{lstm_encoder_forward.2} parent=1 // pred_region
      %53 = vst [vmem:[#allocation3] sm:$0xff] 0.0
      %54 = vst [vmem:[#allocation4] sm:$0xff] 0.0
    $region29: #{lstm_encoder_forward.2} parent=1 // pred_fallthru
      _
    %v55 = vld [vmem:[%s0] sm:$0xf]
    %v56 = vld [vmem:[%s0 + $0x4] sm:$0xf]
    %v57 = vld [vmem:[%s0 + $0x8] sm:$0xf]
    %v58 = vld [vmem:[%s0 + $0xc] sm:$0xf]
    %v59 = vld [vmem:[%s0 + $0x10] sm:$0xf]
    %v60 = vld [vmem:[%s0 + $0x14] sm:$0xf]
    %v61 = vld [vmem:[%s0 + $0x18] sm:$0xf]
    %v62 = vld [vmem:[%s0 + $0x1c] sm:$0xf]
    %v63 = vld [vmem:[#allocation5] sm:$0xff]
    %v64 = vld [vmem:[#allocation5 + $0x8] sm:$0xff]
    %v65 = vld [vmem:[#allocation5 + $0x10] sm:$0xff]
    %v66 = vld [vmem:[#allocation5 + $0x18] sm:$0xff]
    %v67 = vld [vmem:[#allocation5 + $0x20] sm:$0xff]
    %v68 = vld [vmem:[#allocation5 + $0x28] sm:$0xff]
    %v69 = vld [vmem:[#allocation5 + $0x30] sm:$0xff]
    %v70 = vld [vmem:[#allocation5 + $0x38] sm:$0xff]
    %v71 = vld [vmem:[#allocation5 + $0x40] sm:$0xff]
    %v72 = vld [vmem:[#allocation5 + $0x48] sm:$0xff]
    %v73 = vld [vmem:[#allocation5 + $0x50] sm:$0xff]
    %v74 = vld [vmem:[#allocation5 + $0x58] sm:$0xff]
    %v75 = vld [vmem:[#allocation5 + $0x60] sm:$0xff]
    %v76 = vld [vmem:[#allocation5 + $0x68] sm:$0xff]
    %v77 = vld [vmem:[#allocation5 + $0x70] sm:$0xff]
    %v78 = vld [vmem:[#allocation5 + $0x78] sm:$0xff]
    %v79 = vld [vmem:[#allocation5 + $0x80] sm:$0xff]
    %v80 = vld [vmem:[#allocation5 + $0x88] sm:$0xff]
    %v81 = vld [vmem:[#allocation5 + $0x90] sm:$0xff]
    %v82 = vld [vmem:[#allocation5 + $0x98] sm:$0xff]
    %v83 = vld [vmem:[#allocation5 + $0xa0] sm:$0xff]
    %v84 = vld [vmem:[#allocation5 + $0xa8] sm:$0xff]
    %v85 = vld [vmem:[#allocation5 + $0xb0] sm:$0xff]
    %v86 = vld [vmem:[#allocation5 + $0xb8] sm:$0xff]
    %v87 = vld [vmem:[#allocation5 + $0xc0] sm:$0xff]
    %v88 = vld [vmem:[#allocation5 + $0xc8] sm:$0xff]
    %v89 = vld [vmem:[#allocation5 + $0xd0] sm:$0xff]
    %v90 = vld [vmem:[#allocation5 + $0xd8] sm:$0xff]
    %v91 = vld [vmem:[#allocation5 + $0xe0] sm:$0xff]
    %v92 = vld [vmem:[#allocation5 + $0xe8] sm:$0xff]
    %v93 = vld [vmem:[#allocation5 + $0xf0] sm:$0xff]
    %v94 = vld [vmem:[#allocation5 + $0xf8] sm:$0xff]
    %v95 = vld [vmem:[%s3] sm:$0xf]
    %v97 = vlaneseq
    %v98 = vshrl.u32 %v97, 7
    %v99 = vsub.s32 0, %v98
    %v100 = vrot.slane %v95, %v99
    %v101 = vlaneseq
    %v102 = vshrl.u32 %v101, 7
    %v103 = vsub.s32 1, %v102
    %v104 = vrot.slane %v95, %v103
    %v105 = vlaneseq
    %v106 = vshrl.u32 %v105, 7
    %v107 = vsub.s32 2, %v106
    %v108 = vrot.slane %v95, %v107
    %v109 = vlaneseq
    %v110 = vshrl.u32 %v109, 7
    %v111 = vsub.s32 3, %v110
    %v112 = vrot.slane %v95, %v111
    %v125 = vunpack.c.l.b16 %v55
    %v126 = vunpack.c.l.b16 %v56
    %v127 = vunpack.c.l.b16 %v57
    %v128 = vunpack.c.l.b16 %v58
    %v129 = vunpack.c.l.b16 %v59
    %v130 = vunpack.c.l.b16 %v60
    %v131 = vunpack.c.l.b16 %v61
    %v132 = vunpack.c.l.b16 %v62
    %v133 = vpack.c.b16 %v126, %v125
    %v134 = vpack.c.b16 %v128, %v127
    %v135 = vpack.c.b16 %v130, %v129
    %v136 = vpack.c.b16 %v132, %v131
    %v173 = vunpack.c.l.b16 %v63
    %v174 = vunpack.c.h.b16 %v63
    %v175 = vunpack.c.l.b16 %v64
    %v176 = vunpack.c.h.b16 %v64
    %v177 = vunpack.c.l.b16 %v65
    %v178 = vunpack.c.h.b16 %v65
    %v179 = vunpack.c.l.b16 %v66
    %v180 = vunpack.c.h.b16 %v66
    %v181 = vunpack.c.l.b16 %v67
    %v182 = vunpack.c.h.b16 %v67
    %v183 = vunpack.c.l.b16 %v68
    %v184 = vunpack.c.h.b16 %v68
    %v185 = vunpack.c.l.b16 %v69
    %v186 = vunpack.c.h.b16 %v69
    %v187 = vunpack.c.l.b16 %v70
    %v188 = vunpack.c.h.b16 %v70
    %v189 = vunpack.c.l.b16 %v71
    %v190 = vunpack.c.h.b16 %v71
    %v191 = vunpack.c.l.b16 %v72
    %v192 = vunpack.c.h.b16 %v72
    %v193 = vunpack.c.l.b16 %v73
    %v194 = vunpack.c.h.b16 %v73
    %v195 = vunpack.c.l.b16 %v74
    %v196 = vunpack.c.h.b16 %v74
    %v197 = vunpack.c.l.b16 %v75
    %v198 = vunpack.c.h.b16 %v75
    %v199 = vunpack.c.l.b16 %v76
    %v200 = vunpack.c.h.b16 %v76
    %v201 = vunpack.c.l.b16 %v77
    %v202 = vunpack.c.h.b16 %v77
    %v203 = vunpack.c.l.b16 %v78
    %v204 = vunpack.c.h.b16 %v78
    %v205 = vunpack.c.l.b16 %v79
    %v206 = vunpack.c.h.b16 %v79
    %v207 = vunpack.c.l.b16 %v80
    %v208 = vunpack.c.h.b16 %v80
    %v209 = vunpack.c.l.b16 %v81
    %v210 = vunpack.c.h.b16 %v81
    %v211 = vunpack.c.l.b16 %v82
    %v212 = vunpack.c.h.b16 %v82
    %v213 = vunpack.c.l.b16 %v83
    %v214 = vunpack.c.h.b16 %v83
    %v215 = vunpack.c.l.b16 %v84
    %v216 = vunpack.c.h.b16 %v84
    %v217 = vunpack.c.l.b16 %v85
    %v218 = vunpack.c.h.b16 %v85
    %v219 = vunpack.c.l.b16 %v86
    %v220 = vunpack.c.h.b16 %v86
    %v221 = vunpack.c.l.b16 %v87
    %v222 = vunpack.c.h.b16 %v87
    %v223 = vunpack.c.l.b16 %v88
    %v224 = vunpack.c.h.b16 %v88
    %v225 = vunpack.c.l.b16 %v89
    %v226 = vunpack.c.h.b16 %v89
    %v227 = vunpack.c.l.b16 %v90
    %v228 = vunpack.c.h.b16 %v90
    %v229 = vunpack.c.l.b16 %v91
    %v230 = vunpack.c.h.b16 %v91
    %v231 = vunpack.c.l.b16 %v92
    %v232 = vunpack.c.h.b16 %v92
    %v233 = vunpack.c.l.b16 %v93
    %v234 = vunpack.c.h.b16 %v93
    %v235 = vunpack.c.l.b16 %v94
    %v236 = vunpack.c.h.b16 %v94
    %v237 = vpack.c.b16 %v177, %v173
    %v238 = vpack.c.b16 %v178, %v174
    %v239 = vpack.c.b16 %v179, %v175
    %v240 = vpack.c.b16 %v180, %v176
    %v241 = vpack.c.b16 %v185, %v181
    %v242 = vpack.c.b16 %v186, %v182
    %v243 = vpack.c.b16 %v187, %v183
    %v244 = vpack.c.b16 %v188, %v184
    %v245 = vpack.c.b16 %v193, %v189
    %v246 = vpack.c.b16 %v194, %v190
    %v247 = vpack.c.b16 %v195, %v191
    %v248 = vpack.c.b16 %v196, %v192
    %v249 = vpack.c.b16 %v201, %v197
    %v250 = vpack.c.b16 %v202, %v198
    %v251 = vpack.c.b16 %v203, %v199
    %v252 = vpack.c.b16 %v204, %v200
    %v253 = vpack.c.b16 %v209, %v205
    %v254 = vpack.c.b16 %v210, %v206
    %v255 = vpack.c.b16 %v211, %v207
    %v256 = vpack.c.b16 %v212, %v208
    %v257 = vpack.c.b16 %v217, %v213
    %v258 = vpack.c.b16 %v218, %v214
    %v259 = vpack.c.b16 %v219, %v215
    %v260 = vpack.c.b16 %v220, %v216
    %v261 = vpack.c.b16 %v225, %v221
    %v262 = vpack.c.b16 %v226, %v222
    %v263 = vpack.c.b16 %v227, %v223
    %v264 = vpack.c.b16 %v228, %v224
    %v265 = vpack.c.b16 %v233, %v229
    %v266 = vpack.c.b16 %v234, %v230
    %v267 = vpack.c.b16 %v235, %v231
    %v268 = vpack.c.b16 %v236, %v232
    %301 = vmatprep.subr.bf16.mxu0 %v266
    %302 = vmatpush1.bf16.msra.mxu0 %v265
    %303 = vmatprep.subr.bf16.mxu0 %v262
    %304 = vmatpush1.bf16.msra.mxu0 %v261
    %305 = vmatprep.subr.bf16.mxu0 %v258
    %306 = vmatpush1.bf16.msra.mxu0 %v257
    %307 = vmatprep.subr.bf16.mxu0 %v254
    %308 = vmatpush1.bf16.msra.mxu0 %v253
    %309 = vmatprep.subr.bf16.mxu0 %v250
    %310 = vmatpush1.bf16.msra.mxu0 %v249
    %311 = vmatprep.subr.bf16.mxu0 %v246
    %312 = vmatpush1.bf16.msra.mxu0 %v245
    %313 = vmatprep.subr.bf16.mxu0 %v242
    %314 = vmatpush1.bf16.msra.mxu0 %v241
    %315 = vmatprep.subr.bf16.mxu0 %v238
    %316 = vmatpush1.bf16.msra.mxu0 %v237
    %317 = vmatprep.subr.bf16.mxu0 0
    %318 = vmatpush2.bf16.msra.mxu0 0
    %319 = vmatprep.subr.bf16.mxu0 0
    %320 = vmatpush2.bf16.msra.mxu0 0
    %321 = vmatprep.subr.bf16.mxu0 0
    %322 = vmatpush2.bf16.msra.mxu0 0
    %323 = vmatprep.subr.bf16.mxu0 0
    %324 = vmatpush2.bf16.msra.mxu0 0
    %325 = vmatprep.subr.bf16.mxu0 0
    %326 = vmatpush2.bf16.msra.mxu0 0
    %327 = vmatprep.subr.bf16.mxu0 0
    %328 = vmatpush2.bf16.msra.mxu0 0
    %329 = vmatprep.subr.bf16.mxu0 0
    %330 = vmatpush2.bf16.msra.mxu0 0
    %331 = vmatprep.subr.bf16.mxu0 0
    %332 = vmatpush2.bf16.msra.mxu0 0
    %333 = vmatprep.mubr.bf16.mxu0 0
    %334 = vmatmul.mubr.bf16.gmra.mxu0 %v133
    %v335 = vpop.f32.mrf.mxu0
    %v336 = vadd.f32 %v100, %v335
    %v337 = vpop.f32.mrf.mxu0
    %v338 = vadd.f32 %v104, %v337
    %v339 = vpop.f32.mrf.mxu0
    %v340 = vadd.f32 %v100, %v339
    %v341 = vpop.f32.mrf.mxu0
    %v342 = vadd.f32 %v104, %v341
    %343 = vmatprep.mubr.bf16.mxu0 0
    %344 = vmatmul.mubr.bf16.gmra.mxu0 %v134
    %v345 = vpop.f32.mrf.mxu0
    %v346 = vadd.f32 %v100, %v345
    %v347 = vpop.f32.mrf.mxu0
    %v348 = vadd.f32 %v104, %v347
    %v349 = vpop.f32.mrf.mxu0
    %v350 = vadd.f32 %v100, %v349
    %v351 = vpop.f32.mrf.mxu0
    %v352 = vadd.f32 %v104, %v351
    %353 = vmatprep.mubr.bf16.mxu0 0
    %354 = vmatmul.mubr.bf16.gmra.mxu0 %v135
    %v355 = vpop.f32.mrf.mxu0
    %v356 = vadd.f32 %v100, %v355
    %v357 = vpop.f32.mrf.mxu0
    %v358 = vadd.f32 %v104, %v357
    %v359 = vpop.f32.mrf.mxu0
    %v360 = vadd.f32 %v100, %v359
    %v361 = vpop.f32.mrf.mxu0
    %v362 = vadd.f32 %v104, %v361
    %363 = vmatprep.mubr.bf16.mxu0 0
    %364 = vmatmul.mubr.bf16.gmra.mxu0 %v136
    %v365 = vpop.f32.mrf.mxu0
    %v366 = vadd.f32 %v100, %v365
    %v367 = vpop.f32.mrf.mxu0
    %v368 = vadd.f32 %v104, %v367
    %v369 = vpop.f32.mrf.mxu0
    %v370 = vadd.f32 %v100, %v369
    %v371 = vpop.f32.mrf.mxu0
    %v372 = vadd.f32 %v104, %v371
    %373 = vdwg.mxu0
    %374 = vmatprep.subr.bf16.mxu0 %v268
    %375 = vmatpush1.bf16.msra.mxu0 %v267
    %376 = vmatprep.subr.bf16.mxu0 %v264
    %377 = vmatpush1.bf16.msra.mxu0 %v263
    %378 = vmatprep.subr.bf16.mxu0 %v260
    %379 = vmatpush1.bf16.msra.mxu0 %v259
    %380 = vmatprep.subr.bf16.mxu0 %v256
    %381 = vmatpush1.bf16.msra.mxu0 %v255
    %382 = vmatprep.subr.bf16.mxu0 %v252
    %383 = vmatpush1.bf16.msra.mxu0 %v251
    %384 = vmatprep.subr.bf16.mxu0 %v248
    %385 = vmatpush1.bf16.msra.mxu0 %v247
    %386 = vmatprep.subr.bf16.mxu0 %v244
    %387 = vmatpush1.bf16.msra.mxu0 %v243
    %388 = vmatprep.subr.bf16.mxu0 %v240
    %389 = vmatpush1.bf16.msra.mxu0 %v239
    %390 = vmatprep.subr.bf16.mxu0 0
    %391 = vmatpush2.bf16.msra.mxu0 0
    %392 = vmatprep.subr.bf16.mxu0 0
    %393 = vmatpush2.bf16.msra.mxu0 0
    %394 = vmatprep.subr.bf16.mxu0 0
    %395 = vmatpush2.bf16.msra.mxu0 0
    %396 = vmatprep.subr.bf16.mxu0 0
    %397 = vmatpush2.bf16.msra.mxu0 0
    %398 = vmatprep.subr.bf16.mxu0 0
    %399 = vmatpush2.bf16.msra.mxu0 0
    %400 = vmatprep.subr.bf16.mxu0 0
    %401 = vmatpush2.bf16.msra.mxu0 0
    %402 = vmatprep.subr.bf16.mxu0 0
    %403 = vmatpush2.bf16.msra.mxu0 0
    %404 = vmatprep.subr.bf16.mxu0 0
    %405 = vmatpush2.bf16.msra.mxu0 0
    %406 = vmatprep.mubr.bf16.mxu0 0
    %407 = vmatmul.mubr.bf16.gmra.mxu0 %v133
    %v408 = vpop.f32.mrf.mxu0
    %v409 = vadd.f32 %v108, %v408
    %v410 = vpop.f32.mrf.mxu0
    %v411 = vadd.f32 %v112, %v410
    %v412 = vpop.f32.mrf.mxu0
    %v413 = vadd.f32 %v108, %v412
    %v414 = vpop.f32.mrf.mxu0
    %v415 = vadd.f32 %v112, %v414
    %416 = vmatprep.mubr.bf16.mxu0 0
    %417 = vmatmul.mubr.bf16.gmra.mxu0 %v134
    %v418 = vpop.f32.mrf.mxu0
    %v419 = vadd.f32 %v108, %v418
    %v420 = vpop.f32.mrf.mxu0
    %v421 = vadd.f32 %v112, %v420
    %v422 = vpop.f32.mrf.mxu0
    %v423 = vadd.f32 %v108, %v422
    %v424 = vpop.f32.mrf.mxu0
    %v425 = vadd.f32 %v112, %v424
    %426 = vmatprep.mubr.bf16.mxu0 0
    %427 = vmatmul.mubr.bf16.gmra.mxu0 %v135
    %v428 = vpop.f32.mrf.mxu0
    %v429 = vadd.f32 %v108, %v428
    %v430 = vpop.f32.mrf.mxu0
    %v431 = vadd.f32 %v112, %v430
    %v432 = vpop.f32.mrf.mxu0
    %v433 = vadd.f32 %v108, %v432
    %v434 = vpop.f32.mrf.mxu0
    %v435 = vadd.f32 %v112, %v434
    %436 = vmatprep.mubr.bf16.mxu0 0
    %437 = vmatmul.mubr.bf16.gmra.mxu0 %v136
    %v438 = vpop.f32.mrf.mxu0
    %v439 = vadd.f32 %v108, %v438
    %v440 = vpop.f32.mrf.mxu0
    %v441 = vadd.f32 %v112, %v440
    %v442 = vpop.f32.mrf.mxu0
    %v443 = vadd.f32 %v108, %v442
    %v444 = vpop.f32.mrf.mxu0
    %v445 = vadd.f32 %v112, %v444
    %446 = vdwg.mxu0
    %447 = vst [vmem:[#allocation2] sm:$0xff] %v336
    %448 = vst [vmem:[#allocation2 + $0x8] sm:$0xff] %v338
    %449 = vst [vmem:[#allocation2 + $0x10] sm:$0xff] %v409
    %450 = vst [vmem:[#allocation2 + $0x18] sm:$0xff] %v411
    %451 = vst [vmem:[#allocation2 + $0x20] sm:$0xff] %v340
    %452 = vst [vmem:[#allocation2 + $0x28] sm:$0xff] %v342
    %453 = vst [vmem:[#allocation2 + $0x30] sm:$0xff] %v413
    %454 = vst [vmem:[#allocation2 + $0x38] sm:$0xff] %v415
    %455 = vst [vmem:[#allocation2 + $0x40] sm:$0xff] %v346
    %456 = vst [vmem:[#allocation2 + $0x48] sm:$0xff] %v348
    %457 = vst [vmem:[#allocation2 + $0x50] sm:$0xff] %v419
    %458 = vst [vmem:[#allocation2 + $0x58] sm:$0xff] %v421
    %459 = vst [vmem:[#allocation2 + $0x60] sm:$0xff] %v350
    %460 = vst [vmem:[#allocation2 + $0x68] sm:$0xff] %v352
    %461 = vst [vmem:[#allocation2 + $0x70] sm:$0xff] %v423
    %462 = vst [vmem:[#allocation2 + $0x78] sm:$0xff] %v425
    %463 = vst [vmem:[#allocation2 + $0x80] sm:$0xff] %v356
    %464 = vst [vmem:[#allocation2 + $0x88] sm:$0xff] %v358
    %465 = vst [vmem:[#allocation2 + $0x90] sm:$0xff] %v429
    %466 = vst [vmem:[#allocation2 + $0x98] sm:$0xff] %v431
    %467 = vst [vmem:[#allocation2 + $0xa0] sm:$0xff] %v360
    %468 = vst [vmem:[#allocation2 + $0xa8] sm:$0xff] %v362
    %469 = vst [vmem:[#allocation2 + $0xb0] sm:$0xff] %v433
    %470 = vst [vmem:[#allocation2 + $0xb8] sm:$0xff] %v435
    %471 = vst [vmem:[#allocation2 + $0xc0] sm:$0xff] %v366
    %472 = vst [vmem:[#allocation2 + $0xc8] sm:$0xff] %v368
    %473 = vst [vmem:[#allocation2 + $0xd0] sm:$0xff] %v439
    %474 = vst [vmem:[#allocation2 + $0xd8] sm:$0xff] %v441
    %475 = vst [vmem:[#allocation2 + $0xe0] sm:$0xff] %v370
    %476 = vst [vmem:[#allocation2 + $0xe8] sm:$0xff] %v372
    %477 = vst [vmem:[#allocation2 + $0xf0] sm:$0xff] %v443
    %478 = vst [vmem:[#allocation2 + $0xf8] sm:$0xff] %v445
    %v479 = vld [vmem:[#allocation3] sm:$0xff]
    %v480 = vld [vmem:[#allocation4] sm:$0xff]
    %s481 = smul.u32 0, 4
    %s482 = smul.addr %s481, 8
    %s483 = scalar_lea.vmem [#allocation2], %s482
    %v484 = vld [vmem:[%s483] sm:$0xff]
    %v485 = vld [vmem:[%s483 + $0x8] sm:$0xff]
    %v486 = vld [vmem:[%s483 + $0x10] sm:$0xff]
    %v487 = vld [vmem:[%s483 + $0x18] sm:$0xff]
    %v488 = vpack.c.bf16 %v479, %v479
    %v489 = vld [vmem:[#allocation7] sm:$0xff]
    %v490 = vld [vmem:[#allocation7 + $0x8] sm:$0xff]
    %v491 = vld [vmem:[#allocation7 + $0x10] sm:$0xff]
    %v492 = vld [vmem:[#allocation7 + $0x18] sm:$0xff]
    %v493 = vld [vmem:[#allocation7 + $0x20] sm:$0xff]
    %v494 = vld [vmem:[#allocation7 + $0x28] sm:$0xff]
    %v495 = vld [vmem:[#allocation7 + $0x30] sm:$0xff]
    %v496 = vld [vmem:[#allocation7 + $0x38] sm:$0xff]
    %v497 = vld [vmem:[#allocation7 + $0x40] sm:$0xff]
    %v498 = vld [vmem:[#allocation7 + $0x48] sm:$0xff]
    %v499 = vld [vmem:[#allocation7 + $0x50] sm:$0xff]
    %v500 = vld [vmem:[#allocation7 + $0x58] sm:$0xff]
    %v501 = vld [vmem:[#allocation7 + $0x60] sm:$0xff]
    %v502 = vld [vmem:[#allocation7 + $0x68] sm:$0xff]
    %v503 = vld [vmem:[#allocation7 + $0x70] sm:$0xff]
    %v504 = vld [vmem:[#allocation7 + $0x78] sm:$0xff]
    %v505 = vld [vmem:[#allocation7 + $0x80] sm:$0xff]
    %v506 = vld [vmem:[#allocation7 + $0x88] sm:$0xff]
    %v507 = vld [vmem:[#allocation7 + $0x90] sm:$0xff]
    %v508 = vld [vmem:[#allocation7 + $0x98] sm:$0xff]
    %v509 = vld [vmem:[#allocation7 + $0xa0] sm:$0xff]
    %v510 = vld [vmem:[#allocation7 + $0xa8] sm:$0xff]
    %v511 = vld [vmem:[#allocation7 + $0xb0] sm:$0xff]
    %v512 = vld [vmem:[#allocation7 + $0xb8] sm:$0xff]
    %v513 = vld [vmem:[#allocation7 + $0xc0] sm:$0xff]
    %v514 = vld [vmem:[#allocation7 + $0xc8] sm:$0xff]
    %v515 = vld [vmem:[#allocation7 + $0xd0] sm:$0xff]
    %v516 = vld [vmem:[#allocation7 + $0xd8] sm:$0xff]
    %v517 = vld [vmem:[#allocation7 + $0xe0] sm:$0xff]
    %v518 = vld [vmem:[#allocation7 + $0xe8] sm:$0xff]
    %v519 = vld [vmem:[#allocation7 + $0xf0] sm:$0xff]
    %v520 = vld [vmem:[#allocation7 + $0xf8] sm:$0xff]
    %v553 = vunpack.c.l.b16 %v489
    %v554 = vunpack.c.h.b16 %v489
    %v555 = vunpack.c.l.b16 %v490
    %v556 = vunpack.c.h.b16 %v490
    %v557 = vunpack.c.l.b16 %v491
    %v558 = vunpack.c.h.b16 %v491
    %v559 = vunpack.c.l.b16 %v492
    %v560 = vunpack.c.h.b16 %v492
    %v561 = vunpack.c.l.b16 %v493
    %v562 = vunpack.c.h.b16 %v493
    %v563 = vunpack.c.l.b16 %v494
    %v564 = vunpack.c.h.b16 %v494
    %v565 = vunpack.c.l.b16 %v495
    %v566 = vunpack.c.h.b16 %v495
    %v567 = vunpack.c.l.b16 %v496
    %v568 = vunpack.c.h.b16 %v496
    %v569 = vunpack.c.l.b16 %v497
    %v570 = vunpack.c.h.b16 %v497
    %v571 = vunpack.c.l.b16 %v498
    %v572 = vunpack.c.h.b16 %v498
    %v573 = vunpack.c.l.b16 %v499
    %v574 = vunpack.c.h.b16 %v499
    %v575 = vunpack.c.l.b16 %v500
    %v576 = vunpack.c.h.b16 %v500
    %v577 = vunpack.c.l.b16 %v501
    %v578 = vunpack.c.h.b16 %v501
    %v579 = vunpack.c.l.b16 %v502
    %v580 = vunpack.c.h.b16 %v502
    %v581 = vunpack.c.l.b16 %v503
    %v582 = vunpack.c.h.b16 %v503
    %v583 = vunpack.c.l.b16 %v504
    %v584 = vunpack.c.h.b16 %v504
    %v585 = vunpack.c.l.b16 %v505
    %v586 = vunpack.c.h.b16 %v505
    %v587 = vunpack.c.l.b16 %v506
    %v588 = vunpack.c.h.b16 %v506
    %v589 = vunpack.c.l.b16 %v507
    %v590 = vunpack.c.h.b16 %v507
    %v591 = vunpack.c.l.b16 %v508
    %v592 = vunpack.c.h.b16 %v508
    %v593 = vunpack.c.l.b16 %v509
    %v594 = vunpack.c.h.b16 %v509
    %v595 = vunpack.c.l.b16 %v510
    %v596 = vunpack.c.h.b16 %v510
    %v597 = vunpack.c.l.b16 %v511
    %v598 = vunpack.c.h.b16 %v511
    %v599 = vunpack.c.l.b16 %v512
    %v600 = vunpack.c.h.b16 %v512
    %v601 = vunpack.c.l.b16 %v513
    %v602 = vunpack.c.h.b16 %v513
    %v603 = vunpack.c.l.b16 %v514
    %v604 = vunpack.c.h.b16 %v514
    %v605 = vunpack.c.l.b16 %v515
    %v606 = vunpack.c.h.b16 %v515
    %v607 = vunpack.c.l.b16 %v516
    %v608 = vunpack.c.h.b16 %v516
    %v609 = vunpack.c.l.b16 %v517
    %v610 = vunpack.c.h.b16 %v517
    %v611 = vunpack.c.l.b16 %v518
    %v612 = vunpack.c.h.b16 %v518
    %v613 = vunpack.c.l.b16 %v519
    %v614 = vunpack.c.h.b16 %v519
    %v615 = vunpack.c.l.b16 %v520
    %v616 = vunpack.c.h.b16 %v520
    %v617 = vpack.c.b16 %v557, %v553
    %v618 = vpack.c.b16 %v558, %v554
    %v619 = vpack.c.b16 %v559, %v555
    %v620 = vpack.c.b16 %v560, %v556
    %v621 = vpack.c.b16 %v565, %v561
    %v622 = vpack.c.b16 %v566, %v562
    %v623 = vpack.c.b16 %v567, %v563
    %v624 = vpack.c.b16 %v568, %v564
    %v625 = vpack.c.b16 %v573, %v569
    %v626 = vpack.c.b16 %v574, %v570
    %v627 = vpack.c.b16 %v575, %v571
    %v628 = vpack.c.b16 %v576, %v572
    %v629 = vpack.c.b16 %v581, %v577
    %v630 = vpack.c.b16 %v582, %v578
    %v631 = vpack.c.b16 %v583, %v579
    %v632 = vpack.c.b16 %v584, %v580
    %v633 = vpack.c.b16 %v589, %v585
    %v634 = vpack.c.b16 %v590, %v586
    %v635 = vpack.c.b16 %v591, %v587
    %v636 = vpack.c.b16 %v592, %v588
    %v637 = vpack.c.b16 %v597, %v593
    %v638 = vpack.c.b16 %v598, %v594
    %v639 = vpack.c.b16 %v599, %v595
    %v640 = vpack.c.b16 %v600, %v596
    %v641 = vpack.c.b16 %v605, %v601
    %v642 = vpack.c.b16 %v606, %v602
    %v643 = vpack.c.b16 %v607, %v603
    %v644 = vpack.c.b16 %v608, %v604
    %v645 = vpack.c.b16 %v613, %v609
    %v646 = vpack.c.b16 %v614, %v610
    %v647 = vpack.c.b16 %v615, %v611
    %v648 = vpack.c.b16 %v616, %v612
    %681 = vmatprep.subr.bf16.mxu0 %v646
    %682 = vmatpush1.bf16.msra.mxu0 %v645
    %683 = vmatprep.subr.bf16.mxu0 %v642
    %684 = vmatpush1.bf16.msra.mxu0 %v641
    %685 = vmatprep.subr.bf16.mxu0 %v638
    %686 = vmatpush1.bf16.msra.mxu0 %v637
    %687 = vmatprep.subr.bf16.mxu0 %v634
    %688 = vmatpush1.bf16.msra.mxu0 %v633
    %689 = vmatprep.subr.bf16.mxu0 %v630
    %690 = vmatpush1.bf16.msra.mxu0 %v629
    %691 = vmatprep.subr.bf16.mxu0 %v626
    %692 = vmatpush1.bf16.msra.mxu0 %v625
    %693 = vmatprep.subr.bf16.mxu0 %v622
    %694 = vmatpush1.bf16.msra.mxu0 %v621
    %695 = vmatprep.subr.bf16.mxu0 %v618
    %696 = vmatpush1.bf16.msra.mxu0 %v617
    %697 = vmatprep.subr.bf16.mxu0 0
    %698 = vmatpush2.bf16.msra.mxu0 0
    %699 = vmatprep.subr.bf16.mxu0 0
    %700 = vmatpush2.bf16.msra.mxu0 0
    %701 = vmatprep.subr.bf16.mxu0 0
    %702 = vmatpush2.bf16.msra.mxu0 0
    %703 = vmatprep.subr.bf16.mxu0 0
    %704 = vmatpush2.bf16.msra.mxu0 0
    %705 = vmatprep.subr.bf16.mxu0 0
    %706 = vmatpush2.bf16.msra.mxu0 0
    %707 = vmatprep.subr.bf16.mxu0 0
    %708 = vmatpush2.bf16.msra.mxu0 0
    %709 = vmatprep.subr.bf16.mxu0 0
    %710 = vmatpush2.bf16.msra.mxu0 0
    %711 = vmatprep.subr.bf16.mxu0 0
    %712 = vmatpush2.bf16.msra.mxu0 0
    %713 = vmatprep.mubr.bf16.mxu0 0
    %714 = vmatmul.mubr.bf16.gmra.mxu0 %v488
    %v715 = vpop.f32.mrf.mxu0
    %v716 = vadd.f32 0.0, %v715
    %v717 = vpop.f32.mrf.mxu0
    %v718 = vadd.f32 0.0, %v717
    %v719 = vpop.f32.mrf.mxu0
    %v720 = vpop.f32.mrf.mxu0
    %721 = vdwg.mxu0
    %722 = vmatprep.subr.bf16.mxu0 %v648
    %723 = vmatpush1.bf16.msra.mxu0 %v647
    %724 = vmatprep.subr.bf16.mxu0 %v644
    %725 = vmatpush1.bf16.msra.mxu0 %v643
    %726 = vmatprep.subr.bf16.mxu0 %v640
    %727 = vmatpush1.bf16.msra.mxu0 %v639
    %728 = vmatprep.subr.bf16.mxu0 %v636
    %729 = vmatpush1.bf16.msra.mxu0 %v635
    %730 = vmatprep.subr.bf16.mxu0 %v632
    %731 = vmatpush1.bf16.msra.mxu0 %v631
    %732 = vmatprep.subr.bf16.mxu0 %v628
    %733 = vmatpush1.bf16.msra.mxu0 %v627
    %734 = vmatprep.subr.bf16.mxu0 %v624
    %735 = vmatpush1.bf16.msra.mxu0 %v623
    %736 = vmatprep.subr.bf16.mxu0 %v620
    %737 = vmatpush1.bf16.msra.mxu0 %v619
    %738 = vmatprep.subr.bf16.mxu0 0
    %739 = vmatpush2.bf16.msra.mxu0 0
    %740 = vmatprep.subr.bf16.mxu0 0
    %741 = vmatpush2.bf16.msra.mxu0 0
    %742 = vmatprep.subr.bf16.mxu0 0
    %743 = vmatpush2.bf16.msra.mxu0 0
    %744 = vmatprep.subr.bf16.mxu0 0
    %745 = vmatpush2.bf16.msra.mxu0 0
    %746 = vmatprep.subr.bf16.mxu0 0
    %747 = vmatpush2.bf16.msra.mxu0 0
    %748 = vmatprep.subr.bf16.mxu0 0
    %749 = vmatpush2.bf16.msra.mxu0 0
    %750 = vmatprep.subr.bf16.mxu0 0
    %751 = vmatpush2.bf16.msra.mxu0 0
    %752 = vmatprep.subr.bf16.mxu0 0
    %753 = vmatpush2.bf16.msra.mxu0 0
    %754 = vmatprep.mubr.bf16.mxu0 0
    %755 = vmatmul.mubr.bf16.gmra.mxu0 %v488
    %v756 = vpop.f32.mrf.mxu0
    %v757 = vadd.f32 0.0, %v756
    %v758 = vpop.f32.mrf.mxu0
    %v759 = vadd.f32 0.0, %v758
    %v760 = vpop.f32.mrf.mxu0
    %v761 = vpop.f32.mrf.mxu0
    %762 = vdwg.mxu0
    %v763 = vadd.f32 %v484, %v716
    %v764 = vadd.f32 %v485, %v718
    %v765 = vadd.f32 %v486, %v757
    %v766 = vadd.f32 %v487, %v759
    %v767 = vxor.u32 %v763, 2147483648
    %v768 = vmul.f32 %v767, 1.442695
    %v769 = vpow.pop %v768
    %v770 = vadd.f32 %v769, 1.0
    %v771 = vrcp.pop %v770
    %v772 = vmul.f32 1.0, %v771
    %v773 = vxor.u32 %v764, 2147483648
    %v774 = vmul.f32 %v773, 1.442695
    %v775 = vpow.pop %v774
    %v776 = vadd.f32 %v775, 1.0
    %v777 = vrcp.pop %v776
    %v778 = vmul.f32 1.0, %v777
    %v779 = vtanh.pop %v765
    %v780 = vxor.u32 %v766, 2147483648
    %v781 = vmul.f32 %v780, 1.442695
    %v782 = vpow.pop %v781
    %v783 = vadd.f32 %v782, 1.0
    %v784 = vrcp.pop %v783
    %v785 = vmul.f32 1.0, %v784
    %v786 = vmul.f32 %v778, %v480
    %v787 = vmul.f32 %v772, %v779
    %v788 = vadd.f32 %v786, %v787
    %v789 = vtanh.pop %v788
    %v790 = vmul.f32 %v785, %v789
    %v791 = vpack.c.bf16 %v790, %v790
    %792 = vst [vmem:[%s4] sm:$0xf] %v791
    %s793 = smul.u32 1, 4
    %s794 = smul.addr %s793, 8
    %s795 = scalar_lea.vmem [#allocation2], %s794
    %v796 = vld [vmem:[%s795] sm:$0xff]
    %v797 = vld [vmem:[%s795 + $0x8] sm:$0xff]
    %v798 = vld [vmem:[%s795 + $0x10] sm:$0xff]
    %v799 = vld [vmem:[%s795 + $0x18] sm:$0xff]
    %v800 = vld [vmem:[#allocation7] sm:$0xff]
    %v801 = vld [vmem:[#allocation7 + $0x8] sm:$0xff]
    %v802 = vld [vmem:[#allocation7 + $0x10] sm:$0xff]
    %v803 = vld [vmem:[#allocation7 + $0x18] sm:$0xff]
    %v804 = vld [vmem:[#allocation7 + $0x20] sm:$0xff]
    %v805 = vld [vmem:[#allocation7 + $0x28] sm:$0xff]
    %v806 = vld [vmem:[#allocation7 + $0x30] sm:$0xff]
    %v807 = vld [vmem:[#allocation7 + $0x38] sm:$0xff]
    %v808 = vld [vmem:[#allocation7 + $0x40] sm:$0xff]
    %v809 = vld [vmem:[#allocation7 + $0x48] sm:$0xff]
    %v810 = vld [vmem:[#allocation7 + $0x50] sm:$0xff]
    %v811 = vld [vmem:[#allocation7 + $0x58] sm:$0xff]
    %v812 = vld [vmem:[#allocation7 + $0x60] sm:$0xff]
    %v813 = vld [vmem:[#allocation7 + $0x68] sm:$0xff]
    %v814 = vld [vmem:[#allocation7 + $0x70] sm:$0xff]
    %v815 = vld [vmem:[#allocation7 + $0x78] sm:$0xff]
    %v816 = vld [vmem:[#allocation7 + $0x80] sm:$0xff]
    %v817 = vld [vmem:[#allocation7 + $0x88] sm:$0xff]
    %v818 = vld [vmem:[#allocation7 + $0x90] sm:$0xff]
    %v819 = vld [vmem:[#allocation7 + $0x98] sm:$0xff]
    %v820 = vld [vmem:[#allocation7 + $0xa0] sm:$0xff]
    %v821 = vld [vmem:[#allocation7 + $0xa8] sm:$0xff]
    %v822 = vld [vmem:[#allocation7 + $0xb0] sm:$0xff]
    %v823 = vld [vmem:[#allocation7 + $0xb8] sm:$0xff]
    %v824 = vld [vmem:[#allocation7 + $0xc0] sm:$0xff]
    %v825 = vld [vmem:[#allocation7 + $0xc8] sm:$0xff]
    %v826 = vld [vmem:[#allocation7 + $0xd0] sm:$0xff]
    %v827 = vld [vmem:[#allocation7 + $0xd8] sm:$0xff]
    %v828 = vld [vmem:[#allocation7 + $0xe0] sm:$0xff]
    %v829 = vld [vmem:[#allocation7 + $0xe8] sm:$0xff]
    %v830 = vld [vmem:[#allocation7 + $0xf0] sm:$0xff]
    %v831 = vld [vmem:[#allocation7 + $0xf8] sm:$0xff]
    %v864 = vunpack.c.l.b16 %v800
    %v865 = vunpack.c.h.b16 %v800
    %v866 = vunpack.c.l.b16 %v801
    %v867 = vunpack.c.h.b16 %v801
    %v868 = vunpack.c.l.b16 %v802
    %v869 = vunpack.c.h.b16 %v802
    %v870 = vunpack.c.l.b16 %v803
    %v871 = vunpack.c.h.b16 %v803
    %v872 = vunpack.c.l.b16 %v804
    %v873 = vunpack.c.h.b16 %v804
    %v874 = vunpack.c.l.b16 %v805
    %v875 = vunpack.c.h.b16 %v805
    %v876 = vunpack.c.l.b16 %v806
    %v877 = vunpack.c.h.b16 %v806
    %v878 = vunpack.c.l.b16 %v807
    %v879 = vunpack.c.h.b16 %v807
    %v880 = vunpack.c.l.b16 %v808
    %v881 = vunpack.c.h.b16 %v808
    %v882 = vunpack.c.l.b16 %v809
    %v883 = vunpack.c.h.b16 %v809
    %v884 = vunpack.c.l.b16 %v810
    %v885 = vunpack.c.h.b16 %v810
    %v886 = vunpack.c.l.b16 %v811
    %v887 = vunpack.c.h.b16 %v811
    %v888 = vunpack.c.l.b16 %v812
    %v889 = vunpack.c.h.b16 %v812
    %v890 = vunpack.c.l.b16 %v813
    %v891 = vunpack.c.h.b16 %v813
    %v892 = vunpack.c.l.b16 %v814
    %v893 = vunpack.c.h.b16 %v814
    %v894 = vunpack.c.l.b16 %v815
    %v895 = vunpack.c.h.b16 %v815
    %v896 = vunpack.c.l.b16 %v816
    %v897 = vunpack.c.h.b16 %v816
    %v898 = vunpack.c.l.b16 %v817
    %v899 = vunpack.c.h.b16 %v817
    %v900 = vunpack.c.l.b16 %v818
    %v901 = vunpack.c.h.b16 %v818
    %v902 = vunpack.c.l.b16 %v819
    %v903 = vunpack.c.h.b16 %v819
    %v904 = vunpack.c.l.b16 %v820
    %v905 = vunpack.c.h.b16 %v820
    %v906 = vunpack.c.l.b16 %v821
    %v907 = vunpack.c.h.b16 %v821
    %v908 = vunpack.c.l.b16 %v822
    %v909 = vunpack.c.h.b16 %v822
    %v910 = vunpack.c.l.b16 %v823
    %v911 = vunpack.c.h.b16 %v823
    %v912 = vunpack.c.l.b16 %v824
    %v913 = vunpack.c.h.b16 %v824
    %v914 = vunpack.c.l.b16 %v825
    %v915 = vunpack.c.h.b16 %v825
    %v916 = vunpack.c.l.b16 %v826
    %v917 = vunpack.c.h.b16 %v826
    %v918 = vunpack.c.l.b16 %v827
    %v919 = vunpack.c.h.b16 %v827
    %v920 = vunpack.c.l.b16 %v828
    %v921 = vunpack.c.h.b16 %v828
    %v922 = vunpack.c.l.b16 %v829
    %v923 = vunpack.c.h.b16 %v829
    %v924 = vunpack.c.l.b16 %v830
    %v925 = vunpack.c.h.b16 %v830
    %v926 = vunpack.c.l.b16 %v831
    %v927 = vunpack.c.h.b16 %v831
    %v928 = vpack.c.b16 %v868, %v864
    %v929 = vpack.c.b16 %v869, %v865
    %v930 = vpack.c.b16 %v870, %v866
    %v931 = vpack.c.b16 %v871, %v867
    %v932 = vpack.c.b16 %v876, %v872
    %v933 = vpack.c.b16 %v877, %v873
    %v934 = vpack.c.b16 %v878, %v874
    %v935 = vpack.c.b16 %v879, %v875
    %v936 = vpack.c.b16 %v884, %v880
    %v937 = vpack.c.b16 %v885, %v881
    %v938 = vpack.c.b16 %v886, %v882
    %v939 = vpack.c.b16 %v887, %v883
    %v940 = vpack.c.b16 %v892, %v888
    %v941 = vpack.c.b16 %v893, %v889
    %v942 = vpack.c.b16 %v894, %v890
    %v943 = vpack.c.b16 %v895, %v891
    %v944 = vpack.c.b16 %v900, %v896
    %v945 = vpack.c.b16 %v901, %v897
    %v946 = vpack.c.b16 %v902, %v898
    %v947 = vpack.c.b16 %v903, %v899
    %v948 = vpack.c.b16 %v908, %v904
    %v949 = vpack.c.b16 %v909, %v905
    %v950 = vpack.c.b16 %v910, %v906
    %v951 = vpack.c.b16 %v911, %v907
    %v952 = vpack.c.b16 %v916, %v912
    %v953 = vpack.c.b16 %v917, %v913
    %v954 = vpack.c.b16 %v918, %v914
    %v955 = vpack.c.b16 %v919, %v915
    %v956 = vpack.c.b16 %v924, %v920
    %v957 = vpack.c.b16 %v925, %v921
    %v958 = vpack.c.b16 %v926, %v922
    %v959 = vpack.c.b16 %v927, %v923
    %992 = vmatprep.subr.bf16.mxu0 %v957
    %993 = vmatpush1.bf16.msra.mxu0 %v956
    %994 = vmatprep.subr.bf16.mxu0 %v953
    %995 = vmatpush1.bf16.msra.mxu0 %v952
    %996 = vmatprep.subr.bf16.mxu0 %v949
    %997 = vmatpush1.bf16.msra.mxu0 %v948
    %998 = vmatprep.subr.bf16.mxu0 %v945
    %999 = vmatpush1.bf16.msra.mxu0 %v944
    %1000 = vmatprep.subr.bf16.mxu0 %v941
    %1001 = vmatpush1.bf16.msra.mxu0 %v940
    %1002 = vmatprep.subr.bf16.mxu0 %v937
    %1003 = vmatpush1.bf16.msra.mxu0 %v936
    %1004 = vmatprep.subr.bf16.mxu0 %v933
    %1005 = vmatpush1.bf16.msra.mxu0 %v932
    %1006 = vmatprep.subr.bf16.mxu0 %v929
    %1007 = vmatpush1.bf16.msra.mxu0 %v928
    %1008 = vmatprep.subr.bf16.mxu0 0
    %1009 = vmatpush2.bf16.msra.mxu0 0
    %1010 = vmatprep.subr.bf16.mxu0 0
    %1011 = vmatpush2.bf16.msra.mxu0 0
    %1012 = vmatprep.subr.bf16.mxu0 0
    %1013 = vmatpush2.bf16.msra.mxu0 0
    %1014 = vmatprep.subr.bf16.mxu0 0
    %1015 = vmatpush2.bf16.msra.mxu0 0
    %1016 = vmatprep.subr.bf16.mxu0 0
    %1017 = vmatpush2.bf16.msra.mxu0 0
    %1018 = vmatprep.subr.bf16.mxu0 0
    %1019 = vmatpush2.bf16.msra.mxu0 0
    %1020 = vmatprep.subr.bf16.mxu0 0
    %1021 = vmatpush2.bf16.msra.mxu0 0
    %1022 = vmatprep.subr.bf16.mxu0 0
    %1023 = vmatpush2.bf16.msra.mxu0 0
    %1024 = vmatprep.mubr.bf16.mxu0 0
    %1025 = vmatmul.mubr.bf16.gmra.mxu0 %v791
    %v1026 = vpop.f32.mrf.mxu0
    %v1027 = vadd.f32 0.0, %v1026
    %v1028 = vpop.f32.mrf.mxu0
    %v1029 = vadd.f32 0.0, %v1028
    %v1030 = vpop.f32.mrf.mxu0
    %v1031 = vpop.f32.mrf.mxu0
    %1032 = vdwg.mxu0
    %1033 = vmatprep.subr.bf16.mxu0 %v959
    %1034 = vmatpush1.bf16.msra.mxu0 %v958
    %1035 = vmatprep.subr.bf16.mxu0 %v955
    %1036 = vmatpush1.bf16.msra.mxu0 %v954
    %1037 = vmatprep.subr.bf16.mxu0 %v951
    %1038 = vmatpush1.bf16.msra.mxu0 %v950
    %1039 = vmatprep.subr.bf16.mxu0 %v947
    %1040 = vmatpush1.bf16.msra.mxu0 %v946
    %1041 = vmatprep.subr.bf16.mxu0 %v943
    %1042 = vmatpush1.bf16.msra.mxu0 %v942
    %1043 = vmatprep.subr.bf16.mxu0 %v939
    %1044 = vmatpush1.bf16.msra.mxu0 %v938
    %1045 = vmatprep.subr.bf16.mxu0 %v935
    %1046 = vmatpush1.bf16.msra.mxu0 %v934
    %1047 = vmatprep.subr.bf16.mxu0 %v931
    %1048 = vmatpush1.bf16.msra.mxu0 %v930
    %1049 = vmatprep.subr.bf16.mxu0 0
    %1050 = vmatpush2.bf16.msra.mxu0 0
    %1051 = vmatprep.subr.bf16.mxu0 0
    %1052 = vmatpush2.bf16.msra.mxu0 0
    %1053 = vmatprep.subr.bf16.mxu0 0
    %1054 = vmatpush2.bf16.msra.mxu0 0
    %1055 = vmatprep.subr.bf16.mxu0 0
    %1056 = vmatpush2.bf16.msra.mxu0 0
    %1057 = vmatprep.subr.bf16.mxu0 0
    %1058 = vmatpush2.bf16.msra.mxu0 0
    %1059 = vmatprep.subr.bf16.mxu0 0
    %1060 = vmatpush2.bf16.msra.mxu0 0
    %1061 = vmatprep.subr.bf16.mxu0 0
    %1062 = vmatpush2.bf16.msra.mxu0 0
    %1063 = vmatprep.subr.bf16.mxu0 0
    %1064 = vmatpush2.bf16.msra.mxu0 0
    %1065 = vmatprep.mubr.bf16.mxu0 0
    %1066 = vmatmul.mubr.bf16.gmra.mxu0 %v791
    %v1067 = vpop.f32.mrf.mxu0
    %v1068 = vadd.f32 0.0, %v1067
    %v1069 = vpop.f32.mrf.mxu0
    %v1070 = vadd.f32 0.0, %v1069
    %v1071 = vpop.f32.mrf.mxu0
    %v1072 = vpop.f32.mrf.mxu0
    %1073 = vdwg.mxu0
    %v1074 = vadd.f32 %v796, %v1027
    %v1075 = vadd.f32 %v797, %v1029
    %v1076 = vadd.f32 %v798, %v1068
    %v1077 = vadd.f32 %v799, %v1070
    %v1078 = vxor.u32 %v1074, 2147483648
    %v1079 = vmul.f32 %v1078, 1.442695
    %v1080 = vpow.pop %v1079
    %v1081 = vadd.f32 %v1080, 1.0
    %v1082 = vrcp.pop %v1081
    %v1083 = vmul.f32 1.0, %v1082
    %v1084 = vxor.u32 %v1075, 2147483648
    %v1085 = vmul.f32 %v1084, 1.442695
    %v1086 = vpow.pop %v1085
    %v1087 = vadd.f32 %v1086, 1.0
    %v1088 = vrcp.pop %v1087
    %v1089 = vmul.f32 1.0, %v1088
    %v1090 = vtanh.pop %v1076
    %v1091 = vxor.u32 %v1077, 2147483648
    %v1092 = vmul.f32 %v1091, 1.442695
    %v1093 = vpow.pop %v1092
    %v1094 = vadd.f32 %v1093, 1.0
    %v1095 = vrcp.pop %v1094
    %v1096 = vmul.f32 1.0, %v1095
    %v1097 = vmul.f32 %v1089, %v788
    %v1098 = vmul.f32 %v1083, %v1090
    %v1099 = vadd.f32 %v1097, %v1098
    %v1100 = vtanh.pop %v1099
    %v1101 = vmul.f32 %v1096, %v1100
    %v1102 = vpack.c.bf16 %v1101, %v1101
    %s1103 = scalar_lea.vmem %s4, 4
    %1104 = vst [vmem:[%s1103] sm:$0xf] %v1102
    %s1105 = smul.u32 2, 4
    %s1106 = smul.addr %s1105, 8
    %s1107 = scalar_lea.vmem [#allocation2], %s1106
    %v1108 = vld [vmem:[%s1107] sm:$0xff]
    %v1109 = vld [vmem:[%s1107 + $0x8] sm:$0xff]
    %v1110 = vld [vmem:[%s1107 + $0x10] sm:$0xff]
    %v1111 = vld [vmem:[%s1107 + $0x18] sm:$0xff]
    %v1112 = vld [vmem:[#allocation7] sm:$0xff]
    %v1113 = vld [vmem:[#allocation7 + $0x8] sm:$0xff]
    %v1114 = vld [vmem:[#allocation7 + $0x10] sm:$0xff]
    %v1115 = vld [vmem:[#allocation7 + $0x18] sm:$0xff]
    %v1116 = vld [vmem:[#allocation7 + $0x20] sm:$0xff]
    %v1117 = vld [vmem:[#allocation7 + $0x28] sm:$0xff]
    %v1118 = vld [vmem:[#allocation7 + $0x30] sm:$0xff]
    %v1119 = vld [vmem:[#allocation7 + $0x38] sm:$0xff]
    %v1120 = vld [vmem:[#allocation7 + $0x40] sm:$0xff]
    %v1121 = vld [vmem:[#allocation7 + $0x48] sm:$0xff]
    %v1122 = vld [vmem:[#allocation7 + $0x50] sm:$0xff]
    %v1123 = vld [vmem:[#allocation7 + $0x58] sm:$0xff]
    %v1124 = vld [vmem:[#allocation7 + $0x60] sm:$0xff]
    %v1125 = vld [vmem:[#allocation7 + $0x68] sm:$0xff]
    %v1126 = vld [vmem:[#allocation7 + $0x70] sm:$0xff]
    %v1127 = vld [vmem:[#allocation7 + $0x78] sm:$0xff]
    %v1128 = vld [vmem:[#allocation7 + $0x80] sm:$0xff]
    %v1129 = vld [vmem:[#allocation7 + $0x88] sm:$0xff]
    %v1130 = vld [vmem:[#allocation7 + $0x90] sm:$0xff]
    %v1131 = vld [vmem:[#allocation7 + $0x98] sm:$0xff]
    %v1132 = vld [vmem:[#allocation7 + $0xa0] sm:$0xff]
    %v1133 = vld [vmem:[#allocation7 + $0xa8] sm:$0xff]
    %v1134 = vld [vmem:[#allocation7 + $0xb0] sm:$0xff]
    %v1135 = vld [vmem:[#allocation7 + $0xb8] sm:$0xff]
    %v1136 = vld [vmem:[#allocation7 + $0xc0] sm:$0xff]
    %v1137 = vld [vmem:[#allocation7 + $0xc8] sm:$0xff]
    %v1138 = vld [vmem:[#allocation7 + $0xd0] sm:$0xff]
    %v1139 = vld [vmem:[#allocation7 + $0xd8] sm:$0xff]
    %v1140 = vld [vmem:[#allocation7 + $0xe0] sm:$0xff]
    %v1141 = vld [vmem:[#allocation7 + $0xe8] sm:$0xff]
    %v1142 = vld [vmem:[#allocation7 + $0xf0] sm:$0xff]
    %v1143 = vld [vmem:[#allocation7 + $0xf8] sm:$0xff]
    %v1176 = vunpack.c.l.b16 %v1112
    %v1177 = vunpack.c.h.b16 %v1112
    %v1178 = vunpack.c.l.b16 %v1113
    %v1179 = vunpack.c.h.b16 %v1113
    %v1180 = vunpack.c.l.b16 %v1114
    %v1181 = vunpack.c.h.b16 %v1114
    %v1182 = vunpack.c.l.b16 %v1115
    %v1183 = vunpack.c.h.b16 %v1115
    %v1184 = vunpack.c.l.b16 %v1116
    %v1185 = vunpack.c.h.b16 %v1116
    %v1186 = vunpack.c.l.b16 %v1117
    %v1187 = vunpack.c.h.b16 %v1117
    %v1188 = vunpack.c.l.b16 %v1118
    %v1189 = vunpack.c.h.b16 %v1118
    %v1190 = vunpack.c.l.b16 %v1119
    %v1191 = vunpack.c.h.b16 %v1119
    %v1192 = vunpack.c.l.b16 %v1120
    %v1193 = vunpack.c.h.b16 %v1120
    %v1194 = vunpack.c.l.b16 %v1121
    %v1195 = vunpack.c.h.b16 %v1121
    %v1196 = vunpack.c.l.b16 %v1122
    %v1197 = vunpack.c.h.b16 %v1122
    %v1198 = vunpack.c.l.b16 %v1123
    %v1199 = vunpack.c.h.b16 %v1123
    %v1200 = vunpack.c.l.b16 %v1124
    %v1201 = vunpack.c.h.b16 %v1124
    %v1202 = vunpack.c.l.b16 %v1125
    %v1203 = vunpack.c.h.b16 %v1125
    %v1204 = vunpack.c.l.b16 %v1126
    %v1205 = vunpack.c.h.b16 %v1126
    %v1206 = vunpack.c.l.b16 %v1127
    %v1207 = vunpack.c.h.b16 %v1127
    %v1208 = vunpack.c.l.b16 %v1128
    %v1209 = vunpack.c.h.b16 %v1128
    %v1210 = vunpack.c.l.b16 %v1129
    %v1211 = vunpack.c.h.b16 %v1129
    %v1212 = vunpack.c.l.b16 %v1130
    %v1213 = vunpack.c.h.b16 %v1130
    %v1214 = vunpack.c.l.b16 %v1131
    %v1215 = vunpack.c.h.b16 %v1131
    %v1216 = vunpack.c.l.b16 %v1132
    %v1217 = vunpack.c.h.b16 %v1132
    %v1218 = vunpack.c.l.b16 %v1133
    %v1219 = vunpack.c.h.b16 %v1133
    %v1220 = vunpack.c.l.b16 %v1134
    %v1221 = vunpack.c.h.b16 %v1134
    %v1222 = vunpack.c.l.b16 %v1135
    %v1223 = vunpack.c.h.b16 %v1135
    %v1224 = vunpack.c.l.b16 %v1136
    %v1225 = vunpack.c.h.b16 %v1136
    %v1226 = vunpack.c.l.b16 %v1137
    %v1227 = vunpack.c.h.b16 %v1137
    %v1228 = vunpack.c.l.b16 %v1138
    %v1229 = vunpack.c.h.b16 %v1138
    %v1230 = vunpack.c.l.b16 %v1139
    %v1231 = vunpack.c.h.b16 %v1139
    %v1232 = vunpack.c.l.b16 %v1140
    %v1233 = vunpack.c.h.b16 %v1140
    %v1234 = vunpack.c.l.b16 %v1141
    %v1235 = vunpack.c.h.b16 %v1141
    %v1236 = vunpack.c.l.b16 %v1142
    %v1237 = vunpack.c.h.b16 %v1142
    %v1238 = vunpack.c.l.b16 %v1143
    %v1239 = vunpack.c.h.b16 %v1143
    %v1240 = vpack.c.b16 %v1180, %v1176
    %v1241 = vpack.c.b16 %v1181, %v1177
    %v1242 = vpack.c.b16 %v1182, %v1178
    %v1243 = vpack.c.b16 %v1183, %v1179
    %v1244 = vpack.c.b16 %v1188, %v1184
    %v1245 = vpack.c.b16 %v1189, %v1185
    %v1246 = vpack.c.b16 %v1190, %v1186
    %v1247 = vpack.c.b16 %v1191, %v1187
    %v1248 = vpack.c.b16 %v1196, %v1192
    %v1249 = vpack.c.b16 %v1197, %v1193
    %v1250 = vpack.c.b16 %v1198, %v1194
    %v1251 = vpack.c.b16 %v1199, %v1195
    %v1252 = vpack.c.b16 %v1204, %v1200
    %v1253 = vpack.c.b16 %v1205, %v1201
    %v1254 = vpack.c.b16 %v1206, %v1202
    %v1255 = vpack.c.b16 %v1207, %v1203
    %v1256 = vpack.c.b16 %v1212, %v1208
    %v1257 = vpack.c.b16 %v1213, %v1209
    %v1258 = vpack.c.b16 %v1214, %v1210
    %v1259 = vpack.c.b16 %v1215, %v1211
    %v1260 = vpack.c.b16 %v1220, %v1216
    %v1261 = vpack.c.b16 %v1221, %v1217
    %v1262 = vpack.c.b16 %v1222, %v1218
    %v1263 = vpack.c.b16 %v1223, %v1219
    %v1264 = vpack.c.b16 %v1228, %v1224
    %v1265 = vpack.c.b16 %v1229, %v1225
    %v1266 = vpack.c.b16 %v1230, %v1226
    %v1267 = vpack.c.b16 %v1231, %v1227
    %v1268 = vpack.c.b16 %v1236, %v1232
    %v1269 = vpack.c.b16 %v1237, %v1233
    %v1270 = vpack.c.b16 %v1238, %v1234
    %v1271 = vpack.c.b16 %v1239, %v1235
    %1304 = vmatprep.subr.bf16.mxu0 %v1269
    %1305 = vmatpush1.bf16.msra.mxu0 %v1268
    %1306 = vmatprep.subr.bf16.mxu0 %v1265
    %1307 = vmatpush1.bf16.msra.mxu0 %v1264
    %1308 = vmatprep.subr.bf16.mxu0 %v1261
    %1309 = vmatpush1.bf16.msra.mxu0 %v1260
    %1310 = vmatprep.subr.bf16.mxu0 %v1257
    %1311 = vmatpush1.bf16.msra.mxu0 %v1256
    %1312 = vmatprep.subr.bf16.mxu0 %v1253
    %1313 = vmatpush1.bf16.msra.mxu0 %v1252
    %1314 = vmatprep.subr.bf16.mxu0 %v1249
    %1315 = vmatpush1.bf16.msra.mxu0 %v1248
    %1316 = vmatprep.subr.bf16.mxu0 %v1245
    %1317 = vmatpush1.bf16.msra.mxu0 %v1244
    %1318 = vmatprep.subr.bf16.mxu0 %v1241
    %1319 = vmatpush1.bf16.msra.mxu0 %v1240
    %1320 = vmatprep.subr.bf16.mxu0 0
    %1321 = vmatpush2.bf16.msra.mxu0 0
    %1322 = vmatprep.subr.bf16.mxu0 0
    %1323 = vmatpush2.bf16.msra.mxu0 0
    %1324 = vmatprep.subr.bf16.mxu0 0
    %1325 = vmatpush2.bf16.msra.mxu0 0
    %1326 = vmatprep.subr.bf16.mxu0 0
    %1327 = vmatpush2.bf16.msra.mxu0 0
    %1328 = vmatprep.subr.bf16.mxu0 0
    %1329 = vmatpush2.bf16.msra.mxu0 0
    %1330 = vmatprep.subr.bf16.mxu0 0
    %1331 = vmatpush2.bf16.msra.mxu0 0
    %1332 = vmatprep.subr.bf16.mxu0 0
    %1333 = vmatpush2.bf16.msra.mxu0 0
    %1334 = vmatprep.subr.bf16.mxu0 0
    %1335 = vmatpush2.bf16.msra.mxu0 0
    %1336 = vmatprep.mubr.bf16.mxu0 0
    %1337 = vmatmul.mubr.bf16.gmra.mxu0 %v1102
    %v1338 = vpop.f32.mrf.mxu0
    %v1339 = vadd.f32 0.0, %v1338
    %v1340 = vpop.f32.mrf.mxu0
    %v1341 = vadd.f32 0.0, %v1340
    %v1342 = vpop.f32.mrf.mxu0
    %v1343 = vpop.f32.mrf.mxu0
    %1344 = vdwg.mxu0
    %1345 = vmatprep.subr.bf16.mxu0 %v1271
    %1346 = vmatpush1.bf16.msra.mxu0 %v1270
    %1347 = vmatprep.subr.bf16.mxu0 %v1267
    %1348 = vmatpush1.bf16.msra.mxu0 %v1266
    %1349 = vmatprep.subr.bf16.mxu0 %v1263
    %1350 = vmatpush1.bf16.msra.mxu0 %v1262
    %1351 = vmatprep.subr.bf16.mxu0 %v1259
    %1352 = vmatpush1.bf16.msra.mxu0 %v1258
    %1353 = vmatprep.subr.bf16.mxu0 %v1255
    %1354 = vmatpush1.bf16.msra.mxu0 %v1254
    %1355 = vmatprep.subr.bf16.mxu0 %v1251
    %1356 = vmatpush1.bf16.msra.mxu0 %v1250
    %1357 = vmatprep.subr.bf16.mxu0 %v1247
    %1358 = vmatpush1.bf16.msra.mxu0 %v1246
    %1359 = vmatprep.subr.bf16.mxu0 %v1243
    %1360 = vmatpush1.bf16.msra.mxu0 %v1242
    %1361 = vmatprep.subr.bf16.mxu0 0
    %1362 = vmatpush2.bf16.msra.mxu0 0
    %1363 = vmatprep.subr.bf16.mxu0 0
    %1364 = vmatpush2.bf16.msra.mxu0 0
    %1365 = vmatprep.subr.bf16.mxu0 0
    %1366 = vmatpush2.bf16.msra.mxu0 0
    %1367 = vmatprep.subr.bf16.mxu0 0
    %1368 = vmatpush2.bf16.msra.mxu0 0
    %1369 = vmatprep.subr.bf16.mxu0 0
    %1370 = vmatpush2.bf16.msra.mxu0 0
    %1371 = vmatprep.subr.bf16.mxu0 0
    %1372 = vmatpush2.bf16.msra.mxu0 0
    %1373 = vmatprep.subr.bf16.mxu0 0
    %1374 = vmatpush2.bf16.msra.mxu0 0
    %1375 = vmatprep.subr.bf16.mxu0 0
    %1376 = vmatpush2.bf16.msra.mxu0 0
    %1377 = vmatprep.mubr.bf16.mxu0 0
    %1378 = vmatmul.mubr.bf16.gmra.mxu0 %v1102
    %v1379 = vpop.f32.mrf.mxu0
    %v1380 = vadd.f32 0.0, %v1379
    %v1381 = vpop.f32.mrf.mxu0
    %v1382 = vadd.f32 0.0, %v1381
    %v1383 = vpop.f32.mrf.mxu0
    %v1384 = vpop.f32.mrf.mxu0
    %1385 = vdwg.mxu0
    %v1386 = vadd.f32 %v1108, %v1339
    %v1387 = vadd.f32 %v1109, %v1341
    %v1388 = vadd.f32 %v1110, %v1380
    %v1389 = vadd.f32 %v1111, %v1382
    %v1390 = vxor.u32 %v1386, 2147483648
    %v1391 = vmul.f32 %v1390, 1.442695
    %v1392 = vpow.pop %v1391
    %v1393 = vadd.f32 %v1392, 1.0
    %v1394 = vrcp.pop %v1393
    %v1395 = vmul.f32 1.0, %v1394
    %v1396 = vxor.u32 %v1387, 2147483648
    %v1397 = vmul.f32 %v1396, 1.442695
    %v1398 = vpow.pop %v1397
    %v1399 = vadd.f32 %v1398, 1.0
    %v1400 = vrcp.pop %v1399
    %v1401 = vmul.f32 1.0, %v1400
    %v1402 = vtanh.pop %v1388
    %v1403 = vxor.u32 %v1389, 2147483648
    %v1404 = vmul.f32 %v1403, 1.442695
    %v1405 = vpow.pop %v1404
    %v1406 = vadd.f32 %v1405, 1.0
    %v1407 = vrcp.pop %v1406
    %v1408 = vmul.f32 1.0, %v1407
    %v1409 = vmul.f32 %v1401, %v1099
    %v1410 = vmul.f32 %v1395, %v1402
    %v1411 = vadd.f32 %v1409, %v1410
    %v1412 = vtanh.pop %v1411
    %v1413 = vmul.f32 %v1408, %v1412
    %v1414 = vpack.c.bf16 %v1413, %v1413
    %s1415 = scalar_lea.vmem %s4, 8
    %1416 = vst [vmem:[%s1415] sm:$0xf] %v1414
    %s1417 = smul.u32 3, 4
    %s1418 = smul.addr %s1417, 8
    %s1419 = scalar_lea.vmem [#allocation2], %s1418
    %v1420 = vld [vmem:[%s1419] sm:$0xff]
    %v1421 = vld [vmem:[%s1419 + $0x8] sm:$0xff]
    %v1422 = vld [vmem:[%s1419 + $0x10] sm:$0xff]
    %v1423 = vld [vmem:[%s1419 + $0x18] sm:$0xff]
    %v1424 = vld [vmem:[#allocation7] sm:$0xff]
    %v1425 = vld [vmem:[#allocation7 + $0x8] sm:$0xff]
    %v1426 = vld [vmem:[#allocation7 + $0x10] sm:$0xff]
    %v1427 = vld [vmem:[#allocation7 + $0x18] sm:$0xff]
    %v1428 = vld [vmem:[#allocation7 + $0x20] sm:$0xff]
    %v1429 = vld [vmem:[#allocation7 + $0x28] sm:$0xff]
    %v1430 = vld [vmem:[#allocation7 + $0x30] sm:$0xff]
    %v1431 = vld [vmem:[#allocation7 + $0x38] sm:$0xff]
    %v1432 = vld [vmem:[#allocation7 + $0x40] sm:$0xff]
    %v1433 = vld [vmem:[#allocation7 + $0x48] sm:$0xff]
    %v1434 = vld [vmem:[#allocation7 + $0x50] sm:$0xff]
    %v1435 = vld [vmem:[#allocation7 + $0x58] sm:$0xff]
    %v1436 = vld [vmem:[#allocation7 + $0x60] sm:$0xff]
    %v1437 = vld [vmem:[#allocation7 + $0x68] sm:$0xff]
    %v1438 = vld [vmem:[#allocation7 + $0x70] sm:$0xff]
    %v1439 = vld [vmem:[#allocation7 + $0x78] sm:$0xff]
    %v1440 = vld [vmem:[#allocation7 + $0x80] sm:$0xff]
    %v1441 = vld [vmem:[#allocation7 + $0x88] sm:$0xff]
    %v1442 = vld [vmem:[#allocation7 + $0x90] sm:$0xff]
    %v1443 = vld [vmem:[#allocation7 + $0x98] sm:$0xff]
    %v1444 = vld [vmem:[#allocation7 + $0xa0] sm:$0xff]
    %v1445 = vld [vmem:[#allocation7 + $0xa8] sm:$0xff]
    %v1446 = vld [vmem:[#allocation7 + $0xb0] sm:$0xff]
    %v1447 = vld [vmem:[#allocation7 + $0xb8] sm:$0xff]
    %v1448 = vld [vmem:[#allocation7 + $0xc0] sm:$0xff]
    %v1449 = vld [vmem:[#allocation7 + $0xc8] sm:$0xff]
    %v1450 = vld [vmem:[#allocation7 + $0xd0] sm:$0xff]
    %v1451 = vld [vmem:[#allocation7 + $0xd8] sm:$0xff]
    %v1452 = vld [vmem:[#allocation7 + $0xe0] sm:$0xff]
    %v1453 = vld [vmem:[#allocation7 + $0xe8] sm:$0xff]
    %v1454 = vld [vmem:[#allocation7 + $0xf0] sm:$0xff]
    %v1455 = vld [vmem:[#allocation7 + $0xf8] sm:$0xff]
    %v1488 = vunpack.c.l.b16 %v1424
    %v1489 = vunpack.c.h.b16 %v1424
    %v1490 = vunpack.c.l.b16 %v1425
    %v1491 = vunpack.c.h.b16 %v1425
    %v1492 = vunpack.c.l.b16 %v1426
    %v1493 = vunpack.c.h.b16 %v1426
    %v1494 = vunpack.c.l.b16 %v1427
    %v1495 = vunpack.c.h.b16 %v1427
    %v1496 = vunpack.c.l.b16 %v1428
    %v1497 = vunpack.c.h.b16 %v1428
    %v1498 = vunpack.c.l.b16 %v1429
    %v1499 = vunpack.c.h.b16 %v1429
    %v1500 = vunpack.c.l.b16 %v1430
    %v1501 = vunpack.c.h.b16 %v1430
    %v1502 = vunpack.c.l.b16 %v1431
    %v1503 = vunpack.c.h.b16 %v1431
    %v1504 = vunpack.c.l.b16 %v1432
    %v1505 = vunpack.c.h.b16 %v1432
    %v1506 = vunpack.c.l.b16 %v1433
    %v1507 = vunpack.c.h.b16 %v1433
    %v1508 = vunpack.c.l.b16 %v1434
    %v1509 = vunpack.c.h.b16 %v1434
    %v1510 = vunpack.c.l.b16 %v1435
    %v1511 = vunpack.c.h.b16 %v1435
    %v1512 = vunpack.c.l.b16 %v1436
    %v1513 = vunpack.c.h.b16 %v1436
    %v1514 = vunpack.c.l.b16 %v1437
    %v1515 = vunpack.c.h.b16 %v1437
    %v1516 = vunpack.c.l.b16 %v1438
    %v1517 = vunpack.c.h.b16 %v1438
    %v1518 = vunpack.c.l.b16 %v1439
    %v1519 = vunpack.c.h.b16 %v1439
    %v1520 = vunpack.c.l.b16 %v1440
    %v1521 = vunpack.c.h.b16 %v1440
    %v1522 = vunpack.c.l.b16 %v1441
    %v1523 = vunpack.c.h.b16 %v1441
    %v1524 = vunpack.c.l.b16 %v1442
    %v1525 = vunpack.c.h.b16 %v1442
    %v1526 = vunpack.c.l.b16 %v1443
    %v1527 = vunpack.c.h.b16 %v1443
    %v1528 = vunpack.c.l.b16 %v1444
    %v1529 = vunpack.c.h.b16 %v1444
    %v1530 = vunpack.c.l.b16 %v1445
    %v1531 = vunpack.c.h.b16 %v1445
    %v1532 = vunpack.c.l.b16 %v1446
    %v1533 = vunpack.c.h.b16 %v1446
    %v1534 = vunpack.c.l.b16 %v1447
    %v1535 = vunpack.c.h.b16 %v1447
    %v1536 = vunpack.c.l.b16 %v1448
    %v1537 = vunpack.c.h.b16 %v1448
    %v1538 = vunpack.c.l.b16 %v1449
    %v1539 = vunpack.c.h.b16 %v1449
    %v1540 = vunpack.c.l.b16 %v1450
    %v1541 = vunpack.c.h.b16 %v1450
    %v1542 = vunpack.c.l.b16 %v1451
    %v1543 = vunpack.c.h.b16 %v1451
    %v1544 = vunpack.c.l.b16 %v1452
    %v1545 = vunpack.c.h.b16 %v1452
    %v1546 = vunpack.c.l.b16 %v1453
    %v1547 = vunpack.c.h.b16 %v1453
    %v1548 = vunpack.c.l.b16 %v1454
    %v1549 = vunpack.c.h.b16 %v1454
    %v1550 = vunpack.c.l.b16 %v1455
    %v1551 = vunpack.c.h.b16 %v1455
    %v1552 = vpack.c.b16 %v1492, %v1488
    %v1553 = vpack.c.b16 %v1493, %v1489
    %v1554 = vpack.c.b16 %v1494, %v1490
    %v1555 = vpack.c.b16 %v1495, %v1491
    %v1556 = vpack.c.b16 %v1500, %v1496
    %v1557 = vpack.c.b16 %v1501, %v1497
    %v1558 = vpack.c.b16 %v1502, %v1498
    %v1559 = vpack.c.b16 %v1503, %v1499
    %v1560 = vpack.c.b16 %v1508, %v1504
    %v1561 = vpack.c.b16 %v1509, %v1505
    %v1562 = vpack.c.b16 %v1510, %v1506
    %v1563 = vpack.c.b16 %v1511, %v1507
    %v1564 = vpack.c.b16 %v1516, %v1512
    %v1565 = vpack.c.b16 %v1517, %v1513
    %v1566 = vpack.c.b16 %v1518, %v1514
    %v1567 = vpack.c.b16 %v1519, %v1515
    %v1568 = vpack.c.b16 %v1524, %v1520
    %v1569 = vpack.c.b16 %v1525, %v1521
    %v1570 = vpack.c.b16 %v1526, %v1522
    %v1571 = vpack.c.b16 %v1527, %v1523
    %v1572 = vpack.c.b16 %v1532, %v1528
    %v1573 = vpack.c.b16 %v1533, %v1529
    %v1574 = vpack.c.b16 %v1534, %v1530
    %v1575 = vpack.c.b16 %v1535, %v1531
    %v1576 = vpack.c.b16 %v1540, %v1536
    %v1577 = vpack.c.b16 %v1541, %v1537
    %v1578 = vpack.c.b16 %v1542, %v1538
    %v1579 = vpack.c.b16 %v1543, %v1539
    %v1580 = vpack.c.b16 %v1548, %v1544
    %v1581 = vpack.c.b16 %v1549, %v1545
    %v1582 = vpack.c.b16 %v1550, %v1546
    %v1583 = vpack.c.b16 %v1551, %v1547
    %1616 = vmatprep.subr.bf16.mxu0 %v1581
    %1617 = vmatpush1.bf16.msra.mxu0 %v1580
    %1618 = vmatprep.subr.bf16.mxu0 %v1577
    %1619 = vmatpush1.bf16.msra.mxu0 %v1576
    %1620 = vmatprep.subr.bf16.mxu0 %v1573
    %1621 = vmatpush1.bf16.msra.mxu0 %v1572
    %1622 = vmatprep.subr.bf16.mxu0 %v1569
    %1623 = vmatpush1.bf16.msra.mxu0 %v1568
    %1624 = vmatprep.subr.bf16.mxu0 %v1565
    %1625 = vmatpush1.bf16.msra.mxu0 %v1564
    %1626 = vmatprep.subr.bf16.mxu0 %v1561
    %1627 = vmatpush1.bf16.msra.mxu0 %v1560
    %1628 = vmatprep.subr.bf16.mxu0 %v1557
    %1629 = vmatpush1.bf16.msra.mxu0 %v1556
    %1630 = vmatprep.subr.bf16.mxu0 %v1553
    %1631 = vmatpush1.bf16.msra.mxu0 %v1552
    %1632 = vmatprep.subr.bf16.mxu0 0
    %1633 = vmatpush2.bf16.msra.mxu0 0
    %1634 = vmatprep.subr.bf16.mxu0 0
    %1635 = vmatpush2.bf16.msra.mxu0 0
    %1636 = vmatprep.subr.bf16.mxu0 0
    %1637 = vmatpush2.bf16.msra.mxu0 0
    %1638 = vmatprep.subr.bf16.mxu0 0
    %1639 = vmatpush2.bf16.msra.mxu0 0
    %1640 = vmatprep.subr.bf16.mxu0 0
    %1641 = vmatpush2.bf16.msra.mxu0 0
    %1642 = vmatprep.subr.bf16.mxu0 0
    %1643 = vmatpush2.bf16.msra.mxu0 0
    %1644 = vmatprep.subr.bf16.mxu0 0
    %1645 = vmatpush2.bf16.msra.mxu0 0
    %1646 = vmatprep.subr.bf16.mxu0 0
    %1647 = vmatpush2.bf16.msra.mxu0 0
    %1648 = vmatprep.mubr.bf16.mxu0 0
    %1649 = vmatmul.mubr.bf16.gmra.mxu0 %v1414
    %v1650 = vpop.f32.mrf.mxu0
    %v1651 = vadd.f32 0.0, %v1650
    %v1652 = vpop.f32.mrf.mxu0
    %v1653 = vadd.f32 0.0, %v1652
    %v1654 = vpop.f32.mrf.mxu0
    %v1655 = vpop.f32.mrf.mxu0
    %1656 = vdwg.mxu0
    %1657 = vmatprep.subr.bf16.mxu0 %v1583
    %1658 = vmatpush1.bf16.msra.mxu0 %v1582
    %1659 = vmatprep.subr.bf16.mxu0 %v1579
    %1660 = vmatpush1.bf16.msra.mxu0 %v1578
    %1661 = vmatprep.subr.bf16.mxu0 %v1575
    %1662 = vmatpush1.bf16.msra.mxu0 %v1574
    %1663 = vmatprep.subr.bf16.mxu0 %v1571
    %1664 = vmatpush1.bf16.msra.mxu0 %v1570
    %1665 = vmatprep.subr.bf16.mxu0 %v1567
    %1666 = vmatpush1.bf16.msra.mxu0 %v1566
    %1667 = vmatprep.subr.bf16.mxu0 %v1563
    %1668 = vmatpush1.bf16.msra.mxu0 %v1562
    %1669 = vmatprep.subr.bf16.mxu0 %v1559
    %1670 = vmatpush1.bf16.msra.mxu0 %v1558
    %1671 = vmatprep.subr.bf16.mxu0 %v1555
    %1672 = vmatpush1.bf16.msra.mxu0 %v1554
    %1673 = vmatprep.subr.bf16.mxu0 0
    %1674 = vmatpush2.bf16.msra.mxu0 0
    %1675 = vmatprep.subr.bf16.mxu0 0
    %1676 = vmatpush2.bf16.msra.mxu0 0
    %1677 = vmatprep.subr.bf16.mxu0 0
    %1678 = vmatpush2.bf16.msra.mxu0 0
    %1679 = vmatprep.subr.bf16.mxu0 0
    %1680 = vmatpush2.bf16.msra.mxu0 0
    %1681 = vmatprep.subr.bf16.mxu0 0
    %1682 = vmatpush2.bf16.msra.mxu0 0
    %1683 = vmatprep.subr.bf16.mxu0 0
    %1684 = vmatpush2.bf16.msra.mxu0 0
    %1685 = vmatprep.subr.bf16.mxu0 0
    %1686 = vmatpush2.bf16.msra.mxu0 0
    %1687 = vmatprep.subr.bf16.mxu0 0
    %1688 = vmatpush2.bf16.msra.mxu0 0
    %1689 = vmatprep.mubr.bf16.mxu0 0
    %1690 = vmatmul.mubr.bf16.gmra.mxu0 %v1414
    %v1691 = vpop.f32.mrf.mxu0
    %v1692 = vadd.f32 0.0, %v1691
    %v1693 = vpop.f32.mrf.mxu0
    %v1694 = vadd.f32 0.0, %v1693
    %v1695 = vpop.f32.mrf.mxu0
    %v1696 = vpop.f32.mrf.mxu0
    %1697 = vdwg.mxu0
    %v1698 = vadd.f32 %v1420, %v1651
    %v1699 = vadd.f32 %v1421, %v1653
    %v1700 = vadd.f32 %v1422, %v1692
    %v1701 = vadd.f32 %v1423, %v1694
    %v1702 = vxor.u32 %v1698, 2147483648
    %v1703 = vmul.f32 %v1702, 1.442695
    %v1704 = vpow.pop %v1703
    %v1705 = vadd.f32 %v1704, 1.0
    %v1706 = vrcp.pop %v1705
    %v1707 = vmul.f32 1.0, %v1706
    %v1708 = vxor.u32 %v1699, 2147483648
    %v1709 = vmul.f32 %v1708, 1.442695
    %v1710 = vpow.pop %v1709
    %v1711 = vadd.f32 %v1710, 1.0
    %v1712 = vrcp.pop %v1711
    %v1713 = vmul.f32 1.0, %v1712
    %v1714 = vtanh.pop %v1700
    %v1715 = vxor.u32 %v1701, 2147483648
    %v1716 = vmul.f32 %v1715, 1.442695
    %v1717 = vpow.pop %v1716
    %v1718 = vadd.f32 %v1717, 1.0
    %v1719 = vrcp.pop %v1718
    %v1720 = vmul.f32 1.0, %v1719
    %v1721 = vmul.f32 %v1713, %v1411
    %v1722 = vmul.f32 %v1707, %v1714
    %v1723 = vadd.f32 %v1721, %v1722
    %v1724 = vtanh.pop %v1723
    %v1725 = vmul.f32 %v1720, %v1724
    %v1726 = vpack.c.bf16 %v1725, %v1725
    %s1727 = scalar_lea.vmem %s4, 12
    %1728 = vst [vmem:[%s1727] sm:$0xf] %v1726
    %s1729 = smul.u32 4, 4
    %s1730 = smul.addr %s1729, 8
    %s1731 = scalar_lea.vmem [#allocation2], %s1730
    %v1732 = vld [vmem:[%s1731] sm:$0xff]
    %v1733 = vld [vmem:[%s1731 + $0x8] sm:$0xff]
    %v1734 = vld [vmem:[%s1731 + $0x10] sm:$0xff]
    %v1735 = vld [vmem:[%s1731 + $0x18] sm:$0xff]
    %v1736 = vld [vmem:[#allocation7] sm:$0xff]
    %v1737 = vld [vmem:[#allocation7 + $0x8] sm:$0xff]
    %v1738 = vld [vmem:[#allocation7 + $0x10] sm:$0xff]
    %v1739 = vld [vmem:[#allocation7 + $0x18] sm:$0xff]
    %v1740 = vld [vmem:[#allocation7 + $0x20] sm:$0xff]
    %v1741 = vld [vmem:[#allocation7 + $0x28] sm:$0xff]
    %v1742 = vld [vmem:[#allocation7 + $0x30] sm:$0xff]
    %v1743 = vld [vmem:[#allocation7 + $0x38] sm:$0xff]
    %v1744 = vld [vmem:[#allocation7 + $0x40] sm:$0xff]
    %v1745 = vld [vmem:[#allocation7 + $0x48] sm:$0xff]
    %v1746 = vld [vmem:[#allocation7 + $0x50] sm:$0xff]
    %v1747 = vld [vmem:[#allocation7 + $0x58] sm:$0xff]
    %v1748 = vld [vmem:[#allocation7 + $0x60] sm:$0xff]
    %v1749 = vld [vmem:[#allocation7 + $0x68] sm:$0xff]
    %v1750 = vld [vmem:[#allocation7 + $0x70] sm:$0xff]
    %v1751 = vld [vmem:[#allocation7 + $0x78] sm:$0xff]
    %v1752 = vld [vmem:[#allocation7 + $0x80] sm:$0xff]
    %v1753 = vld [vmem:[#allocation7 + $0x88] sm:$0xff]
    %v1754 = vld [vmem:[#allocation7 + $0x90] sm:$0xff]
    %v1755 = vld [vmem:[#allocation7 + $0x98] sm:$0xff]
    %v1756 = vld [vmem:[#allocation7 + $0xa0] sm:$0xff]
    %v1757 = vld [vmem:[#allocation7 + $0xa8] sm:$0xff]
    %v1758 = vld [vmem:[#allocation7 + $0xb0] sm:$0xff]
    %v1759 = vld [vmem:[#allocation7 + $0xb8] sm:$0xff]
    %v1760 = vld [vmem:[#allocation7 + $0xc0] sm:$0xff]
    %v1761 = vld [vmem:[#allocation7 + $0xc8] sm:$0xff]
    %v1762 = vld [vmem:[#allocation7 + $0xd0] sm:$0xff]
    %v1763 = vld [vmem:[#allocation7 + $0xd8] sm:$0xff]
    %v1764 = vld [vmem:[#allocation7 + $0xe0] sm:$0xff]
    %v1765 = vld [vmem:[#allocation7 + $0xe8] sm:$0xff]
    %v1766 = vld [vmem:[#allocation7 + $0xf0] sm:$0xff]
    %v1767 = vld [vmem:[#allocation7 + $0xf8] sm:$0xff]
    %v1800 = vunpack.c.l.b16 %v1736
    %v1801 = vunpack.c.h.b16 %v1736
    %v1802 = vunpack.c.l.b16 %v1737
    %v1803 = vunpack.c.h.b16 %v1737
    %v1804 = vunpack.c.l.b16 %v1738
    %v1805 = vunpack.c.h.b16 %v1738
    %v1806 = vunpack.c.l.b16 %v1739
    %v1807 = vunpack.c.h.b16 %v1739
    %v1808 = vunpack.c.l.b16 %v1740
    %v1809 = vunpack.c.h.b16 %v1740
    %v1810 = vunpack.c.l.b16 %v1741
    %v1811 = vunpack.c.h.b16 %v1741
    %v1812 = vunpack.c.l.b16 %v1742
    %v1813 = vunpack.c.h.b16 %v1742
    %v1814 = vunpack.c.l.b16 %v1743
    %v1815 = vunpack.c.h.b16 %v1743
    %v1816 = vunpack.c.l.b16 %v1744
    %v1817 = vunpack.c.h.b16 %v1744
    %v1818 = vunpack.c.l.b16 %v1745
    %v1819 = vunpack.c.h.b16 %v1745
    %v1820 = vunpack.c.l.b16 %v1746
    %v1821 = vunpack.c.h.b16 %v1746
    %v1822 = vunpack.c.l.b16 %v1747
    %v1823 = vunpack.c.h.b16 %v1747
    %v1824 = vunpack.c.l.b16 %v1748
    %v1825 = vunpack.c.h.b16 %v1748
    %v1826 = vunpack.c.l.b16 %v1749
    %v1827 = vunpack.c.h.b16 %v1749
    %v1828 = vunpack.c.l.b16 %v1750
    %v1829 = vunpack.c.h.b16 %v1750
    %v1830 = vunpack.c.l.b16 %v1751
    %v1831 = vunpack.c.h.b16 %v1751
    %v1832 = vunpack.c.l.b16 %v1752
    %v1833 = vunpack.c.h.b16 %v1752
    %v1834 = vunpack.c.l.b16 %v1753
    %v1835 = vunpack.c.h.b16 %v1753
    %v1836 = vunpack.c.l.b16 %v1754
    %v1837 = vunpack.c.h.b16 %v1754
    %v1838 = vunpack.c.l.b16 %v1755
    %v1839 = vunpack.c.h.b16 %v1755
    %v1840 = vunpack.c.l.b16 %v1756
    %v1841 = vunpack.c.h.b16 %v1756
    %v1842 = vunpack.c.l.b16 %v1757
    %v1843 = vunpack.c.h.b16 %v1757
    %v1844 = vunpack.c.l.b16 %v1758
    %v1845 = vunpack.c.h.b16 %v1758
    %v1846 = vunpack.c.l.b16 %v1759
    %v1847 = vunpack.c.h.b16 %v1759
    %v1848 = vunpack.c.l.b16 %v1760
    %v1849 = vunpack.c.h.b16 %v1760
    %v1850 = vunpack.c.l.b16 %v1761
    %v1851 = vunpack.c.h.b16 %v1761
    %v1852 = vunpack.c.l.b16 %v1762
    %v1853 = vunpack.c.h.b16 %v1762
    %v1854 = vunpack.c.l.b16 %v1763
    %v1855 = vunpack.c.h.b16 %v1763
    %v1856 = vunpack.c.l.b16 %v1764
    %v1857 = vunpack.c.h.b16 %v1764
    %v1858 = vunpack.c.l.b16 %v1765
    %v1859 = vunpack.c.h.b16 %v1765
    %v1860 = vunpack.c.l.b16 %v1766
    %v1861 = vunpack.c.h.b16 %v1766
    %v1862 = vunpack.c.l.b16 %v1767
    %v1863 = vunpack.c.h.b16 %v1767
    %v1864 = vpack.c.b16 %v1804, %v1800
    %v1865 = vpack.c.b16 %v1805, %v1801
    %v1866 = vpack.c.b16 %v1806, %v1802
    %v1867 = vpack.c.b16 %v1807, %v1803
    %v1868 = vpack.c.b16 %v1812, %v1808
    %v1869 = vpack.c.b16 %v1813, %v1809
    %v1870 = vpack.c.b16 %v1814, %v1810
    %v1871 = vpack.c.b16 %v1815, %v1811
    %v1872 = vpack.c.b16 %v1820, %v1816
    %v1873 = vpack.c.b16 %v1821, %v1817
    %v1874 = vpack.c.b16 %v1822, %v1818
    %v1875 = vpack.c.b16 %v1823, %v1819
    %v1876 = vpack.c.b16 %v1828, %v1824
    %v1877 = vpack.c.b16 %v1829, %v1825
    %v1878 = vpack.c.b16 %v1830, %v1826
    %v1879 = vpack.c.b16 %v1831, %v1827
    %v1880 = vpack.c.b16 %v1836, %v1832
    %v1881 = vpack.c.b16 %v1837, %v1833
    %v1882 = vpack.c.b16 %v1838, %v1834
    %v1883 = vpack.c.b16 %v1839, %v1835
    %v1884 = vpack.c.b16 %v1844, %v1840
    %v1885 = vpack.c.b16 %v1845, %v1841
    %v1886 = vpack.c.b16 %v1846, %v1842
    %v1887 = vpack.c.b16 %v1847, %v1843
    %v1888 = vpack.c.b16 %v1852, %v1848
    %v1889 = vpack.c.b16 %v1853, %v1849
    %v1890 = vpack.c.b16 %v1854, %v1850
    %v1891 = vpack.c.b16 %v1855, %v1851
    %v1892 = vpack.c.b16 %v1860, %v1856
    %v1893 = vpack.c.b16 %v1861, %v1857
    %v1894 = vpack.c.b16 %v1862, %v1858
    %v1895 = vpack.c.b16 %v1863, %v1859
    %1928 = vmatprep.subr.bf16.mxu0 %v1893
    %1929 = vmatpush1.bf16.msra.mxu0 %v1892
    %1930 = vmatprep.subr.bf16.mxu0 %v1889
    %1931 = vmatpush1.bf16.msra.mxu0 %v1888
    %1932 = vmatprep.subr.bf16.mxu0 %v1885
    %1933 = vmatpush1.bf16.msra.mxu0 %v1884
    %1934 = vmatprep.subr.bf16.mxu0 %v1881
    %1935 = vmatpush1.bf16.msra.mxu0 %v1880
    %1936 = vmatprep.subr.bf16.mxu0 %v1877
    %1937 = vmatpush1.bf16.msra.mxu0 %v1876
    %1938 = vmatprep.subr.bf16.mxu0 %v1873
    %1939 = vmatpush1.bf16.msra.mxu0 %v1872
    %1940 = vmatprep.subr.bf16.mxu0 %v1869
    %1941 = vmatpush1.bf16.msra.mxu0 %v1868
    %1942 = vmatprep.subr.bf16.mxu0 %v1865
    %1943 = vmatpush1.bf16.msra.mxu0 %v1864
    %1944 = vmatprep.subr.bf16.mxu0 0
    %1945 = vmatpush2.bf16.msra.mxu0 0
    %1946 = vmatprep.subr.bf16.mxu0 0
    %1947 = vmatpush2.bf16.msra.mxu0 0
    %1948 = vmatprep.subr.bf16.mxu0 0
    %1949 = vmatpush2.bf16.msra.mxu0 0
    %1950 = vmatprep.subr.bf16.mxu0 0
    %1951 = vmatpush2.bf16.msra.mxu0 0
    %1952 = vmatprep.subr.bf16.mxu0 0
    %1953 = vmatpush2.bf16.msra.mxu0 0
    %1954 = vmatprep.subr.bf16.mxu0 0
    %1955 = vmatpush2.bf16.msra.mxu0 0
    %1956 = vmatprep.subr.bf16.mxu0 0
    %1957 = vmatpush2.bf16.msra.mxu0 0
    %1958 = vmatprep.subr.bf16.mxu0 0
    %1959 = vmatpush2.bf16.msra.mxu0 0
    %1960 = vmatprep.mubr.bf16.mxu0 0
    %1961 = vmatmul.mubr.bf16.gmra.mxu0 %v1726
    %v1962 = vpop.f32.mrf.mxu0
    %v1963 = vadd.f32 0.0, %v1962
    %v1964 = vpop.f32.mrf.mxu0
    %v1965 = vadd.f32 0.0, %v1964
    %v1966 = vpop.f32.mrf.mxu0
    %v1967 = vpop.f32.mrf.mxu0
    %1968 = vdwg.mxu0
    %1969 = vmatprep.subr.bf16.mxu0 %v1895
    %1970 = vmatpush1.bf16.msra.mxu0 %v1894
    %1971 = vmatprep.subr.bf16.mxu0 %v1891
    %1972 = vmatpush1.bf16.msra.mxu0 %v1890
    %1973 = vmatprep.subr.bf16.mxu0 %v1887
    %1974 = vmatpush1.bf16.msra.mxu0 %v1886
    %1975 = vmatprep.subr.bf16.mxu0 %v1883
    %1976 = vmatpush1.bf16.msra.mxu0 %v1882
    %1977 = vmatprep.subr.bf16.mxu0 %v1879
    %1978 = vmatpush1.bf16.msra.mxu0 %v1878
    %1979 = vmatprep.subr.bf16.mxu0 %v1875
    %1980 = vmatpush1.bf16.msra.mxu0 %v1874
    %1981 = vmatprep.subr.bf16.mxu0 %v1871
    %1982 = vmatpush1.bf16.msra.mxu0 %v1870
    %1983 = vmatprep.subr.bf16.mxu0 %v1867
    %1984 = vmatpush1.bf16.msra.mxu0 %v1866
    %1985 = vmatprep.subr.bf16.mxu0 0
    %1986 = vmatpush2.bf16.msra.mxu0 0
    %1987 = vmatprep.subr.bf16.mxu0 0
    %1988 = vmatpush2.bf16.msra.mxu0 0
    %1989 = vmatprep.subr.bf16.mxu0 0
    %1990 = vmatpush2.bf16.msra.mxu0 0
    %1991 = vmatprep.subr.bf16.mxu0 0
    %1992 = vmatpush2.bf16.msra.mxu0 0
    %1993 = vmatprep.subr.bf16.mxu0 0
    %1994 = vmatpush2.bf16.msra.mxu0 0
    %1995 = vmatprep.subr.bf16.mxu0 0
    %1996 = vmatpush2.bf16.msra.mxu0 0
    %1997 = vmatprep.subr.bf16.mxu0 0
    %1998 = vmatpush2.bf16.msra.mxu0 0
    %1999 = vmatprep.subr.bf16.mxu0 0
    %2000 = vmatpush2.bf16.msra.mxu0 0
    %2001 = vmatprep.mubr.bf16.mxu0 0
    %2002 = vmatmul.mubr.bf16.gmra.mxu0 %v1726
    %v2003 = vpop.f32.mrf.mxu0
    %v2004 = vadd.f32 0.0, %v2003
    %v2005 = vpop.f32.mrf.mxu0
    %v2006 = vadd.f32 0.0, %v2005
    %v2007 = vpop.f32.mrf.mxu0
    %v2008 = vpop.f32.mrf.mxu0
    %2009 = vdwg.mxu0
    %v2010 = vadd.f32 %v1732, %v1963
    %v2011 = vadd.f32 %v1733, %v1965
    %v2012 = vadd.f32 %v1734, %v2004
    %v2013 = vadd.f32 %v1735, %v2006
    %v2014 = vxor.u32 %v2010, 2147483648
    %v2015 = vmul.f32 %v2014, 1.442695
    %v2016 = vpow.pop %v2015
    %v2017 = vadd.f32 %v2016, 1.0
    %v2018 = vrcp.pop %v2017
    %v2019 = vmul.f32 1.0, %v2018
    %v2020 = vxor.u32 %v2011, 2147483648
    %v2021 = vmul.f32 %v2020, 1.442695
    %v2022 = vpow.pop %v2021
    %v2023 = vadd.f32 %v2022, 1.0
    %v2024 = vrcp.pop %v2023
    %v2025 = vmul.f32 1.0, %v2024
    %v2026 = vtanh.pop %v2012
    %v2027 = vxor.u32 %v2013, 2147483648
    %v2028 = vmul.f32 %v2027, 1.442695
    %v2029 = vpow.pop %v2028
    %v2030 = vadd.f32 %v2029, 1.0
    %v2031 = vrcp.pop %v2030
    %v2032 = vmul.f32 1.0, %v2031
    %v2033 = vmul.f32 %v2025, %v1723
    %v2034 = vmul.f32 %v2019, %v2026
    %v2035 = vadd.f32 %v2033, %v2034
    %v2036 = vtanh.pop %v2035
    %v2037 = vmul.f32 %v2032, %v2036
    %v2038 = vpack.c.bf16 %v2037, %v2037
    %s2039 = scalar_lea.vmem %s4, 16
    %2040 = vst [vmem:[%s2039] sm:$0xf] %v2038
    %s2041 = smul.u32 5, 4
    %s2042 = smul.addr %s2041, 8
    %s2043 = scalar_lea.vmem [#allocation2], %s2042
    %v2044 = vld [vmem:[%s2043] sm:$0xff]
    %v2045 = vld [vmem:[%s2043 + $0x8] sm:$0xff]
    %v2046 = vld [vmem:[%s2043 + $0x10] sm:$0xff]
    %v2047 = vld [vmem:[%s2043 + $0x18] sm:$0xff]
    %v2048 = vld [vmem:[#allocation7] sm:$0xff]
    %v2049 = vld [vmem:[#allocation7 + $0x8] sm:$0xff]
    %v2050 = vld [vmem:[#allocation7 + $0x10] sm:$0xff]
    %v2051 = vld [vmem:[#allocation7 + $0x18] sm:$0xff]
    %v2052 = vld [vmem:[#allocation7 + $0x20] sm:$0xff]
    %v2053 = vld [vmem:[#allocation7 + $0x28] sm:$0xff]
    %v2054 = vld [vmem:[#allocation7 + $0x30] sm:$0xff]
    %v2055 = vld [vmem:[#allocation7 + $0x38] sm:$0xff]
    %v2056 = vld [vmem:[#allocation7 + $0x40] sm:$0xff]
    %v2057 = vld [vmem:[#allocation7 + $0x48] sm:$0xff]
    %v2058 = vld [vmem:[#allocation7 + $0x50] sm:$0xff]
    %v2059 = vld [vmem:[#allocation7 + $0x58] sm:$0xff]
    %v2060 = vld [vmem:[#allocation7 + $0x60] sm:$0xff]
    %v2061 = vld [vmem:[#allocation7 + $0x68] sm:$0xff]
    %v2062 = vld [vmem:[#allocation7 + $0x70] sm:$0xff]
    %v2063 = vld [vmem:[#allocation7 + $0x78] sm:$0xff]
    %v2064 = vld [vmem:[#allocation7 + $0x80] sm:$0xff]
    %v2065 = vld [vmem:[#allocation7 + $0x88] sm:$0xff]
    %v2066 = vld [vmem:[#allocation7 + $0x90] sm:$0xff]
    %v2067 = vld [vmem:[#allocation7 + $0x98] sm:$0xff]
    %v2068 = vld [vmem:[#allocation7 + $0xa0] sm:$0xff]
    %v2069 = vld [vmem:[#allocation7 + $0xa8] sm:$0xff]
    %v2070 = vld [vmem:[#allocation7 + $0xb0] sm:$0xff]
    %v2071 = vld [vmem:[#allocation7 + $0xb8] sm:$0xff]
    %v2072 = vld [vmem:[#allocation7 + $0xc0] sm:$0xff]
    %v2073 = vld [vmem:[#allocation7 + $0xc8] sm:$0xff]
    %v2074 = vld [vmem:[#allocation7 + $0xd0] sm:$0xff]
    %v2075 = vld [vmem:[#allocation7 + $0xd8] sm:$0xff]
    %v2076 = vld [vmem:[#allocation7 + $0xe0] sm:$0xff]
    %v2077 = vld [vmem:[#allocation7 + $0xe8] sm:$0xff]
    %v2078 = vld [vmem:[#allocation7 + $0xf0] sm:$0xff]
    %v2079 = vld [vmem:[#allocation7 + $0xf8] sm:$0xff]
    %v2112 = vunpack.c.l.b16 %v2048
    %v2113 = vunpack.c.h.b16 %v2048
    %v2114 = vunpack.c.l.b16 %v2049
    %v2115 = vunpack.c.h.b16 %v2049
    %v2116 = vunpack.c.l.b16 %v2050
    %v2117 = vunpack.c.h.b16 %v2050
    %v2118 = vunpack.c.l.b16 %v2051
    %v2119 = vunpack.c.h.b16 %v2051
    %v2120 = vunpack.c.l.b16 %v2052
    %v2121 = vunpack.c.h.b16 %v2052
    %v2122 = vunpack.c.l.b16 %v2053
    %v2123 = vunpack.c.h.b16 %v2053
    %v2124 = vunpack.c.l.b16 %v2054
    %v2125 = vunpack.c.h.b16 %v2054
    %v2126 = vunpack.c.l.b16 %v2055
    %v2127 = vunpack.c.h.b16 %v2055
    %v2128 = vunpack.c.l.b16 %v2056
    %v2129 = vunpack.c.h.b16 %v2056
    %v2130 = vunpack.c.l.b16 %v2057
    %v2131 = vunpack.c.h.b16 %v2057
    %v2132 = vunpack.c.l.b16 %v2058
    %v2133 = vunpack.c.h.b16 %v2058
    %v2134 = vunpack.c.l.b16 %v2059
    %v2135 = vunpack.c.h.b16 %v2059
    %v2136 = vunpack.c.l.b16 %v2060
    %v2137 = vunpack.c.h.b16 %v2060
    %v2138 = vunpack.c.l.b16 %v2061
    %v2139 = vunpack.c.h.b16 %v2061
    %v2140 = vunpack.c.l.b16 %v2062
    %v2141 = vunpack.c.h.b16 %v2062
    %v2142 = vunpack.c.l.b16 %v2063
    %v2143 = vunpack.c.h.b16 %v2063
    %v2144 = vunpack.c.l.b16 %v2064
    %v2145 = vunpack.c.h.b16 %v2064
    %v2146 = vunpack.c.l.b16 %v2065
    %v2147 = vunpack.c.h.b16 %v2065
    %v2148 = vunpack.c.l.b16 %v2066
    %v2149 = vunpack.c.h.b16 %v2066
    %v2150 = vunpack.c.l.b16 %v2067
    %v2151 = vunpack.c.h.b16 %v2067
    %v2152 = vunpack.c.l.b16 %v2068
    %v2153 = vunpack.c.h.b16 %v2068
    %v2154 = vunpack.c.l.b16 %v2069
    %v2155 = vunpack.c.h.b16 %v2069
    %v2156 = vunpack.c.l.b16 %v2070
    %v2157 = vunpack.c.h.b16 %v2070
    %v2158 = vunpack.c.l.b16 %v2071
    %v2159 = vunpack.c.h.b16 %v2071
    %v2160 = vunpack.c.l.b16 %v2072
    %v2161 = vunpack.c.h.b16 %v2072
    %v2162 = vunpack.c.l.b16 %v2073
    %v2163 = vunpack.c.h.b16 %v2073
    %v2164 = vunpack.c.l.b16 %v2074
    %v2165 = vunpack.c.h.b16 %v2074
    %v2166 = vunpack.c.l.b16 %v2075
    %v2167 = vunpack.c.h.b16 %v2075
    %v2168 = vunpack.c.l.b16 %v2076
    %v2169 = vunpack.c.h.b16 %v2076
    %v2170 = vunpack.c.l.b16 %v2077
    %v2171 = vunpack.c.h.b16 %v2077
    %v2172 = vunpack.c.l.b16 %v2078
    %v2173 = vunpack.c.h.b16 %v2078
    %v2174 = vunpack.c.l.b16 %v2079
    %v2175 = vunpack.c.h.b16 %v2079
    %v2176 = vpack.c.b16 %v2116, %v2112
    %v2177 = vpack.c.b16 %v2117, %v2113
    %v2178 = vpack.c.b16 %v2118, %v2114
    %v2179 = vpack.c.b16 %v2119, %v2115
    %v2180 = vpack.c.b16 %v2124, %v2120
    %v2181 = vpack.c.b16 %v2125, %v2121
    %v2182 = vpack.c.b16 %v2126, %v2122
    %v2183 = vpack.c.b16 %v2127, %v2123
    %v2184 = vpack.c.b16 %v2132, %v2128
    %v2185 = vpack.c.b16 %v2133, %v2129
    %v2186 = vpack.c.b16 %v2134, %v2130
    %v2187 = vpack.c.b16 %v2135, %v2131
    %v2188 = vpack.c.b16 %v2140, %v2136
    %v2189 = vpack.c.b16 %v2141, %v2137
    %v2190 = vpack.c.b16 %v2142, %v2138
    %v2191 = vpack.c.b16 %v2143, %v2139
    %v2192 = vpack.c.b16 %v2148, %v2144
    %v2193 = vpack.c.b16 %v2149, %v2145
    %v2194 = vpack.c.b16 %v2150, %v2146
    %v2195 = vpack.c.b16 %v2151, %v2147
    %v2196 = vpack.c.b16 %v2156, %v2152
    %v2197 = vpack.c.b16 %v2157, %v2153
    %v2198 = vpack.c.b16 %v2158, %v2154
    %v2199 = vpack.c.b16 %v2159, %v2155
    %v2200 = vpack.c.b16 %v2164, %v2160
    %v2201 = vpack.c.b16 %v2165, %v2161
    %v2202 = vpack.c.b16 %v2166, %v2162
    %v2203 = vpack.c.b16 %v2167, %v2163
    %v2204 = vpack.c.b16 %v2172, %v2168
    %v2205 = vpack.c.b16 %v2173, %v2169
    %v2206 = vpack.c.b16 %v2174, %v2170
    %v2207 = vpack.c.b16 %v2175, %v2171
    %2240 = vmatprep.subr.bf16.mxu0 %v2205
    %2241 = vmatpush1.bf16.msra.mxu0 %v2204
    %2242 = vmatprep.subr.bf16.mxu0 %v2201
    %2243 = vmatpush1.bf16.msra.mxu0 %v2200
    %2244 = vmatprep.subr.bf16.mxu0 %v2197
    %2245 = vmatpush1.bf16.msra.mxu0 %v2196
    %2246 = vmatprep.subr.bf16.mxu0 %v2193
    %2247 = vmatpush1.bf16.msra.mxu0 %v2192
    %2248 = vmatprep.subr.bf16.mxu0 %v2189
    %2249 = vmatpush1.bf16.msra.mxu0 %v2188
    %2250 = vmatprep.subr.bf16.mxu0 %v2185
    %2251 = vmatpush1.bf16.msra.mxu0 %v2184
    %2252 = vmatprep.subr.bf16.mxu0 %v2181
    %2253 = vmatpush1.bf16.msra.mxu0 %v2180
    %2254 = vmatprep.subr.bf16.mxu0 %v2177
    %2255 = vmatpush1.bf16.msra.mxu0 %v2176
    %2256 = vmatprep.subr.bf16.mxu0 0
    %2257 = vmatpush2.bf16.msra.mxu0 0
    %2258 = vmatprep.subr.bf16.mxu0 0
    %2259 = vmatpush2.bf16.msra.mxu0 0
    %2260 = vmatprep.subr.bf16.mxu0 0
    %2261 = vmatpush2.bf16.msra.mxu0 0
    %2262 = vmatprep.subr.bf16.mxu0 0
    %2263 = vmatpush2.bf16.msra.mxu0 0
    %2264 = vmatprep.subr.bf16.mxu0 0
    %2265 = vmatpush2.bf16.msra.mxu0 0
    %2266 = vmatprep.subr.bf16.mxu0 0
    %2267 = vmatpush2.bf16.msra.mxu0 0
    %2268 = vmatprep.subr.bf16.mxu0 0
    %2269 = vmatpush2.bf16.msra.mxu0 0
    %2270 = vmatprep.subr.bf16.mxu0 0
    %2271 = vmatpush2.bf16.msra.mxu0 0
    %2272 = vmatprep.mubr.bf16.mxu0 0
    %2273 = vmatmul.mubr.bf16.gmra.mxu0 %v2038
    %v2274 = vpop.f32.mrf.mxu0
    %v2275 = vadd.f32 0.0, %v2274
    %v2276 = vpop.f32.mrf.mxu0
    %v2277 = vadd.f32 0.0, %v2276
    %v2278 = vpop.f32.mrf.mxu0
    %v2279 = vpop.f32.mrf.mxu0
    %2280 = vdwg.mxu0
    %2281 = vmatprep.subr.bf16.mxu0 %v2207
    %2282 = vmatpush1.bf16.msra.mxu0 %v2206
    %2283 = vmatprep.subr.bf16.mxu0 %v2203
    %2284 = vmatpush1.bf16.msra.mxu0 %v2202
    %2285 = vmatprep.subr.bf16.mxu0 %v2199
    %2286 = vmatpush1.bf16.msra.mxu0 %v2198
    %2287 = vmatprep.subr.bf16.mxu0 %v2195
    %2288 = vmatpush1.bf16.msra.mxu0 %v2194
    %2289 = vmatprep.subr.bf16.mxu0 %v2191
    %2290 = vmatpush1.bf16.msra.mxu0 %v2190
    %2291 = vmatprep.subr.bf16.mxu0 %v2187
    %2292 = vmatpush1.bf16.msra.mxu0 %v2186
    %2293 = vmatprep.subr.bf16.mxu0 %v2183
    %2294 = vmatpush1.bf16.msra.mxu0 %v2182
    %2295 = vmatprep.subr.bf16.mxu0 %v2179
    %2296 = vmatpush1.bf16.msra.mxu0 %v2178
    %2297 = vmatprep.subr.bf16.mxu0 0
    %2298 = vmatpush2.bf16.msra.mxu0 0
    %2299 = vmatprep.subr.bf16.mxu0 0
    %2300 = vmatpush2.bf16.msra.mxu0 0
    %2301 = vmatprep.subr.bf16.mxu0 0
    %2302 = vmatpush2.bf16.msra.mxu0 0
    %2303 = vmatprep.subr.bf16.mxu0 0
    %2304 = vmatpush2.bf16.msra.mxu0 0
    %2305 = vmatprep.subr.bf16.mxu0 0
    %2306 = vmatpush2.bf16.msra.mxu0 0
    %2307 = vmatprep.subr.bf16.mxu0 0
    %2308 = vmatpush2.bf16.msra.mxu0 0
    %2309 = vmatprep.subr.bf16.mxu0 0
    %2310 = vmatpush2.bf16.msra.mxu0 0
    %2311 = vmatprep.subr.bf16.mxu0 0
    %2312 = vmatpush2.bf16.msra.mxu0 0
    %2313 = vmatprep.mubr.bf16.mxu0 0
    %2314 = vmatmul.mubr.bf16.gmra.mxu0 %v2038
    %v2315 = vpop.f32.mrf.mxu0
    %v2316 = vadd.f32 0.0, %v2315
    %v2317 = vpop.f32.mrf.mxu0
    %v2318 = vadd.f32 0.0, %v2317
    %v2319 = vpop.f32.mrf.mxu0
    %v2320 = vpop.f32.mrf.mxu0
    %2321 = vdwg.mxu0
    %v2322 = vadd.f32 %v2044, %v2275
    %v2323 = vadd.f32 %v2045, %v2277
    %v2324 = vadd.f32 %v2046, %v2316
    %v2325 = vadd.f32 %v2047, %v2318
    %v2326 = vxor.u32 %v2322, 2147483648
    %v2327 = vmul.f32 %v2326, 1.442695
    %v2328 = vpow.pop %v2327
    %v2329 = vadd.f32 %v2328, 1.0
    %v2330 = vrcp.pop %v2329
    %v2331 = vmul.f32 1.0, %v2330
    %v2332 = vxor.u32 %v2323, 2147483648
    %v2333 = vmul.f32 %v2332, 1.442695
    %v2334 = vpow.pop %v2333
    %v2335 = vadd.f32 %v2334, 1.0
    %v2336 = vrcp.pop %v2335
    %v2337 = vmul.f32 1.0, %v2336
    %v2338 = vtanh.pop %v2324
    %v2339 = vxor.u32 %v2325, 2147483648
    %v2340 = vmul.f32 %v2339, 1.442695
    %v2341 = vpow.pop %v2340
    %v2342 = vadd.f32 %v2341, 1.0
    %v2343 = vrcp.pop %v2342
    %v2344 = vmul.f32 1.0, %v2343
    %v2345 = vmul.f32 %v2337, %v2035
    %v2346 = vmul.f32 %v2331, %v2338
    %v2347 = vadd.f32 %v2345, %v2346
    %v2348 = vtanh.pop %v2347
    %v2349 = vmul.f32 %v2344, %v2348
    %v2350 = vpack.c.bf16 %v2349, %v2349
    %s2351 = scalar_lea.vmem %s4, 20
    %2352 = vst [vmem:[%s2351] sm:$0xf] %v2350
    %s2353 = smul.u32 6, 4
    %s2354 = smul.addr %s2353, 8
    %s2355 = scalar_lea.vmem [#allocation2], %s2354
    %v2356 = vld [vmem:[%s2355] sm:$0xff]
    %v2357 = vld [vmem:[%s2355 + $0x8] sm:$0xff]
    %v2358 = vld [vmem:[%s2355 + $0x10] sm:$0xff]
    %v2359 = vld [vmem:[%s2355 + $0x18] sm:$0xff]
    %v2360 = vld [vmem:[#allocation7] sm:$0xff]
    %v2361 = vld [vmem:[#allocation7 + $0x8] sm:$0xff]
    %v2362 = vld [vmem:[#allocation7 + $0x10] sm:$0xff]
    %v2363 = vld [vmem:[#allocation7 + $0x18] sm:$0xff]
    %v2364 = vld [vmem:[#allocation7 + $0x20] sm:$0xff]
    %v2365 = vld [vmem:[#allocation7 + $0x28] sm:$0xff]
    %v2366 = vld [vmem:[#allocation7 + $0x30] sm:$0xff]
    %v2367 = vld [vmem:[#allocation7 + $0x38] sm:$0xff]
    %v2368 = vld [vmem:[#allocation7 + $0x40] sm:$0xff]
    %v2369 = vld [vmem:[#allocation7 + $0x48] sm:$0xff]
    %v2370 = vld [vmem:[#allocation7 + $0x50] sm:$0xff]
    %v2371 = vld [vmem:[#allocation7 + $0x58] sm:$0xff]
    %v2372 = vld [vmem:[#allocation7 + $0x60] sm:$0xff]
    %v2373 = vld [vmem:[#allocation7 + $0x68] sm:$0xff]
    %v2374 = vld [vmem:[#allocation7 + $0x70] sm:$0xff]
    %v2375 = vld [vmem:[#allocation7 + $0x78] sm:$0xff]
    %v2376 = vld [vmem:[#allocation7 + $0x80] sm:$0xff]
    %v2377 = vld [vmem:[#allocation7 + $0x88] sm:$0xff]
    %v2378 = vld [vmem:[#allocation7 + $0x90] sm:$0xff]
    %v2379 = vld [vmem:[#allocation7 + $0x98] sm:$0xff]
    %v2380 = vld [vmem:[#allocation7 + $0xa0] sm:$0xff]
    %v2381 = vld [vmem:[#allocation7 + $0xa8] sm:$0xff]
    %v2382 = vld [vmem:[#allocation7 + $0xb0] sm:$0xff]
    %v2383 = vld [vmem:[#allocation7 + $0xb8] sm:$0xff]
    %v2384 = vld [vmem:[#allocation7 + $0xc0] sm:$0xff]
    %v2385 = vld [vmem:[#allocation7 + $0xc8] sm:$0xff]
    %v2386 = vld [vmem:[#allocation7 + $0xd0] sm:$0xff]
    %v2387 = vld [vmem:[#allocation7 + $0xd8] sm:$0xff]
    %v2388 = vld [vmem:[#allocation7 + $0xe0] sm:$0xff]
    %v2389 = vld [vmem:[#allocation7 + $0xe8] sm:$0xff]
    %v2390 = vld [vmem:[#allocation7 + $0xf0] sm:$0xff]
    %v2391 = vld [vmem:[#allocation7 + $0xf8] sm:$0xff]
    %v2424 = vunpack.c.l.b16 %v2360
    %v2425 = vunpack.c.h.b16 %v2360
    %v2426 = vunpack.c.l.b16 %v2361
    %v2427 = vunpack.c.h.b16 %v2361
    %v2428 = vunpack.c.l.b16 %v2362
    %v2429 = vunpack.c.h.b16 %v2362
    %v2430 = vunpack.c.l.b16 %v2363
    %v2431 = vunpack.c.h.b16 %v2363
    %v2432 = vunpack.c.l.b16 %v2364
    %v2433 = vunpack.c.h.b16 %v2364
    %v2434 = vunpack.c.l.b16 %v2365
    %v2435 = vunpack.c.h.b16 %v2365
    %v2436 = vunpack.c.l.b16 %v2366
    %v2437 = vunpack.c.h.b16 %v2366
    %v2438 = vunpack.c.l.b16 %v2367
    %v2439 = vunpack.c.h.b16 %v2367
    %v2440 = vunpack.c.l.b16 %v2368
    %v2441 = vunpack.c.h.b16 %v2368
    %v2442 = vunpack.c.l.b16 %v2369
    %v2443 = vunpack.c.h.b16 %v2369
    %v2444 = vunpack.c.l.b16 %v2370
    %v2445 = vunpack.c.h.b16 %v2370
    %v2446 = vunpack.c.l.b16 %v2371
    %v2447 = vunpack.c.h.b16 %v2371
    %v2448 = vunpack.c.l.b16 %v2372
    %v2449 = vunpack.c.h.b16 %v2372
    %v2450 = vunpack.c.l.b16 %v2373
    %v2451 = vunpack.c.h.b16 %v2373
    %v2452 = vunpack.c.l.b16 %v2374
    %v2453 = vunpack.c.h.b16 %v2374
    %v2454 = vunpack.c.l.b16 %v2375
    %v2455 = vunpack.c.h.b16 %v2375
    %v2456 = vunpack.c.l.b16 %v2376
    %v2457 = vunpack.c.h.b16 %v2376
    %v2458 = vunpack.c.l.b16 %v2377
    %v2459 = vunpack.c.h.b16 %v2377
    %v2460 = vunpack.c.l.b16 %v2378
    %v2461 = vunpack.c.h.b16 %v2378
    %v2462 = vunpack.c.l.b16 %v2379
    %v2463 = vunpack.c.h.b16 %v2379
    %v2464 = vunpack.c.l.b16 %v2380
    %v2465 = vunpack.c.h.b16 %v2380
    %v2466 = vunpack.c.l.b16 %v2381
    %v2467 = vunpack.c.h.b16 %v2381
    %v2468 = vunpack.c.l.b16 %v2382
    %v2469 = vunpack.c.h.b16 %v2382
    %v2470 = vunpack.c.l.b16 %v2383
    %v2471 = vunpack.c.h.b16 %v2383
    %v2472 = vunpack.c.l.b16 %v2384
    %v2473 = vunpack.c.h.b16 %v2384
    %v2474 = vunpack.c.l.b16 %v2385
    %v2475 = vunpack.c.h.b16 %v2385
    %v2476 = vunpack.c.l.b16 %v2386
    %v2477 = vunpack.c.h.b16 %v2386
    %v2478 = vunpack.c.l.b16 %v2387
    %v2479 = vunpack.c.h.b16 %v2387
    %v2480 = vunpack.c.l.b16 %v2388
    %v2481 = vunpack.c.h.b16 %v2388
    %v2482 = vunpack.c.l.b16 %v2389
    %v2483 = vunpack.c.h.b16 %v2389
    %v2484 = vunpack.c.l.b16 %v2390
    %v2485 = vunpack.c.h.b16 %v2390
    %v2486 = vunpack.c.l.b16 %v2391
    %v2487 = vunpack.c.h.b16 %v2391
    %v2488 = vpack.c.b16 %v2428, %v2424
    %v2489 = vpack.c.b16 %v2429, %v2425
    %v2490 = vpack.c.b16 %v2430, %v2426
    %v2491 = vpack.c.b16 %v2431, %v2427
    %v2492 = vpack.c.b16 %v2436, %v2432
    %v2493 = vpack.c.b16 %v2437, %v2433
    %v2494 = vpack.c.b16 %v2438, %v2434
    %v2495 = vpack.c.b16 %v2439, %v2435
    %v2496 = vpack.c.b16 %v2444, %v2440
    %v2497 = vpack.c.b16 %v2445, %v2441
    %v2498 = vpack.c.b16 %v2446, %v2442
    %v2499 = vpack.c.b16 %v2447, %v2443
    %v2500 = vpack.c.b16 %v2452, %v2448
    %v2501 = vpack.c.b16 %v2453, %v2449
    %v2502 = vpack.c.b16 %v2454, %v2450
    %v2503 = vpack.c.b16 %v2455, %v2451
    %v2504 = vpack.c.b16 %v2460, %v2456
    %v2505 = vpack.c.b16 %v2461, %v2457
    %v2506 = vpack.c.b16 %v2462, %v2458
    %v2507 = vpack.c.b16 %v2463, %v2459
    %v2508 = vpack.c.b16 %v2468, %v2464
    %v2509 = vpack.c.b16 %v2469, %v2465
    %v2510 = vpack.c.b16 %v2470, %v2466
    %v2511 = vpack.c.b16 %v2471, %v2467
    %v2512 = vpack.c.b16 %v2476, %v2472
    %v2513 = vpack.c.b16 %v2477, %v2473
    %v2514 = vpack.c.b16 %v2478, %v2474
    %v2515 = vpack.c.b16 %v2479, %v2475
    %v2516 = vpack.c.b16 %v2484, %v2480
    %v2517 = vpack.c.b16 %v2485, %v2481
    %v2518 = vpack.c.b16 %v2486, %v2482
    %v2519 = vpack.c.b16 %v2487, %v2483
    %2552 = vmatprep.subr.bf16.mxu0 %v2517
    %2553 = vmatpush1.bf16.msra.mxu0 %v2516
    %2554 = vmatprep.subr.bf16.mxu0 %v2513
    %2555 = vmatpush1.bf16.msra.mxu0 %v2512
    %2556 = vmatprep.subr.bf16.mxu0 %v2509
    %2557 = vmatpush1.bf16.msra.mxu0 %v2508
    %2558 = vmatprep.subr.bf16.mxu0 %v2505
    %2559 = vmatpush1.bf16.msra.mxu0 %v2504
    %2560 = vmatprep.subr.bf16.mxu0 %v2501
    %2561 = vmatpush1.bf16.msra.mxu0 %v2500
    %2562 = vmatprep.subr.bf16.mxu0 %v2497
    %2563 = vmatpush1.bf16.msra.mxu0 %v2496
    %2564 = vmatprep.subr.bf16.mxu0 %v2493
    %2565 = vmatpush1.bf16.msra.mxu0 %v2492
    %2566 = vmatprep.subr.bf16.mxu0 %v2489
    %2567 = vmatpush1.bf16.msra.mxu0 %v2488
    %2568 = vmatprep.subr.bf16.mxu0 0
    %2569 = vmatpush2.bf16.msra.mxu0 0
    %2570 = vmatprep.subr.bf16.mxu0 0
    %2571 = vmatpush2.bf16.msra.mxu0 0
    %2572 = vmatprep.subr.bf16.mxu0 0
    %2573 = vmatpush2.bf16.msra.mxu0 0
    %2574 = vmatprep.subr.bf16.mxu0 0
    %2575 = vmatpush2.bf16.msra.mxu0 0
    %2576 = vmatprep.subr.bf16.mxu0 0
    %2577 = vmatpush2.bf16.msra.mxu0 0
    %2578 = vmatprep.subr.bf16.mxu0 0
    %2579 = vmatpush2.bf16.msra.mxu0 0
    %2580 = vmatprep.subr.bf16.mxu0 0
    %2581 = vmatpush2.bf16.msra.mxu0 0
    %2582 = vmatprep.subr.bf16.mxu0 0
    %2583 = vmatpush2.bf16.msra.mxu0 0
    %2584 = vmatprep.mubr.bf16.mxu0 0
    %2585 = vmatmul.mubr.bf16.gmra.mxu0 %v2350
    %v2586 = vpop.f32.mrf.mxu0
    %v2587 = vadd.f32 0.0, %v2586
    %v2588 = vpop.f32.mrf.mxu0
    %v2589 = vadd.f32 0.0, %v2588
    %v2590 = vpop.f32.mrf.mxu0
    %v2591 = vpop.f32.mrf.mxu0
    %2592 = vdwg.mxu0
    %2593 = vmatprep.subr.bf16.mxu0 %v2519
    %2594 = vmatpush1.bf16.msra.mxu0 %v2518
    %2595 = vmatprep.subr.bf16.mxu0 %v2515
    %2596 = vmatpush1.bf16.msra.mxu0 %v2514
    %2597 = vmatprep.subr.bf16.mxu0 %v2511
    %2598 = vmatpush1.bf16.msra.mxu0 %v2510
    %2599 = vmatprep.subr.bf16.mxu0 %v2507
    %2600 = vmatpush1.bf16.msra.mxu0 %v2506
    %2601 = vmatprep.subr.bf16.mxu0 %v2503
    %2602 = vmatpush1.bf16.msra.mxu0 %v2502
    %2603 = vmatprep.subr.bf16.mxu0 %v2499
    %2604 = vmatpush1.bf16.msra.mxu0 %v2498
    %2605 = vmatprep.subr.bf16.mxu0 %v2495
    %2606 = vmatpush1.bf16.msra.mxu0 %v2494
    %2607 = vmatprep.subr.bf16.mxu0 %v2491
    %2608 = vmatpush1.bf16.msra.mxu0 %v2490
    %2609 = vmatprep.subr.bf16.mxu0 0
    %2610 = vmatpush2.bf16.msra.mxu0 0
    %2611 = vmatprep.subr.bf16.mxu0 0
    %2612 = vmatpush2.bf16.msra.mxu0 0
    %2613 = vmatprep.subr.bf16.mxu0 0
    %2614 = vmatpush2.bf16.msra.mxu0 0
    %2615 = vmatprep.subr.bf16.mxu0 0
    %2616 = vmatpush2.bf16.msra.mxu0 0
    %2617 = vmatprep.subr.bf16.mxu0 0
    %2618 = vmatpush2.bf16.msra.mxu0 0
    %2619 = vmatprep.subr.bf16.mxu0 0
    %2620 = vmatpush2.bf16.msra.mxu0 0
    %2621 = vmatprep.subr.bf16.mxu0 0
    %2622 = vmatpush2.bf16.msra.mxu0 0
    %2623 = vmatprep.subr.bf16.mxu0 0
    %2624 = vmatpush2.bf16.msra.mxu0 0
    %2625 = vmatprep.mubr.bf16.mxu0 0
    %2626 = vmatmul.mubr.bf16.gmra.mxu0 %v2350
    %v2627 = vpop.f32.mrf.mxu0
    %v2628 = vadd.f32 0.0, %v2627
    %v2629 = vpop.f32.mrf.mxu0
    %v2630 = vadd.f32 0.0, %v2629
    %v2631 = vpop.f32.mrf.mxu0
    %v2632 = vpop.f32.mrf.mxu0
    %2633 = vdwg.mxu0
    %v2634 = vadd.f32 %v2356, %v2587
    %v2635 = vadd.f32 %v2357, %v2589
    %v2636 = vadd.f32 %v2358, %v2628
    %v2637 = vadd.f32 %v2359, %v2630
    %v2638 = vxor.u32 %v2634, 2147483648
    %v2639 = vmul.f32 %v2638, 1.442695
    %v2640 = vpow.pop %v2639
    %v2641 = vadd.f32 %v2640, 1.0
    %v2642 = vrcp.pop %v2641
    %v2643 = vmul.f32 1.0, %v2642
    %v2644 = vxor.u32 %v2635, 2147483648
    %v2645 = vmul.f32 %v2644, 1.442695
    %v2646 = vpow.pop %v2645
    %v2647 = vadd.f32 %v2646, 1.0
    %v2648 = vrcp.pop %v2647
    %v2649 = vmul.f32 1.0, %v2648
    %v2650 = vtanh.pop %v2636
    %v2651 = vxor.u32 %v2637, 2147483648
    %v2652 = vmul.f32 %v2651, 1.442695
    %v2653 = vpow.pop %v2652
    %v2654 = vadd.f32 %v2653, 1.0
    %v2655 = vrcp.pop %v2654
    %v2656 = vmul.f32 1.0, %v2655
    %v2657 = vmul.f32 %v2649, %v2347
    %v2658 = vmul.f32 %v2643, %v2650
    %v2659 = vadd.f32 %v2657, %v2658
    %v2660 = vtanh.pop %v2659
    %v2661 = vmul.f32 %v2656, %v2660
    %v2662 = vpack.c.bf16 %v2661, %v2661
    %s2663 = scalar_lea.vmem %s4, 24
    %2664 = vst [vmem:[%s2663] sm:$0xf] %v2662
    %s2665 = smul.u32 7, 4
    %s2666 = smul.addr %s2665, 8
    %s2667 = scalar_lea.vmem [#allocation2], %s2666
    %v2668 = vld [vmem:[%s2667] sm:$0xff]
    %v2669 = vld [vmem:[%s2667 + $0x8] sm:$0xff]
    %v2670 = vld [vmem:[%s2667 + $0x10] sm:$0xff]
    %v2671 = vld [vmem:[%s2667 + $0x18] sm:$0xff]
    %v2672 = vld [vmem:[#allocation7] sm:$0xff]
    %v2673 = vld [vmem:[#allocation7 + $0x8] sm:$0xff]
    %v2674 = vld [vmem:[#allocation7 + $0x10] sm:$0xff]
    %v2675 = vld [vmem:[#allocation7 + $0x18] sm:$0xff]
    %v2676 = vld [vmem:[#allocation7 + $0x20] sm:$0xff]
    %v2677 = vld [vmem:[#allocation7 + $0x28] sm:$0xff]
    %v2678 = vld [vmem:[#allocation7 + $0x30] sm:$0xff]
    %v2679 = vld [vmem:[#allocation7 + $0x38] sm:$0xff]
    %v2680 = vld [vmem:[#allocation7 + $0x40] sm:$0xff]
    %v2681 = vld [vmem:[#allocation7 + $0x48] sm:$0xff]
    %v2682 = vld [vmem:[#allocation7 + $0x50] sm:$0xff]
    %v2683 = vld [vmem:[#allocation7 + $0x58] sm:$0xff]
    %v2684 = vld [vmem:[#allocation7 + $0x60] sm:$0xff]
    %v2685 = vld [vmem:[#allocation7 + $0x68] sm:$0xff]
    %v2686 = vld [vmem:[#allocation7 + $0x70] sm:$0xff]
    %v2687 = vld [vmem:[#allocation7 + $0x78] sm:$0xff]
    %v2688 = vld [vmem:[#allocation7 + $0x80] sm:$0xff]
    %v2689 = vld [vmem:[#allocation7 + $0x88] sm:$0xff]
    %v2690 = vld [vmem:[#allocation7 + $0x90] sm:$0xff]
    %v2691 = vld [vmem:[#allocation7 + $0x98] sm:$0xff]
    %v2692 = vld [vmem:[#allocation7 + $0xa0] sm:$0xff]
    %v2693 = vld [vmem:[#allocation7 + $0xa8] sm:$0xff]
    %v2694 = vld [vmem:[#allocation7 + $0xb0] sm:$0xff]
    %v2695 = vld [vmem:[#allocation7 + $0xb8] sm:$0xff]
    %v2696 = vld [vmem:[#allocation7 + $0xc0] sm:$0xff]
    %v2697 = vld [vmem:[#allocation7 + $0xc8] sm:$0xff]
    %v2698 = vld [vmem:[#allocation7 + $0xd0] sm:$0xff]
    %v2699 = vld [vmem:[#allocation7 + $0xd8] sm:$0xff]
    %v2700 = vld [vmem:[#allocation7 + $0xe0] sm:$0xff]
    %v2701 = vld [vmem:[#allocation7 + $0xe8] sm:$0xff]
    %v2702 = vld [vmem:[#allocation7 + $0xf0] sm:$0xff]
    %v2703 = vld [vmem:[#allocation7 + $0xf8] sm:$0xff]
    %v2736 = vunpack.c.l.b16 %v2672
    %v2737 = vunpack.c.h.b16 %v2672
    %v2738 = vunpack.c.l.b16 %v2673
    %v2739 = vunpack.c.h.b16 %v2673
    %v2740 = vunpack.c.l.b16 %v2674
    %v2741 = vunpack.c.h.b16 %v2674
    %v2742 = vunpack.c.l.b16 %v2675
    %v2743 = vunpack.c.h.b16 %v2675
    %v2744 = vunpack.c.l.b16 %v2676
    %v2745 = vunpack.c.h.b16 %v2676
    %v2746 = vunpack.c.l.b16 %v2677
    %v2747 = vunpack.c.h.b16 %v2677
    %v2748 = vunpack.c.l.b16 %v2678
    %v2749 = vunpack.c.h.b16 %v2678
    %v2750 = vunpack.c.l.b16 %v2679
    %v2751 = vunpack.c.h.b16 %v2679
    %v2752 = vunpack.c.l.b16 %v2680
    %v2753 = vunpack.c.h.b16 %v2680
    %v2754 = vunpack.c.l.b16 %v2681
    %v2755 = vunpack.c.h.b16 %v2681
    %v2756 = vunpack.c.l.b16 %v2682
    %v2757 = vunpack.c.h.b16 %v2682
    %v2758 = vunpack.c.l.b16 %v2683
    %v2759 = vunpack.c.h.b16 %v2683
    %v2760 = vunpack.c.l.b16 %v2684
    %v2761 = vunpack.c.h.b16 %v2684
    %v2762 = vunpack.c.l.b16 %v2685
    %v2763 = vunpack.c.h.b16 %v2685
    %v2764 = vunpack.c.l.b16 %v2686
    %v2765 = vunpack.c.h.b16 %v2686
    %v2766 = vunpack.c.l.b16 %v2687
    %v2767 = vunpack.c.h.b16 %v2687
    %v2768 = vunpack.c.l.b16 %v2688
    %v2769 = vunpack.c.h.b16 %v2688
    %v2770 = vunpack.c.l.b16 %v2689
    %v2771 = vunpack.c.h.b16 %v2689
    %v2772 = vunpack.c.l.b16 %v2690
    %v2773 = vunpack.c.h.b16 %v2690
    %v2774 = vunpack.c.l.b16 %v2691
    %v2775 = vunpack.c.h.b16 %v2691
    %v2776 = vunpack.c.l.b16 %v2692
    %v2777 = vunpack.c.h.b16 %v2692
    %v2778 = vunpack.c.l.b16 %v2693
    %v2779 = vunpack.c.h.b16 %v2693
    %v2780 = vunpack.c.l.b16 %v2694
    %v2781 = vunpack.c.h.b16 %v2694
    %v2782 = vunpack.c.l.b16 %v2695
    %v2783 = vunpack.c.h.b16 %v2695
    %v2784 = vunpack.c.l.b16 %v2696
    %v2785 = vunpack.c.h.b16 %v2696
    %v2786 = vunpack.c.l.b16 %v2697
    %v2787 = vunpack.c.h.b16 %v2697
    %v2788 = vunpack.c.l.b16 %v2698
    %v2789 = vunpack.c.h.b16 %v2698
    %v2790 = vunpack.c.l.b16 %v2699
    %v2791 = vunpack.c.h.b16 %v2699
    %v2792 = vunpack.c.l.b16 %v2700
    %v2793 = vunpack.c.h.b16 %v2700
    %v2794 = vunpack.c.l.b16 %v2701
    %v2795 = vunpack.c.h.b16 %v2701
    %v2796 = vunpack.c.l.b16 %v2702
    %v2797 = vunpack.c.h.b16 %v2702
    %v2798 = vunpack.c.l.b16 %v2703
    %v2799 = vunpack.c.h.b16 %v2703
    %v2800 = vpack.c.b16 %v2740, %v2736
    %v2801 = vpack.c.b16 %v2741, %v2737
    %v2802 = vpack.c.b16 %v2742, %v2738
    %v2803 = vpack.c.b16 %v2743, %v2739
    %v2804 = vpack.c.b16 %v2748, %v2744
    %v2805 = vpack.c.b16 %v2749, %v2745
    %v2806 = vpack.c.b16 %v2750, %v2746
    %v2807 = vpack.c.b16 %v2751, %v2747
    %v2808 = vpack.c.b16 %v2756, %v2752
    %v2809 = vpack.c.b16 %v2757, %v2753
    %v2810 = vpack.c.b16 %v2758, %v2754
    %v2811 = vpack.c.b16 %v2759, %v2755
    %v2812 = vpack.c.b16 %v2764, %v2760
    %v2813 = vpack.c.b16 %v2765, %v2761
    %v2814 = vpack.c.b16 %v2766, %v2762
    %v2815 = vpack.c.b16 %v2767, %v2763
    %v2816 = vpack.c.b16 %v2772, %v2768
    %v2817 = vpack.c.b16 %v2773, %v2769
    %v2818 = vpack.c.b16 %v2774, %v2770
    %v2819 = vpack.c.b16 %v2775, %v2771
    %v2820 = vpack.c.b16 %v2780, %v2776
    %v2821 = vpack.c.b16 %v2781, %v2777
    %v2822 = vpack.c.b16 %v2782, %v2778
    %v2823 = vpack.c.b16 %v2783, %v2779
    %v2824 = vpack.c.b16 %v2788, %v2784
    %v2825 = vpack.c.b16 %v2789, %v2785
    %v2826 = vpack.c.b16 %v2790, %v2786
    %v2827 = vpack.c.b16 %v2791, %v2787
    %v2828 = vpack.c.b16 %v2796, %v2792
    %v2829 = vpack.c.b16 %v2797, %v2793
    %v2830 = vpack.c.b16 %v2798, %v2794
    %v2831 = vpack.c.b16 %v2799, %v2795
    %2864 = vmatprep.subr.bf16.mxu0 %v2829
    %2865 = vmatpush1.bf16.msra.mxu0 %v2828
    %2866 = vmatprep.subr.bf16.mxu0 %v2825
    %2867 = vmatpush1.bf16.msra.mxu0 %v2824
    %2868 = vmatprep.subr.bf16.mxu0 %v2821
    %2869 = vmatpush1.bf16.msra.mxu0 %v2820
    %2870 = vmatprep.subr.bf16.mxu0 %v2817
    %2871 = vmatpush1.bf16.msra.mxu0 %v2816
    %2872 = vmatprep.subr.bf16.mxu0 %v2813
    %2873 = vmatpush1.bf16.msra.mxu0 %v2812
    %2874 = vmatprep.subr.bf16.mxu0 %v2809
    %2875 = vmatpush1.bf16.msra.mxu0 %v2808
    %2876 = vmatprep.subr.bf16.mxu0 %v2805
    %2877 = vmatpush1.bf16.msra.mxu0 %v2804
    %2878 = vmatprep.subr.bf16.mxu0 %v2801
    %2879 = vmatpush1.bf16.msra.mxu0 %v2800
    %2880 = vmatprep.subr.bf16.mxu0 0
    %2881 = vmatpush2.bf16.msra.mxu0 0
    %2882 = vmatprep.subr.bf16.mxu0 0
    %2883 = vmatpush2.bf16.msra.mxu0 0
    %2884 = vmatprep.subr.bf16.mxu0 0
    %2885 = vmatpush2.bf16.msra.mxu0 0
    %2886 = vmatprep.subr.bf16.mxu0 0
    %2887 = vmatpush2.bf16.msra.mxu0 0
    %2888 = vmatprep.subr.bf16.mxu0 0
    %2889 = vmatpush2.bf16.msra.mxu0 0
    %2890 = vmatprep.subr.bf16.mxu0 0
    %2891 = vmatpush2.bf16.msra.mxu0 0
    %2892 = vmatprep.subr.bf16.mxu0 0
    %2893 = vmatpush2.bf16.msra.mxu0 0
    %2894 = vmatprep.subr.bf16.mxu0 0
    %2895 = vmatpush2.bf16.msra.mxu0 0
    %2896 = vmatprep.mubr.bf16.mxu0 0
    %2897 = vmatmul.mubr.bf16.gmra.mxu0 %v2662
    %v2898 = vpop.f32.mrf.mxu0
    %v2899 = vadd.f32 0.0, %v2898
    %v2900 = vpop.f32.mrf.mxu0
    %v2901 = vadd.f32 0.0, %v2900
    %v2902 = vpop.f32.mrf.mxu0
    %v2903 = vpop.f32.mrf.mxu0
    %2904 = vdwg.mxu0
    %2905 = vmatprep.subr.bf16.mxu0 %v2831
    %2906 = vmatpush1.bf16.msra.mxu0 %v2830
    %2907 = vmatprep.subr.bf16.mxu0 %v2827
    %2908 = vmatpush1.bf16.msra.mxu0 %v2826
    %2909 = vmatprep.subr.bf16.mxu0 %v2823
    %2910 = vmatpush1.bf16.msra.mxu0 %v2822
    %2911 = vmatprep.subr.bf16.mxu0 %v2819
    %2912 = vmatpush1.bf16.msra.mxu0 %v2818
    %2913 = vmatprep.subr.bf16.mxu0 %v2815
    %2914 = vmatpush1.bf16.msra.mxu0 %v2814
    %2915 = vmatprep.subr.bf16.mxu0 %v2811
    %2916 = vmatpush1.bf16.msra.mxu0 %v2810
    %2917 = vmatprep.subr.bf16.mxu0 %v2807
    %2918 = vmatpush1.bf16.msra.mxu0 %v2806
    %2919 = vmatprep.subr.bf16.mxu0 %v2803
    %2920 = vmatpush1.bf16.msra.mxu0 %v2802
    %2921 = vmatprep.subr.bf16.mxu0 0
    %2922 = vmatpush2.bf16.msra.mxu0 0
    %2923 = vmatprep.subr.bf16.mxu0 0
    %2924 = vmatpush2.bf16.msra.mxu0 0
    %2925 = vmatprep.subr.bf16.mxu0 0
    %2926 = vmatpush2.bf16.msra.mxu0 0
    %2927 = vmatprep.subr.bf16.mxu0 0
    %2928 = vmatpush2.bf16.msra.mxu0 0
    %2929 = vmatprep.subr.bf16.mxu0 0
    %2930 = vmatpush2.bf16.msra.mxu0 0
    %2931 = vmatprep.subr.bf16.mxu0 0
    %2932 = vmatpush2.bf16.msra.mxu0 0
    %2933 = vmatprep.subr.bf16.mxu0 0
    %2934 = vmatpush2.bf16.msra.mxu0 0
    %2935 = vmatprep.subr.bf16.mxu0 0
    %2936 = vmatpush2.bf16.msra.mxu0 0
    %2937 = vmatprep.mubr.bf16.mxu0 0
    %2938 = vmatmul.mubr.bf16.gmra.mxu0 %v2662
    %v2939 = vpop.f32.mrf.mxu0
    %v2940 = vadd.f32 0.0, %v2939
    %v2941 = vpop.f32.mrf.mxu0
    %v2942 = vadd.f32 0.0, %v2941
    %v2943 = vpop.f32.mrf.mxu0
    %v2944 = vpop.f32.mrf.mxu0
    %2945 = vdwg.mxu0
    %v2946 = vadd.f32 %v2668, %v2899
    %v2947 = vadd.f32 %v2669, %v2901
    %v2948 = vadd.f32 %v2670, %v2940
    %v2949 = vadd.f32 %v2671, %v2942
    %v2950 = vxor.u32 %v2946, 2147483648
    %v2951 = vmul.f32 %v2950, 1.442695
    %v2952 = vpow.pop %v2951
    %v2953 = vadd.f32 %v2952, 1.0
    %v2954 = vrcp.pop %v2953
    %v2955 = vmul.f32 1.0, %v2954
    %v2956 = vxor.u32 %v2947, 2147483648
    %v2957 = vmul.f32 %v2956, 1.442695
    %v2958 = vpow.pop %v2957
    %v2959 = vadd.f32 %v2958, 1.0
    %v2960 = vrcp.pop %v2959
    %v2961 = vmul.f32 1.0, %v2960
    %v2962 = vtanh.pop %v2948
    %v2963 = vxor.u32 %v2949, 2147483648
    %v2964 = vmul.f32 %v2963, 1.442695
    %v2965 = vpow.pop %v2964
    %v2966 = vadd.f32 %v2965, 1.0
    %v2967 = vrcp.pop %v2966
    %v2968 = vmul.f32 1.0, %v2967
    %v2969 = vmul.f32 %v2961, %v2659
    %v2970 = vmul.f32 %v2955, %v2962
    %v2971 = vadd.f32 %v2969, %v2970
    %v2972 = vtanh.pop %v2971
    %v2973 = vmul.f32 %v2968, %v2972
    %v2974 = vpack.c.bf16 %v2973, %v2973
    %s2975 = scalar_lea.vmem %s4, 28
    %2976 = vst [vmem:[%s2975] sm:$0xf] %v2974
    %2977 = vst [vmem:[#allocation3] sm:$0xff] %v2973
    %2978 = vst [vmem:[#allocation4] sm:$0xff] %v2971
    // Predicated region
    $region30: #{lstm_encoder_forward.2} parent=1 // pred_check
      %p2979 = pneg %p49
    $region31: #{lstm_encoder_forward.2} parent=1 // pred_check_branch
      %2981 = sbr.rel (%p2979) target = $region33
    $region32: #{lstm_encoder_forward.2} parent=1 // pred_region
      %v2982 = vld [vmem:[#allocation3] sm:$0xff]
      %2983 = vst [vmem:[%s5] sm:$0xff] %v2982
      %v2984 = vld [vmem:[#allocation4] sm:$0xff]
      %2985 = vst [vmem:[%s6] sm:$0xff] %v2984
    $region33: #{lstm_encoder_forward.2} parent=1 // pred_fallthru
      _
    // Predicated region
    $region34: #{lstm_encoder_forward.2} parent=1 // pred_check
      _
    $region35: #{lstm_encoder_forward.2} parent=1 // pred_check_branch
      %2987 = sbr.rel (0) target = $region37
    $region36: #{lstm_encoder_forward.2} parent=1 // pred_region
      _
    $region37: #{lstm_encoder_forward.2} parent=1 // pred_fallthru
      _
    // Predicated region
    $region38: #{lstm_encoder_forward.2} parent=1 // pred_check
      _
    $region39: #{lstm_encoder_forward.2} parent=1 // pred_check_branch
      %2989 = sbr.rel (0) target = $region41
    $region40: #{lstm_encoder_forward.2} parent=1 // pred_region
      _
    $region41: #{lstm_encoder_forward.2} parent=1 // pred_fallthru
      _
    // Predicated region
    $region42: #{lstm_encoder_forward.2} parent=1 // pred_check
      _
    $region43: #{lstm_encoder_forward.2} parent=1 // pred_check_branch
      %2991 = sbr.rel (0) target = $region45
    $region44: #{lstm_encoder_forward.2} parent=1 // pred_region
      _
    $region45: #{lstm_encoder_forward.2} parent=1 // pred_fallthru
      _
    // Predicated region
    $region46: #{lstm_encoder_forward.2} parent=1 // pred_check
      _
    $region47: #{lstm_encoder_forward.2} parent=1 // pred_check_branch
      %2993 = sbr.rel (0) target = $region49
    $region48: #{lstm_encoder_forward.2} parent=1 // pred_region
      _
    $region49: #{lstm_encoder_forward.2} parent=1 // pred_fallthru
      _
    // Predicated region
    $region50: #{lstm_encoder_forward.2} parent=1 // pred_check
      _
    $region51: #{lstm_encoder_forward.2} parent=1 // pred_check_branch
      %2995 = sbr.rel (0) target = $region53
    $region52: #{lstm_encoder_forward.2} parent=1 // pred_region
      _
    $region53: #{lstm_encoder_forward.2} parent=1 // pred_fallthru
      _
    // Predicated region
    $region54: #{lstm_encoder_forward.2} parent=1 // pred_check
      _
    $region55: #{lstm_encoder_forward.2} parent=1 // pred_check_branch
      %2997 = sbr.rel (0) target = $region57
    $region56: #{lstm_encoder_forward.2} parent=1 // pred_region
      _
    $region57: #{lstm_encoder_forward.2} parent=1 // pred_fallthru
      _
    %2998 = vsyncpa [#allocation6], 1
    %2999 = vsyncpa [#allocation8], 1

// kernel: lstm_encoder_forward.3
$region0: #{lstm_encoder_forward.3}
  #allocation0 [shape = 'u32[]', space=smem, size = 0x4, offset = 0x4, fixed_abs, tag = 'smem constant byte address 0x4 - core index']
  #allocation1 [shape = 'u32[144,128]{1,0:T(1,128)}', space=vmem, size = 0x12000, scoped, tag = 'internal scratch']
  #allocation2 [shape = 'f32[64,512]{1,0:T(8,128)}', space=vmem, size = 0x20000, scoped, tag = 'scratch operand']
  #allocation3 [shape = 'f32[8,128]{1,0:T(8,128)}', space=vmem, size = 0x1000, scoped, tag = 'scratch operand']
  #allocation4 [shape = 'f32[8,128]{1,0:T(8,128)}', space=vmem, size = 0x1000, scoped, tag = 'scratch operand']
  %s0 = inlined_call_operand.vmem [shape: bf16[1,64,128], index: 0, kind: input, shape index: {}]
  %s1 = inlined_call_operand.vmem [shape: bf16[128,512], index: 1, kind: input, shape index: {}]
  %s2 = inlined_call_operand.vmem [shape: bf16[128,512], index: 2, kind: input, shape index: {}]
  %s3 = inlined_call_operand.vmem [shape: f32[1,512], index: 3, kind: input, shape index: {}]
  %s4 = inlined_call_operand.vmem [shape: f32[1,64,128], index: 4, kind: output, shape index: {0}]
  %s5 = inlined_call_operand.vmem [shape: f32[8,128], index: 5, kind: output, shape index: {1}]
  %s6 = inlined_call_operand.vmem [shape: f32[8,128], index: 6, kind: output, shape index: {2}]
  %7 = xla_tuple %s4, %s5, %s6
  %s8 = sld [smem:[#allocation0]]
  $region50: #{lstm_encoder_forward.3} parent=0
    _
  %s10 = ssub.s32 1, %s8
  %s11 = scalar_select 0, %s10, %s8
  // Predicated region
  $region2: #{lstm_encoder_forward.3} parent=0 // pred_check
    _
  $region3: #{lstm_encoder_forward.3} parent=0 // pred_check_branch
    %13 = sbr.rel (0) target = $region5
  $region4: #{lstm_encoder_forward.3} parent=0 // pred_region
    _
  $region5: #{lstm_encoder_forward.3} parent=0 // pred_fallthru
    _
  // Predicated region
  $region6: #{lstm_encoder_forward.3} parent=0 // pred_check
    _
  $region7: #{lstm_encoder_forward.3} parent=0 // pred_check_branch
    %15 = sbr.rel (0) target = $region9
  $region8: #{lstm_encoder_forward.3} parent=0 // pred_region
    _
  $region9: #{lstm_encoder_forward.3} parent=0 // pred_fallthru
    _
  // Predicated region
  $region10: #{lstm_encoder_forward.3} parent=0 // pred_check
    _
  $region11: #{lstm_encoder_forward.3} parent=0 // pred_check_branch
    %17 = sbr.rel (0) target = $region13
  $region12: #{lstm_encoder_forward.3} parent=0 // pred_region
    _
  $region13: #{lstm_encoder_forward.3} parent=0 // pred_fallthru
    _
  // Predicated region
  $region14: #{lstm_encoder_forward.3} parent=0 // pred_check
    _
  $region15: #{lstm_encoder_forward.3} parent=0 // pred_check_branch
    %19 = sbr.rel (0) target = $region17
  $region16: #{lstm_encoder_forward.3} parent=0 // pred_region
    _
  $region17: #{lstm_encoder_forward.3} parent=0 // pred_fallthru
    _
  %p21 = scmp.eq.s32.totalorder 0, 0
  // Predicated region
  $region18: #{lstm_encoder_forward.3} parent=0 // pred_check
    %p22 = pneg %p21
  $region19: #{lstm_encoder_forward.3} parent=0 // pred_check_branch
    %24 = sbr.rel (%p22) target = $region21
  $region20: #{lstm_encoder_forward.3} parent=0 // pred_region
    %25 = vst [vmem:[#allocation3] sm:$0xff] 0.0
    %26 = vst [vmem:[#allocation4] sm:$0xff] 0.0
  $region21: #{lstm_encoder_forward.3} parent=0 // pred_fallthru
    _
  %v27 = vld [vmem:[%s0] sm:$0xf]
  %v28 = vld [vmem:[%s0 + $0x4] sm:$0xf]
  %v29 = vld [vmem:[%s0 + $0x8] sm:$0xf]
  %v30 = vld [vmem:[%s0 + $0xc] sm:$0xf]
  %v31 = vld [vmem:[%s0 + $0x10] sm:$0xf]
  %v32 = vld [vmem:[%s0 + $0x14] sm:$0xf]
  %v33 = vld [vmem:[%s0 + $0x18] sm:$0xf]
  %v34 = vld [vmem:[%s0 + $0x1c] sm:$0xf]
  %v35 = vld [vmem:[%s1] sm:$0xff]
  %v36 = vld [vmem:[%s1 + $0x8] sm:$0xff]
  %v37 = vld [vmem:[%s1 + $0x10] sm:$0xff]
  %v38 = vld [vmem:[%s1 + $0x18] sm:$0xff]
  %v39 = vld [vmem:[%s1 + $0x20] sm:$0xff]
  %v40 = vld [vmem:[%s1 + $0x28] sm:$0xff]
  %v41 = vld [vmem:[%s1 + $0x30] sm:$0xff]
  %v42 = vld [vmem:[%s1 + $0x38] sm:$0xff]
  %v43 = vld [vmem:[%s1 + $0x40] sm:$0xff]
  %v44 = vld [vmem:[%s1 + $0x48] sm:$0xff]
  %v45 = vld [vmem:[%s1 + $0x50] sm:$0xff]
  %v46 = vld [vmem:[%s1 + $0x58] sm:$0xff]
  %v47 = vld [vmem:[%s1 + $0x60] sm:$0xff]
  %v48 = vld [vmem:[%s1 + $0x68] sm:$0xff]
  %v49 = vld [vmem:[%s1 + $0x70] sm:$0xff]
  %v50 = vld [vmem:[%s1 + $0x78] sm:$0xff]
  %v51 = vld [vmem:[%s1 + $0x80] sm:$0xff]
  %v52 = vld [vmem:[%s1 + $0x88] sm:$0xff]
  %v53 = vld [vmem:[%s1 + $0x90] sm:$0xff]
  %v54 = vld [vmem:[%s1 + $0x98] sm:$0xff]
  %v55 = vld [vmem:[%s1 + $0xa0] sm:$0xff]
  %v56 = vld [vmem:[%s1 + $0xa8] sm:$0xff]
  %v57 = vld [vmem:[%s1 + $0xb0] sm:$0xff]
  %v58 = vld [vmem:[%s1 + $0xb8] sm:$0xff]
  %v59 = vld [vmem:[%s1 + $0xc0] sm:$0xff]
  %v60 = vld [vmem:[%s1 + $0xc8] sm:$0xff]
  %v61 = vld [vmem:[%s1 + $0xd0] sm:$0xff]
  %v62 = vld [vmem:[%s1 + $0xd8] sm:$0xff]
  %v63 = vld [vmem:[%s1 + $0xe0] sm:$0xff]
  %v64 = vld [vmem:[%s1 + $0xe8] sm:$0xff]
  %v65 = vld [vmem:[%s1 + $0xf0] sm:$0xff]
  %v66 = vld [vmem:[%s1 + $0xf8] sm:$0xff]
  %v67 = vld [vmem:[%s3] sm:$0xf]
  %v69 = vlaneseq
  %v70 = vshrl.u32 %v69, 7
  %v71 = vsub.s32 0, %v70
  %v72 = vrot.slane %v67, %v71
  %v73 = vlaneseq
  %v74 = vshrl.u32 %v73, 7
  %v75 = vsub.s32 1, %v74
  %v76 = vrot.slane %v67, %v75
  %v77 = vlaneseq
  %v78 = vshrl.u32 %v77, 7
  %v79 = vsub.s32 2, %v78
  %v80 = vrot.slane %v67, %v79
  %v81 = vlaneseq
  %v82 = vshrl.u32 %v81, 7
  %v83 = vsub.s32 3, %v82
  %v84 = vrot.slane %v67, %v83
  %v97 = vunpack.c.l.b16 %v27
  %v98 = vunpack.c.l.b16 %v28
  %v99 = vunpack.c.l.b16 %v29
  %v100 = vunpack.c.l.b16 %v30
  %v101 = vunpack.c.l.b16 %v31
  %v102 = vunpack.c.l.b16 %v32
  %v103 = vunpack.c.l.b16 %v33
  %v104 = vunpack.c.l.b16 %v34
  %v105 = vpack.c.b16 %v98, %v97
  %v106 = vpack.c.b16 %v100, %v99
  %v107 = vpack.c.b16 %v102, %v101
  %v108 = vpack.c.b16 %v104, %v103
  %v145 = vunpack.c.l.b16 %v35
  %v146 = vunpack.c.h.b16 %v35
  %v147 = vunpack.c.l.b16 %v36
  %v148 = vunpack.c.h.b16 %v36
  %v149 = vunpack.c.l.b16 %v37
  %v150 = vunpack.c.h.b16 %v37
  %v151 = vunpack.c.l.b16 %v38
  %v152 = vunpack.c.h.b16 %v38
  %v153 = vunpack.c.l.b16 %v39
  %v154 = vunpack.c.h.b16 %v39
  %v155 = vunpack.c.l.b16 %v40
  %v156 = vunpack.c.h.b16 %v40
  %v157 = vunpack.c.l.b16 %v41
  %v158 = vunpack.c.h.b16 %v41
  %v159 = vunpack.c.l.b16 %v42
  %v160 = vunpack.c.h.b16 %v42
  %v161 = vunpack.c.l.b16 %v43
  %v162 = vunpack.c.h.b16 %v43
  %v163 = vunpack.c.l.b16 %v44
  %v164 = vunpack.c.h.b16 %v44
  %v165 = vunpack.c.l.b16 %v45
  %v166 = vunpack.c.h.b16 %v45
  %v167 = vunpack.c.l.b16 %v46
  %v168 = vunpack.c.h.b16 %v46
  %v169 = vunpack.c.l.b16 %v47
  %v170 = vunpack.c.h.b16 %v47
  %v171 = vunpack.c.l.b16 %v48
  %v172 = vunpack.c.h.b16 %v48
  %v173 = vunpack.c.l.b16 %v49
  %v174 = vunpack.c.h.b16 %v49
  %v175 = vunpack.c.l.b16 %v50
  %v176 = vunpack.c.h.b16 %v50
  %v177 = vunpack.c.l.b16 %v51
  %v178 = vunpack.c.h.b16 %v51
  %v179 = vunpack.c.l.b16 %v52
  %v180 = vunpack.c.h.b16 %v52
  %v181 = vunpack.c.l.b16 %v53
  %v182 = vunpack.c.h.b16 %v53
  %v183 = vunpack.c.l.b16 %v54
  %v184 = vunpack.c.h.b16 %v54
  %v185 = vunpack.c.l.b16 %v55
  %v186 = vunpack.c.h.b16 %v55
  %v187 = vunpack.c.l.b16 %v56
  %v188 = vunpack.c.h.b16 %v56
  %v189 = vunpack.c.l.b16 %v57
  %v190 = vunpack.c.h.b16 %v57
  %v191 = vunpack.c.l.b16 %v58
  %v192 = vunpack.c.h.b16 %v58
  %v193 = vunpack.c.l.b16 %v59
  %v194 = vunpack.c.h.b16 %v59
  %v195 = vunpack.c.l.b16 %v60
  %v196 = vunpack.c.h.b16 %v60
  %v197 = vunpack.c.l.b16 %v61
  %v198 = vunpack.c.h.b16 %v61
  %v199 = vunpack.c.l.b16 %v62
  %v200 = vunpack.c.h.b16 %v62
  %v201 = vunpack.c.l.b16 %v63
  %v202 = vunpack.c.h.b16 %v63
  %v203 = vunpack.c.l.b16 %v64
  %v204 = vunpack.c.h.b16 %v64
  %v205 = vunpack.c.l.b16 %v65
  %v206 = vunpack.c.h.b16 %v65
  %v207 = vunpack.c.l.b16 %v66
  %v208 = vunpack.c.h.b16 %v66
  %v209 = vpack.c.b16 %v149, %v145
  %v210 = vpack.c.b16 %v150, %v146
  %v211 = vpack.c.b16 %v151, %v147
  %v212 = vpack.c.b16 %v152, %v148
  %v213 = vpack.c.b16 %v157, %v153
  %v214 = vpack.c.b16 %v158, %v154
  %v215 = vpack.c.b16 %v159, %v155
  %v216 = vpack.c.b16 %v160, %v156
  %v217 = vpack.c.b16 %v165, %v161
  %v218 = vpack.c.b16 %v166, %v162
  %v219 = vpack.c.b16 %v167, %v163
  %v220 = vpack.c.b16 %v168, %v164
  %v221 = vpack.c.b16 %v173, %v169
  %v222 = vpack.c.b16 %v174, %v170
  %v223 = vpack.c.b16 %v175, %v171
  %v224 = vpack.c.b16 %v176, %v172
  %v225 = vpack.c.b16 %v181, %v177
  %v226 = vpack.c.b16 %v182, %v178
  %v227 = vpack.c.b16 %v183, %v179
  %v228 = vpack.c.b16 %v184, %v180
  %v229 = vpack.c.b16 %v189, %v185
  %v230 = vpack.c.b16 %v190, %v186
  %v231 = vpack.c.b16 %v191, %v187
  %v232 = vpack.c.b16 %v192, %v188
  %v233 = vpack.c.b16 %v197, %v193
  %v234 = vpack.c.b16 %v198, %v194
  %v235 = vpack.c.b16 %v199, %v195
  %v236 = vpack.c.b16 %v200, %v196
  %v237 = vpack.c.b16 %v205, %v201
  %v238 = vpack.c.b16 %v206, %v202
  %v239 = vpack.c.b16 %v207, %v203
  %v240 = vpack.c.b16 %v208, %v204
  %273 = vmatprep.subr.bf16.mxu0 %v238
  %274 = vmatpush1.bf16.msra.mxu0 %v237
  %275 = vmatprep.subr.bf16.mxu0 %v234
  %276 = vmatpush1.bf16.msra.mxu0 %v233
  %277 = vmatprep.subr.bf16.mxu0 %v230
  %278 = vmatpush1.bf16.msra.mxu0 %v229
  %279 = vmatprep.subr.bf16.mxu0 %v226
  %280 = vmatpush1.bf16.msra.mxu0 %v225
  %281 = vmatprep.subr.bf16.mxu0 %v222
  %282 = vmatpush1.bf16.msra.mxu0 %v221
  %283 = vmatprep.subr.bf16.mxu0 %v218
  %284 = vmatpush1.bf16.msra.mxu0 %v217
  %285 = vmatprep.subr.bf16.mxu0 %v214
  %286 = vmatpush1.bf16.msra.mxu0 %v213
  %287 = vmatprep.subr.bf16.mxu0 %v210
  %288 = vmatpush1.bf16.msra.mxu0 %v209
  %289 = vmatprep.subr.bf16.mxu0 0
  %290 = vmatpush2.bf16.msra.mxu0 0
  %291 = vmatprep.subr.bf16.mxu0 0
  %292 = vmatpush2.bf16.msra.mxu0 0
  %293 = vmatprep.subr.bf16.mxu0 0
  %294 = vmatpush2.bf16.msra.mxu0 0
  %295 = vmatprep.subr.bf16.mxu0 0
  %296 = vmatpush2.bf16.msra.mxu0 0
  %297 = vmatprep.subr.bf16.mxu0 0
  %298 = vmatpush2.bf16.msra.mxu0 0
  %299 = vmatprep.subr.bf16.mxu0 0
  %300 = vmatpush2.bf16.msra.mxu0 0
  %301 = vmatprep.subr.bf16.mxu0 0
  %302 = vmatpush2.bf16.msra.mxu0 0
  %303 = vmatprep.subr.bf16.mxu0 0
  %304 = vmatpush2.bf16.msra.mxu0 0
  %305 = vmatprep.mubr.bf16.mxu0 0
  %306 = vmatmul.mubr.bf16.gmra.mxu0 %v105
  %v307 = vpop.f32.mrf.mxu0
  %v308 = vadd.f32 %v72, %v307
  %v309 = vpop.f32.mrf.mxu0
  %v310 = vadd.f32 %v76, %v309
  %v311 = vpop.f32.mrf.mxu0
  %v312 = vadd.f32 %v72, %v311
  %v313 = vpop.f32.mrf.mxu0
  %v314 = vadd.f32 %v76, %v313
  %315 = vmatprep.mubr.bf16.mxu0 0
  %316 = vmatmul.mubr.bf16.gmra.mxu0 %v106
  %v317 = vpop.f32.mrf.mxu0
  %v318 = vadd.f32 %v72, %v317
  %v319 = vpop.f32.mrf.mxu0
  %v320 = vadd.f32 %v76, %v319
  %v321 = vpop.f32.mrf.mxu0
  %v322 = vadd.f32 %v72, %v321
  %v323 = vpop.f32.mrf.mxu0
  %v324 = vadd.f32 %v76, %v323
  %325 = vmatprep.mubr.bf16.mxu0 0
  %326 = vmatmul.mubr.bf16.gmra.mxu0 %v107
  %v327 = vpop.f32.mrf.mxu0
  %v328 = vadd.f32 %v72, %v327
  %v329 = vpop.f32.mrf.mxu0
  %v330 = vadd.f32 %v76, %v329
  %v331 = vpop.f32.mrf.mxu0
  %v332 = vadd.f32 %v72, %v331
  %v333 = vpop.f32.mrf.mxu0
  %v334 = vadd.f32 %v76, %v333
  %335 = vmatprep.mubr.bf16.mxu0 0
  %336 = vmatmul.mubr.bf16.gmra.mxu0 %v108
  %v337 = vpop.f32.mrf.mxu0
  %v338 = vadd.f32 %v72, %v337
  %v339 = vpop.f32.mrf.mxu0
  %v340 = vadd.f32 %v76, %v339
  %v341 = vpop.f32.mrf.mxu0
  %v342 = vadd.f32 %v72, %v341
  %v343 = vpop.f32.mrf.mxu0
  %v344 = vadd.f32 %v76, %v343
  %345 = vdwg.mxu0
  %346 = vmatprep.subr.bf16.mxu0 %v240
  %347 = vmatpush1.bf16.msra.mxu0 %v239
  %348 = vmatprep.subr.bf16.mxu0 %v236
  %349 = vmatpush1.bf16.msra.mxu0 %v235
  %350 = vmatprep.subr.bf16.mxu0 %v232
  %351 = vmatpush1.bf16.msra.mxu0 %v231
  %352 = vmatprep.subr.bf16.mxu0 %v228
  %353 = vmatpush1.bf16.msra.mxu0 %v227
  %354 = vmatprep.subr.bf16.mxu0 %v224
  %355 = vmatpush1.bf16.msra.mxu0 %v223
  %356 = vmatprep.subr.bf16.mxu0 %v220
  %357 = vmatpush1.bf16.msra.mxu0 %v219
  %358 = vmatprep.subr.bf16.mxu0 %v216
  %359 = vmatpush1.bf16.msra.mxu0 %v215
  %360 = vmatprep.subr.bf16.mxu0 %v212
  %361 = vmatpush1.bf16.msra.mxu0 %v211
  %362 = vmatprep.subr.bf16.mxu0 0
  %363 = vmatpush2.bf16.msra.mxu0 0
  %364 = vmatprep.subr.bf16.mxu0 0
  %365 = vmatpush2.bf16.msra.mxu0 0
  %366 = vmatprep.subr.bf16.mxu0 0
  %367 = vmatpush2.bf16.msra.mxu0 0
  %368 = vmatprep.subr.bf16.mxu0 0
  %369 = vmatpush2.bf16.msra.mxu0 0
  %370 = vmatprep.subr.bf16.mxu0 0
  %371 = vmatpush2.bf16.msra.mxu0 0
  %372 = vmatprep.subr.bf16.mxu0 0
  %373 = vmatpush2.bf16.msra.mxu0 0
  %374 = vmatprep.subr.bf16.mxu0 0
  %375 = vmatpush2.bf16.msra.mxu0 0
  %376 = vmatprep.subr.bf16.mxu0 0
  %377 = vmatpush2.bf16.msra.mxu0 0
  %378 = vmatprep.mubr.bf16.mxu0 0
  %379 = vmatmul.mubr.bf16.gmra.mxu0 %v105
  %v380 = vpop.f32.mrf.mxu0
  %v381 = vadd.f32 %v80, %v380
  %v382 = vpop.f32.mrf.mxu0
  %v383 = vadd.f32 %v84, %v382
  %v384 = vpop.f32.mrf.mxu0
  %v385 = vadd.f32 %v80, %v384
  %v386 = vpop.f32.mrf.mxu0
  %v387 = vadd.f32 %v84, %v386
  %388 = vmatprep.mubr.bf16.mxu0 0
  %389 = vmatmul.mubr.bf16.gmra.mxu0 %v106
  %v390 = vpop.f32.mrf.mxu0
  %v391 = vadd.f32 %v80, %v390
  %v392 = vpop.f32.mrf.mxu0
  %v393 = vadd.f32 %v84, %v392
  %v394 = vpop.f32.mrf.mxu0
  %v395 = vadd.f32 %v80, %v394
  %v396 = vpop.f32.mrf.mxu0
  %v397 = vadd.f32 %v84, %v396
  %398 = vmatprep.mubr.bf16.mxu0 0
  %399 = vmatmul.mubr.bf16.gmra.mxu0 %v107
  %v400 = vpop.f32.mrf.mxu0
  %v401 = vadd.f32 %v80, %v400
  %v402 = vpop.f32.mrf.mxu0
  %v403 = vadd.f32 %v84, %v402
  %v404 = vpop.f32.mrf.mxu0
  %v405 = vadd.f32 %v80, %v404
  %v406 = vpop.f32.mrf.mxu0
  %v407 = vadd.f32 %v84, %v406
  %408 = vmatprep.mubr.bf16.mxu0 0
  %409 = vmatmul.mubr.bf16.gmra.mxu0 %v108
  %v410 = vpop.f32.mrf.mxu0
  %v411 = vadd.f32 %v80, %v410
  %v412 = vpop.f32.mrf.mxu0
  %v413 = vadd.f32 %v84, %v412
  %v414 = vpop.f32.mrf.mxu0
  %v415 = vadd.f32 %v80, %v414
  %v416 = vpop.f32.mrf.mxu0
  %v417 = vadd.f32 %v84, %v416
  %418 = vdwg.mxu0
  %419 = vst [vmem:[#allocation2] sm:$0xff] %v308
  %420 = vst [vmem:[#allocation2 + $0x8] sm:$0xff] %v310
  %421 = vst [vmem:[#allocation2 + $0x10] sm:$0xff] %v381
  %422 = vst [vmem:[#allocation2 + $0x18] sm:$0xff] %v383
  %423 = vst [vmem:[#allocation2 + $0x20] sm:$0xff] %v312
  %424 = vst [vmem:[#allocation2 + $0x28] sm:$0xff] %v314
  %425 = vst [vmem:[#allocation2 + $0x30] sm:$0xff] %v385
  %426 = vst [vmem:[#allocation2 + $0x38] sm:$0xff] %v387
  %427 = vst [vmem:[#allocation2 + $0x40] sm:$0xff] %v318
  %428 = vst [vmem:[#allocation2 + $0x48] sm:$0xff] %v320
  %429 = vst [vmem:[#allocation2 + $0x50] sm:$0xff] %v391
  %430 = vst [vmem:[#allocation2 + $0x58] sm:$0xff] %v393
  %431 = vst [vmem:[#allocation2 + $0x60] sm:$0xff] %v322
  %432 = vst [vmem:[#allocation2 + $0x68] sm:$0xff] %v324
  %433 = vst [vmem:[#allocation2 + $0x70] sm:$0xff] %v395
  %434 = vst [vmem:[#allocation2 + $0x78] sm:$0xff] %v397
  %435 = vst [vmem:[#allocation2 + $0x80] sm:$0xff] %v328
  %436 = vst [vmem:[#allocation2 + $0x88] sm:$0xff] %v330
  %437 = vst [vmem:[#allocation2 + $0x90] sm:$0xff] %v401
  %438 = vst [vmem:[#allocation2 + $0x98] sm:$0xff] %v403
  %439 = vst [vmem:[#allocation2 + $0xa0] sm:$0xff] %v332
  %440 = vst [vmem:[#allocation2 + $0xa8] sm:$0xff] %v334
  %441 = vst [vmem:[#allocation2 + $0xb0] sm:$0xff] %v405
  %442 = vst [vmem:[#allocation2 + $0xb8] sm:$0xff] %v407
  %443 = vst [vmem:[#allocation2 + $0xc0] sm:$0xff] %v338
  %444 = vst [vmem:[#allocation2 + $0xc8] sm:$0xff] %v340
  %445 = vst [vmem:[#allocation2 + $0xd0] sm:$0xff] %v411
  %446 = vst [vmem:[#allocation2 + $0xd8] sm:$0xff] %v413
  %447 = vst [vmem:[#allocation2 + $0xe0] sm:$0xff] %v342
  %448 = vst [vmem:[#allocation2 + $0xe8] sm:$0xff] %v344
  %449 = vst [vmem:[#allocation2 + $0xf0] sm:$0xff] %v415
  %450 = vst [vmem:[#allocation2 + $0xf8] sm:$0xff] %v417
  %v451 = vld [vmem:[#allocation3] sm:$0xff]
  %v452 = vld [vmem:[#allocation4] sm:$0xff]
  %s453 = smul.u32 0, 4
  %s454 = smul.addr %s453, 8
  %s455 = scalar_lea.vmem [#allocation2], %s454
  %v456 = vld [vmem:[%s455] sm:$0xff]
  %v457 = vld [vmem:[%s455 + $0x8] sm:$0xff]
  %v458 = vld [vmem:[%s455 + $0x10] sm:$0xff]
  %v459 = vld [vmem:[%s455 + $0x18] sm:$0xff]
  %v460 = vpack.c.bf16 %v451, %v451
  %v461 = vld [vmem:[%s2] sm:$0xff]
  %v462 = vld [vmem:[%s2 + $0x8] sm:$0xff]
  %v463 = vld [vmem:[%s2 + $0x10] sm:$0xff]
  %v464 = vld [vmem:[%s2 + $0x18] sm:$0xff]
  %v465 = vld [vmem:[%s2 + $0x20] sm:$0xff]
  %v466 = vld [vmem:[%s2 + $0x28] sm:$0xff]
  %v467 = vld [vmem:[%s2 + $0x30] sm:$0xff]
  %v468 = vld [vmem:[%s2 + $0x38] sm:$0xff]
  %v469 = vld [vmem:[%s2 + $0x40] sm:$0xff]
  %v470 = vld [vmem:[%s2 + $0x48] sm:$0xff]
  %v471 = vld [vmem:[%s2 + $0x50] sm:$0xff]
  %v472 = vld [vmem:[%s2 + $0x58] sm:$0xff]
  %v473 = vld [vmem:[%s2 + $0x60] sm:$0xff]
  %v474 = vld [vmem:[%s2 + $0x68] sm:$0xff]
  %v475 = vld [vmem:[%s2 + $0x70] sm:$0xff]
  %v476 = vld [vmem:[%s2 + $0x78] sm:$0xff]
  %v477 = vld [vmem:[%s2 + $0x80] sm:$0xff]
  %v478 = vld [vmem:[%s2 + $0x88] sm:$0xff]
  %v479 = vld [vmem:[%s2 + $0x90] sm:$0xff]
  %v480 = vld [vmem:[%s2 + $0x98] sm:$0xff]
  %v481 = vld [vmem:[%s2 + $0xa0] sm:$0xff]
  %v482 = vld [vmem:[%s2 + $0xa8] sm:$0xff]
  %v483 = vld [vmem:[%s2 + $0xb0] sm:$0xff]
  %v484 = vld [vmem:[%s2 + $0xb8] sm:$0xff]
  %v485 = vld [vmem:[%s2 + $0xc0] sm:$0xff]
  %v486 = vld [vmem:[%s2 + $0xc8] sm:$0xff]
  %v487 = vld [vmem:[%s2 + $0xd0] sm:$0xff]
  %v488 = vld [vmem:[%s2 + $0xd8] sm:$0xff]
  %v489 = vld [vmem:[%s2 + $0xe0] sm:$0xff]
  %v490 = vld [vmem:[%s2 + $0xe8] sm:$0xff]
  %v491 = vld [vmem:[%s2 + $0xf0] sm:$0xff]
  %v492 = vld [vmem:[%s2 + $0xf8] sm:$0xff]
  %v525 = vunpack.c.l.b16 %v461
  %v526 = vunpack.c.h.b16 %v461
  %v527 = vunpack.c.l.b16 %v462
  %v528 = vunpack.c.h.b16 %v462
  %v529 = vunpack.c.l.b16 %v463
  %v530 = vunpack.c.h.b16 %v463
  %v531 = vunpack.c.l.b16 %v464
  %v532 = vunpack.c.h.b16 %v464
  %v533 = vunpack.c.l.b16 %v465
  %v534 = vunpack.c.h.b16 %v465
  %v535 = vunpack.c.l.b16 %v466
  %v536 = vunpack.c.h.b16 %v466
  %v537 = vunpack.c.l.b16 %v467
  %v538 = vunpack.c.h.b16 %v467
  %v539 = vunpack.c.l.b16 %v468
  %v540 = vunpack.c.h.b16 %v468
  %v541 = vunpack.c.l.b16 %v469
  %v542 = vunpack.c.h.b16 %v469
  %v543 = vunpack.c.l.b16 %v470
  %v544 = vunpack.c.h.b16 %v470
  %v545 = vunpack.c.l.b16 %v471
  %v546 = vunpack.c.h.b16 %v471
  %v547 = vunpack.c.l.b16 %v472
  %v548 = vunpack.c.h.b16 %v472
  %v549 = vunpack.c.l.b16 %v473
  %v550 = vunpack.c.h.b16 %v473
  %v551 = vunpack.c.l.b16 %v474
  %v552 = vunpack.c.h.b16 %v474
  %v553 = vunpack.c.l.b16 %v475
  %v554 = vunpack.c.h.b16 %v475
  %v555 = vunpack.c.l.b16 %v476
  %v556 = vunpack.c.h.b16 %v476
  %v557 = vunpack.c.l.b16 %v477
  %v558 = vunpack.c.h.b16 %v477
  %v559 = vunpack.c.l.b16 %v478
  %v560 = vunpack.c.h.b16 %v478
  %v561 = vunpack.c.l.b16 %v479
  %v562 = vunpack.c.h.b16 %v479
  %v563 = vunpack.c.l.b16 %v480
  %v564 = vunpack.c.h.b16 %v480
  %v565 = vunpack.c.l.b16 %v481
  %v566 = vunpack.c.h.b16 %v481
  %v567 = vunpack.c.l.b16 %v482
  %v568 = vunpack.c.h.b16 %v482
  %v569 = vunpack.c.l.b16 %v483
  %v570 = vunpack.c.h.b16 %v483
  %v571 = vunpack.c.l.b16 %v484
  %v572 = vunpack.c.h.b16 %v484
  %v573 = vunpack.c.l.b16 %v485
  %v574 = vunpack.c.h.b16 %v485
  %v575 = vunpack.c.l.b16 %v486
  %v576 = vunpack.c.h.b16 %v486
  %v577 = vunpack.c.l.b16 %v487
  %v578 = vunpack.c.h.b16 %v487
  %v579 = vunpack.c.l.b16 %v488
  %v580 = vunpack.c.h.b16 %v488
  %v581 = vunpack.c.l.b16 %v489
  %v582 = vunpack.c.h.b16 %v489
  %v583 = vunpack.c.l.b16 %v490
  %v584 = vunpack.c.h.b16 %v490
  %v585 = vunpack.c.l.b16 %v491
  %v586 = vunpack.c.h.b16 %v491
  %v587 = vunpack.c.l.b16 %v492
  %v588 = vunpack.c.h.b16 %v492
  %v589 = vpack.c.b16 %v529, %v525
  %v590 = vpack.c.b16 %v530, %v526
  %v591 = vpack.c.b16 %v531, %v527
  %v592 = vpack.c.b16 %v532, %v528
  %v593 = vpack.c.b16 %v537, %v533
  %v594 = vpack.c.b16 %v538, %v534
  %v595 = vpack.c.b16 %v539, %v535
  %v596 = vpack.c.b16 %v540, %v536
  %v597 = vpack.c.b16 %v545, %v541
  %v598 = vpack.c.b16 %v546, %v542
  %v599 = vpack.c.b16 %v547, %v543
  %v600 = vpack.c.b16 %v548, %v544
  %v601 = vpack.c.b16 %v553, %v549
  %v602 = vpack.c.b16 %v554, %v550
  %v603 = vpack.c.b16 %v555, %v551
  %v604 = vpack.c.b16 %v556, %v552
  %v605 = vpack.c.b16 %v561, %v557
  %v606 = vpack.c.b16 %v562, %v558
  %v607 = vpack.c.b16 %v563, %v559
  %v608 = vpack.c.b16 %v564, %v560
  %v609 = vpack.c.b16 %v569, %v565
  %v610 = vpack.c.b16 %v570, %v566
  %v611 = vpack.c.b16 %v571, %v567
  %v612 = vpack.c.b16 %v572, %v568
  %v613 = vpack.c.b16 %v577, %v573
  %v614 = vpack.c.b16 %v578, %v574
  %v615 = vpack.c.b16 %v579, %v575
  %v616 = vpack.c.b16 %v580, %v576
  %v617 = vpack.c.b16 %v585, %v581
  %v618 = vpack.c.b16 %v586, %v582
  %v619 = vpack.c.b16 %v587, %v583
  %v620 = vpack.c.b16 %v588, %v584
  %653 = vmatprep.subr.bf16.mxu0 %v618
  %654 = vmatpush1.bf16.msra.mxu0 %v617
  %655 = vmatprep.subr.bf16.mxu0 %v614
  %656 = vmatpush1.bf16.msra.mxu0 %v613
  %657 = vmatprep.subr.bf16.mxu0 %v610
  %658 = vmatpush1.bf16.msra.mxu0 %v609
  %659 = vmatprep.subr.bf16.mxu0 %v606
  %660 = vmatpush1.bf16.msra.mxu0 %v605
  %661 = vmatprep.subr.bf16.mxu0 %v602
  %662 = vmatpush1.bf16.msra.mxu0 %v601
  %663 = vmatprep.subr.bf16.mxu0 %v598
  %664 = vmatpush1.bf16.msra.mxu0 %v597
  %665 = vmatprep.subr.bf16.mxu0 %v594
  %666 = vmatpush1.bf16.msra.mxu0 %v593
  %667 = vmatprep.subr.bf16.mxu0 %v590
  %668 = vmatpush1.bf16.msra.mxu0 %v589
  %669 = vmatprep.subr.bf16.mxu0 0
  %670 = vmatpush2.bf16.msra.mxu0 0
  %671 = vmatprep.subr.bf16.mxu0 0
  %672 = vmatpush2.bf16.msra.mxu0 0
  %673 = vmatprep.subr.bf16.mxu0 0
  %674 = vmatpush2.bf16.msra.mxu0 0
  %675 = vmatprep.subr.bf16.mxu0 0
  %676 = vmatpush2.bf16.msra.mxu0 0
  %677 = vmatprep.subr.bf16.mxu0 0
  %678 = vmatpush2.bf16.msra.mxu0 0
  %679 = vmatprep.subr.bf16.mxu0 0
  %680 = vmatpush2.bf16.msra.mxu0 0
  %681 = vmatprep.subr.bf16.mxu0 0
  %682 = vmatpush2.bf16.msra.mxu0 0
  %683 = vmatprep.subr.bf16.mxu0 0
  %684 = vmatpush2.bf16.msra.mxu0 0
  %685 = vmatprep.mubr.bf16.mxu0 0
  %686 = vmatmul.mubr.bf16.gmra.mxu0 %v460
  %v687 = vpop.f32.mrf.mxu0
  %v688 = vadd.f32 0.0, %v687
  %v689 = vpop.f32.mrf.mxu0
  %v690 = vadd.f32 0.0, %v689
  %v691 = vpop.f32.mrf.mxu0
  %v692 = vpop.f32.mrf.mxu0
  %693 = vdwg.mxu0
  %694 = vmatprep.subr.bf16.mxu0 %v620
  %695 = vmatpush1.bf16.msra.mxu0 %v619
  %696 = vmatprep.subr.bf16.mxu0 %v616
  %697 = vmatpush1.bf16.msra.mxu0 %v615
  %698 = vmatprep.subr.bf16.mxu0 %v612
  %699 = vmatpush1.bf16.msra.mxu0 %v611
  %700 = vmatprep.subr.bf16.mxu0 %v608
  %701 = vmatpush1.bf16.msra.mxu0 %v607
  %702 = vmatprep.subr.bf16.mxu0 %v604
  %703 = vmatpush1.bf16.msra.mxu0 %v603
  %704 = vmatprep.subr.bf16.mxu0 %v600
  %705 = vmatpush1.bf16.msra.mxu0 %v599
  %706 = vmatprep.subr.bf16.mxu0 %v596
  %707 = vmatpush1.bf16.msra.mxu0 %v595
  %708 = vmatprep.subr.bf16.mxu0 %v592
  %709 = vmatpush1.bf16.msra.mxu0 %v591
  %710 = vmatprep.subr.bf16.mxu0 0
  %711 = vmatpush2.bf16.msra.mxu0 0
  %712 = vmatprep.subr.bf16.mxu0 0
  %713 = vmatpush2.bf16.msra.mxu0 0
  %714 = vmatprep.subr.bf16.mxu0 0
  %715 = vmatpush2.bf16.msra.mxu0 0
  %716 = vmatprep.subr.bf16.mxu0 0
  %717 = vmatpush2.bf16.msra.mxu0 0
  %718 = vmatprep.subr.bf16.mxu0 0
  %719 = vmatpush2.bf16.msra.mxu0 0
  %720 = vmatprep.subr.bf16.mxu0 0
  %721 = vmatpush2.bf16.msra.mxu0 0
  %722 = vmatprep.subr.bf16.mxu0 0
  %723 = vmatpush2.bf16.msra.mxu0 0
  %724 = vmatprep.subr.bf16.mxu0 0
  %725 = vmatpush2.bf16.msra.mxu0 0
  %726 = vmatprep.mubr.bf16.mxu0 0
  %727 = vmatmul.mubr.bf16.gmra.mxu0 %v460
  %v728 = vpop.f32.mrf.mxu0
  %v729 = vadd.f32 0.0, %v728
  %v730 = vpop.f32.mrf.mxu0
  %v731 = vadd.f32 0.0, %v730
  %v732 = vpop.f32.mrf.mxu0
  %v733 = vpop.f32.mrf.mxu0
  %734 = vdwg.mxu0
  %v735 = vadd.f32 %v456, %v688
  %v736 = vadd.f32 %v457, %v690
  %v737 = vadd.f32 %v458, %v729
  %v738 = vadd.f32 %v459, %v731
  %v739 = vxor.u32 %v735, 2147483648
  %v740 = vmul.f32 %v739, 1.442695
  %v741 = vpow.pop %v740
  %v742 = vadd.f32 %v741, 1.0
  %v743 = vrcp.pop %v742
  %v744 = vmul.f32 1.0, %v743
  %v745 = vxor.u32 %v736, 2147483648
  %v746 = vmul.f32 %v745, 1.442695
  %v747 = vpow.pop %v746
  %v748 = vadd.f32 %v747, 1.0
  %v749 = vrcp.pop %v748
  %v750 = vmul.f32 1.0, %v749
  %v751 = vtanh.pop %v737
  %v752 = vxor.u32 %v738, 2147483648
  %v753 = vmul.f32 %v752, 1.442695
  %v754 = vpow.pop %v753
  %v755 = vadd.f32 %v754, 1.0
  %v756 = vrcp.pop %v755
  %v757 = vmul.f32 1.0, %v756
  %v758 = vmul.f32 %v750, %v452
  %v759 = vmul.f32 %v744, %v751
  %v760 = vadd.f32 %v758, %v759
  %v761 = vtanh.pop %v760
  %v762 = vmul.f32 %v757, %v761
  %763 = vst [vmem:[%s4] sm:$0xff] %v762
  %s764 = smul.u32 1, 4
  %s765 = smul.addr %s764, 8
  %s766 = scalar_lea.vmem [#allocation2], %s765
  %v767 = vld [vmem:[%s766] sm:$0xff]
  %v768 = vld [vmem:[%s766 + $0x8] sm:$0xff]
  %v769 = vld [vmem:[%s766 + $0x10] sm:$0xff]
  %v770 = vld [vmem:[%s766 + $0x18] sm:$0xff]
  %v771 = vpack.c.bf16 %v762, %v762
  %v772 = vld [vmem:[%s2] sm:$0xff]
  %v773 = vld [vmem:[%s2 + $0x8] sm:$0xff]
  %v774 = vld [vmem:[%s2 + $0x10] sm:$0xff]
  %v775 = vld [vmem:[%s2 + $0x18] sm:$0xff]
  %v776 = vld [vmem:[%s2 + $0x20] sm:$0xff]
  %v777 = vld [vmem:[%s2 + $0x28] sm:$0xff]
  %v778 = vld [vmem:[%s2 + $0x30] sm:$0xff]
  %v779 = vld [vmem:[%s2 + $0x38] sm:$0xff]
  %v780 = vld [vmem:[%s2 + $0x40] sm:$0xff]
  %v781 = vld [vmem:[%s2 + $0x48] sm:$0xff]
  %v782 = vld [vmem:[%s2 + $0x50] sm:$0xff]
  %v783 = vld [vmem:[%s2 + $0x58] sm:$0xff]
  %v784 = vld [vmem:[%s2 + $0x60] sm:$0xff]
  %v785 = vld [vmem:[%s2 + $0x68] sm:$0xff]
  %v786 = vld [vmem:[%s2 + $0x70] sm:$0xff]
  %v787 = vld [vmem:[%s2 + $0x78] sm:$0xff]
  %v788 = vld [vmem:[%s2 + $0x80] sm:$0xff]
  %v789 = vld [vmem:[%s2 + $0x88] sm:$0xff]
  %v790 = vld [vmem:[%s2 + $0x90] sm:$0xff]
  %v791 = vld [vmem:[%s2 + $0x98] sm:$0xff]
  %v792 = vld [vmem:[%s2 + $0xa0] sm:$0xff]
  %v793 = vld [vmem:[%s2 + $0xa8] sm:$0xff]
  %v794 = vld [vmem:[%s2 + $0xb0] sm:$0xff]
  %v795 = vld [vmem:[%s2 + $0xb8] sm:$0xff]
  %v796 = vld [vmem:[%s2 + $0xc0] sm:$0xff]
  %v797 = vld [vmem:[%s2 + $0xc8] sm:$0xff]
  %v798 = vld [vmem:[%s2 + $0xd0] sm:$0xff]
  %v799 = vld [vmem:[%s2 + $0xd8] sm:$0xff]
  %v800 = vld [vmem:[%s2 + $0xe0] sm:$0xff]
  %v801 = vld [vmem:[%s2 + $0xe8] sm:$0xff]
  %v802 = vld [vmem:[%s2 + $0xf0] sm:$0xff]
  %v803 = vld [vmem:[%s2 + $0xf8] sm:$0xff]
  %v836 = vunpack.c.l.b16 %v772
  %v837 = vunpack.c.h.b16 %v772
  %v838 = vunpack.c.l.b16 %v773
  %v839 = vunpack.c.h.b16 %v773
  %v840 = vunpack.c.l.b16 %v774
  %v841 = vunpack.c.h.b16 %v774
  %v842 = vunpack.c.l.b16 %v775
  %v843 = vunpack.c.h.b16 %v775
  %v844 = vunpack.c.l.b16 %v776
  %v845 = vunpack.c.h.b16 %v776
  %v846 = vunpack.c.l.b16 %v777
  %v847 = vunpack.c.h.b16 %v777
  %v848 = vunpack.c.l.b16 %v778
  %v849 = vunpack.c.h.b16 %v778
  %v850 = vunpack.c.l.b16 %v779
  %v851 = vunpack.c.h.b16 %v779
  %v852 = vunpack.c.l.b16 %v780
  %v853 = vunpack.c.h.b16 %v780
  %v854 = vunpack.c.l.b16 %v781
  %v855 = vunpack.c.h.b16 %v781
  %v856 = vunpack.c.l.b16 %v782
  %v857 = vunpack.c.h.b16 %v782
  %v858 = vunpack.c.l.b16 %v783
  %v859 = vunpack.c.h.b16 %v783
  %v860 = vunpack.c.l.b16 %v784
  %v861 = vunpack.c.h.b16 %v784
  %v862 = vunpack.c.l.b16 %v785
  %v863 = vunpack.c.h.b16 %v785
  %v864 = vunpack.c.l.b16 %v786
  %v865 = vunpack.c.h.b16 %v786
  %v866 = vunpack.c.l.b16 %v787
  %v867 = vunpack.c.h.b16 %v787
  %v868 = vunpack.c.l.b16 %v788
  %v869 = vunpack.c.h.b16 %v788
  %v870 = vunpack.c.l.b16 %v789
  %v871 = vunpack.c.h.b16 %v789
  %v872 = vunpack.c.l.b16 %v790
  %v873 = vunpack.c.h.b16 %v790
  %v874 = vunpack.c.l.b16 %v791
  %v875 = vunpack.c.h.b16 %v791
  %v876 = vunpack.c.l.b16 %v792
  %v877 = vunpack.c.h.b16 %v792
  %v878 = vunpack.c.l.b16 %v793
  %v879 = vunpack.c.h.b16 %v793
  %v880 = vunpack.c.l.b16 %v794
  %v881 = vunpack.c.h.b16 %v794
  %v882 = vunpack.c.l.b16 %v795
  %v883 = vunpack.c.h.b16 %v795
  %v884 = vunpack.c.l.b16 %v796
  %v885 = vunpack.c.h.b16 %v796
  %v886 = vunpack.c.l.b16 %v797
  %v887 = vunpack.c.h.b16 %v797
  %v888 = vunpack.c.l.b16 %v798
  %v889 = vunpack.c.h.b16 %v798
  %v890 = vunpack.c.l.b16 %v799
  %v891 = vunpack.c.h.b16 %v799
  %v892 = vunpack.c.l.b16 %v800
  %v893 = vunpack.c.h.b16 %v800
  %v894 = vunpack.c.l.b16 %v801
  %v895 = vunpack.c.h.b16 %v801
  %v896 = vunpack.c.l.b16 %v802
  %v897 = vunpack.c.h.b16 %v802
  %v898 = vunpack.c.l.b16 %v803
  %v899 = vunpack.c.h.b16 %v803
  %v900 = vpack.c.b16 %v840, %v836
  %v901 = vpack.c.b16 %v841, %v837
  %v902 = vpack.c.b16 %v842, %v838
  %v903 = vpack.c.b16 %v843, %v839
  %v904 = vpack.c.b16 %v848, %v844
  %v905 = vpack.c.b16 %v849, %v845
  %v906 = vpack.c.b16 %v850, %v846
  %v907 = vpack.c.b16 %v851, %v847
  %v908 = vpack.c.b16 %v856, %v852
  %v909 = vpack.c.b16 %v857, %v853
  %v910 = vpack.c.b16 %v858, %v854
  %v911 = vpack.c.b16 %v859, %v855
  %v912 = vpack.c.b16 %v864, %v860
  %v913 = vpack.c.b16 %v865, %v861
  %v914 = vpack.c.b16 %v866, %v862
  %v915 = vpack.c.b16 %v867, %v863
  %v916 = vpack.c.b16 %v872, %v868
  %v917 = vpack.c.b16 %v873, %v869
  %v918 = vpack.c.b16 %v874, %v870
  %v919 = vpack.c.b16 %v875, %v871
  %v920 = vpack.c.b16 %v880, %v876
  %v921 = vpack.c.b16 %v881, %v877
  %v922 = vpack.c.b16 %v882, %v878
  %v923 = vpack.c.b16 %v883, %v879
  %v924 = vpack.c.b16 %v888, %v884
  %v925 = vpack.c.b16 %v889, %v885
  %v926 = vpack.c.b16 %v890, %v886
  %v927 = vpack.c.b16 %v891, %v887
  %v928 = vpack.c.b16 %v896, %v892
  %v929 = vpack.c.b16 %v897, %v893
  %v930 = vpack.c.b16 %v898, %v894
  %v931 = vpack.c.b16 %v899, %v895
  %964 = vmatprep.subr.bf16.mxu0 %v929
  %965 = vmatpush1.bf16.msra.mxu0 %v928
  %966 = vmatprep.subr.bf16.mxu0 %v925
  %967 = vmatpush1.bf16.msra.mxu0 %v924
  %968 = vmatprep.subr.bf16.mxu0 %v921
  %969 = vmatpush1.bf16.msra.mxu0 %v920
  %970 = vmatprep.subr.bf16.mxu0 %v917
  %971 = vmatpush1.bf16.msra.mxu0 %v916
  %972 = vmatprep.subr.bf16.mxu0 %v913
  %973 = vmatpush1.bf16.msra.mxu0 %v912
  %974 = vmatprep.subr.bf16.mxu0 %v909
  %975 = vmatpush1.bf16.msra.mxu0 %v908
  %976 = vmatprep.subr.bf16.mxu0 %v905
  %977 = vmatpush1.bf16.msra.mxu0 %v904
  %978 = vmatprep.subr.bf16.mxu0 %v901
  %979 = vmatpush1.bf16.msra.mxu0 %v900
  %980 = vmatprep.subr.bf16.mxu0 0
  %981 = vmatpush2.bf16.msra.mxu0 0
  %982 = vmatprep.subr.bf16.mxu0 0
  %983 = vmatpush2.bf16.msra.mxu0 0
  %984 = vmatprep.subr.bf16.mxu0 0
  %985 = vmatpush2.bf16.msra.mxu0 0
  %986 = vmatprep.subr.bf16.mxu0 0
  %987 = vmatpush2.bf16.msra.mxu0 0
  %988 = vmatprep.subr.bf16.mxu0 0
  %989 = vmatpush2.bf16.msra.mxu0 0
  %990 = vmatprep.subr.bf16.mxu0 0
  %991 = vmatpush2.bf16.msra.mxu0 0
  %992 = vmatprep.subr.bf16.mxu0 0
  %993 = vmatpush2.bf16.msra.mxu0 0
  %994 = vmatprep.subr.bf16.mxu0 0
  %995 = vmatpush2.bf16.msra.mxu0 0
  %996 = vmatprep.mubr.bf16.mxu0 0
  %997 = vmatmul.mubr.bf16.gmra.mxu0 %v771
  %v998 = vpop.f32.mrf.mxu0
  %v999 = vadd.f32 0.0, %v998
  %v1000 = vpop.f32.mrf.mxu0
  %v1001 = vadd.f32 0.0, %v1000
  %v1002 = vpop.f32.mrf.mxu0
  %v1003 = vpop.f32.mrf.mxu0
  %1004 = vdwg.mxu0
  %1005 = vmatprep.subr.bf16.mxu0 %v931
  %1006 = vmatpush1.bf16.msra.mxu0 %v930
  %1007 = vmatprep.subr.bf16.mxu0 %v927
  %1008 = vmatpush1.bf16.msra.mxu0 %v926
  %1009 = vmatprep.subr.bf16.mxu0 %v923
  %1010 = vmatpush1.bf16.msra.mxu0 %v922
  %1011 = vmatprep.subr.bf16.mxu0 %v919
  %1012 = vmatpush1.bf16.msra.mxu0 %v918
  %1013 = vmatprep.subr.bf16.mxu0 %v915
  %1014 = vmatpush1.bf16.msra.mxu0 %v914
  %1015 = vmatprep.subr.bf16.mxu0 %v911
  %1016 = vmatpush1.bf16.msra.mxu0 %v910
  %1017 = vmatprep.subr.bf16.mxu0 %v907
  %1018 = vmatpush1.bf16.msra.mxu0 %v906
  %1019 = vmatprep.subr.bf16.mxu0 %v903
  %1020 = vmatpush1.bf16.msra.mxu0 %v902
  %1021 = vmatprep.subr.bf16.mxu0 0
  %1022 = vmatpush2.bf16.msra.mxu0 0
  %1023 = vmatprep.subr.bf16.mxu0 0
  %1024 = vmatpush2.bf16.msra.mxu0 0
  %1025 = vmatprep.subr.bf16.mxu0 0
  %1026 = vmatpush2.bf16.msra.mxu0 0
  %1027 = vmatprep.subr.bf16.mxu0 0
  %1028 = vmatpush2.bf16.msra.mxu0 0
  %1029 = vmatprep.subr.bf16.mxu0 0
  %1030 = vmatpush2.bf16.msra.mxu0 0
  %1031 = vmatprep.subr.bf16.mxu0 0
  %1032 = vmatpush2.bf16.msra.mxu0 0
  %1033 = vmatprep.subr.bf16.mxu0 0
  %1034 = vmatpush2.bf16.msra.mxu0 0
  %1035 = vmatprep.subr.bf16.mxu0 0
  %1036 = vmatpush2.bf16.msra.mxu0 0
  %1037 = vmatprep.mubr.bf16.mxu0 0
  %1038 = vmatmul.mubr.bf16.gmra.mxu0 %v771
  %v1039 = vpop.f32.mrf.mxu0
  %v1040 = vadd.f32 0.0, %v1039
  %v1041 = vpop.f32.mrf.mxu0
  %v1042 = vadd.f32 0.0, %v1041
  %v1043 = vpop.f32.mrf.mxu0
  %v1044 = vpop.f32.mrf.mxu0
  %1045 = vdwg.mxu0
  %v1046 = vadd.f32 %v767, %v999
  %v1047 = vadd.f32 %v768, %v1001
  %v1048 = vadd.f32 %v769, %v1040
  %v1049 = vadd.f32 %v770, %v1042
  %v1050 = vxor.u32 %v1046, 2147483648
  %v1051 = vmul.f32 %v1050, 1.442695
  %v1052 = vpow.pop %v1051
  %v1053 = vadd.f32 %v1052, 1.0
  %v1054 = vrcp.pop %v1053
  %v1055 = vmul.f32 1.0, %v1054
  %v1056 = vxor.u32 %v1047, 2147483648
  %v1057 = vmul.f32 %v1056, 1.442695
  %v1058 = vpow.pop %v1057
  %v1059 = vadd.f32 %v1058, 1.0
  %v1060 = vrcp.pop %v1059
  %v1061 = vmul.f32 1.0, %v1060
  %v1062 = vtanh.pop %v1048
  %v1063 = vxor.u32 %v1049, 2147483648
  %v1064 = vmul.f32 %v1063, 1.442695
  %v1065 = vpow.pop %v1064
  %v1066 = vadd.f32 %v1065, 1.0
  %v1067 = vrcp.pop %v1066
  %v1068 = vmul.f32 1.0, %v1067
  %v1069 = vmul.f32 %v1061, %v760
  %v1070 = vmul.f32 %v1055, %v1062
  %v1071 = vadd.f32 %v1069, %v1070
  %v1072 = vtanh.pop %v1071
  %v1073 = vmul.f32 %v1068, %v1072
  %s1074 = scalar_lea.vmem %s4, 8
  %1075 = vst [vmem:[%s1074] sm:$0xff] %v1073
  %s1076 = smul.u32 2, 4
  %s1077 = smul.addr %s1076, 8
  %s1078 = scalar_lea.vmem [#allocation2], %s1077
  %v1079 = vld [vmem:[%s1078] sm:$0xff]
  %v1080 = vld [vmem:[%s1078 + $0x8] sm:$0xff]
  %v1081 = vld [vmem:[%s1078 + $0x10] sm:$0xff]
  %v1082 = vld [vmem:[%s1078 + $0x18] sm:$0xff]
  %v1083 = vpack.c.bf16 %v1073, %v1073
  %v1084 = vld [vmem:[%s2] sm:$0xff]
  %v1085 = vld [vmem:[%s2 + $0x8] sm:$0xff]
  %v1086 = vld [vmem:[%s2 + $0x10] sm:$0xff]
  %v1087 = vld [vmem:[%s2 + $0x18] sm:$0xff]
  %v1088 = vld [vmem:[%s2 + $0x20] sm:$0xff]
  %v1089 = vld [vmem:[%s2 + $0x28] sm:$0xff]
  %v1090 = vld [vmem:[%s2 + $0x30] sm:$0xff]
  %v1091 = vld [vmem:[%s2 + $0x38] sm:$0xff]
  %v1092 = vld [vmem:[%s2 + $0x40] sm:$0xff]
  %v1093 = vld [vmem:[%s2 + $0x48] sm:$0xff]
  %v1094 = vld [vmem:[%s2 + $0x50] sm:$0xff]
  %v1095 = vld [vmem:[%s2 + $0x58] sm:$0xff]
  %v1096 = vld [vmem:[%s2 + $0x60] sm:$0xff]
  %v1097 = vld [vmem:[%s2 + $0x68] sm:$0xff]
  %v1098 = vld [vmem:[%s2 + $0x70] sm:$0xff]
  %v1099 = vld [vmem:[%s2 + $0x78] sm:$0xff]
  %v1100 = vld [vmem:[%s2 + $0x80] sm:$0xff]
  %v1101 = vld [vmem:[%s2 + $0x88] sm:$0xff]
  %v1102 = vld [vmem:[%s2 + $0x90] sm:$0xff]
  %v1103 = vld [vmem:[%s2 + $0x98] sm:$0xff]
  %v1104 = vld [vmem:[%s2 + $0xa0] sm:$0xff]
  %v1105 = vld [vmem:[%s2 + $0xa8] sm:$0xff]
  %v1106 = vld [vmem:[%s2 + $0xb0] sm:$0xff]
  %v1107 = vld [vmem:[%s2 + $0xb8] sm:$0xff]
  %v1108 = vld [vmem:[%s2 + $0xc0] sm:$0xff]
  %v1109 = vld [vmem:[%s2 + $0xc8] sm:$0xff]
  %v1110 = vld [vmem:[%s2 + $0xd0] sm:$0xff]
  %v1111 = vld [vmem:[%s2 + $0xd8] sm:$0xff]
  %v1112 = vld [vmem:[%s2 + $0xe0] sm:$0xff]
  %v1113 = vld [vmem:[%s2 + $0xe8] sm:$0xff]
  %v1114 = vld [vmem:[%s2 + $0xf0] sm:$0xff]
  %v1115 = vld [vmem:[%s2 + $0xf8] sm:$0xff]
  %v1148 = vunpack.c.l.b16 %v1084
  %v1149 = vunpack.c.h.b16 %v1084
  %v1150 = vunpack.c.l.b16 %v1085
  %v1151 = vunpack.c.h.b16 %v1085
  %v1152 = vunpack.c.l.b16 %v1086
  %v1153 = vunpack.c.h.b16 %v1086
  %v1154 = vunpack.c.l.b16 %v1087
  %v1155 = vunpack.c.h.b16 %v1087
  %v1156 = vunpack.c.l.b16 %v1088
  %v1157 = vunpack.c.h.b16 %v1088
  %v1158 = vunpack.c.l.b16 %v1089
  %v1159 = vunpack.c.h.b16 %v1089
  %v1160 = vunpack.c.l.b16 %v1090
  %v1161 = vunpack.c.h.b16 %v1090
  %v1162 = vunpack.c.l.b16 %v1091
  %v1163 = vunpack.c.h.b16 %v1091
  %v1164 = vunpack.c.l.b16 %v1092
  %v1165 = vunpack.c.h.b16 %v1092
  %v1166 = vunpack.c.l.b16 %v1093
  %v1167 = vunpack.c.h.b16 %v1093
  %v1168 = vunpack.c.l.b16 %v1094
  %v1169 = vunpack.c.h.b16 %v1094
  %v1170 = vunpack.c.l.b16 %v1095
  %v1171 = vunpack.c.h.b16 %v1095
  %v1172 = vunpack.c.l.b16 %v1096
  %v1173 = vunpack.c.h.b16 %v1096
  %v1174 = vunpack.c.l.b16 %v1097
  %v1175 = vunpack.c.h.b16 %v1097
  %v1176 = vunpack.c.l.b16 %v1098
  %v1177 = vunpack.c.h.b16 %v1098
  %v1178 = vunpack.c.l.b16 %v1099
  %v1179 = vunpack.c.h.b16 %v1099
  %v1180 = vunpack.c.l.b16 %v1100
  %v1181 = vunpack.c.h.b16 %v1100
  %v1182 = vunpack.c.l.b16 %v1101
  %v1183 = vunpack.c.h.b16 %v1101
  %v1184 = vunpack.c.l.b16 %v1102
  %v1185 = vunpack.c.h.b16 %v1102
  %v1186 = vunpack.c.l.b16 %v1103
  %v1187 = vunpack.c.h.b16 %v1103
  %v1188 = vunpack.c.l.b16 %v1104
  %v1189 = vunpack.c.h.b16 %v1104
  %v1190 = vunpack.c.l.b16 %v1105
  %v1191 = vunpack.c.h.b16 %v1105
  %v1192 = vunpack.c.l.b16 %v1106
  %v1193 = vunpack.c.h.b16 %v1106
  %v1194 = vunpack.c.l.b16 %v1107
  %v1195 = vunpack.c.h.b16 %v1107
  %v1196 = vunpack.c.l.b16 %v1108
  %v1197 = vunpack.c.h.b16 %v1108
  %v1198 = vunpack.c.l.b16 %v1109
  %v1199 = vunpack.c.h.b16 %v1109
  %v1200 = vunpack.c.l.b16 %v1110
  %v1201 = vunpack.c.h.b16 %v1110
  %v1202 = vunpack.c.l.b16 %v1111
  %v1203 = vunpack.c.h.b16 %v1111
  %v1204 = vunpack.c.l.b16 %v1112
  %v1205 = vunpack.c.h.b16 %v1112
  %v1206 = vunpack.c.l.b16 %v1113
  %v1207 = vunpack.c.h.b16 %v1113
  %v1208 = vunpack.c.l.b16 %v1114
  %v1209 = vunpack.c.h.b16 %v1114
  %v1210 = vunpack.c.l.b16 %v1115
  %v1211 = vunpack.c.h.b16 %v1115
  %v1212 = vpack.c.b16 %v1152, %v1148
  %v1213 = vpack.c.b16 %v1153, %v1149
  %v1214 = vpack.c.b16 %v1154, %v1150
  %v1215 = vpack.c.b16 %v1155, %v1151
  %v1216 = vpack.c.b16 %v1160, %v1156
  %v1217 = vpack.c.b16 %v1161, %v1157
  %v1218 = vpack.c.b16 %v1162, %v1158
  %v1219 = vpack.c.b16 %v1163, %v1159
  %v1220 = vpack.c.b16 %v1168, %v1164
  %v1221 = vpack.c.b16 %v1169, %v1165
  %v1222 = vpack.c.b16 %v1170, %v1166
  %v1223 = vpack.c.b16 %v1171, %v1167
  %v1224 = vpack.c.b16 %v1176, %v1172
  %v1225 = vpack.c.b16 %v1177, %v1173
  %v1226 = vpack.c.b16 %v1178, %v1174
  %v1227 = vpack.c.b16 %v1179, %v1175
  %v1228 = vpack.c.b16 %v1184, %v1180
  %v1229 = vpack.c.b16 %v1185, %v1181
  %v1230 = vpack.c.b16 %v1186, %v1182
  %v1231 = vpack.c.b16 %v1187, %v1183
  %v1232 = vpack.c.b16 %v1192, %v1188
  %v1233 = vpack.c.b16 %v1193, %v1189
  %v1234 = vpack.c.b16 %v1194, %v1190
  %v1235 = vpack.c.b16 %v1195, %v1191
  %v1236 = vpack.c.b16 %v1200, %v1196
  %v1237 = vpack.c.b16 %v1201, %v1197
  %v1238 = vpack.c.b16 %v1202, %v1198
  %v1239 = vpack.c.b16 %v1203, %v1199
  %v1240 = vpack.c.b16 %v1208, %v1204
  %v1241 = vpack.c.b16 %v1209, %v1205
  %v1242 = vpack.c.b16 %v1210, %v1206
  %v1243 = vpack.c.b16 %v1211, %v1207
  %1276 = vmatprep.subr.bf16.mxu0 %v1241
  %1277 = vmatpush1.bf16.msra.mxu0 %v1240
  %1278 = vmatprep.subr.bf16.mxu0 %v1237
  %1279 = vmatpush1.bf16.msra.mxu0 %v1236
  %1280 = vmatprep.subr.bf16.mxu0 %v1233
  %1281 = vmatpush1.bf16.msra.mxu0 %v1232
  %1282 = vmatprep.subr.bf16.mxu0 %v1229
  %1283 = vmatpush1.bf16.msra.mxu0 %v1228
  %1284 = vmatprep.subr.bf16.mxu0 %v1225
  %1285 = vmatpush1.bf16.msra.mxu0 %v1224
  %1286 = vmatprep.subr.bf16.mxu0 %v1221
  %1287 = vmatpush1.bf16.msra.mxu0 %v1220
  %1288 = vmatprep.subr.bf16.mxu0 %v1217
  %1289 = vmatpush1.bf16.msra.mxu0 %v1216
  %1290 = vmatprep.subr.bf16.mxu0 %v1213
  %1291 = vmatpush1.bf16.msra.mxu0 %v1212
  %1292 = vmatprep.subr.bf16.mxu0 0
  %1293 = vmatpush2.bf16.msra.mxu0 0
  %1294 = vmatprep.subr.bf16.mxu0 0
  %1295 = vmatpush2.bf16.msra.mxu0 0
  %1296 = vmatprep.subr.bf16.mxu0 0
  %1297 = vmatpush2.bf16.msra.mxu0 0
  %1298 = vmatprep.subr.bf16.mxu0 0
  %1299 = vmatpush2.bf16.msra.mxu0 0
  %1300 = vmatprep.subr.bf16.mxu0 0
  %1301 = vmatpush2.bf16.msra.mxu0 0
  %1302 = vmatprep.subr.bf16.mxu0 0
  %1303 = vmatpush2.bf16.msra.mxu0 0
  %1304 = vmatprep.subr.bf16.mxu0 0
  %1305 = vmatpush2.bf16.msra.mxu0 0
  %1306 = vmatprep.subr.bf16.mxu0 0
  %1307 = vmatpush2.bf16.msra.mxu0 0
  %1308 = vmatprep.mubr.bf16.mxu0 0
  %1309 = vmatmul.mubr.bf16.gmra.mxu0 %v1083
  %v1310 = vpop.f32.mrf.mxu0
  %v1311 = vadd.f32 0.0, %v1310
  %v1312 = vpop.f32.mrf.mxu0
  %v1313 = vadd.f32 0.0, %v1312
  %v1314 = vpop.f32.mrf.mxu0
  %v1315 = vpop.f32.mrf.mxu0
  %1316 = vdwg.mxu0
  %1317 = vmatprep.subr.bf16.mxu0 %v1243
  %1318 = vmatpush1.bf16.msra.mxu0 %v1242
  %1319 = vmatprep.subr.bf16.mxu0 %v1239
  %1320 = vmatpush1.bf16.msra.mxu0 %v1238
  %1321 = vmatprep.subr.bf16.mxu0 %v1235
  %1322 = vmatpush1.bf16.msra.mxu0 %v1234
  %1323 = vmatprep.subr.bf16.mxu0 %v1231
  %1324 = vmatpush1.bf16.msra.mxu0 %v1230
  %1325 = vmatprep.subr.bf16.mxu0 %v1227
  %1326 = vmatpush1.bf16.msra.mxu0 %v1226
  %1327 = vmatprep.subr.bf16.mxu0 %v1223
  %1328 = vmatpush1.bf16.msra.mxu0 %v1222
  %1329 = vmatprep.subr.bf16.mxu0 %v1219
  %1330 = vmatpush1.bf16.msra.mxu0 %v1218
  %1331 = vmatprep.subr.bf16.mxu0 %v1215
  %1332 = vmatpush1.bf16.msra.mxu0 %v1214
  %1333 = vmatprep.subr.bf16.mxu0 0
  %1334 = vmatpush2.bf16.msra.mxu0 0
  %1335 = vmatprep.subr.bf16.mxu0 0
  %1336 = vmatpush2.bf16.msra.mxu0 0
  %1337 = vmatprep.subr.bf16.mxu0 0
  %1338 = vmatpush2.bf16.msra.mxu0 0
  %1339 = vmatprep.subr.bf16.mxu0 0
  %1340 = vmatpush2.bf16.msra.mxu0 0
  %1341 = vmatprep.subr.bf16.mxu0 0
  %1342 = vmatpush2.bf16.msra.mxu0 0
  %1343 = vmatprep.subr.bf16.mxu0 0
  %1344 = vmatpush2.bf16.msra.mxu0 0
  %1345 = vmatprep.subr.bf16.mxu0 0
  %1346 = vmatpush2.bf16.msra.mxu0 0
  %1347 = vmatprep.subr.bf16.mxu0 0
  %1348 = vmatpush2.bf16.msra.mxu0 0
  %1349 = vmatprep.mubr.bf16.mxu0 0
  %1350 = vmatmul.mubr.bf16.gmra.mxu0 %v1083
  %v1351 = vpop.f32.mrf.mxu0
  %v1352 = vadd.f32 0.0, %v1351
  %v1353 = vpop.f32.mrf.mxu0
  %v1354 = vadd.f32 0.0, %v1353
  %v1355 = vpop.f32.mrf.mxu0
  %v1356 = vpop.f32.mrf.mxu0
  %1357 = vdwg.mxu0
  %v1358 = vadd.f32 %v1079, %v1311
  %v1359 = vadd.f32 %v1080, %v1313
  %v1360 = vadd.f32 %v1081, %v1352
  %v1361 = vadd.f32 %v1082, %v1354
  %v1362 = vxor.u32 %v1358, 2147483648
  %v1363 = vmul.f32 %v1362, 1.442695
  %v1364 = vpow.pop %v1363
  %v1365 = vadd.f32 %v1364, 1.0
  %v1366 = vrcp.pop %v1365
  %v1367 = vmul.f32 1.0, %v1366
  %v1368 = vxor.u32 %v1359, 2147483648
  %v1369 = vmul.f32 %v1368, 1.442695
  %v1370 = vpow.pop %v1369
  %v1371 = vadd.f32 %v1370, 1.0
  %v1372 = vrcp.pop %v1371
  %v1373 = vmul.f32 1.0, %v1372
  %v1374 = vtanh.pop %v1360
  %v1375 = vxor.u32 %v1361, 2147483648
  %v1376 = vmul.f32 %v1375, 1.442695
  %v1377 = vpow.pop %v1376
  %v1378 = vadd.f32 %v1377, 1.0
  %v1379 = vrcp.pop %v1378
  %v1380 = vmul.f32 1.0, %v1379
  %v1381 = vmul.f32 %v1373, %v1071
  %v1382 = vmul.f32 %v1367, %v1374
  %v1383 = vadd.f32 %v1381, %v1382
  %v1384 = vtanh.pop %v1383
  %v1385 = vmul.f32 %v1380, %v1384
  %s1386 = scalar_lea.vmem %s4, 16
  %1387 = vst [vmem:[%s1386] sm:$0xff] %v1385
  %s1388 = smul.u32 3, 4
  %s1389 = smul.addr %s1388, 8
  %s1390 = scalar_lea.vmem [#allocation2], %s1389
  %v1391 = vld [vmem:[%s1390] sm:$0xff]
  %v1392 = vld [vmem:[%s1390 + $0x8] sm:$0xff]
  %v1393 = vld [vmem:[%s1390 + $0x10] sm:$0xff]
  %v1394 = vld [vmem:[%s1390 + $0x18] sm:$0xff]
  %v1395 = vpack.c.bf16 %v1385, %v1385
  %v1396 = vld [vmem:[%s2] sm:$0xff]
  %v1397 = vld [vmem:[%s2 + $0x8] sm:$0xff]
  %v1398 = vld [vmem:[%s2 + $0x10] sm:$0xff]
  %v1399 = vld [vmem:[%s2 + $0x18] sm:$0xff]
  %v1400 = vld [vmem:[%s2 + $0x20] sm:$0xff]
  %v1401 = vld [vmem:[%s2 + $0x28] sm:$0xff]
  %v1402 = vld [vmem:[%s2 + $0x30] sm:$0xff]
  %v1403 = vld [vmem:[%s2 + $0x38] sm:$0xff]
  %v1404 = vld [vmem:[%s2 + $0x40] sm:$0xff]
  %v1405 = vld [vmem:[%s2 + $0x48] sm:$0xff]
  %v1406 = vld [vmem:[%s2 + $0x50] sm:$0xff]
  %v1407 = vld [vmem:[%s2 + $0x58] sm:$0xff]
  %v1408 = vld [vmem:[%s2 + $0x60] sm:$0xff]
  %v1409 = vld [vmem:[%s2 + $0x68] sm:$0xff]
  %v1410 = vld [vmem:[%s2 + $0x70] sm:$0xff]
  %v1411 = vld [vmem:[%s2 + $0x78] sm:$0xff]
  %v1412 = vld [vmem:[%s2 + $0x80] sm:$0xff]
  %v1413 = vld [vmem:[%s2 + $0x88] sm:$0xff]
  %v1414 = vld [vmem:[%s2 + $0x90] sm:$0xff]
  %v1415 = vld [vmem:[%s2 + $0x98] sm:$0xff]
  %v1416 = vld [vmem:[%s2 + $0xa0] sm:$0xff]
  %v1417 = vld [vmem:[%s2 + $0xa8] sm:$0xff]
  %v1418 = vld [vmem:[%s2 + $0xb0] sm:$0xff]
  %v1419 = vld [vmem:[%s2 + $0xb8] sm:$0xff]
  %v1420 = vld [vmem:[%s2 + $0xc0] sm:$0xff]
  %v1421 = vld [vmem:[%s2 + $0xc8] sm:$0xff]
  %v1422 = vld [vmem:[%s2 + $0xd0] sm:$0xff]
  %v1423 = vld [vmem:[%s2 + $0xd8] sm:$0xff]
  %v1424 = vld [vmem:[%s2 + $0xe0] sm:$0xff]
  %v1425 = vld [vmem:[%s2 + $0xe8] sm:$0xff]
  %v1426 = vld [vmem:[%s2 + $0xf0] sm:$0xff]
  %v1427 = vld [vmem:[%s2 + $0xf8] sm:$0xff]
  %v1460 = vunpack.c.l.b16 %v1396
  %v1461 = vunpack.c.h.b16 %v1396
  %v1462 = vunpack.c.l.b16 %v1397
  %v1463 = vunpack.c.h.b16 %v1397
  %v1464 = vunpack.c.l.b16 %v1398
  %v1465 = vunpack.c.h.b16 %v1398
  %v1466 = vunpack.c.l.b16 %v1399
  %v1467 = vunpack.c.h.b16 %v1399
  %v1468 = vunpack.c.l.b16 %v1400
  %v1469 = vunpack.c.h.b16 %v1400
  %v1470 = vunpack.c.l.b16 %v1401
  %v1471 = vunpack.c.h.b16 %v1401
  %v1472 = vunpack.c.l.b16 %v1402
  %v1473 = vunpack.c.h.b16 %v1402
  %v1474 = vunpack.c.l.b16 %v1403
  %v1475 = vunpack.c.h.b16 %v1403
  %v1476 = vunpack.c.l.b16 %v1404
  %v1477 = vunpack.c.h.b16 %v1404
  %v1478 = vunpack.c.l.b16 %v1405
  %v1479 = vunpack.c.h.b16 %v1405
  %v1480 = vunpack.c.l.b16 %v1406
  %v1481 = vunpack.c.h.b16 %v1406
  %v1482 = vunpack.c.l.b16 %v1407
  %v1483 = vunpack.c.h.b16 %v1407
  %v1484 = vunpack.c.l.b16 %v1408
  %v1485 = vunpack.c.h.b16 %v1408
  %v1486 = vunpack.c.l.b16 %v1409
  %v1487 = vunpack.c.h.b16 %v1409
  %v1488 = vunpack.c.l.b16 %v1410
  %v1489 = vunpack.c.h.b16 %v1410
  %v1490 = vunpack.c.l.b16 %v1411
  %v1491 = vunpack.c.h.b16 %v1411
  %v1492 = vunpack.c.l.b16 %v1412
  %v1493 = vunpack.c.h.b16 %v1412
  %v1494 = vunpack.c.l.b16 %v1413
  %v1495 = vunpack.c.h.b16 %v1413
  %v1496 = vunpack.c.l.b16 %v1414
  %v1497 = vunpack.c.h.b16 %v1414
  %v1498 = vunpack.c.l.b16 %v1415
  %v1499 = vunpack.c.h.b16 %v1415
  %v1500 = vunpack.c.l.b16 %v1416
  %v1501 = vunpack.c.h.b16 %v1416
  %v1502 = vunpack.c.l.b16 %v1417
  %v1503 = vunpack.c.h.b16 %v1417
  %v1504 = vunpack.c.l.b16 %v1418
  %v1505 = vunpack.c.h.b16 %v1418
  %v1506 = vunpack.c.l.b16 %v1419
  %v1507 = vunpack.c.h.b16 %v1419
  %v1508 = vunpack.c.l.b16 %v1420
  %v1509 = vunpack.c.h.b16 %v1420
  %v1510 = vunpack.c.l.b16 %v1421
  %v1511 = vunpack.c.h.b16 %v1421
  %v1512 = vunpack.c.l.b16 %v1422
  %v1513 = vunpack.c.h.b16 %v1422
  %v1514 = vunpack.c.l.b16 %v1423
  %v1515 = vunpack.c.h.b16 %v1423
  %v1516 = vunpack.c.l.b16 %v1424
  %v1517 = vunpack.c.h.b16 %v1424
  %v1518 = vunpack.c.l.b16 %v1425
  %v1519 = vunpack.c.h.b16 %v1425
  %v1520 = vunpack.c.l.b16 %v1426
  %v1521 = vunpack.c.h.b16 %v1426
  %v1522 = vunpack.c.l.b16 %v1427
  %v1523 = vunpack.c.h.b16 %v1427
  %v1524 = vpack.c.b16 %v1464, %v1460
  %v1525 = vpack.c.b16 %v1465, %v1461
  %v1526 = vpack.c.b16 %v1466, %v1462
  %v1527 = vpack.c.b16 %v1467, %v1463
  %v1528 = vpack.c.b16 %v1472, %v1468
  %v1529 = vpack.c.b16 %v1473, %v1469
  %v1530 = vpack.c.b16 %v1474, %v1470
  %v1531 = vpack.c.b16 %v1475, %v1471
  %v1532 = vpack.c.b16 %v1480, %v1476
  %v1533 = vpack.c.b16 %v1481, %v1477
  %v1534 = vpack.c.b16 %v1482, %v1478
  %v1535 = vpack.c.b16 %v1483, %v1479
  %v1536 = vpack.c.b16 %v1488, %v1484
  %v1537 = vpack.c.b16 %v1489, %v1485
  %v1538 = vpack.c.b16 %v1490, %v1486
  %v1539 = vpack.c.b16 %v1491, %v1487
  %v1540 = vpack.c.b16 %v1496, %v1492
  %v1541 = vpack.c.b16 %v1497, %v1493
  %v1542 = vpack.c.b16 %v1498, %v1494
  %v1543 = vpack.c.b16 %v1499, %v1495
  %v1544 = vpack.c.b16 %v1504, %v1500
  %v1545 = vpack.c.b16 %v1505, %v1501
  %v1546 = vpack.c.b16 %v1506, %v1502
  %v1547 = vpack.c.b16 %v1507, %v1503
  %v1548 = vpack.c.b16 %v1512, %v1508
  %v1549 = vpack.c.b16 %v1513, %v1509
  %v1550 = vpack.c.b16 %v1514, %v1510
  %v1551 = vpack.c.b16 %v1515, %v1511
  %v1552 = vpack.c.b16 %v1520, %v1516
  %v1553 = vpack.c.b16 %v1521, %v1517
  %v1554 = vpack.c.b16 %v1522, %v1518
  %v1555 = vpack.c.b16 %v1523, %v1519
  %1588 = vmatprep.subr.bf16.mxu0 %v1553
  %1589 = vmatpush1.bf16.msra.mxu0 %v1552
  %1590 = vmatprep.subr.bf16.mxu0 %v1549
  %1591 = vmatpush1.bf16.msra.mxu0 %v1548
  %1592 = vmatprep.subr.bf16.mxu0 %v1545
  %1593 = vmatpush1.bf16.msra.mxu0 %v1544
  %1594 = vmatprep.subr.bf16.mxu0 %v1541
  %1595 = vmatpush1.bf16.msra.mxu0 %v1540
  %1596 = vmatprep.subr.bf16.mxu0 %v1537
  %1597 = vmatpush1.bf16.msra.mxu0 %v1536
  %1598 = vmatprep.subr.bf16.mxu0 %v1533
  %1599 = vmatpush1.bf16.msra.mxu0 %v1532
  %1600 = vmatprep.subr.bf16.mxu0 %v1529
  %1601 = vmatpush1.bf16.msra.mxu0 %v1528
  %1602 = vmatprep.subr.bf16.mxu0 %v1525
  %1603 = vmatpush1.bf16.msra.mxu0 %v1524
  %1604 = vmatprep.subr.bf16.mxu0 0
  %1605 = vmatpush2.bf16.msra.mxu0 0
  %1606 = vmatprep.subr.bf16.mxu0 0
  %1607 = vmatpush2.bf16.msra.mxu0 0
  %1608 = vmatprep.subr.bf16.mxu0 0
  %1609 = vmatpush2.bf16.msra.mxu0 0
  %1610 = vmatprep.subr.bf16.mxu0 0
  %1611 = vmatpush2.bf16.msra.mxu0 0
  %1612 = vmatprep.subr.bf16.mxu0 0
  %1613 = vmatpush2.bf16.msra.mxu0 0
  %1614 = vmatprep.subr.bf16.mxu0 0
  %1615 = vmatpush2.bf16.msra.mxu0 0
  %1616 = vmatprep.subr.bf16.mxu0 0
  %1617 = vmatpush2.bf16.msra.mxu0 0
  %1618 = vmatprep.subr.bf16.mxu0 0
  %1619 = vmatpush2.bf16.msra.mxu0 0
  %1620 = vmatprep.mubr.bf16.mxu0 0
  %1621 = vmatmul.mubr.bf16.gmra.mxu0 %v1395
  %v1622 = vpop.f32.mrf.mxu0
  %v1623 = vadd.f32 0.0, %v1622
  %v1624 = vpop.f32.mrf.mxu0
  %v1625 = vadd.f32 0.0, %v1624
  %v1626 = vpop.f32.mrf.mxu0
  %v1627 = vpop.f32.mrf.mxu0
  %1628 = vdwg.mxu0
  %1629 = vmatprep.subr.bf16.mxu0 %v1555
  %1630 = vmatpush1.bf16.msra.mxu0 %v1554
  %1631 = vmatprep.subr.bf16.mxu0 %v1551
  %1632 = vmatpush1.bf16.msra.mxu0 %v1550
  %1633 = vmatprep.subr.bf16.mxu0 %v1547
  %1634 = vmatpush1.bf16.msra.mxu0 %v1546
  %1635 = vmatprep.subr.bf16.mxu0 %v1543
  %1636 = vmatpush1.bf16.msra.mxu0 %v1542
  %1637 = vmatprep.subr.bf16.mxu0 %v1539
  %1638 = vmatpush1.bf16.msra.mxu0 %v1538
  %1639 = vmatprep.subr.bf16.mxu0 %v1535
  %1640 = vmatpush1.bf16.msra.mxu0 %v1534
  %1641 = vmatprep.subr.bf16.mxu0 %v1531
  %1642 = vmatpush1.bf16.msra.mxu0 %v1530
  %1643 = vmatprep.subr.bf16.mxu0 %v1527
  %1644 = vmatpush1.bf16.msra.mxu0 %v1526
  %1645 = vmatprep.subr.bf16.mxu0 0
  %1646 = vmatpush2.bf16.msra.mxu0 0
  %1647 = vmatprep.subr.bf16.mxu0 0
  %1648 = vmatpush2.bf16.msra.mxu0 0
  %1649 = vmatprep.subr.bf16.mxu0 0
  %1650 = vmatpush2.bf16.msra.mxu0 0
  %1651 = vmatprep.subr.bf16.mxu0 0
  %1652 = vmatpush2.bf16.msra.mxu0 0
  %1653 = vmatprep.subr.bf16.mxu0 0
  %1654 = vmatpush2.bf16.msra.mxu0 0
  %1655 = vmatprep.subr.bf16.mxu0 0
  %1656 = vmatpush2.bf16.msra.mxu0 0
  %1657 = vmatprep.subr.bf16.mxu0 0
  %1658 = vmatpush2.bf16.msra.mxu0 0
  %1659 = vmatprep.subr.bf16.mxu0 0
  %1660 = vmatpush2.bf16.msra.mxu0 0
  %1661 = vmatprep.mubr.bf16.mxu0 0
  %1662 = vmatmul.mubr.bf16.gmra.mxu0 %v1395
  %v1663 = vpop.f32.mrf.mxu0
  %v1664 = vadd.f32 0.0, %v1663
  %v1665 = vpop.f32.mrf.mxu0
  %v1666 = vadd.f32 0.0, %v1665
  %v1667 = vpop.f32.mrf.mxu0
  %v1668 = vpop.f32.mrf.mxu0
  %1669 = vdwg.mxu0
  %v1670 = vadd.f32 %v1391, %v1623
  %v1671 = vadd.f32 %v1392, %v1625
  %v1672 = vadd.f32 %v1393, %v1664
  %v1673 = vadd.f32 %v1394, %v1666
  %v1674 = vxor.u32 %v1670, 2147483648
  %v1675 = vmul.f32 %v1674, 1.442695
  %v1676 = vpow.pop %v1675
  %v1677 = vadd.f32 %v1676, 1.0
  %v1678 = vrcp.pop %v1677
  %v1679 = vmul.f32 1.0, %v1678
  %v1680 = vxor.u32 %v1671, 2147483648
  %v1681 = vmul.f32 %v1680, 1.442695
  %v1682 = vpow.pop %v1681
  %v1683 = vadd.f32 %v1682, 1.0
  %v1684 = vrcp.pop %v1683
  %v1685 = vmul.f32 1.0, %v1684
  %v1686 = vtanh.pop %v1672
  %v1687 = vxor.u32 %v1673, 2147483648
  %v1688 = vmul.f32 %v1687, 1.442695
  %v1689 = vpow.pop %v1688
  %v1690 = vadd.f32 %v1689, 1.0
  %v1691 = vrcp.pop %v1690
  %v1692 = vmul.f32 1.0, %v1691
  %v1693 = vmul.f32 %v1685, %v1383
  %v1694 = vmul.f32 %v1679, %v1686
  %v1695 = vadd.f32 %v1693, %v1694
  %v1696 = vtanh.pop %v1695
  %v1697 = vmul.f32 %v1692, %v1696
  %s1698 = scalar_lea.vmem %s4, 24
  %1699 = vst [vmem:[%s1698] sm:$0xff] %v1697
  %s1700 = smul.u32 4, 4
  %s1701 = smul.addr %s1700, 8
  %s1702 = scalar_lea.vmem [#allocation2], %s1701
  %v1703 = vld [vmem:[%s1702] sm:$0xff]
  %v1704 = vld [vmem:[%s1702 + $0x8] sm:$0xff]
  %v1705 = vld [vmem:[%s1702 + $0x10] sm:$0xff]
  %v1706 = vld [vmem:[%s1702 + $0x18] sm:$0xff]
  %v1707 = vpack.c.bf16 %v1697, %v1697
  %v1708 = vld [vmem:[%s2] sm:$0xff]
  %v1709 = vld [vmem:[%s2 + $0x8] sm:$0xff]
  %v1710 = vld [vmem:[%s2 + $0x10] sm:$0xff]
  %v1711 = vld [vmem:[%s2 + $0x18] sm:$0xff]
  %v1712 = vld [vmem:[%s2 + $0x20] sm:$0xff]
  %v1713 = vld [vmem:[%s2 + $0x28] sm:$0xff]
  %v1714 = vld [vmem:[%s2 + $0x30] sm:$0xff]
  %v1715 = vld [vmem:[%s2 + $0x38] sm:$0xff]
  %v1716 = vld [vmem:[%s2 + $0x40] sm:$0xff]
  %v1717 = vld [vmem:[%s2 + $0x48] sm:$0xff]
  %v1718 = vld [vmem:[%s2 + $0x50] sm:$0xff]
  %v1719 = vld [vmem:[%s2 + $0x58] sm:$0xff]
  %v1720 = vld [vmem:[%s2 + $0x60] sm:$0xff]
  %v1721 = vld [vmem:[%s2 + $0x68] sm:$0xff]
  %v1722 = vld [vmem:[%s2 + $0x70] sm:$0xff]
  %v1723 = vld [vmem:[%s2 + $0x78] sm:$0xff]
  %v1724 = vld [vmem:[%s2 + $0x80] sm:$0xff]
  %v1725 = vld [vmem:[%s2 + $0x88] sm:$0xff]
  %v1726 = vld [vmem:[%s2 + $0x90] sm:$0xff]
  %v1727 = vld [vmem:[%s2 + $0x98] sm:$0xff]
  %v1728 = vld [vmem:[%s2 + $0xa0] sm:$0xff]
  %v1729 = vld [vmem:[%s2 + $0xa8] sm:$0xff]
  %v1730 = vld [vmem:[%s2 + $0xb0] sm:$0xff]
  %v1731 = vld [vmem:[%s2 + $0xb8] sm:$0xff]
  %v1732 = vld [vmem:[%s2 + $0xc0] sm:$0xff]
  %v1733 = vld [vmem:[%s2 + $0xc8] sm:$0xff]
  %v1734 = vld [vmem:[%s2 + $0xd0] sm:$0xff]
  %v1735 = vld [vmem:[%s2 + $0xd8] sm:$0xff]
  %v1736 = vld [vmem:[%s2 + $0xe0] sm:$0xff]
  %v1737 = vld [vmem:[%s2 + $0xe8] sm:$0xff]
  %v1738 = vld [vmem:[%s2 + $0xf0] sm:$0xff]
  %v1739 = vld [vmem:[%s2 + $0xf8] sm:$0xff]
  %v1772 = vunpack.c.l.b16 %v1708
  %v1773 = vunpack.c.h.b16 %v1708
  %v1774 = vunpack.c.l.b16 %v1709
  %v1775 = vunpack.c.h.b16 %v1709
  %v1776 = vunpack.c.l.b16 %v1710
  %v1777 = vunpack.c.h.b16 %v1710
  %v1778 = vunpack.c.l.b16 %v1711
  %v1779 = vunpack.c.h.b16 %v1711
  %v1780 = vunpack.c.l.b16 %v1712
  %v1781 = vunpack.c.h.b16 %v1712
  %v1782 = vunpack.c.l.b16 %v1713
  %v1783 = vunpack.c.h.b16 %v1713
  %v1784 = vunpack.c.l.b16 %v1714
  %v1785 = vunpack.c.h.b16 %v1714
  %v1786 = vunpack.c.l.b16 %v1715
  %v1787 = vunpack.c.h.b16 %v1715
  %v1788 = vunpack.c.l.b16 %v1716
  %v1789 = vunpack.c.h.b16 %v1716
  %v1790 = vunpack.c.l.b16 %v1717
  %v1791 = vunpack.c.h.b16 %v1717
  %v1792 = vunpack.c.l.b16 %v1718
  %v1793 = vunpack.c.h.b16 %v1718
  %v1794 = vunpack.c.l.b16 %v1719
  %v1795 = vunpack.c.h.b16 %v1719
  %v1796 = vunpack.c.l.b16 %v1720
  %v1797 = vunpack.c.h.b16 %v1720
  %v1798 = vunpack.c.l.b16 %v1721
  %v1799 = vunpack.c.h.b16 %v1721
  %v1800 = vunpack.c.l.b16 %v1722
  %v1801 = vunpack.c.h.b16 %v1722
  %v1802 = vunpack.c.l.b16 %v1723
  %v1803 = vunpack.c.h.b16 %v1723
  %v1804 = vunpack.c.l.b16 %v1724
  %v1805 = vunpack.c.h.b16 %v1724
  %v1806 = vunpack.c.l.b16 %v1725
  %v1807 = vunpack.c.h.b16 %v1725
  %v1808 = vunpack.c.l.b16 %v1726
  %v1809 = vunpack.c.h.b16 %v1726
  %v1810 = vunpack.c.l.b16 %v1727
  %v1811 = vunpack.c.h.b16 %v1727
  %v1812 = vunpack.c.l.b16 %v1728
  %v1813 = vunpack.c.h.b16 %v1728
  %v1814 = vunpack.c.l.b16 %v1729
  %v1815 = vunpack.c.h.b16 %v1729
  %v1816 = vunpack.c.l.b16 %v1730
  %v1817 = vunpack.c.h.b16 %v1730
  %v1818 = vunpack.c.l.b16 %v1731
  %v1819 = vunpack.c.h.b16 %v1731
  %v1820 = vunpack.c.l.b16 %v1732
  %v1821 = vunpack.c.h.b16 %v1732
  %v1822 = vunpack.c.l.b16 %v1733
  %v1823 = vunpack.c.h.b16 %v1733
  %v1824 = vunpack.c.l.b16 %v1734
  %v1825 = vunpack.c.h.b16 %v1734
  %v1826 = vunpack.c.l.b16 %v1735
  %v1827 = vunpack.c.h.b16 %v1735
  %v1828 = vunpack.c.l.b16 %v1736
  %v1829 = vunpack.c.h.b16 %v1736
  %v1830 = vunpack.c.l.b16 %v1737
  %v1831 = vunpack.c.h.b16 %v1737
  %v1832 = vunpack.c.l.b16 %v1738
  %v1833 = vunpack.c.h.b16 %v1738
  %v1834 = vunpack.c.l.b16 %v1739
  %v1835 = vunpack.c.h.b16 %v1739
  %v1836 = vpack.c.b16 %v1776, %v1772
  %v1837 = vpack.c.b16 %v1777, %v1773
  %v1838 = vpack.c.b16 %v1778, %v1774
  %v1839 = vpack.c.b16 %v1779, %v1775
  %v1840 = vpack.c.b16 %v1784, %v1780
  %v1841 = vpack.c.b16 %v1785, %v1781
  %v1842 = vpack.c.b16 %v1786, %v1782
  %v1843 = vpack.c.b16 %v1787, %v1783
  %v1844 = vpack.c.b16 %v1792, %v1788
  %v1845 = vpack.c.b16 %v1793, %v1789
  %v1846 = vpack.c.b16 %v1794, %v1790
  %v1847 = vpack.c.b16 %v1795, %v1791
  %v1848 = vpack.c.b16 %v1800, %v1796
  %v1849 = vpack.c.b16 %v1801, %v1797
  %v1850 = vpack.c.b16 %v1802, %v1798
  %v1851 = vpack.c.b16 %v1803, %v1799
  %v1852 = vpack.c.b16 %v1808, %v1804
  %v1853 = vpack.c.b16 %v1809, %v1805
  %v1854 = vpack.c.b16 %v1810, %v1806
  %v1855 = vpack.c.b16 %v1811, %v1807
  %v1856 = vpack.c.b16 %v1816, %v1812
  %v1857 = vpack.c.b16 %v1817, %v1813
  %v1858 = vpack.c.b16 %v1818, %v1814
  %v1859 = vpack.c.b16 %v1819, %v1815
  %v1860 = vpack.c.b16 %v1824, %v1820
  %v1861 = vpack.c.b16 %v1825, %v1821
  %v1862 = vpack.c.b16 %v1826, %v1822
  %v1863 = vpack.c.b16 %v1827, %v1823
  %v1864 = vpack.c.b16 %v1832, %v1828
  %v1865 = vpack.c.b16 %v1833, %v1829
  %v1866 = vpack.c.b16 %v1834, %v1830
  %v1867 = vpack.c.b16 %v1835, %v1831
  %1900 = vmatprep.subr.bf16.mxu0 %v1865
  %1901 = vmatpush1.bf16.msra.mxu0 %v1864
  %1902 = vmatprep.subr.bf16.mxu0 %v1861
  %1903 = vmatpush1.bf16.msra.mxu0 %v1860
  %1904 = vmatprep.subr.bf16.mxu0 %v1857
  %1905 = vmatpush1.bf16.msra.mxu0 %v1856
  %1906 = vmatprep.subr.bf16.mxu0 %v1853
  %1907 = vmatpush1.bf16.msra.mxu0 %v1852
  %1908 = vmatprep.subr.bf16.mxu0 %v1849
  %1909 = vmatpush1.bf16.msra.mxu0 %v1848
  %1910 = vmatprep.subr.bf16.mxu0 %v1845
  %1911 = vmatpush1.bf16.msra.mxu0 %v1844
  %1912 = vmatprep.subr.bf16.mxu0 %v1841
  %1913 = vmatpush1.bf16.msra.mxu0 %v1840
  %1914 = vmatprep.subr.bf16.mxu0 %v1837
  %1915 = vmatpush1.bf16.msra.mxu0 %v1836
  %1916 = vmatprep.subr.bf16.mxu0 0
  %1917 = vmatpush2.bf16.msra.mxu0 0
  %1918 = vmatprep.subr.bf16.mxu0 0
  %1919 = vmatpush2.bf16.msra.mxu0 0
  %1920 = vmatprep.subr.bf16.mxu0 0
  %1921 = vmatpush2.bf16.msra.mxu0 0
  %1922 = vmatprep.subr.bf16.mxu0 0
  %1923 = vmatpush2.bf16.msra.mxu0 0
  %1924 = vmatprep.subr.bf16.mxu0 0
  %1925 = vmatpush2.bf16.msra.mxu0 0
  %1926 = vmatprep.subr.bf16.mxu0 0
  %1927 = vmatpush2.bf16.msra.mxu0 0
  %1928 = vmatprep.subr.bf16.mxu0 0
  %1929 = vmatpush2.bf16.msra.mxu0 0
  %1930 = vmatprep.subr.bf16.mxu0 0
  %1931 = vmatpush2.bf16.msra.mxu0 0
  %1932 = vmatprep.mubr.bf16.mxu0 0
  %1933 = vmatmul.mubr.bf16.gmra.mxu0 %v1707
  %v1934 = vpop.f32.mrf.mxu0
  %v1935 = vadd.f32 0.0, %v1934
  %v1936 = vpop.f32.mrf.mxu0
  %v1937 = vadd.f32 0.0, %v1936
  %v1938 = vpop.f32.mrf.mxu0
  %v1939 = vpop.f32.mrf.mxu0
  %1940 = vdwg.mxu0
  %1941 = vmatprep.subr.bf16.mxu0 %v1867
  %1942 = vmatpush1.bf16.msra.mxu0 %v1866
  %1943 = vmatprep.subr.bf16.mxu0 %v1863
  %1944 = vmatpush1.bf16.msra.mxu0 %v1862
  %1945 = vmatprep.subr.bf16.mxu0 %v1859
  %1946 = vmatpush1.bf16.msra.mxu0 %v1858
  %1947 = vmatprep.subr.bf16.mxu0 %v1855
  %1948 = vmatpush1.bf16.msra.mxu0 %v1854
  %1949 = vmatprep.subr.bf16.mxu0 %v1851
  %1950 = vmatpush1.bf16.msra.mxu0 %v1850
  %1951 = vmatprep.subr.bf16.mxu0 %v1847
  %1952 = vmatpush1.bf16.msra.mxu0 %v1846
  %1953 = vmatprep.subr.bf16.mxu0 %v1843
  %1954 = vmatpush1.bf16.msra.mxu0 %v1842
  %1955 = vmatprep.subr.bf16.mxu0 %v1839
  %1956 = vmatpush1.bf16.msra.mxu0 %v1838
  %1957 = vmatprep.subr.bf16.mxu0 0
  %1958 = vmatpush2.bf16.msra.mxu0 0
  %1959 = vmatprep.subr.bf16.mxu0 0
  %1960 = vmatpush2.bf16.msra.mxu0 0
  %1961 = vmatprep.subr.bf16.mxu0 0
  %1962 = vmatpush2.bf16.msra.mxu0 0
  %1963 = vmatprep.subr.bf16.mxu0 0
  %1964 = vmatpush2.bf16.msra.mxu0 0
  %1965 = vmatprep.subr.bf16.mxu0 0
  %1966 = vmatpush2.bf16.msra.mxu0 0
  %1967 = vmatprep.subr.bf16.mxu0 0
  %1968 = vmatpush2.bf16.msra.mxu0 0
  %1969 = vmatprep.subr.bf16.mxu0 0
  %1970 = vmatpush2.bf16.msra.mxu0 0
  %1971 = vmatprep.subr.bf16.mxu0 0
  %1972 = vmatpush2.bf16.msra.mxu0 0
  %1973 = vmatprep.mubr.bf16.mxu0 0
  %1974 = vmatmul.mubr.bf16.gmra.mxu0 %v1707
  %v1975 = vpop.f32.mrf.mxu0
  %v1976 = vadd.f32 0.0, %v1975
  %v1977 = vpop.f32.mrf.mxu0
  %v1978 = vadd.f32 0.0, %v1977
  %v1979 = vpop.f32.mrf.mxu0
  %v1980 = vpop.f32.mrf.mxu0
  %1981 = vdwg.mxu0
  %v1982 = vadd.f32 %v1703, %v1935
  %v1983 = vadd.f32 %v1704, %v1937
  %v1984 = vadd.f32 %v1705, %v1976
  %v1985 = vadd.f32 %v1706, %v1978
  %v1986 = vxor.u32 %v1982, 2147483648
  %v1987 = vmul.f32 %v1986, 1.442695
  %v1988 = vpow.pop %v1987
  %v1989 = vadd.f32 %v1988, 1.0
  %v1990 = vrcp.pop %v1989
  %v1991 = vmul.f32 1.0, %v1990
  %v1992 = vxor.u32 %v1983, 2147483648
  %v1993 = vmul.f32 %v1992, 1.442695
  %v1994 = vpow.pop %v1993
  %v1995 = vadd.f32 %v1994, 1.0
  %v1996 = vrcp.pop %v1995
  %v1997 = vmul.f32 1.0, %v1996
  %v1998 = vtanh.pop %v1984
  %v1999 = vxor.u32 %v1985, 2147483648
  %v2000 = vmul.f32 %v1999, 1.442695
  %v2001 = vpow.pop %v2000
  %v2002 = vadd.f32 %v2001, 1.0
  %v2003 = vrcp.pop %v2002
  %v2004 = vmul.f32 1.0, %v2003
  %v2005 = vmul.f32 %v1997, %v1695
  %v2006 = vmul.f32 %v1991, %v1998
  %v2007 = vadd.f32 %v2005, %v2006
  %v2008 = vtanh.pop %v2007
  %v2009 = vmul.f32 %v2004, %v2008
  %s2010 = scalar_lea.vmem %s4, 32
  %2011 = vst [vmem:[%s2010] sm:$0xff] %v2009
  %s2012 = smul.u32 5, 4
  %s2013 = smul.addr %s2012, 8
  %s2014 = scalar_lea.vmem [#allocation2], %s2013
  %v2015 = vld [vmem:[%s2014] sm:$0xff]
  %v2016 = vld [vmem:[%s2014 + $0x8] sm:$0xff]
  %v2017 = vld [vmem:[%s2014 + $0x10] sm:$0xff]
  %v2018 = vld [vmem:[%s2014 + $0x18] sm:$0xff]
  %v2019 = vpack.c.bf16 %v2009, %v2009
  %v2020 = vld [vmem:[%s2] sm:$0xff]
  %v2021 = vld [vmem:[%s2 + $0x8] sm:$0xff]
  %v2022 = vld [vmem:[%s2 + $0x10] sm:$0xff]
  %v2023 = vld [vmem:[%s2 + $0x18] sm:$0xff]
  %v2024 = vld [vmem:[%s2 + $0x20] sm:$0xff]
  %v2025 = vld [vmem:[%s2 + $0x28] sm:$0xff]
  %v2026 = vld [vmem:[%s2 + $0x30] sm:$0xff]
  %v2027 = vld [vmem:[%s2 + $0x38] sm:$0xff]
  %v2028 = vld [vmem:[%s2 + $0x40] sm:$0xff]
  %v2029 = vld [vmem:[%s2 + $0x48] sm:$0xff]
  %v2030 = vld [vmem:[%s2 + $0x50] sm:$0xff]
  %v2031 = vld [vmem:[%s2 + $0x58] sm:$0xff]
  %v2032 = vld [vmem:[%s2 + $0x60] sm:$0xff]
  %v2033 = vld [vmem:[%s2 + $0x68] sm:$0xff]
  %v2034 = vld [vmem:[%s2 + $0x70] sm:$0xff]
  %v2035 = vld [vmem:[%s2 + $0x78] sm:$0xff]
  %v2036 = vld [vmem:[%s2 + $0x80] sm:$0xff]
  %v2037 = vld [vmem:[%s2 + $0x88] sm:$0xff]
  %v2038 = vld [vmem:[%s2 + $0x90] sm:$0xff]
  %v2039 = vld [vmem:[%s2 + $0x98] sm:$0xff]
  %v2040 = vld [vmem:[%s2 + $0xa0] sm:$0xff]
  %v2041 = vld [vmem:[%s2 + $0xa8] sm:$0xff]
  %v2042 = vld [vmem:[%s2 + $0xb0] sm:$0xff]
  %v2043 = vld [vmem:[%s2 + $0xb8] sm:$0xff]
  %v2044 = vld [vmem:[%s2 + $0xc0] sm:$0xff]
  %v2045 = vld [vmem:[%s2 + $0xc8] sm:$0xff]
  %v2046 = vld [vmem:[%s2 + $0xd0] sm:$0xff]
  %v2047 = vld [vmem:[%s2 + $0xd8] sm:$0xff]
  %v2048 = vld [vmem:[%s2 + $0xe0] sm:$0xff]
  %v2049 = vld [vmem:[%s2 + $0xe8] sm:$0xff]
  %v2050 = vld [vmem:[%s2 + $0xf0] sm:$0xff]
  %v2051 = vld [vmem:[%s2 + $0xf8] sm:$0xff]
  %v2084 = vunpack.c.l.b16 %v2020
  %v2085 = vunpack.c.h.b16 %v2020
  %v2086 = vunpack.c.l.b16 %v2021
  %v2087 = vunpack.c.h.b16 %v2021
  %v2088 = vunpack.c.l.b16 %v2022
  %v2089 = vunpack.c.h.b16 %v2022
  %v2090 = vunpack.c.l.b16 %v2023
  %v2091 = vunpack.c.h.b16 %v2023
  %v2092 = vunpack.c.l.b16 %v2024
  %v2093 = vunpack.c.h.b16 %v2024
  %v2094 = vunpack.c.l.b16 %v2025
  %v2095 = vunpack.c.h.b16 %v2025
  %v2096 = vunpack.c.l.b16 %v2026
  %v2097 = vunpack.c.h.b16 %v2026
  %v2098 = vunpack.c.l.b16 %v2027
  %v2099 = vunpack.c.h.b16 %v2027
  %v2100 = vunpack.c.l.b16 %v2028
  %v2101 = vunpack.c.h.b16 %v2028
  %v2102 = vunpack.c.l.b16 %v2029
  %v2103 = vunpack.c.h.b16 %v2029
  %v2104 = vunpack.c.l.b16 %v2030
  %v2105 = vunpack.c.h.b16 %v2030
  %v2106 = vunpack.c.l.b16 %v2031
  %v2107 = vunpack.c.h.b16 %v2031
  %v2108 = vunpack.c.l.b16 %v2032
  %v2109 = vunpack.c.h.b16 %v2032
  %v2110 = vunpack.c.l.b16 %v2033
  %v2111 = vunpack.c.h.b16 %v2033
  %v2112 = vunpack.c.l.b16 %v2034
  %v2113 = vunpack.c.h.b16 %v2034
  %v2114 = vunpack.c.l.b16 %v2035
  %v2115 = vunpack.c.h.b16 %v2035
  %v2116 = vunpack.c.l.b16 %v2036
  %v2117 = vunpack.c.h.b16 %v2036
  %v2118 = vunpack.c.l.b16 %v2037
  %v2119 = vunpack.c.h.b16 %v2037
  %v2120 = vunpack.c.l.b16 %v2038
  %v2121 = vunpack.c.h.b16 %v2038
  %v2122 = vunpack.c.l.b16 %v2039
  %v2123 = vunpack.c.h.b16 %v2039
  %v2124 = vunpack.c.l.b16 %v2040
  %v2125 = vunpack.c.h.b16 %v2040
  %v2126 = vunpack.c.l.b16 %v2041
  %v2127 = vunpack.c.h.b16 %v2041
  %v2128 = vunpack.c.l.b16 %v2042
  %v2129 = vunpack.c.h.b16 %v2042
  %v2130 = vunpack.c.l.b16 %v2043
  %v2131 = vunpack.c.h.b16 %v2043
  %v2132 = vunpack.c.l.b16 %v2044
  %v2133 = vunpack.c.h.b16 %v2044
  %v2134 = vunpack.c.l.b16 %v2045
  %v2135 = vunpack.c.h.b16 %v2045
  %v2136 = vunpack.c.l.b16 %v2046
  %v2137 = vunpack.c.h.b16 %v2046
  %v2138 = vunpack.c.l.b16 %v2047
  %v2139 = vunpack.c.h.b16 %v2047
  %v2140 = vunpack.c.l.b16 %v2048
  %v2141 = vunpack.c.h.b16 %v2048
  %v2142 = vunpack.c.l.b16 %v2049
  %v2143 = vunpack.c.h.b16 %v2049
  %v2144 = vunpack.c.l.b16 %v2050
  %v2145 = vunpack.c.h.b16 %v2050
  %v2146 = vunpack.c.l.b16 %v2051
  %v2147 = vunpack.c.h.b16 %v2051
  %v2148 = vpack.c.b16 %v2088, %v2084
  %v2149 = vpack.c.b16 %v2089, %v2085
  %v2150 = vpack.c.b16 %v2090, %v2086
  %v2151 = vpack.c.b16 %v2091, %v2087
  %v2152 = vpack.c.b16 %v2096, %v2092
  %v2153 = vpack.c.b16 %v2097, %v2093
  %v2154 = vpack.c.b16 %v2098, %v2094
  %v2155 = vpack.c.b16 %v2099, %v2095
  %v2156 = vpack.c.b16 %v2104, %v2100
  %v2157 = vpack.c.b16 %v2105, %v2101
  %v2158 = vpack.c.b16 %v2106, %v2102
  %v2159 = vpack.c.b16 %v2107, %v2103
  %v2160 = vpack.c.b16 %v2112, %v2108
  %v2161 = vpack.c.b16 %v2113, %v2109
  %v2162 = vpack.c.b16 %v2114, %v2110
  %v2163 = vpack.c.b16 %v2115, %v2111
  %v2164 = vpack.c.b16 %v2120, %v2116
  %v2165 = vpack.c.b16 %v2121, %v2117
  %v2166 = vpack.c.b16 %v2122, %v2118
  %v2167 = vpack.c.b16 %v2123, %v2119
  %v2168 = vpack.c.b16 %v2128, %v2124
  %v2169 = vpack.c.b16 %v2129, %v2125
  %v2170 = vpack.c.b16 %v2130, %v2126
  %v2171 = vpack.c.b16 %v2131, %v2127
  %v2172 = vpack.c.b16 %v2136, %v2132
  %v2173 = vpack.c.b16 %v2137, %v2133
  %v2174 = vpack.c.b16 %v2138, %v2134
  %v2175 = vpack.c.b16 %v2139, %v2135
  %v2176 = vpack.c.b16 %v2144, %v2140
  %v2177 = vpack.c.b16 %v2145, %v2141
  %v2178 = vpack.c.b16 %v2146, %v2142
  %v2179 = vpack.c.b16 %v2147, %v2143
  %2212 = vmatprep.subr.bf16.mxu0 %v2177
  %2213 = vmatpush1.bf16.msra.mxu0 %v2176
  %2214 = vmatprep.subr.bf16.mxu0 %v2173
  %2215 = vmatpush1.bf16.msra.mxu0 %v2172
  %2216 = vmatprep.subr.bf16.mxu0 %v2169
  %2217 = vmatpush1.bf16.msra.mxu0 %v2168
  %2218 = vmatprep.subr.bf16.mxu0 %v2165
  %2219 = vmatpush1.bf16.msra.mxu0 %v2164
  %2220 = vmatprep.subr.bf16.mxu0 %v2161
  %2221 = vmatpush1.bf16.msra.mxu0 %v2160
  %2222 = vmatprep.subr.bf16.mxu0 %v2157
  %2223 = vmatpush1.bf16.msra.mxu0 %v2156
  %2224 = vmatprep.subr.bf16.mxu0 %v2153
  %2225 = vmatpush1.bf16.msra.mxu0 %v2152
  %2226 = vmatprep.subr.bf16.mxu0 %v2149
  %2227 = vmatpush1.bf16.msra.mxu0 %v2148
  %2228 = vmatprep.subr.bf16.mxu0 0
  %2229 = vmatpush2.bf16.msra.mxu0 0
  %2230 = vmatprep.subr.bf16.mxu0 0
  %2231 = vmatpush2.bf16.msra.mxu0 0
  %2232 = vmatprep.subr.bf16.mxu0 0
  %2233 = vmatpush2.bf16.msra.mxu0 0
  %2234 = vmatprep.subr.bf16.mxu0 0
  %2235 = vmatpush2.bf16.msra.mxu0 0
  %2236 = vmatprep.subr.bf16.mxu0 0
  %2237 = vmatpush2.bf16.msra.mxu0 0
  %2238 = vmatprep.subr.bf16.mxu0 0
  %2239 = vmatpush2.bf16.msra.mxu0 0
  %2240 = vmatprep.subr.bf16.mxu0 0
  %2241 = vmatpush2.bf16.msra.mxu0 0
  %2242 = vmatprep.subr.bf16.mxu0 0
  %2243 = vmatpush2.bf16.msra.mxu0 0
  %2244 = vmatprep.mubr.bf16.mxu0 0
  %2245 = vmatmul.mubr.bf16.gmra.mxu0 %v2019
  %v2246 = vpop.f32.mrf.mxu0
  %v2247 = vadd.f32 0.0, %v2246
  %v2248 = vpop.f32.mrf.mxu0
  %v2249 = vadd.f32 0.0, %v2248
  %v2250 = vpop.f32.mrf.mxu0
  %v2251 = vpop.f32.mrf.mxu0
  %2252 = vdwg.mxu0
  %2253 = vmatprep.subr.bf16.mxu0 %v2179
  %2254 = vmatpush1.bf16.msra.mxu0 %v2178
  %2255 = vmatprep.subr.bf16.mxu0 %v2175
  %2256 = vmatpush1.bf16.msra.mxu0 %v2174
  %2257 = vmatprep.subr.bf16.mxu0 %v2171
  %2258 = vmatpush1.bf16.msra.mxu0 %v2170
  %2259 = vmatprep.subr.bf16.mxu0 %v2167
  %2260 = vmatpush1.bf16.msra.mxu0 %v2166
  %2261 = vmatprep.subr.bf16.mxu0 %v2163
  %2262 = vmatpush1.bf16.msra.mxu0 %v2162
  %2263 = vmatprep.subr.bf16.mxu0 %v2159
  %2264 = vmatpush1.bf16.msra.mxu0 %v2158
  %2265 = vmatprep.subr.bf16.mxu0 %v2155
  %2266 = vmatpush1.bf16.msra.mxu0 %v2154
  %2267 = vmatprep.subr.bf16.mxu0 %v2151
  %2268 = vmatpush1.bf16.msra.mxu0 %v2150
  %2269 = vmatprep.subr.bf16.mxu0 0
  %2270 = vmatpush2.bf16.msra.mxu0 0
  %2271 = vmatprep.subr.bf16.mxu0 0
  %2272 = vmatpush2.bf16.msra.mxu0 0
  %2273 = vmatprep.subr.bf16.mxu0 0
  %2274 = vmatpush2.bf16.msra.mxu0 0
  %2275 = vmatprep.subr.bf16.mxu0 0
  %2276 = vmatpush2.bf16.msra.mxu0 0
  %2277 = vmatprep.subr.bf16.mxu0 0
  %2278 = vmatpush2.bf16.msra.mxu0 0
  %2279 = vmatprep.subr.bf16.mxu0 0
  %2280 = vmatpush2.bf16.msra.mxu0 0
  %2281 = vmatprep.subr.bf16.mxu0 0
  %2282 = vmatpush2.bf16.msra.mxu0 0
  %2283 = vmatprep.subr.bf16.mxu0 0
  %2284 = vmatpush2.bf16.msra.mxu0 0
  %2285 = vmatprep.mubr.bf16.mxu0 0
  %2286 = vmatmul.mubr.bf16.gmra.mxu0 %v2019
  %v2287 = vpop.f32.mrf.mxu0
  %v2288 = vadd.f32 0.0, %v2287
  %v2289 = vpop.f32.mrf.mxu0
  %v2290 = vadd.f32 0.0, %v2289
  %v2291 = vpop.f32.mrf.mxu0
  %v2292 = vpop.f32.mrf.mxu0
  %2293 = vdwg.mxu0
  %v2294 = vadd.f32 %v2015, %v2247
  %v2295 = vadd.f32 %v2016, %v2249
  %v2296 = vadd.f32 %v2017, %v2288
  %v2297 = vadd.f32 %v2018, %v2290
  %v2298 = vxor.u32 %v2294, 2147483648
  %v2299 = vmul.f32 %v2298, 1.442695
  %v2300 = vpow.pop %v2299
  %v2301 = vadd.f32 %v2300, 1.0
  %v2302 = vrcp.pop %v2301
  %v2303 = vmul.f32 1.0, %v2302
  %v2304 = vxor.u32 %v2295, 2147483648
  %v2305 = vmul.f32 %v2304, 1.442695
  %v2306 = vpow.pop %v2305
  %v2307 = vadd.f32 %v2306, 1.0
  %v2308 = vrcp.pop %v2307
  %v2309 = vmul.f32 1.0, %v2308
  %v2310 = vtanh.pop %v2296
  %v2311 = vxor.u32 %v2297, 2147483648
  %v2312 = vmul.f32 %v2311, 1.442695
  %v2313 = vpow.pop %v2312
  %v2314 = vadd.f32 %v2313, 1.0
  %v2315 = vrcp.pop %v2314
  %v2316 = vmul.f32 1.0, %v2315
  %v2317 = vmul.f32 %v2309, %v2007
  %v2318 = vmul.f32 %v2303, %v2310
  %v2319 = vadd.f32 %v2317, %v2318
  %v2320 = vtanh.pop %v2319
  %v2321 = vmul.f32 %v2316, %v2320
  %s2322 = scalar_lea.vmem %s4, 40
  %2323 = vst [vmem:[%s2322] sm:$0xff] %v2321
  %s2324 = smul.u32 6, 4
  %s2325 = smul.addr %s2324, 8
  %s2326 = scalar_lea.vmem [#allocation2], %s2325
  %v2327 = vld [vmem:[%s2326] sm:$0xff]
  %v2328 = vld [vmem:[%s2326 + $0x8] sm:$0xff]
  %v2329 = vld [vmem:[%s2326 + $0x10] sm:$0xff]
  %v2330 = vld [vmem:[%s2326 + $0x18] sm:$0xff]
  %v2331 = vpack.c.bf16 %v2321, %v2321
  %v2332 = vld [vmem:[%s2] sm:$0xff]
  %v2333 = vld [vmem:[%s2 + $0x8] sm:$0xff]
  %v2334 = vld [vmem:[%s2 + $0x10] sm:$0xff]
  %v2335 = vld [vmem:[%s2 + $0x18] sm:$0xff]
  %v2336 = vld [vmem:[%s2 + $0x20] sm:$0xff]
  %v2337 = vld [vmem:[%s2 + $0x28] sm:$0xff]
  %v2338 = vld [vmem:[%s2 + $0x30] sm:$0xff]
  %v2339 = vld [vmem:[%s2 + $0x38] sm:$0xff]
  %v2340 = vld [vmem:[%s2 + $0x40] sm:$0xff]
  %v2341 = vld [vmem:[%s2 + $0x48] sm:$0xff]
  %v2342 = vld [vmem:[%s2 + $0x50] sm:$0xff]
  %v2343 = vld [vmem:[%s2 + $0x58] sm:$0xff]
  %v2344 = vld [vmem:[%s2 + $0x60] sm:$0xff]
  %v2345 = vld [vmem:[%s2 + $0x68] sm:$0xff]
  %v2346 = vld [vmem:[%s2 + $0x70] sm:$0xff]
  %v2347 = vld [vmem:[%s2 + $0x78] sm:$0xff]
  %v2348 = vld [vmem:[%s2 + $0x80] sm:$0xff]
  %v2349 = vld [vmem:[%s2 + $0x88] sm:$0xff]
  %v2350 = vld [vmem:[%s2 + $0x90] sm:$0xff]
  %v2351 = vld [vmem:[%s2 + $0x98] sm:$0xff]
  %v2352 = vld [vmem:[%s2 + $0xa0] sm:$0xff]
  %v2353 = vld [vmem:[%s2 + $0xa8] sm:$0xff]
  %v2354 = vld [vmem:[%s2 + $0xb0] sm:$0xff]
  %v2355 = vld [vmem:[%s2 + $0xb8] sm:$0xff]
  %v2356 = vld [vmem:[%s2 + $0xc0] sm:$0xff]
  %v2357 = vld [vmem:[%s2 + $0xc8] sm:$0xff]
  %v2358 = vld [vmem:[%s2 + $0xd0] sm:$0xff]
  %v2359 = vld [vmem:[%s2 + $0xd8] sm:$0xff]
  %v2360 = vld [vmem:[%s2 + $0xe0] sm:$0xff]
  %v2361 = vld [vmem:[%s2 + $0xe8] sm:$0xff]
  %v2362 = vld [vmem:[%s2 + $0xf0] sm:$0xff]
  %v2363 = vld [vmem:[%s2 + $0xf8] sm:$0xff]
  %v2396 = vunpack.c.l.b16 %v2332
  %v2397 = vunpack.c.h.b16 %v2332
  %v2398 = vunpack.c.l.b16 %v2333
  %v2399 = vunpack.c.h.b16 %v2333
  %v2400 = vunpack.c.l.b16 %v2334
  %v2401 = vunpack.c.h.b16 %v2334
  %v2402 = vunpack.c.l.b16 %v2335
  %v2403 = vunpack.c.h.b16 %v2335
  %v2404 = vunpack.c.l.b16 %v2336
  %v2405 = vunpack.c.h.b16 %v2336
  %v2406 = vunpack.c.l.b16 %v2337
  %v2407 = vunpack.c.h.b16 %v2337
  %v2408 = vunpack.c.l.b16 %v2338
  %v2409 = vunpack.c.h.b16 %v2338
  %v2410 = vunpack.c.l.b16 %v2339
  %v2411 = vunpack.c.h.b16 %v2339
  %v2412 = vunpack.c.l.b16 %v2340
  %v2413 = vunpack.c.h.b16 %v2340
  %v2414 = vunpack.c.l.b16 %v2341
  %v2415 = vunpack.c.h.b16 %v2341
  %v2416 = vunpack.c.l.b16 %v2342
  %v2417 = vunpack.c.h.b16 %v2342
  %v2418 = vunpack.c.l.b16 %v2343
  %v2419 = vunpack.c.h.b16 %v2343
  %v2420 = vunpack.c.l.b16 %v2344
  %v2421 = vunpack.c.h.b16 %v2344
  %v2422 = vunpack.c.l.b16 %v2345
  %v2423 = vunpack.c.h.b16 %v2345
  %v2424 = vunpack.c.l.b16 %v2346
  %v2425 = vunpack.c.h.b16 %v2346
  %v2426 = vunpack.c.l.b16 %v2347
  %v2427 = vunpack.c.h.b16 %v2347
  %v2428 = vunpack.c.l.b16 %v2348
  %v2429 = vunpack.c.h.b16 %v2348
  %v2430 = vunpack.c.l.b16 %v2349
  %v2431 = vunpack.c.h.b16 %v2349
  %v2432 = vunpack.c.l.b16 %v2350
  %v2433 = vunpack.c.h.b16 %v2350
  %v2434 = vunpack.c.l.b16 %v2351
  %v2435 = vunpack.c.h.b16 %v2351
  %v2436 = vunpack.c.l.b16 %v2352
  %v2437 = vunpack.c.h.b16 %v2352
  %v2438 = vunpack.c.l.b16 %v2353
  %v2439 = vunpack.c.h.b16 %v2353
  %v2440 = vunpack.c.l.b16 %v2354
  %v2441 = vunpack.c.h.b16 %v2354
  %v2442 = vunpack.c.l.b16 %v2355
  %v2443 = vunpack.c.h.b16 %v2355
  %v2444 = vunpack.c.l.b16 %v2356
  %v2445 = vunpack.c.h.b16 %v2356
  %v2446 = vunpack.c.l.b16 %v2357
  %v2447 = vunpack.c.h.b16 %v2357
  %v2448 = vunpack.c.l.b16 %v2358
  %v2449 = vunpack.c.h.b16 %v2358
  %v2450 = vunpack.c.l.b16 %v2359
  %v2451 = vunpack.c.h.b16 %v2359
  %v2452 = vunpack.c.l.b16 %v2360
  %v2453 = vunpack.c.h.b16 %v2360
  %v2454 = vunpack.c.l.b16 %v2361
  %v2455 = vunpack.c.h.b16 %v2361
  %v2456 = vunpack.c.l.b16 %v2362
  %v2457 = vunpack.c.h.b16 %v2362
  %v2458 = vunpack.c.l.b16 %v2363
  %v2459 = vunpack.c.h.b16 %v2363
  %v2460 = vpack.c.b16 %v2400, %v2396
  %v2461 = vpack.c.b16 %v2401, %v2397
  %v2462 = vpack.c.b16 %v2402, %v2398
  %v2463 = vpack.c.b16 %v2403, %v2399
  %v2464 = vpack.c.b16 %v2408, %v2404
  %v2465 = vpack.c.b16 %v2409, %v2405
  %v2466 = vpack.c.b16 %v2410, %v2406
  %v2467 = vpack.c.b16 %v2411, %v2407
  %v2468 = vpack.c.b16 %v2416, %v2412
  %v2469 = vpack.c.b16 %v2417, %v2413
  %v2470 = vpack.c.b16 %v2418, %v2414
  %v2471 = vpack.c.b16 %v2419, %v2415
  %v2472 = vpack.c.b16 %v2424, %v2420
  %v2473 = vpack.c.b16 %v2425, %v2421
  %v2474 = vpack.c.b16 %v2426, %v2422
  %v2475 = vpack.c.b16 %v2427, %v2423
  %v2476 = vpack.c.b16 %v2432, %v2428
  %v2477 = vpack.c.b16 %v2433, %v2429
  %v2478 = vpack.c.b16 %v2434, %v2430
  %v2479 = vpack.c.b16 %v2435, %v2431
  %v2480 = vpack.c.b16 %v2440, %v2436
  %v2481 = vpack.c.b16 %v2441, %v2437
  %v2482 = vpack.c.b16 %v2442, %v2438
  %v2483 = vpack.c.b16 %v2443, %v2439
  %v2484 = vpack.c.b16 %v2448, %v2444
  %v2485 = vpack.c.b16 %v2449, %v2445
  %v2486 = vpack.c.b16 %v2450, %v2446
  %v2487 = vpack.c.b16 %v2451, %v2447
  %v2488 = vpack.c.b16 %v2456, %v2452
  %v2489 = vpack.c.b16 %v2457, %v2453
  %v2490 = vpack.c.b16 %v2458, %v2454
  %v2491 = vpack.c.b16 %v2459, %v2455
  %2524 = vmatprep.subr.bf16.mxu0 %v2489
  %2525 = vmatpush1.bf16.msra.mxu0 %v2488
  %2526 = vmatprep.subr.bf16.mxu0 %v2485
  %2527 = vmatpush1.bf16.msra.mxu0 %v2484
  %2528 = vmatprep.subr.bf16.mxu0 %v2481
  %2529 = vmatpush1.bf16.msra.mxu0 %v2480
  %2530 = vmatprep.subr.bf16.mxu0 %v2477
  %2531 = vmatpush1.bf16.msra.mxu0 %v2476
  %2532 = vmatprep.subr.bf16.mxu0 %v2473
  %2533 = vmatpush1.bf16.msra.mxu0 %v2472
  %2534 = vmatprep.subr.bf16.mxu0 %v2469
  %2535 = vmatpush1.bf16.msra.mxu0 %v2468
  %2536 = vmatprep.subr.bf16.mxu0 %v2465
  %2537 = vmatpush1.bf16.msra.mxu0 %v2464
  %2538 = vmatprep.subr.bf16.mxu0 %v2461
  %2539 = vmatpush1.bf16.msra.mxu0 %v2460
  %2540 = vmatprep.subr.bf16.mxu0 0
  %2541 = vmatpush2.bf16.msra.mxu0 0
  %2542 = vmatprep.subr.bf16.mxu0 0
  %2543 = vmatpush2.bf16.msra.mxu0 0
  %2544 = vmatprep.subr.bf16.mxu0 0
  %2545 = vmatpush2.bf16.msra.mxu0 0
  %2546 = vmatprep.subr.bf16.mxu0 0
  %2547 = vmatpush2.bf16.msra.mxu0 0
  %2548 = vmatprep.subr.bf16.mxu0 0
  %2549 = vmatpush2.bf16.msra.mxu0 0
  %2550 = vmatprep.subr.bf16.mxu0 0
  %2551 = vmatpush2.bf16.msra.mxu0 0
  %2552 = vmatprep.subr.bf16.mxu0 0
  %2553 = vmatpush2.bf16.msra.mxu0 0
  %2554 = vmatprep.subr.bf16.mxu0 0
  %2555 = vmatpush2.bf16.msra.mxu0 0
  %2556 = vmatprep.mubr.bf16.mxu0 0
  %2557 = vmatmul.mubr.bf16.gmra.mxu0 %v2331
  %v2558 = vpop.f32.mrf.mxu0
  %v2559 = vadd.f32 0.0, %v2558
  %v2560 = vpop.f32.mrf.mxu0
  %v2561 = vadd.f32 0.0, %v2560
  %v2562 = vpop.f32.mrf.mxu0
  %v2563 = vpop.f32.mrf.mxu0
  %2564 = vdwg.mxu0
  %2565 = vmatprep.subr.bf16.mxu0 %v2491
  %2566 = vmatpush1.bf16.msra.mxu0 %v2490
  %2567 = vmatprep.subr.bf16.mxu0 %v2487
  %2568 = vmatpush1.bf16.msra.mxu0 %v2486
  %2569 = vmatprep.subr.bf16.mxu0 %v2483
  %2570 = vmatpush1.bf16.msra.mxu0 %v2482
  %2571 = vmatprep.subr.bf16.mxu0 %v2479
  %2572 = vmatpush1.bf16.msra.mxu0 %v2478
  %2573 = vmatprep.subr.bf16.mxu0 %v2475
  %2574 = vmatpush1.bf16.msra.mxu0 %v2474
  %2575 = vmatprep.subr.bf16.mxu0 %v2471
  %2576 = vmatpush1.bf16.msra.mxu0 %v2470
  %2577 = vmatprep.subr.bf16.mxu0 %v2467
  %2578 = vmatpush1.bf16.msra.mxu0 %v2466
  %2579 = vmatprep.subr.bf16.mxu0 %v2463
  %2580 = vmatpush1.bf16.msra.mxu0 %v2462
  %2581 = vmatprep.subr.bf16.mxu0 0
  %2582 = vmatpush2.bf16.msra.mxu0 0
  %2583 = vmatprep.subr.bf16.mxu0 0
  %2584 = vmatpush2.bf16.msra.mxu0 0
  %2585 = vmatprep.subr.bf16.mxu0 0
  %2586 = vmatpush2.bf16.msra.mxu0 0
  %2587 = vmatprep.subr.bf16.mxu0 0
  %2588 = vmatpush2.bf16.msra.mxu0 0
  %2589 = vmatprep.subr.bf16.mxu0 0
  %2590 = vmatpush2.bf16.msra.mxu0 0
  %2591 = vmatprep.subr.bf16.mxu0 0
  %2592 = vmatpush2.bf16.msra.mxu0 0
  %2593 = vmatprep.subr.bf16.mxu0 0
  %2594 = vmatpush2.bf16.msra.mxu0 0
  %2595 = vmatprep.subr.bf16.mxu0 0
  %2596 = vmatpush2.bf16.msra.mxu0 0
  %2597 = vmatprep.mubr.bf16.mxu0 0
  %2598 = vmatmul.mubr.bf16.gmra.mxu0 %v2331
  %v2599 = vpop.f32.mrf.mxu0
  %v2600 = vadd.f32 0.0, %v2599
  %v2601 = vpop.f32.mrf.mxu0
  %v2602 = vadd.f32 0.0, %v2601
  %v2603 = vpop.f32.mrf.mxu0
  %v2604 = vpop.f32.mrf.mxu0
  %2605 = vdwg.mxu0
  %v2606 = vadd.f32 %v2327, %v2559
  %v2607 = vadd.f32 %v2328, %v2561
  %v2608 = vadd.f32 %v2329, %v2600
  %v2609 = vadd.f32 %v2330, %v2602
  %v2610 = vxor.u32 %v2606, 2147483648
  %v2611 = vmul.f32 %v2610, 1.442695
  %v2612 = vpow.pop %v2611
  %v2613 = vadd.f32 %v2612, 1.0
  %v2614 = vrcp.pop %v2613
  %v2615 = vmul.f32 1.0, %v2614
  %v2616 = vxor.u32 %v2607, 2147483648
  %v2617 = vmul.f32 %v2616, 1.442695
  %v2618 = vpow.pop %v2617
  %v2619 = vadd.f32 %v2618, 1.0
  %v2620 = vrcp.pop %v2619
  %v2621 = vmul.f32 1.0, %v2620
  %v2622 = vtanh.pop %v2608
  %v2623 = vxor.u32 %v2609, 2147483648
  %v2624 = vmul.f32 %v2623, 1.442695
  %v2625 = vpow.pop %v2624
  %v2626 = vadd.f32 %v2625, 1.0
  %v2627 = vrcp.pop %v2626
  %v2628 = vmul.f32 1.0, %v2627
  %v2629 = vmul.f32 %v2621, %v2319
  %v2630 = vmul.f32 %v2615, %v2622
  %v2631 = vadd.f32 %v2629, %v2630
  %v2632 = vtanh.pop %v2631
  %v2633 = vmul.f32 %v2628, %v2632
  %s2634 = scalar_lea.vmem %s4, 48
  %2635 = vst [vmem:[%s2634] sm:$0xff] %v2633
  %s2636 = smul.u32 7, 4
  %s2637 = smul.addr %s2636, 8
  %s2638 = scalar_lea.vmem [#allocation2], %s2637
  %v2639 = vld [vmem:[%s2638] sm:$0xff]
  %v2640 = vld [vmem:[%s2638 + $0x8] sm:$0xff]
  %v2641 = vld [vmem:[%s2638 + $0x10] sm:$0xff]
  %v2642 = vld [vmem:[%s2638 + $0x18] sm:$0xff]
  %v2643 = vpack.c.bf16 %v2633, %v2633
  %v2644 = vld [vmem:[%s2] sm:$0xff]
  %v2645 = vld [vmem:[%s2 + $0x8] sm:$0xff]
  %v2646 = vld [vmem:[%s2 + $0x10] sm:$0xff]
  %v2647 = vld [vmem:[%s2 + $0x18] sm:$0xff]
  %v2648 = vld [vmem:[%s2 + $0x20] sm:$0xff]
  %v2649 = vld [vmem:[%s2 + $0x28] sm:$0xff]
  %v2650 = vld [vmem:[%s2 + $0x30] sm:$0xff]
  %v2651 = vld [vmem:[%s2 + $0x38] sm:$0xff]
  %v2652 = vld [vmem:[%s2 + $0x40] sm:$0xff]
  %v2653 = vld [vmem:[%s2 + $0x48] sm:$0xff]
  %v2654 = vld [vmem:[%s2 + $0x50] sm:$0xff]
  %v2655 = vld [vmem:[%s2 + $0x58] sm:$0xff]
  %v2656 = vld [vmem:[%s2 + $0x60] sm:$0xff]
  %v2657 = vld [vmem:[%s2 + $0x68] sm:$0xff]
  %v2658 = vld [vmem:[%s2 + $0x70] sm:$0xff]
  %v2659 = vld [vmem:[%s2 + $0x78] sm:$0xff]
  %v2660 = vld [vmem:[%s2 + $0x80] sm:$0xff]
  %v2661 = vld [vmem:[%s2 + $0x88] sm:$0xff]
  %v2662 = vld [vmem:[%s2 + $0x90] sm:$0xff]
  %v2663 = vld [vmem:[%s2 + $0x98] sm:$0xff]
  %v2664 = vld [vmem:[%s2 + $0xa0] sm:$0xff]
  %v2665 = vld [vmem:[%s2 + $0xa8] sm:$0xff]
  %v2666 = vld [vmem:[%s2 + $0xb0] sm:$0xff]
  %v2667 = vld [vmem:[%s2 + $0xb8] sm:$0xff]
  %v2668 = vld [vmem:[%s2 + $0xc0] sm:$0xff]
  %v2669 = vld [vmem:[%s2 + $0xc8] sm:$0xff]
  %v2670 = vld [vmem:[%s2 + $0xd0] sm:$0xff]
  %v2671 = vld [vmem:[%s2 + $0xd8] sm:$0xff]
  %v2672 = vld [vmem:[%s2 + $0xe0] sm:$0xff]
  %v2673 = vld [vmem:[%s2 + $0xe8] sm:$0xff]
  %v2674 = vld [vmem:[%s2 + $0xf0] sm:$0xff]
  %v2675 = vld [vmem:[%s2 + $0xf8] sm:$0xff]
  %v2708 = vunpack.c.l.b16 %v2644
  %v2709 = vunpack.c.h.b16 %v2644
  %v2710 = vunpack.c.l.b16 %v2645
  %v2711 = vunpack.c.h.b16 %v2645
  %v2712 = vunpack.c.l.b16 %v2646
  %v2713 = vunpack.c.h.b16 %v2646
  %v2714 = vunpack.c.l.b16 %v2647
  %v2715 = vunpack.c.h.b16 %v2647
  %v2716 = vunpack.c.l.b16 %v2648
  %v2717 = vunpack.c.h.b16 %v2648
  %v2718 = vunpack.c.l.b16 %v2649
  %v2719 = vunpack.c.h.b16 %v2649
  %v2720 = vunpack.c.l.b16 %v2650
  %v2721 = vunpack.c.h.b16 %v2650
  %v2722 = vunpack.c.l.b16 %v2651
  %v2723 = vunpack.c.h.b16 %v2651
  %v2724 = vunpack.c.l.b16 %v2652
  %v2725 = vunpack.c.h.b16 %v2652
  %v2726 = vunpack.c.l.b16 %v2653
  %v2727 = vunpack.c.h.b16 %v2653
  %v2728 = vunpack.c.l.b16 %v2654
  %v2729 = vunpack.c.h.b16 %v2654
  %v2730 = vunpack.c.l.b16 %v2655
  %v2731 = vunpack.c.h.b16 %v2655
  %v2732 = vunpack.c.l.b16 %v2656
  %v2733 = vunpack.c.h.b16 %v2656
  %v2734 = vunpack.c.l.b16 %v2657
  %v2735 = vunpack.c.h.b16 %v2657
  %v2736 = vunpack.c.l.b16 %v2658
  %v2737 = vunpack.c.h.b16 %v2658
  %v2738 = vunpack.c.l.b16 %v2659
  %v2739 = vunpack.c.h.b16 %v2659
  %v2740 = vunpack.c.l.b16 %v2660
  %v2741 = vunpack.c.h.b16 %v2660
  %v2742 = vunpack.c.l.b16 %v2661
  %v2743 = vunpack.c.h.b16 %v2661
  %v2744 = vunpack.c.l.b16 %v2662
  %v2745 = vunpack.c.h.b16 %v2662
  %v2746 = vunpack.c.l.b16 %v2663
  %v2747 = vunpack.c.h.b16 %v2663
  %v2748 = vunpack.c.l.b16 %v2664
  %v2749 = vunpack.c.h.b16 %v2664
  %v2750 = vunpack.c.l.b16 %v2665
  %v2751 = vunpack.c.h.b16 %v2665
  %v2752 = vunpack.c.l.b16 %v2666
  %v2753 = vunpack.c.h.b16 %v2666
  %v2754 = vunpack.c.l.b16 %v2667
  %v2755 = vunpack.c.h.b16 %v2667
  %v2756 = vunpack.c.l.b16 %v2668
  %v2757 = vunpack.c.h.b16 %v2668
  %v2758 = vunpack.c.l.b16 %v2669
  %v2759 = vunpack.c.h.b16 %v2669
  %v2760 = vunpack.c.l.b16 %v2670
  %v2761 = vunpack.c.h.b16 %v2670
  %v2762 = vunpack.c.l.b16 %v2671
  %v2763 = vunpack.c.h.b16 %v2671
  %v2764 = vunpack.c.l.b16 %v2672
  %v2765 = vunpack.c.h.b16 %v2672
  %v2766 = vunpack.c.l.b16 %v2673
  %v2767 = vunpack.c.h.b16 %v2673
  %v2768 = vunpack.c.l.b16 %v2674
  %v2769 = vunpack.c.h.b16 %v2674
  %v2770 = vunpack.c.l.b16 %v2675
  %v2771 = vunpack.c.h.b16 %v2675
  %v2772 = vpack.c.b16 %v2712, %v2708
  %v2773 = vpack.c.b16 %v2713, %v2709
  %v2774 = vpack.c.b16 %v2714, %v2710
  %v2775 = vpack.c.b16 %v2715, %v2711
  %v2776 = vpack.c.b16 %v2720, %v2716
  %v2777 = vpack.c.b16 %v2721, %v2717
  %v2778 = vpack.c.b16 %v2722, %v2718
  %v2779 = vpack.c.b16 %v2723, %v2719
  %v2780 = vpack.c.b16 %v2728, %v2724
  %v2781 = vpack.c.b16 %v2729, %v2725
  %v2782 = vpack.c.b16 %v2730, %v2726
  %v2783 = vpack.c.b16 %v2731, %v2727
  %v2784 = vpack.c.b16 %v2736, %v2732
  %v2785 = vpack.c.b16 %v2737, %v2733
  %v2786 = vpack.c.b16 %v2738, %v2734
  %v2787 = vpack.c.b16 %v2739, %v2735
  %v2788 = vpack.c.b16 %v2744, %v2740
  %v2789 = vpack.c.b16 %v2745, %v2741
  %v2790 = vpack.c.b16 %v2746, %v2742
  %v2791 = vpack.c.b16 %v2747, %v2743
  %v2792 = vpack.c.b16 %v2752, %v2748
  %v2793 = vpack.c.b16 %v2753, %v2749
  %v2794 = vpack.c.b16 %v2754, %v2750
  %v2795 = vpack.c.b16 %v2755, %v2751
  %v2796 = vpack.c.b16 %v2760, %v2756
  %v2797 = vpack.c.b16 %v2761, %v2757
  %v2798 = vpack.c.b16 %v2762, %v2758
  %v2799 = vpack.c.b16 %v2763, %v2759
  %v2800 = vpack.c.b16 %v2768, %v2764
  %v2801 = vpack.c.b16 %v2769, %v2765
  %v2802 = vpack.c.b16 %v2770, %v2766
  %v2803 = vpack.c.b16 %v2771, %v2767
  %2836 = vmatprep.subr.bf16.mxu0 %v2801
  %2837 = vmatpush1.bf16.msra.mxu0 %v2800
  %2838 = vmatprep.subr.bf16.mxu0 %v2797
  %2839 = vmatpush1.bf16.msra.mxu0 %v2796
  %2840 = vmatprep.subr.bf16.mxu0 %v2793
  %2841 = vmatpush1.bf16.msra.mxu0 %v2792
  %2842 = vmatprep.subr.bf16.mxu0 %v2789
  %2843 = vmatpush1.bf16.msra.mxu0 %v2788
  %2844 = vmatprep.subr.bf16.mxu0 %v2785
  %2845 = vmatpush1.bf16.msra.mxu0 %v2784
  %2846 = vmatprep.subr.bf16.mxu0 %v2781
  %2847 = vmatpush1.bf16.msra.mxu0 %v2780
  %2848 = vmatprep.subr.bf16.mxu0 %v2777
  %2849 = vmatpush1.bf16.msra.mxu0 %v2776
  %2850 = vmatprep.subr.bf16.mxu0 %v2773
  %2851 = vmatpush1.bf16.msra.mxu0 %v2772
  %2852 = vmatprep.subr.bf16.mxu0 0
  %2853 = vmatpush2.bf16.msra.mxu0 0
  %2854 = vmatprep.subr.bf16.mxu0 0
  %2855 = vmatpush2.bf16.msra.mxu0 0
  %2856 = vmatprep.subr.bf16.mxu0 0
  %2857 = vmatpush2.bf16.msra.mxu0 0
  %2858 = vmatprep.subr.bf16.mxu0 0
  %2859 = vmatpush2.bf16.msra.mxu0 0
  %2860 = vmatprep.subr.bf16.mxu0 0
  %2861 = vmatpush2.bf16.msra.mxu0 0
  %2862 = vmatprep.subr.bf16.mxu0 0
  %2863 = vmatpush2.bf16.msra.mxu0 0
  %2864 = vmatprep.subr.bf16.mxu0 0
  %2865 = vmatpush2.bf16.msra.mxu0 0
  %2866 = vmatprep.subr.bf16.mxu0 0
  %2867 = vmatpush2.bf16.msra.mxu0 0
  %2868 = vmatprep.mubr.bf16.mxu0 0
  %2869 = vmatmul.mubr.bf16.gmra.mxu0 %v2643
  %v2870 = vpop.f32.mrf.mxu0
  %v2871 = vadd.f32 0.0, %v2870
  %v2872 = vpop.f32.mrf.mxu0
  %v2873 = vadd.f32 0.0, %v2872
  %v2874 = vpop.f32.mrf.mxu0
  %v2875 = vpop.f32.mrf.mxu0
  %2876 = vdwg.mxu0
  %2877 = vmatprep.subr.bf16.mxu0 %v2803
  %2878 = vmatpush1.bf16.msra.mxu0 %v2802
  %2879 = vmatprep.subr.bf16.mxu0 %v2799
  %2880 = vmatpush1.bf16.msra.mxu0 %v2798
  %2881 = vmatprep.subr.bf16.mxu0 %v2795
  %2882 = vmatpush1.bf16.msra.mxu0 %v2794
  %2883 = vmatprep.subr.bf16.mxu0 %v2791
  %2884 = vmatpush1.bf16.msra.mxu0 %v2790
  %2885 = vmatprep.subr.bf16.mxu0 %v2787
  %2886 = vmatpush1.bf16.msra.mxu0 %v2786
  %2887 = vmatprep.subr.bf16.mxu0 %v2783
  %2888 = vmatpush1.bf16.msra.mxu0 %v2782
  %2889 = vmatprep.subr.bf16.mxu0 %v2779
  %2890 = vmatpush1.bf16.msra.mxu0 %v2778
  %2891 = vmatprep.subr.bf16.mxu0 %v2775
  %2892 = vmatpush1.bf16.msra.mxu0 %v2774
  %2893 = vmatprep.subr.bf16.mxu0 0
  %2894 = vmatpush2.bf16.msra.mxu0 0
  %2895 = vmatprep.subr.bf16.mxu0 0
  %2896 = vmatpush2.bf16.msra.mxu0 0
  %2897 = vmatprep.subr.bf16.mxu0 0
  %2898 = vmatpush2.bf16.msra.mxu0 0
  %2899 = vmatprep.subr.bf16.mxu0 0
  %2900 = vmatpush2.bf16.msra.mxu0 0
  %2901 = vmatprep.subr.bf16.mxu0 0
  %2902 = vmatpush2.bf16.msra.mxu0 0
  %2903 = vmatprep.subr.bf16.mxu0 0
  %2904 = vmatpush2.bf16.msra.mxu0 0
  %2905 = vmatprep.subr.bf16.mxu0 0
  %2906 = vmatpush2.bf16.msra.mxu0 0
  %2907 = vmatprep.subr.bf16.mxu0 0
  %2908 = vmatpush2.bf16.msra.mxu0 0
  %2909 = vmatprep.mubr.bf16.mxu0 0
  %2910 = vmatmul.mubr.bf16.gmra.mxu0 %v2643
  %v2911 = vpop.f32.mrf.mxu0
  %v2912 = vadd.f32 0.0, %v2911
  %v2913 = vpop.f32.mrf.mxu0
  %v2914 = vadd.f32 0.0, %v2913
  %v2915 = vpop.f32.mrf.mxu0
  %v2916 = vpop.f32.mrf.mxu0
  %2917 = vdwg.mxu0
  %v2918 = vadd.f32 %v2639, %v2871
  %v2919 = vadd.f32 %v2640, %v2873
  %v2920 = vadd.f32 %v2641, %v2912
  %v2921 = vadd.f32 %v2642, %v2914
  %v2922 = vxor.u32 %v2918, 2147483648
  %v2923 = vmul.f32 %v2922, 1.442695
  %v2924 = vpow.pop %v2923
  %v2925 = vadd.f32 %v2924, 1.0
  %v2926 = vrcp.pop %v2925
  %v2927 = vmul.f32 1.0, %v2926
  %v2928 = vxor.u32 %v2919, 2147483648
  %v2929 = vmul.f32 %v2928, 1.442695
  %v2930 = vpow.pop %v2929
  %v2931 = vadd.f32 %v2930, 1.0
  %v2932 = vrcp.pop %v2931
  %v2933 = vmul.f32 1.0, %v2932
  %v2934 = vtanh.pop %v2920
  %v2935 = vxor.u32 %v2921, 2147483648
  %v2936 = vmul.f32 %v2935, 1.442695
  %v2937 = vpow.pop %v2936
  %v2938 = vadd.f32 %v2937, 1.0
  %v2939 = vrcp.pop %v2938
  %v2940 = vmul.f32 1.0, %v2939
  %v2941 = vmul.f32 %v2933, %v2631
  %v2942 = vmul.f32 %v2927, %v2934
  %v2943 = vadd.f32 %v2941, %v2942
  %v2944 = vtanh.pop %v2943
  %v2945 = vmul.f32 %v2940, %v2944
  %s2946 = scalar_lea.vmem %s4, 56
  %2947 = vst [vmem:[%s2946] sm:$0xff] %v2945
  %2948 = vst [vmem:[#allocation3] sm:$0xff] %v2945
  %2949 = vst [vmem:[#allocation4] sm:$0xff] %v2943
  // Predicated region
  $region22: #{lstm_encoder_forward.3} parent=0 // pred_check
    %p2950 = pneg %p21
  $region23: #{lstm_encoder_forward.3} parent=0 // pred_check_branch
    %2952 = sbr.rel (%p2950) target = $region25
  $region24: #{lstm_encoder_forward.3} parent=0 // pred_region
    %v2953 = vld [vmem:[#allocation3] sm:$0xff]
    %2954 = vst [vmem:[%s5] sm:$0xff] %v2953
    %v2955 = vld [vmem:[#allocation4] sm:$0xff]
    %2956 = vst [vmem:[%s6] sm:$0xff] %v2955
  $region25: #{lstm_encoder_forward.3} parent=0 // pred_fallthru
    _
  // Predicated region
  $region26: #{lstm_encoder_forward.3} parent=0 // pred_check
    _
  $region27: #{lstm_encoder_forward.3} parent=0 // pred_check_branch
    %2958 = sbr.rel (0) target = $region29
  $region28: #{lstm_encoder_forward.3} parent=0 // pred_region
    _
  $region29: #{lstm_encoder_forward.3} parent=0 // pred_fallthru
    _
  // Predicated region
  $region30: #{lstm_encoder_forward.3} parent=0 // pred_check
    _
  $region31: #{lstm_encoder_forward.3} parent=0 // pred_check_branch
    %2960 = sbr.rel (0) target = $region33
  $region32: #{lstm_encoder_forward.3} parent=0 // pred_region
    _
  $region33: #{lstm_encoder_forward.3} parent=0 // pred_fallthru
    _
  // Predicated region
  $region34: #{lstm_encoder_forward.3} parent=0 // pred_check
    _
  $region35: #{lstm_encoder_forward.3} parent=0 // pred_check_branch
    %2962 = sbr.rel (0) target = $region37
  $region36: #{lstm_encoder_forward.3} parent=0 // pred_region
    _
  $region37: #{lstm_encoder_forward.3} parent=0 // pred_fallthru
    _
  // Predicated region
  $region38: #{lstm_encoder_forward.3} parent=0 // pred_check
    _
  $region39: #{lstm_encoder_forward.3} parent=0 // pred_check_branch
    %2964 = sbr.rel (0) target = $region41
  $region40: #{lstm_encoder_forward.3} parent=0 // pred_region
    _
  $region41: #{lstm_encoder_forward.3} parent=0 // pred_fallthru
    _
  // Predicated region
  $region42: #{lstm_encoder_forward.3} parent=0 // pred_check
    _
  $region43: #{lstm_encoder_forward.3} parent=0 // pred_check_branch
    %2966 = sbr.rel (0) target = $region45
  $region44: #{lstm_encoder_forward.3} parent=0 // pred_region
    _
  $region45: #{lstm_encoder_forward.3} parent=0 // pred_fallthru
    _
  // Predicated region
  $region46: #{lstm_encoder_forward.3} parent=0 // pred_check
    _
  $region47: #{lstm_encoder_forward.3} parent=0 // pred_check_branch
    %2968 = sbr.rel (0) target = $region49
  $region48: #{lstm_encoder_forward.3} parent=0 // pred_region
    _
  $region49: #{lstm_encoder_forward.3} parent=0 // pred_fallthru
    _

</llo_original>
